<compile_context>
chip_gen: v7x
topology: tpu7x:2x2x1
jax: 0.10.0
libtpu: 0.0.40
codegen_flags: <defaults>
</compile_context>

<pallas_src>
import jax
import jax.numpy as jnp
from jax import lax
from jax.experimental import pallas as pl
from jax.experimental.pallas import tpu as pltpu


# ---------------------------------------------------------------------------
# Fused TinyVGG kernel (one grid step per G stacked images)
# ---------------------------------------------------------------------------
def _tinyvgg_kernel(x_ref,
                    t1_ref, b1_ref,
                    t2e_ref, t2o_ref, b2_ref,
                    t3_ref, b3_ref,
                    t4e_ref, t4o_ref, b4_ref,
                    sh1_ref, sh2_ref, rp1_ref, rp2_ref,
                    wf_ref, bf_ref,
                    o_ref):
    f32 = jnp.float32
    bf16 = jnp.bfloat16
    exact = lax.Precision.HIGHEST

    def shift_pair(xb, sh_ref):
        # bf16 0/1 row-shift selectors: single MXU pass, exact for bf16 data.
        # Per-image top/bottom zero padding (and image-boundary isolation for
        # the stacked-G layout) is baked into the selectors.
        dn = jnp.dot(sh_ref[0], xb, preferred_element_type=f32).astype(bf16)
        up = jnp.dot(sh_ref[1], xb, preferred_element_type=f32).astype(bf16)
        return dn, up

    def conv_acc(dn, md, up, t_ref):
        # 3x3 conv as 3 MXU matmuls against row-Toeplitz weights (W padding
        # folded into the Toeplitz matrices), f32 accumulation.
        acc = jnp.dot(dn, t_ref[0], preferred_element_type=f32)
        acc = acc + jnp.dot(md, t_ref[1], preferred_element_type=f32)
        acc = acc + jnp.dot(up, t_ref[2], preferred_element_type=f32)
        return acc

    # ----- conv block 1 ----------------------------------------------------
    xb = x_ref[0]                                            # (G*H, W*Cin) bf16
    dn, up = shift_pair(xb, sh1_ref)
    h1 = jnp.maximum(conv_acc(dn, xb, up, t1_ref) + b1_ref[...], 0.0)
    h1b = h1.astype(bf16)                                    # (G*H, W*C)

    # conv2 with the pool's COLUMN max folded into even/odd output-column
    # Toeplitz halves (same total MACs as a plain conv2, exact f32 max).
    dn, up = shift_pair(h1b, sh1_ref)
    acc_e = conv_acc(dn, h1b, up, t2e_ref)                   # even output cols
    acc_o = conv_acc(dn, h1b, up, t2o_ref)                   # odd  output cols
    h2c = jnp.maximum(jnp.maximum(acc_e, acc_o) + b2_ref[...], 0.0)
    # pool1 ROW max: two single-pass bf16 even/odd row selections + max
    # (feeds bf16 conv3, so bf16 rounding here is free of extra error).
    h2cb = h2c.astype(bf16)
    h2 = jnp.maximum(jnp.dot(rp1_ref[0], h2cb, preferred_element_type=f32),
                     jnp.dot(rp1_ref[1], h2cb, preferred_element_type=f32))
    h2b = h2.astype(bf16)                                    # (G*H/2, W/2*C)

    # ----- conv block 2 ----------------------------------------------------
    dn, up = shift_pair(h2b, sh2_ref)
    h3 = jnp.maximum(conv_acc(dn, h2b, up, t3_ref) + b3_ref[...], 0.0)
    h3b = h3.astype(bf16)

    dn, up = shift_pair(h3b, sh2_ref)
    acc_e = conv_acc(dn, h3b, up, t4e_ref)
    acc_o = conv_acc(dn, h3b, up, t4o_ref)
    h4c = jnp.maximum(jnp.maximum(acc_e, acc_o) + b4_ref[...], 0.0)  # f32
    # Final pool ROW max feeding the f32 classifier: keep it EXACT via two
    # tiny f32 HIGHEST selection matmuls (negligible MXU cost at this size).
    pooled = jnp.maximum(
        jnp.dot(rp2_ref[0], h4c, preferred_element_type=f32, precision=exact),
        jnp.dot(rp2_ref[1], h4c, preferred_element_type=f32, precision=exact))
    # pooled: (G*H4, W4*C) exact f32

    # ----- classifier --------------------------------------------------------
    # wf is pre-permuted to the kernel's (h, w*C + c) flatten order, so no
    # in-kernel transpose.  out_dim*G scalar reductions in the epilogue
    # (out_dim=3, G=2 -> 6 tiny reductions; negligible after the MXU trims).
    G = o_ref.shape[1]
    out_dim = o_ref.shape[-1]
    h4_rows = pooled.shape[0] // G
    row_i = lax.broadcasted_iota(jnp.int32, (G, out_dim), 0)
    col_i = lax.broadcasted_iota(jnp.int32, (G, out_dim), 1)
    res = jnp.zeros((G, out_dim), f32)
    for g in range(G):
        hg = pooled[g * h4_rows:(g + 1) * h4_rows, :]
        for o in range(out_dim):
            s = jnp.sum(hg * wf_ref[o])
            res = res + jnp.where((row_i == g) & (col_i == o), s, 0.0)
    o_ref[0] = res + bf_ref[...]


# ---------------------------------------------------------------------------
# One-time weight / selector transforms (wrapper side, weight-derived only)
# ---------------------------------------------------------------------------
def _toeplitz_weights(w_oihw, width):
    """PyTorch (Cout,Cin,3,3) conv weight -> (3, width*Cin, width*Cout) f32
    row-Toeplitz matrices T[dy], with the dx (width) zero-padding folded in."""
    cout, cin, _, _ = w_oihw.shape
    w_t = jnp.transpose(w_oihw, (2, 3, 1, 0)).astype(jnp.float32)  # (3,3,Cin,Cout)
    win = jnp.arange(width)[:, None]
    wout = jnp.arange(width)[None, :]
    dx = win - wout + 1
    valid = ((dx >= 0) & (dx <= 2)).astype(jnp.float32)[:, :, None, None]
    dxc = jnp.clip(dx, 0, 2)
    mats = []
    for dy in range(3):
        blk = w_t[dy][dxc] * valid                          # (W, W, Cin, Cout)
        mats.append(jnp.transpose(blk, (0, 2, 1, 3)).reshape(width * cin,
                                                             width * cout))
    return jnp.stack(mats)


def _split_pooled_cols(t_full, width, cout):
    """Split a Toeplitz (3, K, width*cout) into even/odd output-column halves
    (folds the 2x2 max-pool's column reduction into the conv weights)."""
    k = t_full.shape[1]
    t4d = t_full.reshape(3, k, width, cout)
    te = t4d[:, :, 0::2, :].reshape(3, k, (width // 2) * cout)
    to = t4d[:, :, 1::2, :].reshape(3, k, (width // 2) * cout)
    return te.astype(jnp.bfloat16), to.astype(jnp.bfloat16)


def _shift_selectors(rows, img_rows):
    """bf16 0/1 down/up row-shift selectors for G stacked images of img_rows
    rows each; zero rows at per-image boundaries implement padding=1."""
    i = jnp.arange(rows)[:, None]
    j = jnp.arange(rows)[None, :]
    dn = (j == i - 1) & (i % img_rows != 0)
    up = (j == i + 1) & (i % img_rows != img_rows - 1)
    return jnp.stack([dn, up]).astype(jnp.bfloat16)


def _row_pool_selectors(rows, dtype):
    """Even/odd row compaction selectors (rows -> rows//2); works unchanged on
    G stacked images because the per-image row count is even."""
    i = jnp.arange(rows // 2)[:, None]
    j = jnp.arange(rows)[None, :]
    return jnp.stack([(j == 2 * i), (j == 2 * i + 1)]).astype(dtype)


# ---------------------------------------------------------------------------
# TinyVGG forward (NCHW in / (B, output_shape) out, like the PyTorch module)
# ---------------------------------------------------------------------------
def tiny_vgg_forward(x_nchw, p, images_per_step=2):
    B, cin, H, W = x_nchw.shape
    hidden = p["w1"].shape[0]
    out_dim = p["wf"].shape[0]
    assert H % 4 == 0 and W % 4 == 0
    H2, W2, H4, W4 = H // 2, W // 2, H // 4, W // 4
    assert p["wf"].shape[1] == hidden * H4 * W4

    # G images per grid step (stacked along the matmul M dimension).
    # NOTE: for larger batches keep B/G even so both v7x TensorCores get work.
    G = max(1, min(images_per_step, B))
    Bp = ((B + G - 1) // G) * G
    NB = Bp // G

    # Lane-friendly channel padding (Cin 3 -> 4 so W*Cin is a multiple of 128).
    cin_pad = ((cin + 3) // 4) * 4

    # Input relayout NCHW -> lane-dense stacked (NB, G*H, W*Cin_pad) in bf16.
    x = jnp.transpose(x_nchw, (0, 2, 3, 1))
    x = jnp.pad(x, ((0, Bp - B), (0, 0), (0, 0), (0, cin_pad - cin)))
    x = x.reshape(NB, G * H, W * cin_pad).astype(jnp.bfloat16)

    # Weight-derived constants (would be cached across calls in practice).
    w1p = jnp.pad(p["w1"], ((0, 0), (0, cin_pad - cin), (0, 0), (0, 0)))
    t1 = _toeplitz_weights(w1p, W).astype(jnp.bfloat16)
    t2e, t2o = _split_pooled_cols(_toeplitz_weights(p["w2"], W), W, hidden)
    t3 = _toeplitz_weights(p["w3"], W2).astype(jnp.bfloat16)
    t4e, t4o = _split_pooled_cols(_toeplitz_weights(p["w4"], W2), W2, hidden)

    b1 = jnp.tile(p["b1"].astype(jnp.float32), W).reshape(1, W * hidden)
    b2 = jnp.tile(p["b2"].astype(jnp.float32), W2).reshape(1, W2 * hidden)
    b3 = jnp.tile(p["b3"].astype(jnp.float32), W2).reshape(1, W2 * hidden)
    b4 = jnp.tile(p["b4"].astype(jnp.float32), W4).reshape(1, W4 * hidden)

    sh1 = _shift_selectors(G * H, H)
    sh2 = _shift_selectors(G * H2, H2)
    rp1 = _row_pool_selectors(G * H, jnp.bfloat16)
    rp2 = _row_pool_selectors(G * H2, jnp.float32)

    # nn.Flatten uses (C, H, W) order; permute wf once into the kernel's
    # (h, w*C + c) layout so no activation transpose is needed per call.
    wf = jnp.transpose(p["wf"].reshape(out_dim, hidden, H4, W4),
                       (0, 2, 3, 1)).reshape(out_dim, H4, W4 * hidden)
    wf = wf.astype(jnp.float32)
    bf = p["bf"].reshape(1, out_dim).astype(jnp.float32)

    consts = (t1, b1, t2e, t2o, b2, t3, b3, t4e, t4o, b4,
              sh1, sh2, rp1, rp2, wf, bf)

    def _const_spec(arr):
        nd = arr.ndim
        idx = lambda b, _nd=nd: (0,) * _nd
        try:
            # Constants never change across grid steps: single-buffer them so
            # they don't eat double-buffer VMEM (matters on 64 MiB v7x).
            return pl.BlockSpec(arr.shape, idx, pipeline_mode=pl.Buffered(1))
        except (TypeError, AttributeError):
            return pl.BlockSpec(arr.shape, idx)

    out = pl.pallas_call(
        _tinyvgg_kernel,
        out_shape=jax.ShapeDtypeStruct((NB, G, out_dim), jnp.float32),
        grid_spec=pltpu.PrefetchScalarGridSpec(
            num_scalar_prefetch=0,
            grid=(NB,),
            in_specs=[pl.BlockSpec((1, G * H, W * cin_pad), lambda b: (b, 0, 0))]
                     + [_const_spec(a) for a in consts],
            out_specs=pl.BlockSpec((1, G, out_dim), lambda b: (b, 0, 0)),
        ),
        compiler_params=pltpu.CompilerParams(
            dimension_semantics=("parallel",),
            vmem_limit_bytes=32 * 1024 * 1024,
        ),
    )(x, *consts)
    return out.reshape(Bp, out_dim)[:B]


# ---------------------------------------------------------------------------
# Parameter init + pure-JAX reference (for validation)
# ---------------------------------------------------------------------------
def init_params(key, in_ch, hidden, out_dim):
    ks = jax.random.split(key, 10)

    def w(k, shape):
        return 0.05 * jax.random.normal(k, shape, jnp.float32)

    return dict(
        w1=w(ks[0], (hidden, in_ch, 3, 3)), b1=w(ks[1], (hidden,)),
        w2=w(ks[2], (hidden, hidden, 3, 3)), b2=w(ks[3], (hidden,)),
        w3=w(ks[4], (hidden, hidden, 3, 3)), b3=w(ks[5], (hidden,)),
        w4=w(ks[6], (hidden, hidden, 3, 3)), b4=w(ks[7], (hidden,)),
        wf=w(ks[8], (out_dim, hidden * 16 * 16)), bf=w(ks[9], (out_dim,)),
    )


def reference_forward(x_nchw, p):
    def conv(x, w, b):
        y = lax.conv_general_dilated(
            x, w, (1, 1), "SAME",
            dimension_numbers=("NCHW", "OIHW", "NCHW"))
        return jax.nn.relu(y + b[None, :, None, None])

    def pool(x):
        return lax.reduce_window(x, -jnp.inf, lax.max,
                                 (1, 1, 2, 2), (1, 1, 2, 2), "VALID")

    x = conv(x_nchw, p["w1"], p["b1"])
    x = conv(x, p["w2"], p["b2"])
    x = pool(x)
    x = conv(x, p["w3"], p["b3"])
    x = conv(x, p["w4"], p["b4"])
    x = pool(x)
    B = x.shape[0]
    return x.reshape(B, -1) @ p["wf"].T + p["bf"][None, :]


if __name__ == "__main__":
    key = jax.random.PRNGKey(0)
    kx, kp = jax.random.split(key)

    # 64x64 spatial input: two 2x2 pools -> 16x16, matching the hardcoded
    # hidden_units * 16 * 16 in the PyTorch classifier.
    B, Cin, H, W = 2, 3, 64, 64
    hidden, out_dim = 8, 3

    x = jax.random.normal(kx, (B, Cin, H, W), jnp.float32)
    params = init_params(kp, Cin, hidden, out_dim)

    fwd = jax.jit(tiny_vgg_forward)
    y = jax.block_until_ready(fwd(x, params))

    y_ref = reference_forward(x, params)
    assert y.shape == (B, out_dim)
    if not jnp.allclose(y, y_ref, rtol=2e-3, atol=2e-3):
        max_err = jnp.max(jnp.abs(y - y_ref))
        raise AssertionError(
            f"Pallas TinyVGG output mismatches JAX reference (max err {max_err})")

    print("KERNEL_OK")
</pallas_src>

<mosaic_0001>
module attributes {stable_mosaic.version = 11 : i64} {
  func.func @_tinyvgg_kernel(%arg0: i32, %arg1: memref<1x128x256xbf16, #tpu.memory_space<vmem>>, %arg2: memref<3x256x512xbf16, #tpu.memory_space<vmem>>, %arg3: memref<1x512xf32, #tpu.memory_space<vmem>>, %arg4: memref<3x512x256xbf16, #tpu.memory_space<vmem>>, %arg5: memref<3x512x256xbf16, #tpu.memory_space<vmem>>, %arg6: memref<1x256xf32, #tpu.memory_space<vmem>>, %arg7: memref<3x256x256xbf16, #tpu.memory_space<vmem>>, %arg8: memref<1x256xf32, #tpu.memory_space<vmem>>, %arg9: memref<3x256x128xbf16, #tpu.memory_space<vmem>>, %arg10: memref<3x256x128xbf16, #tpu.memory_space<vmem>>, %arg11: memref<1x128xf32, #tpu.memory_space<vmem>>, %arg12: memref<2x128x128xbf16, #tpu.memory_space<vmem>>, %arg13: memref<2x64x64xbf16, #tpu.memory_space<vmem>>, %arg14: memref<2x64x128xbf16, #tpu.memory_space<vmem>>, %arg15: memref<2x32x64xf32, #tpu.memory_space<vmem>>, %arg16: memref<3x16x128xf32, #tpu.memory_space<vmem>>, %arg17: memref<1x3xf32, #tpu.memory_space<vmem>>, %arg18: memref<1x2x3xf32, #tpu.memory_space<vmem>>) attributes {dimension_semantics = [#tpu.dimension_semantics<parallel>], iteration_bounds = array<i64: 1>, scalar_prefetch = 0 : i64, scratch_operands = 0 : i64, tpu.core_type = #tpu.core_type<tc>, window_params = [{transform_indices = @transform_0, window_bounds = array<i64: 1, 128, 256>}, {pipeline_mode = #tpu.pipeline_mode<synchronous>, transform_indices = @transform_1, window_bounds = array<i64: 3, 256, 512>}, {pipeline_mode = #tpu.pipeline_mode<synchronous>, transform_indices = @transform_2, window_bounds = array<i64: 1, 512>}, {pipeline_mode = #tpu.pipeline_mode<synchronous>, transform_indices = @transform_3, window_bounds = array<i64: 3, 512, 256>}, {pipeline_mode = #tpu.pipeline_mode<synchronous>, transform_indices = @transform_4, window_bounds = array<i64: 3, 512, 256>}, {pipeline_mode = #tpu.pipeline_mode<synchronous>, transform_indices = @transform_5, window_bounds = array<i64: 1, 256>}, {pipeline_mode = #tpu.pipeline_mode<synchronous>, transform_indices = @transform_6, window_bounds = array<i64: 3, 256, 256>}, {pipeline_mode = #tpu.pipeline_mode<synchronous>, transform_indices = @transform_7, window_bounds = array<i64: 1, 256>}, {pipeline_mode = #tpu.pipeline_mode<synchronous>, transform_indices = @transform_8, window_bounds = array<i64: 3, 256, 128>}, {pipeline_mode = #tpu.pipeline_mode<synchronous>, transform_indices = @transform_9, window_bounds = array<i64: 3, 256, 128>}, {pipeline_mode = #tpu.pipeline_mode<synchronous>, transform_indices = @transform_10, window_bounds = array<i64: 1, 128>}, {pipeline_mode = #tpu.pipeline_mode<synchronous>, transform_indices = @transform_11, window_bounds = array<i64: 2, 128, 128>}, {pipeline_mode = #tpu.pipeline_mode<synchronous>, transform_indices = @transform_12, window_bounds = array<i64: 2, 64, 64>}, {pipeline_mode = #tpu.pipeline_mode<synchronous>, transform_indices = @transform_13, window_bounds = array<i64: 2, 64, 128>}, {pipeline_mode = #tpu.pipeline_mode<synchronous>, transform_indices = @transform_14, window_bounds = array<i64: 2, 32, 64>}, {pipeline_mode = #tpu.pipeline_mode<synchronous>, transform_indices = @transform_15, window_bounds = array<i64: 3, 16, 128>}, {pipeline_mode = #tpu.pipeline_mode<synchronous>, transform_indices = @transform_16, window_bounds = array<i64: 1, 3>}, {transform_indices = @transform_17, window_bounds = array<i64: 1, 2, 3>}]} {
    %c0 = arith.constant 0 : index
    %c0_0 = arith.constant 0 : index
    %c0_1 = arith.constant 0 : index
    %0 = vector.load %arg1[%c0, %c0_0, %c0_1] : memref<1x128x256xbf16, #tpu.memory_space<vmem>>, vector<1x128x256xbf16>
    %1 = vector.shape_cast %0 : vector<1x128x256xbf16> to vector<128x256xbf16>
    %c0_2 = arith.constant 0 : index
    %c0_3 = arith.constant 0 : index
    %c0_4 = arith.constant 0 : index
    %2 = vector.load %arg12[%c0_2, %c0_3, %c0_4] : memref<2x128x128xbf16, #tpu.memory_space<vmem>>, vector<1x128x128xbf16>
    %3 = vector.shape_cast %2 : vector<1x128x128xbf16> to vector<128x128xbf16>
    %cst = arith.constant dense<0.000000e+00> : vector<128x256xf32>
    %4 = tpu.matmul %3, %1, %cst {dimension_numbers = #tpu.dot_dimension_numbers<[1], [0], [0], [1], [0, 0, 1, 1], [], []>} : vector<128x128xbf16>, vector<128x256xbf16>, vector<128x256xf32> -> vector<128x256xf32>
    %5 = arith.truncf %4 : vector<128x256xf32> to vector<128x256xbf16>
    %c1 = arith.constant 1 : index
    %c0_5 = arith.constant 0 : index
    %c0_6 = arith.constant 0 : index
    %6 = vector.load %arg12[%c1, %c0_5, %c0_6] : memref<2x128x128xbf16, #tpu.memory_space<vmem>>, vector<1x128x128xbf16>
    %7 = vector.shape_cast %6 : vector<1x128x128xbf16> to vector<128x128xbf16>
    %cst_7 = arith.constant dense<0.000000e+00> : vector<128x256xf32>
    %8 = tpu.matmul %7, %1, %cst_7 {dimension_numbers = #tpu.dot_dimension_numbers<[1], [0], [0], [1], [0, 0, 1, 1], [], []>} : vector<128x128xbf16>, vector<128x256xbf16>, vector<128x256xf32> -> vector<128x256xf32>
    %9 = arith.truncf %8 : vector<128x256xf32> to vector<128x256xbf16>
    %c0_8 = arith.constant 0 : index
    %c0_9 = arith.constant 0 : index
    %c0_10 = arith.constant 0 : index
    %10 = vector.load %arg2[%c0_8, %c0_9, %c0_10] : memref<3x256x512xbf16, #tpu.memory_space<vmem>>, vector<1x256x512xbf16>
    %11 = vector.shape_cast %10 : vector<1x256x512xbf16> to vector<256x512xbf16>
    %cst_11 = arith.constant dense<0.000000e+00> : vector<128x512xf32>
    %12 = tpu.matmul %5, %11, %cst_11 {dimension_numbers = #tpu.dot_dimension_numbers<[1], [0], [0], [1], [0, 0, 1, 1], [], []>} : vector<128x256xbf16>, vector<256x512xbf16>, vector<128x512xf32> -> vector<128x512xf32>
    %c1_12 = arith.constant 1 : index
    %c0_13 = arith.constant 0 : index
    %c0_14 = arith.constant 0 : index
    %13 = vector.load %arg2[%c1_12, %c0_13, %c0_14] : memref<3x256x512xbf16, #tpu.memory_space<vmem>>, vector<1x256x512xbf16>
    %14 = vector.shape_cast %13 : vector<1x256x512xbf16> to vector<256x512xbf16>
    %cst_15 = arith.constant dense<0.000000e+00> : vector<128x512xf32>
    %15 = tpu.matmul %1, %14, %cst_15 {dimension_numbers = #tpu.dot_dimension_numbers<[1], [0], [0], [1], [0, 0, 1, 1], [], []>} : vector<128x256xbf16>, vector<256x512xbf16>, vector<128x512xf32> -> vector<128x512xf32>
    %16 = arith.addf %12, %15 : vector<128x512xf32>
    %c2 = arith.constant 2 : index
    %c0_16 = arith.constant 0 : index
    %c0_17 = arith.constant 0 : index
    %17 = vector.load %arg2[%c2, %c0_16, %c0_17] : memref<3x256x512xbf16, #tpu.memory_space<vmem>>, vector<1x256x512xbf16>
    %18 = vector.shape_cast %17 : vector<1x256x512xbf16> to vector<256x512xbf16>
    %cst_18 = arith.constant dense<0.000000e+00> : vector<128x512xf32>
    %19 = tpu.matmul %9, %18, %cst_18 {dimension_numbers = #tpu.dot_dimension_numbers<[1], [0], [0], [1], [0, 0, 1, 1], [], []>} : vector<128x256xbf16>, vector<256x512xbf16>, vector<128x512xf32> -> vector<128x512xf32>
    %20 = arith.addf %16, %19 : vector<128x512xf32>
    %c0_19 = arith.constant 0 : index
    %c0_20 = arith.constant 0 : index
    %21 = vector.load %arg3[%c0_19, %c0_20] : memref<1x512xf32, #tpu.memory_space<vmem>>, vector<1x512xf32>
    %22 = vector.broadcast %21 : vector<1x512xf32> to vector<128x512xf32>
    %23 = arith.addf %20, %22 : vector<128x512xf32>
    %cst_21 = arith.constant 0.000000e+00 : f32
    %24 = vector.broadcast %cst_21 : f32 to vector<128x512xf32>
    %25 = arith.maximumf %23, %24 : vector<128x512xf32>
    %26 = arith.truncf %25 : vector<128x512xf32> to vector<128x512xbf16>
    %c0_22 = arith.constant 0 : index
    %c0_23 = arith.constant 0 : index
    %c0_24 = arith.constant 0 : index
    %27 = vector.load %arg12[%c0_22, %c0_23, %c0_24] : memref<2x128x128xbf16, #tpu.memory_space<vmem>>, vector<1x128x128xbf16>
    %28 = vector.shape_cast %27 : vector<1x128x128xbf16> to vector<128x128xbf16>
    %cst_25 = arith.constant dense<0.000000e+00> : vector<128x512xf32>
    %29 = tpu.matmul %28, %26, %cst_25 {dimension_numbers = #tpu.dot_dimension_numbers<[1], [0], [0], [1], [0, 0, 1, 1], [], []>} : vector<128x128xbf16>, vector<128x512xbf16>, vector<128x512xf32> -> vector<128x512xf32>
    %30 = arith.truncf %29 : vector<128x512xf32> to vector<128x512xbf16>
    %c1_26 = arith.constant 1 : index
    %c0_27 = arith.constant 0 : index
    %c0_28 = arith.constant 0 : index
    %31 = vector.load %arg12[%c1_26, %c0_27, %c0_28] : memref<2x128x128xbf16, #tpu.memory_space<vmem>>, vector<1x128x128xbf16>
    %32 = vector.shape_cast %31 : vector<1x128x128xbf16> to vector<128x128xbf16>
    %cst_29 = arith.constant dense<0.000000e+00> : vector<128x512xf32>
    %33 = tpu.matmul %32, %26, %cst_29 {dimension_numbers = #tpu.dot_dimension_numbers<[1], [0], [0], [1], [0, 0, 1, 1], [], []>} : vector<128x128xbf16>, vector<128x512xbf16>, vector<128x512xf32> -> vector<128x512xf32>
    %34 = arith.truncf %33 : vector<128x512xf32> to vector<128x512xbf16>
    %c0_30 = arith.constant 0 : index
    %c0_31 = arith.constant 0 : index
    %c0_32 = arith.constant 0 : index
    %35 = vector.load %arg4[%c0_30, %c0_31, %c0_32] : memref<3x512x256xbf16, #tpu.memory_space<vmem>>, vector<1x512x256xbf16>
    %36 = vector.shape_cast %35 : vector<1x512x256xbf16> to vector<512x256xbf16>
    %cst_33 = arith.constant dense<0.000000e+00> : vector<128x256xf32>
    %37 = tpu.matmul %30, %36, %cst_33 {dimension_numbers = #tpu.dot_dimension_numbers<[1], [0], [0], [1], [0, 0, 1, 1], [], []>} : vector<128x512xbf16>, vector<512x256xbf16>, vector<128x256xf32> -> vector<128x256xf32>
    %c1_34 = arith.constant 1 : index
    %c0_35 = arith.constant 0 : index
    %c0_36 = arith.constant 0 : index
    %38 = vector.load %arg4[%c1_34, %c0_35, %c0_36] : memref<3x512x256xbf16, #tpu.memory_space<vmem>>, vector<1x512x256xbf16>
    %39 = vector.shape_cast %38 : vector<1x512x256xbf16> to vector<512x256xbf16>
    %cst_37 = arith.constant dense<0.000000e+00> : vector<128x256xf32>
    %40 = tpu.matmul %26, %39, %cst_37 {dimension_numbers = #tpu.dot_dimension_numbers<[1], [0], [0], [1], [0, 0, 1, 1], [], []>} : vector<128x512xbf16>, vector<512x256xbf16>, vector<128x256xf32> -> vector<128x256xf32>
    %41 = arith.addf %37, %40 : vector<128x256xf32>
    %c2_38 = arith.constant 2 : index
    %c0_39 = arith.constant 0 : index
    %c0_40 = arith.constant 0 : index
    %42 = vector.load %arg4[%c2_38, %c0_39, %c0_40] : memref<3x512x256xbf16, #tpu.memory_space<vmem>>, vector<1x512x256xbf16>
    %43 = vector.shape_cast %42 : vector<1x512x256xbf16> to vector<512x256xbf16>
    %cst_41 = arith.constant dense<0.000000e+00> : vector<128x256xf32>
    %44 = tpu.matmul %34, %43, %cst_41 {dimension_numbers = #tpu.dot_dimension_numbers<[1], [0], [0], [1], [0, 0, 1, 1], [], []>} : vector<128x512xbf16>, vector<512x256xbf16>, vector<128x256xf32> -> vector<128x256xf32>
    %45 = arith.addf %41, %44 : vector<128x256xf32>
    %c0_42 = arith.constant 0 : index
    %c0_43 = arith.constant 0 : index
    %c0_44 = arith.constant 0 : index
    %46 = vector.load %arg5[%c0_42, %c0_43, %c0_44] : memref<3x512x256xbf16, #tpu.memory_space<vmem>>, vector<1x512x256xbf16>
    %47 = vector.shape_cast %46 : vector<1x512x256xbf16> to vector<512x256xbf16>
    %cst_45 = arith.constant dense<0.000000e+00> : vector<128x256xf32>
    %48 = tpu.matmul %30, %47, %cst_45 {dimension_numbers = #tpu.dot_dimension_numbers<[1], [0], [0], [1], [0, 0, 1, 1], [], []>} : vector<128x512xbf16>, vector<512x256xbf16>, vector<128x256xf32> -> vector<128x256xf32>
    %c1_46 = arith.constant 1 : index
    %c0_47 = arith.constant 0 : index
    %c0_48 = arith.constant 0 : index
    %49 = vector.load %arg5[%c1_46, %c0_47, %c0_48] : memref<3x512x256xbf16, #tpu.memory_space<vmem>>, vector<1x512x256xbf16>
    %50 = vector.shape_cast %49 : vector<1x512x256xbf16> to vector<512x256xbf16>
    %cst_49 = arith.constant dense<0.000000e+00> : vector<128x256xf32>
    %51 = tpu.matmul %26, %50, %cst_49 {dimension_numbers = #tpu.dot_dimension_numbers<[1], [0], [0], [1], [0, 0, 1, 1], [], []>} : vector<128x512xbf16>, vector<512x256xbf16>, vector<128x256xf32> -> vector<128x256xf32>
    %52 = arith.addf %48, %51 : vector<128x256xf32>
    %c2_50 = arith.constant 2 : index
    %c0_51 = arith.constant 0 : index
    %c0_52 = arith.constant 0 : index
    %53 = vector.load %arg5[%c2_50, %c0_51, %c0_52] : memref<3x512x256xbf16, #tpu.memory_space<vmem>>, vector<1x512x256xbf16>
    %54 = vector.shape_cast %53 : vector<1x512x256xbf16> to vector<512x256xbf16>
    %cst_53 = arith.constant dense<0.000000e+00> : vector<128x256xf32>
    %55 = tpu.matmul %34, %54, %cst_53 {dimension_numbers = #tpu.dot_dimension_numbers<[1], [0], [0], [1], [0, 0, 1, 1], [], []>} : vector<128x512xbf16>, vector<512x256xbf16>, vector<128x256xf32> -> vector<128x256xf32>
    %56 = arith.addf %52, %55 : vector<128x256xf32>
    %57 = arith.maximumf %45, %56 : vector<128x256xf32>
    %c0_54 = arith.constant 0 : index
    %c0_55 = arith.constant 0 : index
    %58 = vector.load %arg6[%c0_54, %c0_55] : memref<1x256xf32, #tpu.memory_space<vmem>>, vector<1x256xf32>
    %59 = vector.broadcast %58 : vector<1x256xf32> to vector<128x256xf32>
    %60 = arith.addf %57, %59 : vector<128x256xf32>
    %cst_56 = arith.constant 0.000000e+00 : f32
    %61 = vector.broadcast %cst_56 : f32 to vector<128x256xf32>
    %62 = arith.maximumf %60, %61 : vector<128x256xf32>
    %63 = arith.truncf %62 : vector<128x256xf32> to vector<128x256xbf16>
    %c0_57 = arith.constant 0 : index
    %c0_58 = arith.constant 0 : index
    %c0_59 = arith.constant 0 : index
    %64 = vector.load %arg14[%c0_57, %c0_58, %c0_59] : memref<2x64x128xbf16, #tpu.memory_space<vmem>>, vector<1x64x128xbf16>
    %65 = vector.shape_cast %64 : vector<1x64x128xbf16> to vector<64x128xbf16>
    %cst_60 = arith.constant dense<0.000000e+00> : vector<64x256xf32>
    %66 = tpu.matmul %65, %63, %cst_60 {dimension_numbers = #tpu.dot_dimension_numbers<[1], [0], [0], [1], [0, 0, 1, 1], [], []>} : vector<64x128xbf16>, vector<128x256xbf16>, vector<64x256xf32> -> vector<64x256xf32>
    %c1_61 = arith.constant 1 : index
    %c0_62 = arith.constant 0 : index
    %c0_63 = arith.constant 0 : index
    %67 = vector.load %arg14[%c1_61, %c0_62, %c0_63] : memref<2x64x128xbf16, #tpu.memory_space<vmem>>, vector<1x64x128xbf16>
    %68 = vector.shape_cast %67 : vector<1x64x128xbf16> to vector<64x128xbf16>
    %cst_64 = arith.constant dense<0.000000e+00> : vector<64x256xf32>
    %69 = tpu.matmul %68, %63, %cst_64 {dimension_numbers = #tpu.dot_dimension_numbers<[1], [0], [0], [1], [0, 0, 1, 1], [], []>} : vector<64x128xbf16>, vector<128x256xbf16>, vector<64x256xf32> -> vector<64x256xf32>
    %70 = arith.maximumf %66, %69 : vector<64x256xf32>
    %71 = arith.truncf %70 : vector<64x256xf32> to vector<64x256xbf16>
    %c0_65 = arith.constant 0 : index
    %c0_66 = arith.constant 0 : index
    %c0_67 = arith.constant 0 : index
    %72 = vector.load %arg13[%c0_65, %c0_66, %c0_67] : memref<2x64x64xbf16, #tpu.memory_space<vmem>>, vector<1x64x64xbf16>
    %73 = vector.shape_cast %72 : vector<1x64x64xbf16> to vector<64x64xbf16>
    %cst_68 = arith.constant dense<0.000000e+00> : vector<64x256xf32>
    %74 = tpu.matmul %73, %71, %cst_68 {dimension_numbers = #tpu.dot_dimension_numbers<[1], [0], [0], [1], [0, 0, 1, 1], [], []>} : vector<64x64xbf16>, vector<64x256xbf16>, vector<64x256xf32> -> vector<64x256xf32>
    %75 = arith.truncf %74 : vector<64x256xf32> to vector<64x256xbf16>
    %c1_69 = arith.constant 1 : index
    %c0_70 = arith.constant 0 : index
    %c0_71 = arith.constant 0 : index
    %76 = vector.load %arg13[%c1_69, %c0_70, %c0_71] : memref<2x64x64xbf16, #tpu.memory_space<vmem>>, vector<1x64x64xbf16>
    %77 = vector.shape_cast %76 : vector<1x64x64xbf16> to vector<64x64xbf16>
    %cst_72 = arith.constant dense<0.000000e+00> : vector<64x256xf32>
    %78 = tpu.matmul %77, %71, %cst_72 {dimension_numbers = #tpu.dot_dimension_numbers<[1], [0], [0], [1], [0, 0, 1, 1], [], []>} : vector<64x64xbf16>, vector<64x256xbf16>, vector<64x256xf32> -> vector<64x256xf32>
    %79 = arith.truncf %78 : vector<64x256xf32> to vector<64x256xbf16>
    %c0_73 = arith.constant 0 : index
    %c0_74 = arith.constant 0 : index
    %c0_75 = arith.constant 0 : index
    %80 = vector.load %arg7[%c0_73, %c0_74, %c0_75] : memref<3x256x256xbf16, #tpu.memory_space<vmem>>, vector<1x256x256xbf16>
    %81 = vector.shape_cast %80 : vector<1x256x256xbf16> to vector<256x256xbf16>
    %cst_76 = arith.constant dense<0.000000e+00> : vector<64x256xf32>
    %82 = tpu.matmul %75, %81, %cst_76 {dimension_numbers = #tpu.dot_dimension_numbers<[1], [0], [0], [1], [0, 0, 1, 1], [], []>} : vector<64x256xbf16>, vector<256x256xbf16>, vector<64x256xf32> -> vector<64x256xf32>
    %c1_77 = arith.constant 1 : index
    %c0_78 = arith.constant 0 : index
    %c0_79 = arith.constant 0 : index
    %83 = vector.load %arg7[%c1_77, %c0_78, %c0_79] : memref<3x256x256xbf16, #tpu.memory_space<vmem>>, vector<1x256x256xbf16>
    %84 = vector.shape_cast %83 : vector<1x256x256xbf16> to vector<256x256xbf16>
    %cst_80 = arith.constant dense<0.000000e+00> : vector<64x256xf32>
    %85 = tpu.matmul %71, %84, %cst_80 {dimension_numbers = #tpu.dot_dimension_numbers<[1], [0], [0], [1], [0, 0, 1, 1], [], []>} : vector<64x256xbf16>, vector<256x256xbf16>, vector<64x256xf32> -> vector<64x256xf32>
    %86 = arith.addf %82, %85 : vector<64x256xf32>
    %c2_81 = arith.constant 2 : index
    %c0_82 = arith.constant 0 : index
    %c0_83 = arith.constant 0 : index
    %87 = vector.load %arg7[%c2_81, %c0_82, %c0_83] : memref<3x256x256xbf16, #tpu.memory_space<vmem>>, vector<1x256x256xbf16>
    %88 = vector.shape_cast %87 : vector<1x256x256xbf16> to vector<256x256xbf16>
    %cst_84 = arith.constant dense<0.000000e+00> : vector<64x256xf32>
    %89 = tpu.matmul %79, %88, %cst_84 {dimension_numbers = #tpu.dot_dimension_numbers<[1], [0], [0], [1], [0, 0, 1, 1], [], []>} : vector<64x256xbf16>, vector<256x256xbf16>, vector<64x256xf32> -> vector<64x256xf32>
    %90 = arith.addf %86, %89 : vector<64x256xf32>
    %c0_85 = arith.constant 0 : index
    %c0_86 = arith.constant 0 : index
    %91 = vector.load %arg8[%c0_85, %c0_86] : memref<1x256xf32, #tpu.memory_space<vmem>>, vector<1x256xf32>
    %92 = vector.broadcast %91 : vector<1x256xf32> to vector<64x256xf32>
    %93 = arith.addf %90, %92 : vector<64x256xf32>
    %cst_87 = arith.constant 0.000000e+00 : f32
    %94 = vector.broadcast %cst_87 : f32 to vector<64x256xf32>
    %95 = arith.maximumf %93, %94 : vector<64x256xf32>
    %96 = arith.truncf %95 : vector<64x256xf32> to vector<64x256xbf16>
    %c0_88 = arith.constant 0 : index
    %c0_89 = arith.constant 0 : index
    %c0_90 = arith.constant 0 : index
    %97 = vector.load %arg13[%c0_88, %c0_89, %c0_90] : memref<2x64x64xbf16, #tpu.memory_space<vmem>>, vector<1x64x64xbf16>
    %98 = vector.shape_cast %97 : vector<1x64x64xbf16> to vector<64x64xbf16>
    %cst_91 = arith.constant dense<0.000000e+00> : vector<64x256xf32>
    %99 = tpu.matmul %98, %96, %cst_91 {dimension_numbers = #tpu.dot_dimension_numbers<[1], [0], [0], [1], [0, 0, 1, 1], [], []>} : vector<64x64xbf16>, vector<64x256xbf16>, vector<64x256xf32> -> vector<64x256xf32>
    %100 = arith.truncf %99 : vector<64x256xf32> to vector<64x256xbf16>
    %c1_92 = arith.constant 1 : index
    %c0_93 = arith.constant 0 : index
    %c0_94 = arith.constant 0 : index
    %101 = vector.load %arg13[%c1_92, %c0_93, %c0_94] : memref<2x64x64xbf16, #tpu.memory_space<vmem>>, vector<1x64x64xbf16>
    %102 = vector.shape_cast %101 : vector<1x64x64xbf16> to vector<64x64xbf16>
    %cst_95 = arith.constant dense<0.000000e+00> : vector<64x256xf32>
    %103 = tpu.matmul %102, %96, %cst_95 {dimension_numbers = #tpu.dot_dimension_numbers<[1], [0], [0], [1], [0, 0, 1, 1], [], []>} : vector<64x64xbf16>, vector<64x256xbf16>, vector<64x256xf32> -> vector<64x256xf32>
    %104 = arith.truncf %103 : vector<64x256xf32> to vector<64x256xbf16>
    %c0_96 = arith.constant 0 : index
    %c0_97 = arith.constant 0 : index
    %c0_98 = arith.constant 0 : index
    %105 = vector.load %arg9[%c0_96, %c0_97, %c0_98] : memref<3x256x128xbf16, #tpu.memory_space<vmem>>, vector<1x256x128xbf16>
    %106 = vector.shape_cast %105 : vector<1x256x128xbf16> to vector<256x128xbf16>
    %cst_99 = arith.constant dense<0.000000e+00> : vector<64x128xf32>
    %107 = tpu.matmul %100, %106, %cst_99 {dimension_numbers = #tpu.dot_dimension_numbers<[1], [0], [0], [1], [0, 0, 1, 1], [], []>} : vector<64x256xbf16>, vector<256x128xbf16>, vector<64x128xf32> -> vector<64x128xf32>
    %c1_100 = arith.constant 1 : index
    %c0_101 = arith.constant 0 : index
    %c0_102 = arith.constant 0 : index
    %108 = vector.load %arg9[%c1_100, %c0_101, %c0_102] : memref<3x256x128xbf16, #tpu.memory_space<vmem>>, vector<1x256x128xbf16>
    %109 = vector.shape_cast %108 : vector<1x256x128xbf16> to vector<256x128xbf16>
    %cst_103 = arith.constant dense<0.000000e+00> : vector<64x128xf32>
    %110 = tpu.matmul %96, %109, %cst_103 {dimension_numbers = #tpu.dot_dimension_numbers<[1], [0], [0], [1], [0, 0, 1, 1], [], []>} : vector<64x256xbf16>, vector<256x128xbf16>, vector<64x128xf32> -> vector<64x128xf32>
    %111 = arith.addf %107, %110 : vector<64x128xf32>
    %c2_104 = arith.constant 2 : index
    %c0_105 = arith.constant 0 : index
    %c0_106 = arith.constant 0 : index
    %112 = vector.load %arg9[%c2_104, %c0_105, %c0_106] : memref<3x256x128xbf16, #tpu.memory_space<vmem>>, vector<1x256x128xbf16>
    %113 = vector.shape_cast %112 : vector<1x256x128xbf16> to vector<256x128xbf16>
    %cst_107 = arith.constant dense<0.000000e+00> : vector<64x128xf32>
    %114 = tpu.matmul %104, %113, %cst_107 {dimension_numbers = #tpu.dot_dimension_numbers<[1], [0], [0], [1], [0, 0, 1, 1], [], []>} : vector<64x256xbf16>, vector<256x128xbf16>, vector<64x128xf32> -> vector<64x128xf32>
    %115 = arith.addf %111, %114 : vector<64x128xf32>
    %c0_108 = arith.constant 0 : index
    %c0_109 = arith.constant 0 : index
    %c0_110 = arith.constant 0 : index
    %116 = vector.load %arg10[%c0_108, %c0_109, %c0_110] : memref<3x256x128xbf16, #tpu.memory_space<vmem>>, vector<1x256x128xbf16>
    %117 = vector.shape_cast %116 : vector<1x256x128xbf16> to vector<256x128xbf16>
    %cst_111 = arith.constant dense<0.000000e+00> : vector<64x128xf32>
    %118 = tpu.matmul %100, %117, %cst_111 {dimension_numbers = #tpu.dot_dimension_numbers<[1], [0], [0], [1], [0, 0, 1, 1], [], []>} : vector<64x256xbf16>, vector<256x128xbf16>, vector<64x128xf32> -> vector<64x128xf32>
    %c1_112 = arith.constant 1 : index
    %c0_113 = arith.constant 0 : index
    %c0_114 = arith.constant 0 : index
    %119 = vector.load %arg10[%c1_112, %c0_113, %c0_114] : memref<3x256x128xbf16, #tpu.memory_space<vmem>>, vector<1x256x128xbf16>
    %120 = vector.shape_cast %119 : vector<1x256x128xbf16> to vector<256x128xbf16>
    %cst_115 = arith.constant dense<0.000000e+00> : vector<64x128xf32>
    %121 = tpu.matmul %96, %120, %cst_115 {dimension_numbers = #tpu.dot_dimension_numbers<[1], [0], [0], [1], [0, 0, 1, 1], [], []>} : vector<64x256xbf16>, vector<256x128xbf16>, vector<64x128xf32> -> vector<64x128xf32>
    %122 = arith.addf %118, %121 : vector<64x128xf32>
    %c2_116 = arith.constant 2 : index
    %c0_117 = arith.constant 0 : index
    %c0_118 = arith.constant 0 : index
    %123 = vector.load %arg10[%c2_116, %c0_117, %c0_118] : memref<3x256x128xbf16, #tpu.memory_space<vmem>>, vector<1x256x128xbf16>
    %124 = vector.shape_cast %123 : vector<1x256x128xbf16> to vector<256x128xbf16>
    %cst_119 = arith.constant dense<0.000000e+00> : vector<64x128xf32>
    %125 = tpu.matmul %104, %124, %cst_119 {dimension_numbers = #tpu.dot_dimension_numbers<[1], [0], [0], [1], [0, 0, 1, 1], [], []>} : vector<64x256xbf16>, vector<256x128xbf16>, vector<64x128xf32> -> vector<64x128xf32>
    %126 = arith.addf %122, %125 : vector<64x128xf32>
    %127 = arith.maximumf %115, %126 : vector<64x128xf32>
    %c0_120 = arith.constant 0 : index
    %c0_121 = arith.constant 0 : index
    %128 = vector.load %arg11[%c0_120, %c0_121] : memref<1x128xf32, #tpu.memory_space<vmem>>, vector<1x128xf32>
    %129 = vector.broadcast %128 : vector<1x128xf32> to vector<64x128xf32>
    %130 = arith.addf %127, %129 : vector<64x128xf32>
    %cst_122 = arith.constant 0.000000e+00 : f32
    %131 = vector.broadcast %cst_122 : f32 to vector<64x128xf32>
    %132 = arith.maximumf %130, %131 : vector<64x128xf32>
    %c0_123 = arith.constant 0 : index
    %c0_124 = arith.constant 0 : index
    %c0_125 = arith.constant 0 : index
    %133 = vector.load %arg15[%c0_123, %c0_124, %c0_125] : memref<2x32x64xf32, #tpu.memory_space<vmem>>, vector<1x32x64xf32>
    %134 = vector.shape_cast %133 : vector<1x32x64xf32> to vector<32x64xf32>
    %cst_126 = arith.constant dense<0.000000e+00> : vector<32x128xf32>
    %135 = tpu.matmul %134, %132, %cst_126 {dimension_numbers = #tpu.dot_dimension_numbers<[1], [0], [0], [1], [0, 0, 1, 1], [], []>, precision = #tpu.contract_precision<fp32>} : vector<32x64xf32>, vector<64x128xf32>, vector<32x128xf32> -> vector<32x128xf32>
    %c1_127 = arith.constant 1 : index
    %c0_128 = arith.constant 0 : index
    %c0_129 = arith.constant 0 : index
    %136 = vector.load %arg15[%c1_127, %c0_128, %c0_129] : memref<2x32x64xf32, #tpu.memory_space<vmem>>, vector<1x32x64xf32>
    %137 = vector.shape_cast %136 : vector<1x32x64xf32> to vector<32x64xf32>
    %cst_130 = arith.constant dense<0.000000e+00> : vector<32x128xf32>
    %138 = tpu.matmul %137, %132, %cst_130 {dimension_numbers = #tpu.dot_dimension_numbers<[1], [0], [0], [1], [0, 0, 1, 1], [], []>, precision = #tpu.contract_precision<fp32>} : vector<32x64xf32>, vector<64x128xf32>, vector<32x128xf32> -> vector<32x128xf32>
    %139 = arith.maximumf %135, %138 : vector<32x128xf32>
    %140 = tpu.iota {dimensions = array<i32: 0>} : vector<2x3xi32>
    %141 = tpu.iota {dimensions = array<i32: 1>} : vector<2x3xi32>
    %cst_131 = arith.constant 0.000000e+00 : f32
    %142 = vector.broadcast %cst_131 : f32 to vector<2x3xf32>
    %143 = vector.extract_strided_slice %139 {offsets = [0, 0], sizes = [16, 128], strides = [1, 1]} : vector<32x128xf32> to vector<16x128xf32>
    %c0_132 = arith.constant 0 : index
    %c0_133 = arith.constant 0 : index
    %c0_134 = arith.constant 0 : index
    %144 = vector.load %arg16[%c0_132, %c0_133, %c0_134] : memref<3x16x128xf32, #tpu.memory_space<vmem>>, vector<1x16x128xf32>
    %145 = vector.shape_cast %144 : vector<1x16x128xf32> to vector<16x128xf32>
    %146 = arith.mulf %143, %145 : vector<16x128xf32>
    %147 = vector.shape_cast %146 : vector<16x128xf32> to vector<1x16x128xf32>
    %cst_135 = arith.constant dense<0.000000e+00> : vector<1xf32>
    %148 = vector.multi_reduction <add>, %147, %cst_135 [1, 2] : vector<1x16x128xf32> to vector<1xf32>
    %149 = vector.shape_cast %148 : vector<1xf32> to vector<1x1x1xf32>
    %150 = vector.extract %149[0, 0, 0] : f32 from vector<1x1x1xf32>
    %c0_i32 = arith.constant 0 : i32
    %151 = vector.broadcast %c0_i32 : i32 to vector<2x3xi32>
    %152 = arith.cmpi eq, %140, %151 : vector<2x3xi32>
    %c0_i32_136 = arith.constant 0 : i32
    %153 = vector.broadcast %c0_i32_136 : i32 to vector<2x3xi32>
    %154 = arith.cmpi eq, %141, %153 : vector<2x3xi32>
    %155 = arith.andi %152, %154 : vector<2x3xi1>
    %cst_137 = arith.constant 0.000000e+00 : f32
    %156 = vector.broadcast %150 : f32 to vector<2x3xf32>
    %157 = vector.broadcast %cst_137 : f32 to vector<2x3xf32>
    %158 = arith.select %155, %156, %157 : vector<2x3xi1>, vector<2x3xf32>
    %159 = arith.addf %142, %158 : vector<2x3xf32>
    %c1_138 = arith.constant 1 : index
    %c0_139 = arith.constant 0 : index
    %c0_140 = arith.constant 0 : index
    %160 = vector.load %arg16[%c1_138, %c0_139, %c0_140] : memref<3x16x128xf32, #tpu.memory_space<vmem>>, vector<1x16x128xf32>
    %161 = vector.shape_cast %160 : vector<1x16x128xf32> to vector<16x128xf32>
    %162 = arith.mulf %143, %161 : vector<16x128xf32>
    %163 = vector.shape_cast %162 : vector<16x128xf32> to vector<1x16x128xf32>
    %cst_141 = arith.constant dense<0.000000e+00> : vector<1xf32>
    %164 = vector.multi_reduction <add>, %163, %cst_141 [1, 2] : vector<1x16x128xf32> to vector<1xf32>
    %165 = vector.shape_cast %164 : vector<1xf32> to vector<1x1x1xf32>
    %166 = vector.extract %165[0, 0, 0] : f32 from vector<1x1x1xf32>
    %c0_i32_142 = arith.constant 0 : i32
    %167 = vector.broadcast %c0_i32_142 : i32 to vector<2x3xi32>
    %168 = arith.cmpi eq, %140, %167 : vector<2x3xi32>
    %c1_i32 = arith.constant 1 : i32
    %169 = vector.broadcast %c1_i32 : i32 to vector<2x3xi32>
    %170 = arith.cmpi eq, %141, %169 : vector<2x3xi32>
    %171 = arith.andi %168, %170 : vector<2x3xi1>
    %cst_143 = arith.constant 0.000000e+00 : f32
    %172 = vector.broadcast %166 : f32 to vector<2x3xf32>
    %173 = vector.broadcast %cst_143 : f32 to vector<2x3xf32>
    %174 = arith.select %171, %172, %173 : vector<2x3xi1>, vector<2x3xf32>
    %175 = arith.addf %159, %174 : vector<2x3xf32>
    %c2_144 = arith.constant 2 : index
    %c0_145 = arith.constant 0 : index
    %c0_146 = arith.constant 0 : index
    %176 = vector.load %arg16[%c2_144, %c0_145, %c0_146] : memref<3x16x128xf32, #tpu.memory_space<vmem>>, vector<1x16x128xf32>
    %177 = vector.shape_cast %176 : vector<1x16x128xf32> to vector<16x128xf32>
    %178 = arith.mulf %143, %177 : vector<16x128xf32>
    %179 = vector.shape_cast %178 : vector<16x128xf32> to vector<1x16x128xf32>
    %cst_147 = arith.constant dense<0.000000e+00> : vector<1xf32>
    %180 = vector.multi_reduction <add>, %179, %cst_147 [1, 2] : vector<1x16x128xf32> to vector<1xf32>
    %181 = vector.shape_cast %180 : vector<1xf32> to vector<1x1x1xf32>
    %182 = vector.extract %181[0, 0, 0] : f32 from vector<1x1x1xf32>
    %c0_i32_148 = arith.constant 0 : i32
    %183 = vector.broadcast %c0_i32_148 : i32 to vector<2x3xi32>
    %184 = arith.cmpi eq, %140, %183 : vector<2x3xi32>
    %c2_i32 = arith.constant 2 : i32
    %185 = vector.broadcast %c2_i32 : i32 to vector<2x3xi32>
    %186 = arith.cmpi eq, %141, %185 : vector<2x3xi32>
    %187 = arith.andi %184, %186 : vector<2x3xi1>
    %cst_149 = arith.constant 0.000000e+00 : f32
    %188 = vector.broadcast %182 : f32 to vector<2x3xf32>
    %189 = vector.broadcast %cst_149 : f32 to vector<2x3xf32>
    %190 = arith.select %187, %188, %189 : vector<2x3xi1>, vector<2x3xf32>
    %191 = arith.addf %175, %190 : vector<2x3xf32>
    %192 = vector.extract_strided_slice %139 {offsets = [16, 0], sizes = [16, 128], strides = [1, 1]} : vector<32x128xf32> to vector<16x128xf32>
    %c0_150 = arith.constant 0 : index
    %c0_151 = arith.constant 0 : index
    %c0_152 = arith.constant 0 : index
    %193 = vector.load %arg16[%c0_150, %c0_151, %c0_152] : memref<3x16x128xf32, #tpu.memory_space<vmem>>, vector<1x16x128xf32>
    %194 = vector.shape_cast %193 : vector<1x16x128xf32> to vector<16x128xf32>
    %195 = arith.mulf %192, %194 : vector<16x128xf32>
    %196 = vector.shape_cast %195 : vector<16x128xf32> to vector<1x16x128xf32>
    %cst_153 = arith.constant dense<0.000000e+00> : vector<1xf32>
    %197 = vector.multi_reduction <add>, %196, %cst_153 [1, 2] : vector<1x16x128xf32> to vector<1xf32>
    %198 = vector.shape_cast %197 : vector<1xf32> to vector<1x1x1xf32>
    %199 = vector.extract %198[0, 0, 0] : f32 from vector<1x1x1xf32>
    %c1_i32_154 = arith.constant 1 : i32
    %200 = vector.broadcast %c1_i32_154 : i32 to vector<2x3xi32>
    %201 = arith.cmpi eq, %140, %200 : vector<2x3xi32>
    %c0_i32_155 = arith.constant 0 : i32
    %202 = vector.broadcast %c0_i32_155 : i32 to vector<2x3xi32>
    %203 = arith.cmpi eq, %141, %202 : vector<2x3xi32>
    %204 = arith.andi %201, %203 : vector<2x3xi1>
    %cst_156 = arith.constant 0.000000e+00 : f32
    %205 = vector.broadcast %199 : f32 to vector<2x3xf32>
    %206 = vector.broadcast %cst_156 : f32 to vector<2x3xf32>
    %207 = arith.select %204, %205, %206 : vector<2x3xi1>, vector<2x3xf32>
    %208 = arith.addf %191, %207 : vector<2x3xf32>
    %c1_157 = arith.constant 1 : index
    %c0_158 = arith.constant 0 : index
    %c0_159 = arith.constant 0 : index
    %209 = vector.load %arg16[%c1_157, %c0_158, %c0_159] : memref<3x16x128xf32, #tpu.memory_space<vmem>>, vector<1x16x128xf32>
    %210 = vector.shape_cast %209 : vector<1x16x128xf32> to vector<16x128xf32>
    %211 = arith.mulf %192, %210 : vector<16x128xf32>
    %212 = vector.shape_cast %211 : vector<16x128xf32> to vector<1x16x128xf32>
    %cst_160 = arith.constant dense<0.000000e+00> : vector<1xf32>
    %213 = vector.multi_reduction <add>, %212, %cst_160 [1, 2] : vector<1x16x128xf32> to vector<1xf32>
    %214 = vector.shape_cast %213 : vector<1xf32> to vector<1x1x1xf32>
    %215 = vector.extract %214[0, 0, 0] : f32 from vector<1x1x1xf32>
    %c1_i32_161 = arith.constant 1 : i32
    %216 = vector.broadcast %c1_i32_161 : i32 to vector<2x3xi32>
    %217 = arith.cmpi eq, %140, %216 : vector<2x3xi32>
    %c1_i32_162 = arith.constant 1 : i32
    %218 = vector.broadcast %c1_i32_162 : i32 to vector<2x3xi32>
    %219 = arith.cmpi eq, %141, %218 : vector<2x3xi32>
    %220 = arith.andi %217, %219 : vector<2x3xi1>
    %cst_163 = arith.constant 0.000000e+00 : f32
    %221 = vector.broadcast %215 : f32 to vector<2x3xf32>
    %222 = vector.broadcast %cst_163 : f32 to vector<2x3xf32>
    %223 = arith.select %220, %221, %222 : vector<2x3xi1>, vector<2x3xf32>
    %224 = arith.addf %208, %223 : vector<2x3xf32>
    %c2_164 = arith.constant 2 : index
    %c0_165 = arith.constant 0 : index
    %c0_166 = arith.constant 0 : index
    %225 = vector.load %arg16[%c2_164, %c0_165, %c0_166] : memref<3x16x128xf32, #tpu.memory_space<vmem>>, vector<1x16x128xf32>
    %226 = vector.shape_cast %225 : vector<1x16x128xf32> to vector<16x128xf32>
    %227 = arith.mulf %192, %226 : vector<16x128xf32>
    %228 = vector.shape_cast %227 : vector<16x128xf32> to vector<1x16x128xf32>
    %cst_167 = arith.constant dense<0.000000e+00> : vector<1xf32>
    %229 = vector.multi_reduction <add>, %228, %cst_167 [1, 2] : vector<1x16x128xf32> to vector<1xf32>
    %230 = vector.shape_cast %229 : vector<1xf32> to vector<1x1x1xf32>
    %231 = vector.extract %230[0, 0, 0] : f32 from vector<1x1x1xf32>
    %c1_i32_168 = arith.constant 1 : i32
    %232 = vector.broadcast %c1_i32_168 : i32 to vector<2x3xi32>
    %233 = arith.cmpi eq, %140, %232 : vector<2x3xi32>
    %c2_i32_169 = arith.constant 2 : i32
    %234 = vector.broadcast %c2_i32_169 : i32 to vector<2x3xi32>
    %235 = arith.cmpi eq, %141, %234 : vector<2x3xi32>
    %236 = arith.andi %233, %235 : vector<2x3xi1>
    %cst_170 = arith.constant 0.000000e+00 : f32
    %237 = vector.broadcast %231 : f32 to vector<2x3xf32>
    %238 = vector.broadcast %cst_170 : f32 to vector<2x3xf32>
    %239 = arith.select %236, %237, %238 : vector<2x3xi1>, vector<2x3xf32>
    %240 = arith.addf %224, %239 : vector<2x3xf32>
    %c0_171 = arith.constant 0 : index
    %c0_172 = arith.constant 0 : index
    %241 = vector.load %arg17[%c0_171, %c0_172] : memref<1x3xf32, #tpu.memory_space<vmem>>, vector<1x3xf32>
    %242 = vector.broadcast %241 : vector<1x3xf32> to vector<2x3xf32>
    %243 = arith.addf %240, %242 : vector<2x3xf32>
    %c0_173 = arith.constant 0 : index
    %c0_174 = arith.constant 0 : index
    %c0_175 = arith.constant 0 : index
    %244 = vector.load %arg18[%c0_173, %c0_174, %c0_175] : memref<1x2x3xf32, #tpu.memory_space<vmem>>, vector<1x2x3xf32>
    %245 = vector.shape_cast %244 : vector<1x2x3xf32> to vector<2x3xf32>
    %246 = vector.shape_cast %243 : vector<2x3xf32> to vector<1x2x3xf32>
    tpu.vector_store %arg18[%c0_173, %c0_174, %c0_175], %246 {strides = array<i32>} : memref<1x2x3xf32, #tpu.memory_space<vmem>>, vector<1x2x3xf32>,
    return
  }
  func.func @transform_0(%arg0: i32) -> (i32, i32, i32) {
    %c0_i32 = arith.constant 0 : i32
    %c0_i32_0 = arith.constant 0 : i32
    %c0_i32_1 = arith.constant 0 : i32
    return %arg0, %c0_i32, %c0_i32_0 : i32, i32, i32
  }
  func.func @transform_1(%arg0: i32) -> (i32, i32, i32) {
    %c0_i32 = arith.constant 0 : i32
    %c0_i32_0 = arith.constant 0 : i32
    %c0_i32_1 = arith.constant 0 : i32
    %c0_i32_2 = arith.constant 0 : i32
    return %c0_i32, %c0_i32_0, %c0_i32_1 : i32, i32, i32
  }
  func.func @transform_2(%arg0: i32) -> (i32, i32) {
    %c0_i32 = arith.constant 0 : i32
    %c0_i32_0 = arith.constant 0 : i32
    %c0_i32_1 = arith.constant 0 : i32
    return %c0_i32, %c0_i32_0 : i32, i32
  }
  func.func @transform_3(%arg0: i32) -> (i32, i32, i32) {
    %c0_i32 = arith.constant 0 : i32
    %c0_i32_0 = arith.constant 0 : i32
    %c0_i32_1 = arith.constant 0 : i32
    %c0_i32_2 = arith.constant 0 : i32
    return %c0_i32, %c0_i32_0, %c0_i32_1 : i32, i32, i32
  }
  func.func @transform_4(%arg0: i32) -> (i32, i32, i32) {
    %c0_i32 = arith.constant 0 : i32
    %c0_i32_0 = arith.constant 0 : i32
    %c0_i32_1 = arith.constant 0 : i32
    %c0_i32_2 = arith.constant 0 : i32
    return %c0_i32, %c0_i32_0, %c0_i32_1 : i32, i32, i32
  }
  func.func @transform_5(%arg0: i32) -> (i32, i32) {
    %c0_i32 = arith.constant 0 : i32
    %c0_i32_0 = arith.constant 0 : i32
    %c0_i32_1 = arith.constant 0 : i32
    return %c0_i32, %c0_i32_0 : i32, i32
  }
  func.func @transform_6(%arg0: i32) -> (i32, i32, i32) {
    %c0_i32 = arith.constant 0 : i32
    %c0_i32_0 = arith.constant 0 : i32
    %c0_i32_1 = arith.constant 0 : i32
    %c0_i32_2 = arith.constant 0 : i32
    return %c0_i32, %c0_i32_0, %c0_i32_1 : i32, i32, i32
  }
  func.func @transform_7(%arg0: i32) -> (i32, i32) {
    %c0_i32 = arith.constant 0 : i32
    %c0_i32_0 = arith.constant 0 : i32
    %c0_i32_1 = arith.constant 0 : i32
    return %c0_i32, %c0_i32_0 : i32, i32
  }
  func.func @transform_8(%arg0: i32) -> (i32, i32, i32) {
    %c0_i32 = arith.constant 0 : i32
    %c0_i32_0 = arith.constant 0 : i32
    %c0_i32_1 = arith.constant 0 : i32
    %c0_i32_2 = arith.constant 0 : i32
    return %c0_i32, %c0_i32_0, %c0_i32_1 : i32, i32, i32
  }
  func.func @transform_9(%arg0: i32) -> (i32, i32, i32) {
    %c0_i32 = arith.constant 0 : i32
    %c0_i32_0 = arith.constant 0 : i32
    %c0_i32_1 = arith.constant 0 : i32
    %c0_i32_2 = arith.constant 0 : i32
    return %c0_i32, %c0_i32_0, %c0_i32_1 : i32, i32, i32
  }
  func.func @transform_10(%arg0: i32) -> (i32, i32) {
    %c0_i32 = arith.constant 0 : i32
    %c0_i32_0 = arith.constant 0 : i32
    %c0_i32_1 = arith.constant 0 : i32
    return %c0_i32, %c0_i32_0 : i32, i32
  }
  func.func @transform_11(%arg0: i32) -> (i32, i32, i32) {
    %c0_i32 = arith.constant 0 : i32
    %c0_i32_0 = arith.constant 0 : i32
    %c0_i32_1 = arith.constant 0 : i32
    %c0_i32_2 = arith.constant 0 : i32
    return %c0_i32, %c0_i32_0, %c0_i32_1 : i32, i32, i32
  }
  func.func @transform_12(%arg0: i32) -> (i32, i32, i32) {
    %c0_i32 = arith.constant 0 : i32
    %c0_i32_0 = arith.constant 0 : i32
    %c0_i32_1 = arith.constant 0 : i32
    %c0_i32_2 = arith.constant 0 : i32
    return %c0_i32, %c0_i32_0, %c0_i32_1 : i32, i32, i32
  }
  func.func @transform_13(%arg0: i32) -> (i32, i32, i32) {
    %c0_i32 = arith.constant 0 : i32
    %c0_i32_0 = arith.constant 0 : i32
    %c0_i32_1 = arith.constant 0 : i32
    %c0_i32_2 = arith.constant 0 : i32
    return %c0_i32, %c0_i32_0, %c0_i32_1 : i32, i32, i32
  }
  func.func @transform_14(%arg0: i32) -> (i32, i32, i32) {
    %c0_i32 = arith.constant 0 : i32
    %c0_i32_0 = arith.constant 0 : i32
    %c0_i32_1 = arith.constant 0 : i32
    %c0_i32_2 = arith.constant 0 : i32
    return %c0_i32, %c0_i32_0, %c0_i32_1 : i32, i32, i32
  }
  func.func @transform_15(%arg0: i32) -> (i32, i32, i32) {
    %c0_i32 = arith.constant 0 : i32
    %c0_i32_0 = arith.constant 0 : i32
    %c0_i32_1 = arith.constant 0 : i32
    %c0_i32_2 = arith.constant 0 : i32
    return %c0_i32, %c0_i32_0, %c0_i32_1 : i32, i32, i32
  }
  func.func @transform_16(%arg0: i32) -> (i32, i32) {
    %c0_i32 = arith.constant 0 : i32
    %c0_i32_0 = arith.constant 0 : i32
    %c0_i32_1 = arith.constant 0 : i32
    return %c0_i32, %c0_i32_0 : i32, i32
  }
  func.func @transform_17(%arg0: i32) -> (i32, i32, i32) {
    %c0_i32 = arith.constant 0 : i32
    %c0_i32_0 = arith.constant 0 : i32
    %c0_i32_1 = arith.constant 0 : i32
    return %arg0, %c0_i32, %c0_i32_0 : i32, i32, i32
  }
}

</mosaic_0001>

<llo_original>
// kernel: tile.23
$region0: #{tile.23}
  #allocation0 [shape = 's32[1]{0}', space=sflag, size = 0x4, scoped, tag = 'scoped memory for tile.23']
  %s0 = inlined_call_operand.vmem [shape: f32[8], index: 0, kind: input, shape index: {}]
  %s1 = inlined_call_operand.vmem [shape: f32[64,8], index: 1, kind: output, shape index: {}]
  // Predicated region
  $region2: #{tile.23} parent=0 // pred_check
    _
  $region3: #{tile.23} parent=0 // pred_check_branch
    %3 = sbr.rel (0) target = $region5
  $region4: #{tile.23} parent=0 // pred_region
    _
  $region5: #{tile.23} parent=0 // pred_fallthru
    _
  %v4 = vld [vmem:[%s0] ss:$0 sm:$0xff]
  %5 = vst [vmem:[%s1] sm:$0xff] %v4
  %s6 = scalar_lea.vmem %s1, 8
  %7 = vst [vmem:[%s6] sm:$0xff] %v4
  %s8 = scalar_lea.vmem %s1, 16
  %9 = vst [vmem:[%s8] sm:$0xff] %v4
  %s10 = scalar_lea.vmem %s1, 24
  %11 = vst [vmem:[%s10] sm:$0xff] %v4
  %s12 = scalar_lea.vmem %s1, 32
  %13 = vst [vmem:[%s12] sm:$0xff] %v4
  %s14 = scalar_lea.vmem %s1, 40
  %15 = vst [vmem:[%s14] sm:$0xff] %v4
  %s16 = scalar_lea.vmem %s1, 48
  %17 = vst [vmem:[%s16] sm:$0xff] %v4
  %s18 = scalar_lea.vmem %s1, 56
  %19 = vst [vmem:[%s18] sm:$0xff] %v4

// kernel: tile.24
$region0: #{tile.24}
  %s0 = inlined_call_operand.vmem [shape: f32[64,8], index: 0, kind: input, shape index: {}]
  %s1 = inlined_call_operand.vmem [shape: f32[1,512], index: 1, kind: output, shape index: {}]
  $region1: #{tile.24} parent=0
    #allocation0 [shape = 'u8[16384]{0}', space=vmem, size = 0x4000, scoped, tag = 'scoped mem for output reshape']
    %s2 = smov 3
    %v3 = vld [vmem:[%s0] ss:$16 sm:%s2]
    %s4 = smov 12
    %v5 = vld [vmem:[%s0] ss:$16 sm:%s4]
    %vm6 = vcmask 1043458
    %v7 = vsel %vm6, %v5, %v3
    %vm8 = vcmask 64512
    %9 = vst.msk [vmem:[#allocation0] ss:$8 sm:$0xf] %vm8, %v7
    %s10 = scalar_lea.vmem %s0, 15
    %s11 = smov 3
    %v12 = vld [vmem:[%s10] ss:$16 sm:%s11]
    %s13 = scalar_lea.vmem %s0, 15
    %s14 = smov 12
    %v15 = vld [vmem:[%s13] ss:$16 sm:%s14]
    %vm16 = vcmask 1043458
    %v17 = vsel %vm16, %v15, %v12
    %18 = vrot.lane.b32.xlu0 %v17, 120
    %v19 = vpop.permute.xlu0 %18
    %vm20 = vcmask 1048512
    %21 = vst.msk [vmem:[#allocation0] ss:$8 sm:$0xf] %vm20, %v19
    %s22 = scalar_lea.vmem %s0, 14
    %s23 = smov 3
    %v24 = vld [vmem:[%s22] ss:$16 sm:%s23]
    %s25 = scalar_lea.vmem %s0, 14
    %s26 = smov 12
    %v27 = vld [vmem:[%s25] ss:$16 sm:%s26]
    %vm28 = vcmask 1043458
    %v29 = vsel %vm28, %v27, %v24
    %30 = vrot.lane.b32.xlu0 %v29, 112
    %v31 = vpop.permute.xlu0 %30
    %vm32 = vcmask 982912
    %33 = vst.msk [vmem:[#allocation0] ss:$8 sm:$0xf] %vm32, %v31
    %s34 = scalar_lea.vmem %s0, 13
    %s35 = smov 3
    %v36 = vld [vmem:[%s34] ss:$16 sm:%s35]
    %s37 = scalar_lea.vmem %s0, 13
    %s38 = smov 12
    %v39 = vld [vmem:[%s37] ss:$16 sm:%s38]
    %vm40 = vcmask 1043458
    %v41 = vsel %vm40, %v39, %v36
    %42 = vrot.lane.b32.xlu0 %v41, 104
    %v43 = vpop.permute.xlu0 %42
    %vm44 = vcmask 917312
    %45 = vst.msk [vmem:[#allocation0] ss:$8 sm:$0xf] %vm44, %v43
    %s46 = scalar_lea.vmem %s0, 12
    %s47 = smov 3
    %v48 = vld [vmem:[%s46] ss:$16 sm:%s47]
    %s49 = scalar_lea.vmem %s0, 12
    %s50 = smov 12
    %v51 = vld [vmem:[%s49] ss:$16 sm:%s50]
    %vm52 = vcmask 1043458
    %v53 = vsel %vm52, %v51, %v48
    %54 = vrot.lane.b32.xlu0 %v53, 96
    %v55 = vpop.permute.xlu0 %54
    %vm56 = vcmask 851712
    %57 = vst.msk [vmem:[#allocation0] ss:$8 sm:$0xf] %vm56, %v55
    %s58 = scalar_lea.vmem %s0, 11
    %s59 = smov 3
    %v60 = vld [vmem:[%s58] ss:$16 sm:%s59]
    %s61 = scalar_lea.vmem %s0, 11
    %s62 = smov 12
    %v63 = vld [vmem:[%s61] ss:$16 sm:%s62]
    %vm64 = vcmask 1043458
    %v65 = vsel %vm64, %v63, %v60
    %66 = vrot.lane.b32.xlu0 %v65, 88
    %v67 = vpop.permute.xlu0 %66
    %vm68 = vcmask 786112
    %69 = vst.msk [vmem:[#allocation0] ss:$8 sm:$0xf] %vm68, %v67
    %s70 = scalar_lea.vmem %s0, 10
    %s71 = smov 3
    %v72 = vld [vmem:[%s70] ss:$16 sm:%s71]
    %s73 = scalar_lea.vmem %s0, 10
    %s74 = smov 12
    %v75 = vld [vmem:[%s73] ss:$16 sm:%s74]
    %vm76 = vcmask 1043458
    %v77 = vsel %vm76, %v75, %v72
    %78 = vrot.lane.b32.xlu0 %v77, 80
    %v79 = vpop.permute.xlu0 %78
    %vm80 = vcmask 720512
    %81 = vst.msk [vmem:[#allocation0] ss:$8 sm:$0xf] %vm80, %v79
    %s82 = scalar_lea.vmem %s0, 9
    %s83 = smov 3
    %v84 = vld [vmem:[%s82] ss:$16 sm:%s83]
    %s85 = scalar_lea.vmem %s0, 9
    %s86 = smov 12
    %v87 = vld [vmem:[%s85] ss:$16 sm:%s86]
    %vm88 = vcmask 1043458
    %v89 = vsel %vm88, %v87, %v84
    %90 = vrot.lane.b32.xlu0 %v89, 72
    %v91 = vpop.permute.xlu0 %90
    %vm92 = vcmask 654912
    %93 = vst.msk [vmem:[#allocation0] ss:$8 sm:$0xf] %vm92, %v91
    %s94 = scalar_lea.vmem %s0, 8
    %s95 = smov 3
    %v96 = vld [vmem:[%s94] ss:$16 sm:%s95]
    %s97 = scalar_lea.vmem %s0, 8
    %s98 = smov 12
    %v99 = vld [vmem:[%s97] ss:$16 sm:%s98]
    %vm100 = vcmask 1043458
    %v101 = vsel %vm100, %v99, %v96
    %102 = vrot.lane.b32.xlu0 %v101, 64
    %v103 = vpop.permute.xlu0 %102
    %vm104 = vcmask 589312
    %105 = vst.msk [vmem:[#allocation0] ss:$8 sm:$0xf] %vm104, %v103
    %s106 = scalar_lea.vmem %s0, 7
    %s107 = smov 3
    %v108 = vld [vmem:[%s106] ss:$16 sm:%s107]
    %s109 = scalar_lea.vmem %s0, 7
    %s110 = smov 12
    %v111 = vld [vmem:[%s109] ss:$16 sm:%s110]
    %vm112 = vcmask 1043458
    %v113 = vsel %vm112, %v111, %v108
    %114 = vrot.lane.b32.xlu0 %v113, 56
    %v115 = vpop.permute.xlu0 %114
    %vm116 = vcmask 523712
    %117 = vst.msk [vmem:[#allocation0] ss:$8 sm:$0xf] %vm116, %v115
    %s118 = scalar_lea.vmem %s0, 6
    %s119 = smov 3
    %v120 = vld [vmem:[%s118] ss:$16 sm:%s119]
    %s121 = scalar_lea.vmem %s0, 6
    %s122 = smov 12
    %v123 = vld [vmem:[%s121] ss:$16 sm:%s122]
    %vm124 = vcmask 1043458
    %v125 = vsel %vm124, %v123, %v120
    %126 = vrot.lane.b32.xlu0 %v125, 48
    %v127 = vpop.permute.xlu0 %126
    %vm128 = vcmask 458112
    %129 = vst.msk [vmem:[#allocation0] ss:$8 sm:$0xf] %vm128, %v127
    %s130 = scalar_lea.vmem %s0, 5
    %s131 = smov 3
    %v132 = vld [vmem:[%s130] ss:$16 sm:%s131]
    %s133 = scalar_lea.vmem %s0, 5
    %s134 = smov 12
    %v135 = vld [vmem:[%s133] ss:$16 sm:%s134]
    %vm136 = vcmask 1043458
    %v137 = vsel %vm136, %v135, %v132
    %138 = vrot.lane.b32.xlu0 %v137, 40
    %v139 = vpop.permute.xlu0 %138
    %vm140 = vcmask 392512
    %141 = vst.msk [vmem:[#allocation0] ss:$8 sm:$0xf] %vm140, %v139
    %s142 = scalar_lea.vmem %s0, 4
    %s143 = smov 3
    %v144 = vld [vmem:[%s142] ss:$16 sm:%s143]
    %s145 = scalar_lea.vmem %s0, 4
    %s146 = smov 12
    %v147 = vld [vmem:[%s145] ss:$16 sm:%s146]
    %vm148 = vcmask 1043458
    %v149 = vsel %vm148, %v147, %v144
    %150 = vrot.lane.b32.xlu0 %v149, 32
    %v151 = vpop.permute.xlu0 %150
    %vm152 = vcmask 326912
    %153 = vst.msk [vmem:[#allocation0] ss:$8 sm:$0xf] %vm152, %v151
    %s154 = scalar_lea.vmem %s0, 3
    %s155 = smov 3
    %v156 = vld [vmem:[%s154] ss:$16 sm:%s155]
    %s157 = scalar_lea.vmem %s0, 3
    %s158 = smov 12
    %v159 = vld [vmem:[%s157] ss:$16 sm:%s158]
    %vm160 = vcmask 1043458
    %v161 = vsel %vm160, %v159, %v156
    %162 = vrot.lane.b32.xlu0 %v161, 24
    %v163 = vpop.permute.xlu0 %162
    %vm164 = vcmask 261312
    %165 = vst.msk [vmem:[#allocation0] ss:$8 sm:$0xf] %vm164, %v163
    %s166 = scalar_lea.vmem %s0, 2
    %s167 = smov 3
    %v168 = vld [vmem:[%s166] ss:$16 sm:%s167]
    %s169 = scalar_lea.vmem %s0, 2
    %s170 = smov 12
    %v171 = vld [vmem:[%s169] ss:$16 sm:%s170]
    %vm172 = vcmask 1043458
    %v173 = vsel %vm172, %v171, %v168
    %174 = vrot.lane.b32.xlu0 %v173, 16
    %v175 = vpop.permute.xlu0 %174
    %vm176 = vcmask 195712
    %177 = vst.msk [vmem:[#allocation0] ss:$8 sm:$0xf] %vm176, %v175
    %s178 = scalar_lea.vmem %s0, 1
    %s179 = smov 3
    %v180 = vld [vmem:[%s178] ss:$16 sm:%s179]
    %s181 = scalar_lea.vmem %s0, 1
    %s182 = smov 12
    %v183 = vld [vmem:[%s181] ss:$16 sm:%s182]
    %vm184 = vcmask 1043458
    %v185 = vsel %vm184, %v183, %v180
    %186 = vrot.lane.b32.xlu0 %v185, 8
    %v187 = vpop.permute.xlu0 %186
    %vm188 = vcmask 130112
    %189 = vst.msk [vmem:[#allocation0] ss:$8 sm:$0xf] %vm188, %v187
    %s191 = sshllo.u32 0, 1
    %v193 = vld [vmem:[#allocation0] sm:%s191]
    %s194 = sshllo.u32 0, 1
    %195 = vst [vmem:[%s1] sm:%s194] %v193
    %s196 = scalar_lea.vmem [#allocation0], 8
    %v197 = vld [vmem:[%s196] sm:%s191]
    %s198 = sshllo.u32 0, 1
    %s199 = scalar_lea.vmem %s1, 1
    %200 = vst [vmem:[%s199] sm:%s198] %v197
    %s201 = scalar_lea.vmem [#allocation0], 16
    %v202 = vld [vmem:[%s201] sm:%s191]
    %s203 = sshllo.u32 0, 1
    %s204 = smul.addr 1, 2
    %s205 = scalar_lea.vmem %s1, %s204
    %206 = vst [vmem:[%s205] sm:%s203] %v202
    %s207 = scalar_lea.vmem [#allocation0], 24
    %v208 = vld [vmem:[%s207] sm:%s191]
    %s209 = sshllo.u32 0, 1
    %s210 = smul.addr 1, 3
    %s211 = scalar_lea.vmem %s1, %s210
    %212 = vst [vmem:[%s211] sm:%s209] %v208

// kernel: tile.28
$region0: #{tile.28}
  #allocation0 [shape = 's32[1]{0}', space=sflag, size = 0x4, scoped, tag = 'scoped memory for tile.28']
  %s0 = inlined_call_operand.vmem [shape: f32[8], index: 0, kind: input, shape index: {}]
  %s1 = inlined_call_operand.vmem [shape: f32[32,8], index: 1, kind: output, shape index: {}]
  // Predicated region
  $region2: #{tile.28} parent=0 // pred_check
    _
  $region3: #{tile.28} parent=0 // pred_check_branch
    %3 = sbr.rel (0) target = $region5
  $region4: #{tile.28} parent=0 // pred_region
    _
  $region5: #{tile.28} parent=0 // pred_fallthru
    _
  %v4 = vld [vmem:[%s0] ss:$0 sm:$0xff]
  %5 = vst [vmem:[%s1] sm:$0xff] %v4
  %s6 = scalar_lea.vmem %s1, 8
  %7 = vst [vmem:[%s6] sm:$0xff] %v4
  %s8 = scalar_lea.vmem %s1, 16
  %9 = vst [vmem:[%s8] sm:$0xff] %v4
  %s10 = scalar_lea.vmem %s1, 24
  %11 = vst [vmem:[%s10] sm:$0xff] %v4

// kernel: tile.29
$region0: #{tile.29}
  %s0 = inlined_call_operand.vmem [shape: f32[32,8], index: 0, kind: input, shape index: {}]
  %s1 = inlined_call_operand.vmem [shape: f32[1,256], index: 1, kind: output, shape index: {}]
  $region1: #{tile.29} parent=0
    #allocation0 [shape = 'u8[8192]{0}', space=vmem, size = 0x2000, scoped, tag = 'scoped mem for output reshape']
    %s2 = smov 3
    %v3 = vld [vmem:[%s0] ss:$16 sm:%s2]
    %vm4 = vcmask 64512
    %5 = vst.msk [vmem:[#allocation0] ss:$8 sm:$0x3] %vm4, %v3
    %s6 = scalar_lea.vmem %s0, 15
    %s7 = smov 3
    %v8 = vld [vmem:[%s6] ss:$16 sm:%s7]
    %9 = vrot.lane.b32.xlu0 %v8, 120
    %v10 = vpop.permute.xlu0 %9
    %vm11 = vcmask 1048512
    %12 = vst.msk [vmem:[#allocation0] ss:$8 sm:$0x3] %vm11, %v10
    %s13 = scalar_lea.vmem %s0, 14
    %s14 = smov 3
    %v15 = vld [vmem:[%s13] ss:$16 sm:%s14]
    %16 = vrot.lane.b32.xlu0 %v15, 112
    %v17 = vpop.permute.xlu0 %16
    %vm18 = vcmask 982912
    %19 = vst.msk [vmem:[#allocation0] ss:$8 sm:$0x3] %vm18, %v17
    %s20 = scalar_lea.vmem %s0, 13
    %s21 = smov 3
    %v22 = vld [vmem:[%s20] ss:$16 sm:%s21]
    %23 = vrot.lane.b32.xlu0 %v22, 104
    %v24 = vpop.permute.xlu0 %23
    %vm25 = vcmask 917312
    %26 = vst.msk [vmem:[#allocation0] ss:$8 sm:$0x3] %vm25, %v24
    %s27 = scalar_lea.vmem %s0, 12
    %s28 = smov 3
    %v29 = vld [vmem:[%s27] ss:$16 sm:%s28]
    %30 = vrot.lane.b32.xlu0 %v29, 96
    %v31 = vpop.permute.xlu0 %30
    %vm32 = vcmask 851712
    %33 = vst.msk [vmem:[#allocation0] ss:$8 sm:$0x3] %vm32, %v31
    %s34 = scalar_lea.vmem %s0, 11
    %s35 = smov 3
    %v36 = vld [vmem:[%s34] ss:$16 sm:%s35]
    %37 = vrot.lane.b32.xlu0 %v36, 88
    %v38 = vpop.permute.xlu0 %37
    %vm39 = vcmask 786112
    %40 = vst.msk [vmem:[#allocation0] ss:$8 sm:$0x3] %vm39, %v38
    %s41 = scalar_lea.vmem %s0, 10
    %s42 = smov 3
    %v43 = vld [vmem:[%s41] ss:$16 sm:%s42]
    %44 = vrot.lane.b32.xlu0 %v43, 80
    %v45 = vpop.permute.xlu0 %44
    %vm46 = vcmask 720512
    %47 = vst.msk [vmem:[#allocation0] ss:$8 sm:$0x3] %vm46, %v45
    %s48 = scalar_lea.vmem %s0, 9
    %s49 = smov 3
    %v50 = vld [vmem:[%s48] ss:$16 sm:%s49]
    %51 = vrot.lane.b32.xlu0 %v50, 72
    %v52 = vpop.permute.xlu0 %51
    %vm53 = vcmask 654912
    %54 = vst.msk [vmem:[#allocation0] ss:$8 sm:$0x3] %vm53, %v52
    %s55 = scalar_lea.vmem %s0, 8
    %s56 = smov 3
    %v57 = vld [vmem:[%s55] ss:$16 sm:%s56]
    %58 = vrot.lane.b32.xlu0 %v57, 64
    %v59 = vpop.permute.xlu0 %58
    %vm60 = vcmask 589312
    %61 = vst.msk [vmem:[#allocation0] ss:$8 sm:$0x3] %vm60, %v59
    %s62 = scalar_lea.vmem %s0, 7
    %s63 = smov 3
    %v64 = vld [vmem:[%s62] ss:$16 sm:%s63]
    %65 = vrot.lane.b32.xlu0 %v64, 56
    %v66 = vpop.permute.xlu0 %65
    %vm67 = vcmask 523712
    %68 = vst.msk [vmem:[#allocation0] ss:$8 sm:$0x3] %vm67, %v66
    %s69 = scalar_lea.vmem %s0, 6
    %s70 = smov 3
    %v71 = vld [vmem:[%s69] ss:$16 sm:%s70]
    %72 = vrot.lane.b32.xlu0 %v71, 48
    %v73 = vpop.permute.xlu0 %72
    %vm74 = vcmask 458112
    %75 = vst.msk [vmem:[#allocation0] ss:$8 sm:$0x3] %vm74, %v73
    %s76 = scalar_lea.vmem %s0, 5
    %s77 = smov 3
    %v78 = vld [vmem:[%s76] ss:$16 sm:%s77]
    %79 = vrot.lane.b32.xlu0 %v78, 40
    %v80 = vpop.permute.xlu0 %79
    %vm81 = vcmask 392512
    %82 = vst.msk [vmem:[#allocation0] ss:$8 sm:$0x3] %vm81, %v80
    %s83 = scalar_lea.vmem %s0, 4
    %s84 = smov 3
    %v85 = vld [vmem:[%s83] ss:$16 sm:%s84]
    %86 = vrot.lane.b32.xlu0 %v85, 32
    %v87 = vpop.permute.xlu0 %86
    %vm88 = vcmask 326912
    %89 = vst.msk [vmem:[#allocation0] ss:$8 sm:$0x3] %vm88, %v87
    %s90 = scalar_lea.vmem %s0, 3
    %s91 = smov 3
    %v92 = vld [vmem:[%s90] ss:$16 sm:%s91]
    %93 = vrot.lane.b32.xlu0 %v92, 24
    %v94 = vpop.permute.xlu0 %93
    %vm95 = vcmask 261312
    %96 = vst.msk [vmem:[#allocation0] ss:$8 sm:$0x3] %vm95, %v94
    %s97 = scalar_lea.vmem %s0, 2
    %s98 = smov 3
    %v99 = vld [vmem:[%s97] ss:$16 sm:%s98]
    %100 = vrot.lane.b32.xlu0 %v99, 16
    %v101 = vpop.permute.xlu0 %100
    %vm102 = vcmask 195712
    %103 = vst.msk [vmem:[#allocation0] ss:$8 sm:$0x3] %vm102, %v101
    %s104 = scalar_lea.vmem %s0, 1
    %s105 = smov 3
    %v106 = vld [vmem:[%s104] ss:$16 sm:%s105]
    %107 = vrot.lane.b32.xlu0 %v106, 8
    %v108 = vpop.permute.xlu0 %107
    %vm109 = vcmask 130112
    %110 = vst.msk [vmem:[#allocation0] ss:$8 sm:$0x3] %vm109, %v108
    %s112 = sshllo.u32 0, 1
    %v114 = vld [vmem:[#allocation0] sm:%s112]
    %s115 = sshllo.u32 0, 1
    %116 = vst [vmem:[%s1] sm:%s115] %v114
    %s117 = scalar_lea.vmem [#allocation0], 8
    %v118 = vld [vmem:[%s117] sm:%s112]
    %s119 = sshllo.u32 0, 1
    %s120 = scalar_lea.vmem %s1, 1
    %121 = vst [vmem:[%s120] sm:%s119] %v118

// kernel: tile.38
$region0: #{tile.38}
  #allocation0 [shape = 's32[1]{0}', space=sflag, size = 0x4, scoped, tag = 'scoped memory for tile.38']
  %s0 = inlined_call_operand.vmem [shape: f32[8], index: 0, kind: input, shape index: {}]
  %s1 = inlined_call_operand.vmem [shape: f32[16,8], index: 1, kind: output, shape index: {}]
  // Predicated region
  $region2: #{tile.38} parent=0 // pred_check
    _
  $region3: #{tile.38} parent=0 // pred_check_branch
    %3 = sbr.rel (0) target = $region5
  $region4: #{tile.38} parent=0 // pred_region
    _
  $region5: #{tile.38} parent=0 // pred_fallthru
    _
  %v4 = vld [vmem:[%s0] ss:$0 sm:$0xff]
  %5 = vst [vmem:[%s1] sm:$0xff] %v4
  %s6 = scalar_lea.vmem %s1, 8
  %7 = vst [vmem:[%s6] sm:$0xff] %v4

// kernel: tile.39
$region0: #{tile.39}
  %s0 = inlined_call_operand.vmem [shape: f32[16,8], index: 0, kind: input, shape index: {}]
  %s1 = inlined_call_operand.vmem [shape: f32[1,128], index: 1, kind: output, shape index: {}]
  $region1: #{tile.39} parent=0
    #allocation0 [shape = 'u8[4096]{0}', space=vmem, size = 0x1000, scoped, tag = 'scoped mem for output reshape']
    %v2 = vld [vmem:[%s0] sm:$0x1]
    %vm3 = vcmask 64512
    %4 = vst.msk [vmem:[#allocation0] sm:$0x1] %vm3, %v2
    %s5 = scalar_lea.vmem %s0, 15
    %v6 = vld [vmem:[%s5] sm:$0x1]
    %7 = vrot.lane.b32.xlu0 %v6, 120
    %v8 = vpop.permute.xlu0 %7
    %vm9 = vcmask 1048512
    %10 = vst.msk [vmem:[#allocation0] sm:$0x1] %vm9, %v8
    %s11 = scalar_lea.vmem %s0, 14
    %v12 = vld [vmem:[%s11] sm:$0x1]
    %13 = vrot.lane.b32.xlu0 %v12, 112
    %v14 = vpop.permute.xlu0 %13
    %vm15 = vcmask 982912
    %16 = vst.msk [vmem:[#allocation0] sm:$0x1] %vm15, %v14
    %s17 = scalar_lea.vmem %s0, 13
    %v18 = vld [vmem:[%s17] sm:$0x1]
    %19 = vrot.lane.b32.xlu0 %v18, 104
    %v20 = vpop.permute.xlu0 %19
    %vm21 = vcmask 917312
    %22 = vst.msk [vmem:[#allocation0] sm:$0x1] %vm21, %v20
    %s23 = scalar_lea.vmem %s0, 12
    %v24 = vld [vmem:[%s23] sm:$0x1]
    %25 = vrot.lane.b32.xlu0 %v24, 96
    %v26 = vpop.permute.xlu0 %25
    %vm27 = vcmask 851712
    %28 = vst.msk [vmem:[#allocation0] sm:$0x1] %vm27, %v26
    %s29 = scalar_lea.vmem %s0, 11
    %v30 = vld [vmem:[%s29] sm:$0x1]
    %31 = vrot.lane.b32.xlu0 %v30, 88
    %v32 = vpop.permute.xlu0 %31
    %vm33 = vcmask 786112
    %34 = vst.msk [vmem:[#allocation0] sm:$0x1] %vm33, %v32
    %s35 = scalar_lea.vmem %s0, 10
    %v36 = vld [vmem:[%s35] sm:$0x1]
    %37 = vrot.lane.b32.xlu0 %v36, 80
    %v38 = vpop.permute.xlu0 %37
    %vm39 = vcmask 720512
    %40 = vst.msk [vmem:[#allocation0] sm:$0x1] %vm39, %v38
    %s41 = scalar_lea.vmem %s0, 9
    %v42 = vld [vmem:[%s41] sm:$0x1]
    %43 = vrot.lane.b32.xlu0 %v42, 72
    %v44 = vpop.permute.xlu0 %43
    %vm45 = vcmask 654912
    %46 = vst.msk [vmem:[#allocation0] sm:$0x1] %vm45, %v44
    %s47 = scalar_lea.vmem %s0, 8
    %v48 = vld [vmem:[%s47] sm:$0x1]
    %49 = vrot.lane.b32.xlu0 %v48, 64
    %v50 = vpop.permute.xlu0 %49
    %vm51 = vcmask 589312
    %52 = vst.msk [vmem:[#allocation0] sm:$0x1] %vm51, %v50
    %s53 = scalar_lea.vmem %s0, 7
    %v54 = vld [vmem:[%s53] sm:$0x1]
    %55 = vrot.lane.b32.xlu0 %v54, 56
    %v56 = vpop.permute.xlu0 %55
    %vm57 = vcmask 523712
    %58 = vst.msk [vmem:[#allocation0] sm:$0x1] %vm57, %v56
    %s59 = scalar_lea.vmem %s0, 6
    %v60 = vld [vmem:[%s59] sm:$0x1]
    %61 = vrot.lane.b32.xlu0 %v60, 48
    %v62 = vpop.permute.xlu0 %61
    %vm63 = vcmask 458112
    %64 = vst.msk [vmem:[#allocation0] sm:$0x1] %vm63, %v62
    %s65 = scalar_lea.vmem %s0, 5
    %v66 = vld [vmem:[%s65] sm:$0x1]
    %67 = vrot.lane.b32.xlu0 %v66, 40
    %v68 = vpop.permute.xlu0 %67
    %vm69 = vcmask 392512
    %70 = vst.msk [vmem:[#allocation0] sm:$0x1] %vm69, %v68
    %s71 = scalar_lea.vmem %s0, 4
    %v72 = vld [vmem:[%s71] sm:$0x1]
    %73 = vrot.lane.b32.xlu0 %v72, 32
    %v74 = vpop.permute.xlu0 %73
    %vm75 = vcmask 326912
    %76 = vst.msk [vmem:[#allocation0] sm:$0x1] %vm75, %v74
    %s77 = scalar_lea.vmem %s0, 3
    %v78 = vld [vmem:[%s77] sm:$0x1]
    %79 = vrot.lane.b32.xlu0 %v78, 24
    %v80 = vpop.permute.xlu0 %79
    %vm81 = vcmask 261312
    %82 = vst.msk [vmem:[#allocation0] sm:$0x1] %vm81, %v80
    %s83 = scalar_lea.vmem %s0, 2
    %v84 = vld [vmem:[%s83] sm:$0x1]
    %85 = vrot.lane.b32.xlu0 %v84, 16
    %v86 = vpop.permute.xlu0 %85
    %vm87 = vcmask 195712
    %88 = vst.msk [vmem:[#allocation0] sm:$0x1] %vm87, %v86
    %s89 = scalar_lea.vmem %s0, 1
    %v90 = vld [vmem:[%s89] sm:$0x1]
    %91 = vrot.lane.b32.xlu0 %v90, 8
    %v92 = vpop.permute.xlu0 %91
    %vm93 = vcmask 130112
    %94 = vst.msk [vmem:[#allocation0] sm:$0x1] %vm93, %v92
    %s96 = sshllo.u32 0, 1
    %v98 = vld [vmem:[#allocation0] sm:%s96]
    %s99 = sshllo.u32 0, 1
    %100 = vst [vmem:[%s1] sm:%s99] %v98

// kernel: tiny_vgg_forward.1
$region0: #{tiny_vgg_forward.1}
  #allocation0 [shape = 'u32[]', space=smem, size = 0x4, offset = 0x4, fixed_abs, tag = 'smem constant byte address 0x4 - core index']
  #allocation1 [shape = 'u32[144,128]{1,0:T(1,128)}', space=vmem, size = 0x12000, scoped, tag = 'internal scratch']
  %s0 = inlined_call_operand.vmem [shape: bf16[1,128,256], index: 0, kind: input, shape index: {}]
  %s1 = inlined_call_operand.vmem [shape: bf16[3,256,512], index: 1, kind: input, shape index: {}]
  %s2 = inlined_call_operand.vmem [shape: f32[1,512], index: 2, kind: input, shape index: {}]
  %s3 = inlined_call_operand.vmem [shape: bf16[3,512,256], index: 3, kind: input, shape index: {}]
  %s4 = inlined_call_operand.vmem [shape: bf16[3,512,256], index: 4, kind: input, shape index: {}]
  %s5 = inlined_call_operand.vmem [shape: f32[1,256], index: 5, kind: input, shape index: {}]
  %s6 = inlined_call_operand.vmem [shape: bf16[3,256,256], index: 6, kind: input, shape index: {}]
  %s7 = inlined_call_operand.vmem [shape: f32[1,256], index: 7, kind: input, shape index: {}]
  %s8 = inlined_call_operand.vmem [shape: bf16[3,256,128], index: 8, kind: input, shape index: {}]
  %s9 = inlined_call_operand.vmem [shape: bf16[3,256,128], index: 9, kind: input, shape index: {}]
  %s10 = inlined_call_operand.vmem [shape: f32[1,128], index: 10, kind: input, shape index: {}]
  %s11 = inlined_call_operand.vmem [shape: bf16[2,128,128], index: 11, kind: input, shape index: {}]
  %s12 = inlined_call_operand.vmem [shape: bf16[2,64,64], index: 12, kind: input, shape index: {}]
  %s13 = inlined_call_operand.vmem [shape: bf16[2,64,128], index: 13, kind: input, shape index: {}]
  %s14 = inlined_call_operand.vmem [shape: f32[2,32,64], index: 14, kind: input, shape index: {}]
  %s15 = inlined_call_operand.vmem [shape: f32[3,16,128], index: 15, kind: input, shape index: {}]
  %s16 = inlined_call_operand.vmem [shape: f32[1,3], index: 16, kind: input, shape index: {}]
  %s17 = inlined_call_operand.hbm [shape: f32[1,2,3], index: 17, kind: output, shape index: {}]
  %s18 = sld [smem:[#allocation0]]
  $region78: #{tiny_vgg_forward.1} parent=0
    _
  %s20 = ssub.s32 1, %s18
  %s21 = scalar_select 0, %s20, %s18
  $region1: #{tiny_vgg_forward.1} parent=0
    #allocation2 [shape = 'u8[1024]{0}', space=vmem, size = 0x400, scoped, tag = 'output window, operand 0, single buffered']
    #allocation3 [shape = 's32[1]{0}', space=sflag, size = 0x4, scoped, tag = 'scoped memory for tiny_vgg_forward.1']
    %22 = vsyncpa [#allocation3], 0
    // Predicated region
    $region2: #{tiny_vgg_forward.1} parent=1 // pred_check
      _
    $region3: #{tiny_vgg_forward.1} parent=1 // pred_check_branch
      %24 = sbr.rel (0) target = $region5
    $region4: #{tiny_vgg_forward.1} parent=1 // pred_region
      _
    $region5: #{tiny_vgg_forward.1} parent=1 // pred_fallthru
      _
    // Predicated region
    $region6: #{tiny_vgg_forward.1} parent=1 // pred_check
      _
    $region7: #{tiny_vgg_forward.1} parent=1 // pred_check_branch
      %26 = sbr.rel (0) target = $region9
    $region8: #{tiny_vgg_forward.1} parent=1 // pred_region
      _
    $region9: #{tiny_vgg_forward.1} parent=1 // pred_fallthru
      _
    // Predicated region
    $region10: #{tiny_vgg_forward.1} parent=1 // pred_check
      _
    $region11: #{tiny_vgg_forward.1} parent=1 // pred_check_branch
      %28 = sbr.rel (0) target = $region13
    $region12: #{tiny_vgg_forward.1} parent=1 // pred_region
      _
    $region13: #{tiny_vgg_forward.1} parent=1 // pred_fallthru
      _
    // Predicated region
    $region14: #{tiny_vgg_forward.1} parent=1 // pred_check
      _
    $region15: #{tiny_vgg_forward.1} parent=1 // pred_check_branch
      %30 = sbr.rel (0) target = $region17
    $region16: #{tiny_vgg_forward.1} parent=1 // pred_region
      _
    $region17: #{tiny_vgg_forward.1} parent=1 // pred_fallthru
      _
    // Predicated region
    $region18: #{tiny_vgg_forward.1} parent=1 // pred_check
      _
    $region19: #{tiny_vgg_forward.1} parent=1 // pred_check_branch
      %32 = sbr.rel (0) target = $region21
    $region20: #{tiny_vgg_forward.1} parent=1 // pred_region
      _
    $region21: #{tiny_vgg_forward.1} parent=1 // pred_fallthru
      _
    // Predicated region
    $region22: #{tiny_vgg_forward.1} parent=1 // pred_check
      _
    $region23: #{tiny_vgg_forward.1} parent=1 // pred_check_branch
      %34 = sbr.rel (0) target = $region25
    $region24: #{tiny_vgg_forward.1} parent=1 // pred_region
      _
    $region25: #{tiny_vgg_forward.1} parent=1 // pred_fallthru
      _
    // Predicated region
    $region26: #{tiny_vgg_forward.1} parent=1 // pred_check
      _
    $region27: #{tiny_vgg_forward.1} parent=1 // pred_check_branch
      %36 = sbr.rel (0) target = $region29
    $region28: #{tiny_vgg_forward.1} parent=1 // pred_region
      _
    $region29: #{tiny_vgg_forward.1} parent=1 // pred_fallthru
      _
    // Predicated region
    $region30: #{tiny_vgg_forward.1} parent=1 // pred_check
      _
    $region31: #{tiny_vgg_forward.1} parent=1 // pred_check_branch
      %38 = sbr.rel (0) target = $region33
    $region32: #{tiny_vgg_forward.1} parent=1 // pred_region
      _
    $region33: #{tiny_vgg_forward.1} parent=1 // pred_fallthru
      _
    // Predicated region
    $region34: #{tiny_vgg_forward.1} parent=1 // pred_check
      _
    $region35: #{tiny_vgg_forward.1} parent=1 // pred_check_branch
      %40 = sbr.rel (0) target = $region37
    $region36: #{tiny_vgg_forward.1} parent=1 // pred_region
      _
    $region37: #{tiny_vgg_forward.1} parent=1 // pred_fallthru
      _
    // Predicated region
    $region38: #{tiny_vgg_forward.1} parent=1 // pred_check
      _
    $region39: #{tiny_vgg_forward.1} parent=1 // pred_check_branch
      %42 = sbr.rel (0) target = $region41
    $region40: #{tiny_vgg_forward.1} parent=1 // pred_region
      _
    $region41: #{tiny_vgg_forward.1} parent=1 // pred_fallthru
      _
    // Predicated region
    $region42: #{tiny_vgg_forward.1} parent=1 // pred_check
      _
    $region43: #{tiny_vgg_forward.1} parent=1 // pred_check_branch
      %44 = sbr.rel (0) target = $region45
    $region44: #{tiny_vgg_forward.1} parent=1 // pred_region
      _
    $region45: #{tiny_vgg_forward.1} parent=1 // pred_fallthru
      _
    // Predicated region
    $region46: #{tiny_vgg_forward.1} parent=1 // pred_check
      _
    $region47: #{tiny_vgg_forward.1} parent=1 // pred_check_branch
      %46 = sbr.rel (0) target = $region49
    $region48: #{tiny_vgg_forward.1} parent=1 // pred_region
      _
    $region49: #{tiny_vgg_forward.1} parent=1 // pred_fallthru
      _
    // Predicated region
    $region50: #{tiny_vgg_forward.1} parent=1 // pred_check
      _
    $region51: #{tiny_vgg_forward.1} parent=1 // pred_check_branch
      %48 = sbr.rel (0) target = $region53
    $region52: #{tiny_vgg_forward.1} parent=1 // pred_region
      _
    $region53: #{tiny_vgg_forward.1} parent=1 // pred_fallthru
      _
    // Predicated region
    $region54: #{tiny_vgg_forward.1} parent=1 // pred_check
      _
    $region55: #{tiny_vgg_forward.1} parent=1 // pred_check_branch
      %50 = sbr.rel (0) target = $region57
    $region56: #{tiny_vgg_forward.1} parent=1 // pred_region
      _
    $region57: #{tiny_vgg_forward.1} parent=1 // pred_fallthru
      _
    // Predicated region
    $region58: #{tiny_vgg_forward.1} parent=1 // pred_check
      _
    $region59: #{tiny_vgg_forward.1} parent=1 // pred_check_branch
      %52 = sbr.rel (0) target = $region61
    $region60: #{tiny_vgg_forward.1} parent=1 // pred_region
      _
    $region61: #{tiny_vgg_forward.1} parent=1 // pred_fallthru
      _
    // Predicated region
    $region62: #{tiny_vgg_forward.1} parent=1 // pred_check
      _
    $region63: #{tiny_vgg_forward.1} parent=1 // pred_check_branch
      %54 = sbr.rel (0) target = $region65
    $region64: #{tiny_vgg_forward.1} parent=1 // pred_region
      _
    $region65: #{tiny_vgg_forward.1} parent=1 // pred_fallthru
      _
    // Predicated region
    $region66: #{tiny_vgg_forward.1} parent=1 // pred_check
      _
    $region67: #{tiny_vgg_forward.1} parent=1 // pred_check_branch
      %56 = sbr.rel (0) target = $region69
    $region68: #{tiny_vgg_forward.1} parent=1 // pred_region
      _
    $region69: #{tiny_vgg_forward.1} parent=1 // pred_fallthru
      _
    %v58 = vld [vmem:[%s0] sm:$0xff]
    %v59 = vld [vmem:[%s0 + $0x8] sm:$0xff]
    %v60 = vld [vmem:[%s0 + $0x10] sm:$0xff]
    %v61 = vld [vmem:[%s0 + $0x18] sm:$0xff]
    %v62 = vld [vmem:[%s0 + $0x20] sm:$0xff]
    %v63 = vld [vmem:[%s0 + $0x28] sm:$0xff]
    %v64 = vld [vmem:[%s0 + $0x30] sm:$0xff]
    %v65 = vld [vmem:[%s0 + $0x38] sm:$0xff]
    %v66 = vld [vmem:[%s0 + $0x40] sm:$0xff]
    %v67 = vld [vmem:[%s0 + $0x48] sm:$0xff]
    %v68 = vld [vmem:[%s0 + $0x50] sm:$0xff]
    %v69 = vld [vmem:[%s0 + $0x58] sm:$0xff]
    %v70 = vld [vmem:[%s0 + $0x60] sm:$0xff]
    %v71 = vld [vmem:[%s0 + $0x68] sm:$0xff]
    %v72 = vld [vmem:[%s0 + $0x70] sm:$0xff]
    %v73 = vld [vmem:[%s0 + $0x78] sm:$0xff]
    %v74 = vld [vmem:[%s11] sm:$0xf]
    %v75 = vld [vmem:[%s11 + $0x4] sm:$0xf]
    %v76 = vld [vmem:[%s11 + $0x8] sm:$0xf]
    %v77 = vld [vmem:[%s11 + $0xc] sm:$0xf]
    %v78 = vld [vmem:[%s11 + $0x10] sm:$0xf]
    %v79 = vld [vmem:[%s11 + $0x14] sm:$0xf]
    %v80 = vld [vmem:[%s11 + $0x18] sm:$0xf]
    %v81 = vld [vmem:[%s11 + $0x1c] sm:$0xf]
    %v82 = vld [vmem:[%s11 + $0x20] sm:$0xf]
    %v83 = vld [vmem:[%s11 + $0x24] sm:$0xf]
    %v84 = vld [vmem:[%s11 + $0x28] sm:$0xf]
    %v85 = vld [vmem:[%s11 + $0x2c] sm:$0xf]
    %v86 = vld [vmem:[%s11 + $0x30] sm:$0xf]
    %v87 = vld [vmem:[%s11 + $0x34] sm:$0xf]
    %v88 = vld [vmem:[%s11 + $0x38] sm:$0xf]
    %v89 = vld [vmem:[%s11 + $0x3c] sm:$0xf]
    %v106 = vunpack.c.l.b16 %v74
    %v107 = vunpack.c.l.b16 %v75
    %v108 = vunpack.c.l.b16 %v76
    %v109 = vunpack.c.l.b16 %v77
    %v110 = vunpack.c.l.b16 %v78
    %v111 = vunpack.c.l.b16 %v79
    %v112 = vunpack.c.l.b16 %v80
    %v113 = vunpack.c.l.b16 %v81
    %v114 = vunpack.c.l.b16 %v82
    %v115 = vunpack.c.l.b16 %v83
    %v116 = vunpack.c.l.b16 %v84
    %v117 = vunpack.c.l.b16 %v85
    %v118 = vunpack.c.l.b16 %v86
    %v119 = vunpack.c.l.b16 %v87
    %v120 = vunpack.c.l.b16 %v88
    %v121 = vunpack.c.l.b16 %v89
    %v122 = vpack.c.b16 %v107, %v106
    %v123 = vpack.c.b16 %v109, %v108
    %v124 = vpack.c.b16 %v111, %v110
    %v125 = vpack.c.b16 %v113, %v112
    %v126 = vpack.c.b16 %v115, %v114
    %v127 = vpack.c.b16 %v117, %v116
    %v128 = vpack.c.b16 %v119, %v118
    %v129 = vpack.c.b16 %v121, %v120
    %v154 = vunpack.c.l.b16 %v58
    %v155 = vunpack.c.h.b16 %v58
    %v156 = vunpack.c.l.b16 %v59
    %v157 = vunpack.c.h.b16 %v59
    %v158 = vunpack.c.l.b16 %v60
    %v159 = vunpack.c.h.b16 %v60
    %v160 = vunpack.c.l.b16 %v61
    %v161 = vunpack.c.h.b16 %v61
    %v162 = vunpack.c.l.b16 %v62
    %v163 = vunpack.c.h.b16 %v62
    %v164 = vunpack.c.l.b16 %v63
    %v165 = vunpack.c.h.b16 %v63
    %v166 = vunpack.c.l.b16 %v64
    %v167 = vunpack.c.h.b16 %v64
    %v168 = vunpack.c.l.b16 %v65
    %v169 = vunpack.c.h.b16 %v65
    %v170 = vunpack.c.l.b16 %v66
    %v171 = vunpack.c.h.b16 %v66
    %v172 = vunpack.c.l.b16 %v67
    %v173 = vunpack.c.h.b16 %v67
    %v174 = vunpack.c.l.b16 %v68
    %v175 = vunpack.c.h.b16 %v68
    %v176 = vunpack.c.l.b16 %v69
    %v177 = vunpack.c.h.b16 %v69
    %v178 = vunpack.c.l.b16 %v70
    %v179 = vunpack.c.h.b16 %v70
    %v180 = vunpack.c.l.b16 %v71
    %v181 = vunpack.c.h.b16 %v71
    %v182 = vunpack.c.l.b16 %v72
    %v183 = vunpack.c.h.b16 %v72
    %v184 = vunpack.c.l.b16 %v73
    %v185 = vunpack.c.h.b16 %v73
    %v186 = vpack.c.b16 %v156, %v154
    %v187 = vpack.c.b16 %v157, %v155
    %v188 = vpack.c.b16 %v160, %v158
    %v189 = vpack.c.b16 %v161, %v159
    %v190 = vpack.c.b16 %v164, %v162
    %v191 = vpack.c.b16 %v165, %v163
    %v192 = vpack.c.b16 %v168, %v166
    %v193 = vpack.c.b16 %v169, %v167
    %v194 = vpack.c.b16 %v172, %v170
    %v195 = vpack.c.b16 %v173, %v171
    %v196 = vpack.c.b16 %v176, %v174
    %v197 = vpack.c.b16 %v177, %v175
    %v198 = vpack.c.b16 %v180, %v178
    %v199 = vpack.c.b16 %v181, %v179
    %v200 = vpack.c.b16 %v184, %v182
    %v201 = vpack.c.b16 %v185, %v183
    %218 = vmatprep.subr.bf16.mxu0 %v187
    %219 = vmatpush1.bf16.msra.mxu0 %v186
    %220 = vmatprep.subr.bf16.mxu0 %v189
    %221 = vmatpush1.bf16.msra.mxu0 %v188
    %222 = vmatprep.subr.bf16.mxu0 %v191
    %223 = vmatpush1.bf16.msra.mxu0 %v190
    %224 = vmatprep.subr.bf16.mxu0 %v193
    %225 = vmatpush1.bf16.msra.mxu0 %v192
    %226 = vmatprep.subr.bf16.mxu0 %v195
    %227 = vmatpush1.bf16.msra.mxu0 %v194
    %228 = vmatprep.subr.bf16.mxu0 %v197
    %229 = vmatpush1.bf16.msra.mxu0 %v196
    %230 = vmatprep.subr.bf16.mxu0 %v199
    %231 = vmatpush1.bf16.msra.mxu0 %v198
    %232 = vmatprep.subr.bf16.mxu0 %v201
    %233 = vmatpush1.bf16.msra.mxu0 %v200
    %234 = vmatprep.subr.bf16.mxu0 0
    %235 = vmatpush1.bf16.msra.mxu0 0
    %236 = vmatprep.subr.bf16.mxu0 0
    %237 = vmatpush1.bf16.msra.mxu0 0
    %238 = vmatprep.subr.bf16.mxu0 0
    %239 = vmatpush1.bf16.msra.mxu0 0
    %240 = vmatprep.subr.bf16.mxu0 0
    %241 = vmatpush1.bf16.msra.mxu0 0
    %242 = vmatprep.subr.bf16.mxu0 0
    %243 = vmatpush1.bf16.msra.mxu0 0
    %244 = vmatprep.subr.bf16.mxu0 0
    %245 = vmatpush1.bf16.msra.mxu0 0
    %246 = vmatprep.subr.bf16.mxu0 0
    %247 = vmatpush1.bf16.msra.mxu0 0
    %248 = vmatprep.subr.bf16.mxu0 0
    %249 = vmatpush1.bf16.msra.mxu0 0
    %250 = vmatprep.mubr.bf16.mxu0 0
    %251 = vmatmul.mubr.bf16.gmra.mrb[0].mxu0 %v122
    %v252 = vpop.f32.mrb[0].mxu0
    %v253 = vadd.f32 0.0, %v252
    %v254 = vpop.f32.mrb[0].mxu0
    %v255 = vadd.f32 0.0, %v254
    %v256 = vpop.f32.mrb[0].mxu0
    %v257 = vadd.f32 0.0, %v256
    %v258 = vpop.f32.mrb[0].mxu0
    %v259 = vadd.f32 0.0, %v258
    %260 = vmatprep.mubr.bf16.mxu0 0
    %261 = vmatmul.mubr.bf16.gmra.mrb[0].mxu0 %v123
    %v262 = vpop.f32.mrb[0].mxu0
    %v263 = vadd.f32 0.0, %v262
    %v264 = vpop.f32.mrb[0].mxu0
    %v265 = vadd.f32 0.0, %v264
    %v266 = vpop.f32.mrb[0].mxu0
    %v267 = vadd.f32 0.0, %v266
    %v268 = vpop.f32.mrb[0].mxu0
    %v269 = vadd.f32 0.0, %v268
    %270 = vmatprep.mubr.bf16.mxu0 0
    %271 = vmatmul.mubr.bf16.gmra.mrb[0].mxu0 %v124
    %v272 = vpop.f32.mrb[0].mxu0
    %v273 = vadd.f32 0.0, %v272
    %v274 = vpop.f32.mrb[0].mxu0
    %v275 = vadd.f32 0.0, %v274
    %v276 = vpop.f32.mrb[0].mxu0
    %v277 = vadd.f32 0.0, %v276
    %v278 = vpop.f32.mrb[0].mxu0
    %v279 = vadd.f32 0.0, %v278
    %280 = vmatprep.mubr.bf16.mxu0 0
    %281 = vmatmul.mubr.bf16.gmra.mrb[0].mxu0 %v125
    %v282 = vpop.f32.mrb[0].mxu0
    %v283 = vadd.f32 0.0, %v282
    %v284 = vpop.f32.mrb[0].mxu0
    %v285 = vadd.f32 0.0, %v284
    %v286 = vpop.f32.mrb[0].mxu0
    %v287 = vadd.f32 0.0, %v286
    %v288 = vpop.f32.mrb[0].mxu0
    %v289 = vadd.f32 0.0, %v288
    %290 = vmatprep.mubr.bf16.mxu0 0
    %291 = vmatmul.mubr.bf16.gmra.mrb[0].mxu0 %v126
    %v292 = vpop.f32.mrb[0].mxu0
    %v293 = vadd.f32 0.0, %v292
    %v294 = vpop.f32.mrb[0].mxu0
    %v295 = vadd.f32 0.0, %v294
    %v296 = vpop.f32.mrb[0].mxu0
    %v297 = vadd.f32 0.0, %v296
    %v298 = vpop.f32.mrb[0].mxu0
    %v299 = vadd.f32 0.0, %v298
    %300 = vmatprep.mubr.bf16.mxu0 0
    %301 = vmatmul.mubr.bf16.gmra.mrb[0].mxu0 %v127
    %v302 = vpop.f32.mrb[0].mxu0
    %v303 = vadd.f32 0.0, %v302
    %v304 = vpop.f32.mrb[0].mxu0
    %v305 = vadd.f32 0.0, %v304
    %v306 = vpop.f32.mrb[0].mxu0
    %v307 = vadd.f32 0.0, %v306
    %v308 = vpop.f32.mrb[0].mxu0
    %v309 = vadd.f32 0.0, %v308
    %310 = vmatprep.mubr.bf16.mxu0 0
    %311 = vmatmul.mubr.bf16.gmra.mrb[0].mxu0 %v128
    %v312 = vpop.f32.mrb[0].mxu0
    %v313 = vadd.f32 0.0, %v312
    %v314 = vpop.f32.mrb[0].mxu0
    %v315 = vadd.f32 0.0, %v314
    %v316 = vpop.f32.mrb[0].mxu0
    %v317 = vadd.f32 0.0, %v316
    %v318 = vpop.f32.mrb[0].mxu0
    %v319 = vadd.f32 0.0, %v318
    %320 = vmatprep.mubr.bf16.mxu0 0
    %321 = vmatmul.mubr.bf16.gmra.mrb[0].mxu0 %v129
    %v322 = vpop.f32.mrb[0].mxu0
    %v323 = vadd.f32 0.0, %v322
    %v324 = vpop.f32.mrb[0].mxu0
    %v325 = vadd.f32 0.0, %v324
    %v326 = vpop.f32.mrb[0].mxu0
    %v327 = vadd.f32 0.0, %v326
    %v328 = vpop.f32.mrb[0].mxu0
    %v329 = vadd.f32 0.0, %v328
    %330 = vdwg.mxu0
    %v331 = vpack.c.bf16 %v257, %v253
    %v332 = vpack.c.bf16 %v259, %v255
    %v333 = vpack.c.bf16 %v267, %v263
    %v334 = vpack.c.bf16 %v269, %v265
    %v335 = vpack.c.bf16 %v277, %v273
    %v336 = vpack.c.bf16 %v279, %v275
    %v337 = vpack.c.bf16 %v287, %v283
    %v338 = vpack.c.bf16 %v289, %v285
    %v339 = vpack.c.bf16 %v297, %v293
    %v340 = vpack.c.bf16 %v299, %v295
    %v341 = vpack.c.bf16 %v307, %v303
    %v342 = vpack.c.bf16 %v309, %v305
    %v343 = vpack.c.bf16 %v317, %v313
    %v344 = vpack.c.bf16 %v319, %v315
    %v345 = vpack.c.bf16 %v327, %v323
    %v346 = vpack.c.bf16 %v329, %v325
    %s347 = scalar_lea.vmem %s11, 64
    %v348 = vld [vmem:[%s347] sm:$0xf]
    %v349 = vld [vmem:[%s347 + $0x4] sm:$0xf]
    %v350 = vld [vmem:[%s347 + $0x8] sm:$0xf]
    %v351 = vld [vmem:[%s347 + $0xc] sm:$0xf]
    %v352 = vld [vmem:[%s347 + $0x10] sm:$0xf]
    %v353 = vld [vmem:[%s347 + $0x14] sm:$0xf]
    %v354 = vld [vmem:[%s347 + $0x18] sm:$0xf]
    %v355 = vld [vmem:[%s347 + $0x1c] sm:$0xf]
    %v356 = vld [vmem:[%s347 + $0x20] sm:$0xf]
    %v357 = vld [vmem:[%s347 + $0x24] sm:$0xf]
    %v358 = vld [vmem:[%s347 + $0x28] sm:$0xf]
    %v359 = vld [vmem:[%s347 + $0x2c] sm:$0xf]
    %v360 = vld [vmem:[%s347 + $0x30] sm:$0xf]
    %v361 = vld [vmem:[%s347 + $0x34] sm:$0xf]
    %v362 = vld [vmem:[%s347 + $0x38] sm:$0xf]
    %v363 = vld [vmem:[%s347 + $0x3c] sm:$0xf]
    %v380 = vunpack.c.l.b16 %v348
    %v381 = vunpack.c.l.b16 %v349
    %v382 = vunpack.c.l.b16 %v350
    %v383 = vunpack.c.l.b16 %v351
    %v384 = vunpack.c.l.b16 %v352
    %v385 = vunpack.c.l.b16 %v353
    %v386 = vunpack.c.l.b16 %v354
    %v387 = vunpack.c.l.b16 %v355
    %v388 = vunpack.c.l.b16 %v356
    %v389 = vunpack.c.l.b16 %v357
    %v390 = vunpack.c.l.b16 %v358
    %v391 = vunpack.c.l.b16 %v359
    %v392 = vunpack.c.l.b16 %v360
    %v393 = vunpack.c.l.b16 %v361
    %v394 = vunpack.c.l.b16 %v362
    %v395 = vunpack.c.l.b16 %v363
    %v396 = vpack.c.b16 %v381, %v380
    %v397 = vpack.c.b16 %v383, %v382
    %v398 = vpack.c.b16 %v385, %v384
    %v399 = vpack.c.b16 %v387, %v386
    %v400 = vpack.c.b16 %v389, %v388
    %v401 = vpack.c.b16 %v391, %v390
    %v402 = vpack.c.b16 %v393, %v392
    %v403 = vpack.c.b16 %v395, %v394
    %412 = vmatprep.subr.bf16.mxu0 %v187
    %413 = vmatpush1.bf16.msra.mxu0 %v186
    %414 = vmatprep.subr.bf16.mxu0 %v189
    %415 = vmatpush1.bf16.msra.mxu0 %v188
    %416 = vmatprep.subr.bf16.mxu0 %v191
    %417 = vmatpush1.bf16.msra.mxu0 %v190
    %418 = vmatprep.subr.bf16.mxu0 %v193
    %419 = vmatpush1.bf16.msra.mxu0 %v192
    %420 = vmatprep.subr.bf16.mxu0 %v195
    %421 = vmatpush1.bf16.msra.mxu0 %v194
    %422 = vmatprep.subr.bf16.mxu0 %v197
    %423 = vmatpush1.bf16.msra.mxu0 %v196
    %424 = vmatprep.subr.bf16.mxu0 %v199
    %425 = vmatpush1.bf16.msra.mxu0 %v198
    %426 = vmatprep.subr.bf16.mxu0 %v201
    %427 = vmatpush1.bf16.msra.mxu0 %v200
    %428 = vmatprep.subr.bf16.mxu0 0
    %429 = vmatpush1.bf16.msra.mxu0 0
    %430 = vmatprep.subr.bf16.mxu0 0
    %431 = vmatpush1.bf16.msra.mxu0 0
    %432 = vmatprep.subr.bf16.mxu0 0
    %433 = vmatpush1.bf16.msra.mxu0 0
    %434 = vmatprep.subr.bf16.mxu0 0
    %435 = vmatpush1.bf16.msra.mxu0 0
    %436 = vmatprep.subr.bf16.mxu0 0
    %437 = vmatpush1.bf16.msra.mxu0 0
    %438 = vmatprep.subr.bf16.mxu0 0
    %439 = vmatpush1.bf16.msra.mxu0 0
    %440 = vmatprep.subr.bf16.mxu0 0
    %441 = vmatpush1.bf16.msra.mxu0 0
    %442 = vmatprep.subr.bf16.mxu0 0
    %443 = vmatpush1.bf16.msra.mxu0 0
    %444 = vmatprep.mubr.bf16.mxu0 0
    %445 = vmatmul.mubr.bf16.gmra.mrb[0].mxu0 %v396
    %v446 = vpop.f32.mrb[0].mxu0
    %v447 = vadd.f32 0.0, %v446
    %v448 = vpop.f32.mrb[0].mxu0
    %v449 = vadd.f32 0.0, %v448
    %v450 = vpop.f32.mrb[0].mxu0
    %v451 = vadd.f32 0.0, %v450
    %v452 = vpop.f32.mrb[0].mxu0
    %v453 = vadd.f32 0.0, %v452
    %454 = vmatprep.mubr.bf16.mxu0 0
    %455 = vmatmul.mubr.bf16.gmra.mrb[0].mxu0 %v397
    %v456 = vpop.f32.mrb[0].mxu0
    %v457 = vadd.f32 0.0, %v456
    %v458 = vpop.f32.mrb[0].mxu0
    %v459 = vadd.f32 0.0, %v458
    %v460 = vpop.f32.mrb[0].mxu0
    %v461 = vadd.f32 0.0, %v460
    %v462 = vpop.f32.mrb[0].mxu0
    %v463 = vadd.f32 0.0, %v462
    %464 = vmatprep.mubr.bf16.mxu0 0
    %465 = vmatmul.mubr.bf16.gmra.mrb[0].mxu0 %v398
    %v466 = vpop.f32.mrb[0].mxu0
    %v467 = vadd.f32 0.0, %v466
    %v468 = vpop.f32.mrb[0].mxu0
    %v469 = vadd.f32 0.0, %v468
    %v470 = vpop.f32.mrb[0].mxu0
    %v471 = vadd.f32 0.0, %v470
    %v472 = vpop.f32.mrb[0].mxu0
    %v473 = vadd.f32 0.0, %v472
    %474 = vmatprep.mubr.bf16.mxu0 0
    %475 = vmatmul.mubr.bf16.gmra.mrb[0].mxu0 %v399
    %v476 = vpop.f32.mrb[0].mxu0
    %v477 = vadd.f32 0.0, %v476
    %v478 = vpop.f32.mrb[0].mxu0
    %v479 = vadd.f32 0.0, %v478
    %v480 = vpop.f32.mrb[0].mxu0
    %v481 = vadd.f32 0.0, %v480
    %v482 = vpop.f32.mrb[0].mxu0
    %v483 = vadd.f32 0.0, %v482
    %484 = vmatprep.mubr.bf16.mxu0 0
    %485 = vmatmul.mubr.bf16.gmra.mrb[0].mxu0 %v400
    %v486 = vpop.f32.mrb[0].mxu0
    %v487 = vadd.f32 0.0, %v486
    %v488 = vpop.f32.mrb[0].mxu0
    %v489 = vadd.f32 0.0, %v488
    %v490 = vpop.f32.mrb[0].mxu0
    %v491 = vadd.f32 0.0, %v490
    %v492 = vpop.f32.mrb[0].mxu0
    %v493 = vadd.f32 0.0, %v492
    %494 = vmatprep.mubr.bf16.mxu0 0
    %495 = vmatmul.mubr.bf16.gmra.mrb[0].mxu0 %v401
    %v496 = vpop.f32.mrb[0].mxu0
    %v497 = vadd.f32 0.0, %v496
    %v498 = vpop.f32.mrb[0].mxu0
    %v499 = vadd.f32 0.0, %v498
    %v500 = vpop.f32.mrb[0].mxu0
    %v501 = vadd.f32 0.0, %v500
    %v502 = vpop.f32.mrb[0].mxu0
    %v503 = vadd.f32 0.0, %v502
    %504 = vmatprep.mubr.bf16.mxu0 0
    %505 = vmatmul.mubr.bf16.gmra.mrb[0].mxu0 %v402
    %v506 = vpop.f32.mrb[0].mxu0
    %v507 = vadd.f32 0.0, %v506
    %v508 = vpop.f32.mrb[0].mxu0
    %v509 = vadd.f32 0.0, %v508
    %v510 = vpop.f32.mrb[0].mxu0
    %v511 = vadd.f32 0.0, %v510
    %v512 = vpop.f32.mrb[0].mxu0
    %v513 = vadd.f32 0.0, %v512
    %514 = vmatprep.mubr.bf16.mxu0 0
    %515 = vmatmul.mubr.bf16.gmra.mrb[0].mxu0 %v403
    %v516 = vpop.f32.mrb[0].mxu0
    %v517 = vadd.f32 0.0, %v516
    %v518 = vpop.f32.mrb[0].mxu0
    %v519 = vadd.f32 0.0, %v518
    %v520 = vpop.f32.mrb[0].mxu0
    %v521 = vadd.f32 0.0, %v520
    %v522 = vpop.f32.mrb[0].mxu0
    %v523 = vadd.f32 0.0, %v522
    %524 = vdwg.mxu0
    %v525 = vpack.c.bf16 %v451, %v447
    %v526 = vpack.c.bf16 %v453, %v449
    %v527 = vpack.c.bf16 %v461, %v457
    %v528 = vpack.c.bf16 %v463, %v459
    %v529 = vpack.c.bf16 %v471, %v467
    %v530 = vpack.c.bf16 %v473, %v469
    %v531 = vpack.c.bf16 %v481, %v477
    %v532 = vpack.c.bf16 %v483, %v479
    %v533 = vpack.c.bf16 %v491, %v487
    %v534 = vpack.c.bf16 %v493, %v489
    %v535 = vpack.c.bf16 %v501, %v497
    %v536 = vpack.c.bf16 %v503, %v499
    %v537 = vpack.c.bf16 %v511, %v507
    %v538 = vpack.c.bf16 %v513, %v509
    %v539 = vpack.c.bf16 %v521, %v517
    %v540 = vpack.c.bf16 %v523, %v519
    %v541 = vld [vmem:[%s1] sm:$0xff]
    %v542 = vld [vmem:[%s1 + $0x8] sm:$0xff]
    %v543 = vld [vmem:[%s1 + $0x10] sm:$0xff]
    %v544 = vld [vmem:[%s1 + $0x18] sm:$0xff]
    %v545 = vld [vmem:[%s1 + $0x20] sm:$0xff]
    %v546 = vld [vmem:[%s1 + $0x28] sm:$0xff]
    %v547 = vld [vmem:[%s1 + $0x30] sm:$0xff]
    %v548 = vld [vmem:[%s1 + $0x38] sm:$0xff]
    %v549 = vld [vmem:[%s1 + $0x40] sm:$0xff]
    %v550 = vld [vmem:[%s1 + $0x48] sm:$0xff]
    %v551 = vld [vmem:[%s1 + $0x50] sm:$0xff]
    %v552 = vld [vmem:[%s1 + $0x58] sm:$0xff]
    %v553 = vld [vmem:[%s1 + $0x60] sm:$0xff]
    %v554 = vld [vmem:[%s1 + $0x68] sm:$0xff]
    %v555 = vld [vmem:[%s1 + $0x70] sm:$0xff]
    %v556 = vld [vmem:[%s1 + $0x78] sm:$0xff]
    %v557 = vld [vmem:[%s1 + $0x80] sm:$0xff]
    %v558 = vld [vmem:[%s1 + $0x88] sm:$0xff]
    %v559 = vld [vmem:[%s1 + $0x90] sm:$0xff]
    %v560 = vld [vmem:[%s1 + $0x98] sm:$0xff]
    %v561 = vld [vmem:[%s1 + $0xa0] sm:$0xff]
    %v562 = vld [vmem:[%s1 + $0xa8] sm:$0xff]
    %v563 = vld [vmem:[%s1 + $0xb0] sm:$0xff]
    %v564 = vld [vmem:[%s1 + $0xb8] sm:$0xff]
    %v565 = vld [vmem:[%s1 + $0xc0] sm:$0xff]
    %v566 = vld [vmem:[%s1 + $0xc8] sm:$0xff]
    %v567 = vld [vmem:[%s1 + $0xd0] sm:$0xff]
    %v568 = vld [vmem:[%s1 + $0xd8] sm:$0xff]
    %v569 = vld [vmem:[%s1 + $0xe0] sm:$0xff]
    %v570 = vld [vmem:[%s1 + $0xe8] sm:$0xff]
    %v571 = vld [vmem:[%s1 + $0xf0] sm:$0xff]
    %v572 = vld [vmem:[%s1 + $0xf8] sm:$0xff]
    %v573 = vld [vmem:[%s1 + $0x100] sm:$0xff]
    %v574 = vld [vmem:[%s1 + $0x108] sm:$0xff]
    %v575 = vld [vmem:[%s1 + $0x110] sm:$0xff]
    %v576 = vld [vmem:[%s1 + $0x118] sm:$0xff]
    %v577 = vld [vmem:[%s1 + $0x120] sm:$0xff]
    %v578 = vld [vmem:[%s1 + $0x128] sm:$0xff]
    %v579 = vld [vmem:[%s1 + $0x130] sm:$0xff]
    %v580 = vld [vmem:[%s1 + $0x138] sm:$0xff]
    %v581 = vld [vmem:[%s1 + $0x140] sm:$0xff]
    %v582 = vld [vmem:[%s1 + $0x148] sm:$0xff]
    %v583 = vld [vmem:[%s1 + $0x150] sm:$0xff]
    %v584 = vld [vmem:[%s1 + $0x158] sm:$0xff]
    %v585 = vld [vmem:[%s1 + $0x160] sm:$0xff]
    %v586 = vld [vmem:[%s1 + $0x168] sm:$0xff]
    %v587 = vld [vmem:[%s1 + $0x170] sm:$0xff]
    %v588 = vld [vmem:[%s1 + $0x178] sm:$0xff]
    %v589 = vld [vmem:[%s1 + $0x180] sm:$0xff]
    %v590 = vld [vmem:[%s1 + $0x188] sm:$0xff]
    %v591 = vld [vmem:[%s1 + $0x190] sm:$0xff]
    %v592 = vld [vmem:[%s1 + $0x198] sm:$0xff]
    %v593 = vld [vmem:[%s1 + $0x1a0] sm:$0xff]
    %v594 = vld [vmem:[%s1 + $0x1a8] sm:$0xff]
    %v595 = vld [vmem:[%s1 + $0x1b0] sm:$0xff]
    %v596 = vld [vmem:[%s1 + $0x1b8] sm:$0xff]
    %v597 = vld [vmem:[%s1 + $0x1c0] sm:$0xff]
    %v598 = vld [vmem:[%s1 + $0x1c8] sm:$0xff]
    %v599 = vld [vmem:[%s1 + $0x1d0] sm:$0xff]
    %v600 = vld [vmem:[%s1 + $0x1d8] sm:$0xff]
    %v601 = vld [vmem:[%s1 + $0x1e0] sm:$0xff]
    %v602 = vld [vmem:[%s1 + $0x1e8] sm:$0xff]
    %v603 = vld [vmem:[%s1 + $0x1f0] sm:$0xff]
    %v604 = vld [vmem:[%s1 + $0x1f8] sm:$0xff]
    %s605 = scalar_lea.vmem %s1, 512
    %v606 = vld [vmem:[%s605] sm:$0xff]
    %v607 = vld [vmem:[%s605 + $0x8] sm:$0xff]
    %v608 = vld [vmem:[%s605 + $0x10] sm:$0xff]
    %v609 = vld [vmem:[%s605 + $0x18] sm:$0xff]
    %v610 = vld [vmem:[%s605 + $0x20] sm:$0xff]
    %v611 = vld [vmem:[%s605 + $0x28] sm:$0xff]
    %v612 = vld [vmem:[%s605 + $0x30] sm:$0xff]
    %v613 = vld [vmem:[%s605 + $0x38] sm:$0xff]
    %v614 = vld [vmem:[%s605 + $0x40] sm:$0xff]
    %v615 = vld [vmem:[%s605 + $0x48] sm:$0xff]
    %v616 = vld [vmem:[%s605 + $0x50] sm:$0xff]
    %v617 = vld [vmem:[%s605 + $0x58] sm:$0xff]
    %v618 = vld [vmem:[%s605 + $0x60] sm:$0xff]
    %v619 = vld [vmem:[%s605 + $0x68] sm:$0xff]
    %v620 = vld [vmem:[%s605 + $0x70] sm:$0xff]
    %v621 = vld [vmem:[%s605 + $0x78] sm:$0xff]
    %v622 = vld [vmem:[%s605 + $0x80] sm:$0xff]
    %v623 = vld [vmem:[%s605 + $0x88] sm:$0xff]
    %v624 = vld [vmem:[%s605 + $0x90] sm:$0xff]
    %v625 = vld [vmem:[%s605 + $0x98] sm:$0xff]
    %v626 = vld [vmem:[%s605 + $0xa0] sm:$0xff]
    %v627 = vld [vmem:[%s605 + $0xa8] sm:$0xff]
    %v628 = vld [vmem:[%s605 + $0xb0] sm:$0xff]
    %v629 = vld [vmem:[%s605 + $0xb8] sm:$0xff]
    %v630 = vld [vmem:[%s605 + $0xc0] sm:$0xff]
    %v631 = vld [vmem:[%s605 + $0xc8] sm:$0xff]
    %v632 = vld [vmem:[%s605 + $0xd0] sm:$0xff]
    %v633 = vld [vmem:[%s605 + $0xd8] sm:$0xff]
    %v634 = vld [vmem:[%s605 + $0xe0] sm:$0xff]
    %v635 = vld [vmem:[%s605 + $0xe8] sm:$0xff]
    %v636 = vld [vmem:[%s605 + $0xf0] sm:$0xff]
    %v637 = vld [vmem:[%s605 + $0xf8] sm:$0xff]
    %v638 = vld [vmem:[%s605 + $0x100] sm:$0xff]
    %v639 = vld [vmem:[%s605 + $0x108] sm:$0xff]
    %v640 = vld [vmem:[%s605 + $0x110] sm:$0xff]
    %v641 = vld [vmem:[%s605 + $0x118] sm:$0xff]
    %v642 = vld [vmem:[%s605 + $0x120] sm:$0xff]
    %v643 = vld [vmem:[%s605 + $0x128] sm:$0xff]
    %v644 = vld [vmem:[%s605 + $0x130] sm:$0xff]
    %v645 = vld [vmem:[%s605 + $0x138] sm:$0xff]
    %v646 = vld [vmem:[%s605 + $0x140] sm:$0xff]
    %v647 = vld [vmem:[%s605 + $0x148] sm:$0xff]
    %v648 = vld [vmem:[%s605 + $0x150] sm:$0xff]
    %v649 = vld [vmem:[%s605 + $0x158] sm:$0xff]
    %v650 = vld [vmem:[%s605 + $0x160] sm:$0xff]
    %v651 = vld [vmem:[%s605 + $0x168] sm:$0xff]
    %v652 = vld [vmem:[%s605 + $0x170] sm:$0xff]
    %v653 = vld [vmem:[%s605 + $0x178] sm:$0xff]
    %v654 = vld [vmem:[%s605 + $0x180] sm:$0xff]
    %v655 = vld [vmem:[%s605 + $0x188] sm:$0xff]
    %v656 = vld [vmem:[%s605 + $0x190] sm:$0xff]
    %v657 = vld [vmem:[%s605 + $0x198] sm:$0xff]
    %v658 = vld [vmem:[%s605 + $0x1a0] sm:$0xff]
    %v659 = vld [vmem:[%s605 + $0x1a8] sm:$0xff]
    %v660 = vld [vmem:[%s605 + $0x1b0] sm:$0xff]
    %v661 = vld [vmem:[%s605 + $0x1b8] sm:$0xff]
    %v662 = vld [vmem:[%s605 + $0x1c0] sm:$0xff]
    %v663 = vld [vmem:[%s605 + $0x1c8] sm:$0xff]
    %v664 = vld [vmem:[%s605 + $0x1d0] sm:$0xff]
    %v665 = vld [vmem:[%s605 + $0x1d8] sm:$0xff]
    %v666 = vld [vmem:[%s605 + $0x1e0] sm:$0xff]
    %v667 = vld [vmem:[%s605 + $0x1e8] sm:$0xff]
    %v668 = vld [vmem:[%s605 + $0x1f0] sm:$0xff]
    %v669 = vld [vmem:[%s605 + $0x1f8] sm:$0xff]
    %v734 = vunpack.c.l.b16 %v606
    %v735 = vunpack.c.h.b16 %v606
    %v736 = vunpack.c.l.b16 %v607
    %v737 = vunpack.c.h.b16 %v607
    %v738 = vunpack.c.l.b16 %v608
    %v739 = vunpack.c.h.b16 %v608
    %v740 = vunpack.c.l.b16 %v609
    %v741 = vunpack.c.h.b16 %v609
    %v742 = vunpack.c.l.b16 %v610
    %v743 = vunpack.c.h.b16 %v610
    %v744 = vunpack.c.l.b16 %v611
    %v745 = vunpack.c.h.b16 %v611
    %v746 = vunpack.c.l.b16 %v612
    %v747 = vunpack.c.h.b16 %v612
    %v748 = vunpack.c.l.b16 %v613
    %v749 = vunpack.c.h.b16 %v613
    %v750 = vunpack.c.l.b16 %v614
    %v751 = vunpack.c.h.b16 %v614
    %v752 = vunpack.c.l.b16 %v615
    %v753 = vunpack.c.h.b16 %v615
    %v754 = vunpack.c.l.b16 %v616
    %v755 = vunpack.c.h.b16 %v616
    %v756 = vunpack.c.l.b16 %v617
    %v757 = vunpack.c.h.b16 %v617
    %v758 = vunpack.c.l.b16 %v618
    %v759 = vunpack.c.h.b16 %v618
    %v760 = vunpack.c.l.b16 %v619
    %v761 = vunpack.c.h.b16 %v619
    %v762 = vunpack.c.l.b16 %v620
    %v763 = vunpack.c.h.b16 %v620
    %v764 = vunpack.c.l.b16 %v621
    %v765 = vunpack.c.h.b16 %v621
    %v766 = vunpack.c.l.b16 %v622
    %v767 = vunpack.c.h.b16 %v622
    %v768 = vunpack.c.l.b16 %v623
    %v769 = vunpack.c.h.b16 %v623
    %v770 = vunpack.c.l.b16 %v624
    %v771 = vunpack.c.h.b16 %v624
    %v772 = vunpack.c.l.b16 %v625
    %v773 = vunpack.c.h.b16 %v625
    %v774 = vunpack.c.l.b16 %v626
    %v775 = vunpack.c.h.b16 %v626
    %v776 = vunpack.c.l.b16 %v627
    %v777 = vunpack.c.h.b16 %v627
    %v778 = vunpack.c.l.b16 %v628
    %v779 = vunpack.c.h.b16 %v628
    %v780 = vunpack.c.l.b16 %v629
    %v781 = vunpack.c.h.b16 %v629
    %v782 = vunpack.c.l.b16 %v630
    %v783 = vunpack.c.h.b16 %v630
    %v784 = vunpack.c.l.b16 %v631
    %v785 = vunpack.c.h.b16 %v631
    %v786 = vunpack.c.l.b16 %v632
    %v787 = vunpack.c.h.b16 %v632
    %v788 = vunpack.c.l.b16 %v633
    %v789 = vunpack.c.h.b16 %v633
    %v790 = vunpack.c.l.b16 %v634
    %v791 = vunpack.c.h.b16 %v634
    %v792 = vunpack.c.l.b16 %v635
    %v793 = vunpack.c.h.b16 %v635
    %v794 = vunpack.c.l.b16 %v636
    %v795 = vunpack.c.h.b16 %v636
    %v796 = vunpack.c.l.b16 %v637
    %v797 = vunpack.c.h.b16 %v637
    %v798 = vunpack.c.l.b16 %v638
    %v799 = vunpack.c.h.b16 %v638
    %v800 = vunpack.c.l.b16 %v639
    %v801 = vunpack.c.h.b16 %v639
    %v802 = vunpack.c.l.b16 %v640
    %v803 = vunpack.c.h.b16 %v640
    %v804 = vunpack.c.l.b16 %v641
    %v805 = vunpack.c.h.b16 %v641
    %v806 = vunpack.c.l.b16 %v642
    %v807 = vunpack.c.h.b16 %v642
    %v808 = vunpack.c.l.b16 %v643
    %v809 = vunpack.c.h.b16 %v643
    %v810 = vunpack.c.l.b16 %v644
    %v811 = vunpack.c.h.b16 %v644
    %v812 = vunpack.c.l.b16 %v645
    %v813 = vunpack.c.h.b16 %v645
    %v814 = vunpack.c.l.b16 %v646
    %v815 = vunpack.c.h.b16 %v646
    %v816 = vunpack.c.l.b16 %v647
    %v817 = vunpack.c.h.b16 %v647
    %v818 = vunpack.c.l.b16 %v648
    %v819 = vunpack.c.h.b16 %v648
    %v820 = vunpack.c.l.b16 %v649
    %v821 = vunpack.c.h.b16 %v649
    %v822 = vunpack.c.l.b16 %v650
    %v823 = vunpack.c.h.b16 %v650
    %v824 = vunpack.c.l.b16 %v651
    %v825 = vunpack.c.h.b16 %v651
    %v826 = vunpack.c.l.b16 %v652
    %v827 = vunpack.c.h.b16 %v652
    %v828 = vunpack.c.l.b16 %v653
    %v829 = vunpack.c.h.b16 %v653
    %v830 = vunpack.c.l.b16 %v654
    %v831 = vunpack.c.h.b16 %v654
    %v832 = vunpack.c.l.b16 %v655
    %v833 = vunpack.c.h.b16 %v655
    %v834 = vunpack.c.l.b16 %v656
    %v835 = vunpack.c.h.b16 %v656
    %v836 = vunpack.c.l.b16 %v657
    %v837 = vunpack.c.h.b16 %v657
    %v838 = vunpack.c.l.b16 %v658
    %v839 = vunpack.c.h.b16 %v658
    %v840 = vunpack.c.l.b16 %v659
    %v841 = vunpack.c.h.b16 %v659
    %v842 = vunpack.c.l.b16 %v660
    %v843 = vunpack.c.h.b16 %v660
    %v844 = vunpack.c.l.b16 %v661
    %v845 = vunpack.c.h.b16 %v661
    %v846 = vunpack.c.l.b16 %v662
    %v847 = vunpack.c.h.b16 %v662
    %v848 = vunpack.c.l.b16 %v663
    %v849 = vunpack.c.h.b16 %v663
    %v850 = vunpack.c.l.b16 %v664
    %v851 = vunpack.c.h.b16 %v664
    %v852 = vunpack.c.l.b16 %v665
    %v853 = vunpack.c.h.b16 %v665
    %v854 = vunpack.c.l.b16 %v666
    %v855 = vunpack.c.h.b16 %v666
    %v856 = vunpack.c.l.b16 %v667
    %v857 = vunpack.c.h.b16 %v667
    %v858 = vunpack.c.l.b16 %v668
    %v859 = vunpack.c.h.b16 %v668
    %v860 = vunpack.c.l.b16 %v669
    %v861 = vunpack.c.h.b16 %v669
    %v862 = vpack.c.b16 %v738, %v734
    %v863 = vpack.c.b16 %v739, %v735
    %v864 = vpack.c.b16 %v740, %v736
    %v865 = vpack.c.b16 %v741, %v737
    %v866 = vpack.c.b16 %v746, %v742
    %v867 = vpack.c.b16 %v747, %v743
    %v868 = vpack.c.b16 %v748, %v744
    %v869 = vpack.c.b16 %v749, %v745
    %v870 = vpack.c.b16 %v754, %v750
    %v871 = vpack.c.b16 %v755, %v751
    %v872 = vpack.c.b16 %v756, %v752
    %v873 = vpack.c.b16 %v757, %v753
    %v874 = vpack.c.b16 %v762, %v758
    %v875 = vpack.c.b16 %v763, %v759
    %v876 = vpack.c.b16 %v764, %v760
    %v877 = vpack.c.b16 %v765, %v761
    %v878 = vpack.c.b16 %v770, %v766
    %v879 = vpack.c.b16 %v771, %v767
    %v880 = vpack.c.b16 %v772, %v768
    %v881 = vpack.c.b16 %v773, %v769
    %v882 = vpack.c.b16 %v778, %v774
    %v883 = vpack.c.b16 %v779, %v775
    %v884 = vpack.c.b16 %v780, %v776
    %v885 = vpack.c.b16 %v781, %v777
    %v886 = vpack.c.b16 %v786, %v782
    %v887 = vpack.c.b16 %v787, %v783
    %v888 = vpack.c.b16 %v788, %v784
    %v889 = vpack.c.b16 %v789, %v785
    %v890 = vpack.c.b16 %v794, %v790
    %v891 = vpack.c.b16 %v795, %v791
    %v892 = vpack.c.b16 %v796, %v792
    %v893 = vpack.c.b16 %v797, %v793
    %v894 = vpack.c.b16 %v802, %v798
    %v895 = vpack.c.b16 %v803, %v799
    %v896 = vpack.c.b16 %v804, %v800
    %v897 = vpack.c.b16 %v805, %v801
    %v898 = vpack.c.b16 %v810, %v806
    %v899 = vpack.c.b16 %v811, %v807
    %v900 = vpack.c.b16 %v812, %v808
    %v901 = vpack.c.b16 %v813, %v809
    %v902 = vpack.c.b16 %v818, %v814
    %v903 = vpack.c.b16 %v819, %v815
    %v904 = vpack.c.b16 %v820, %v816
    %v905 = vpack.c.b16 %v821, %v817
    %v906 = vpack.c.b16 %v826, %v822
    %v907 = vpack.c.b16 %v827, %v823
    %v908 = vpack.c.b16 %v828, %v824
    %v909 = vpack.c.b16 %v829, %v825
    %v910 = vpack.c.b16 %v834, %v830
    %v911 = vpack.c.b16 %v835, %v831
    %v912 = vpack.c.b16 %v836, %v832
    %v913 = vpack.c.b16 %v837, %v833
    %v914 = vpack.c.b16 %v842, %v838
    %v915 = vpack.c.b16 %v843, %v839
    %v916 = vpack.c.b16 %v844, %v840
    %v917 = vpack.c.b16 %v845, %v841
    %v918 = vpack.c.b16 %v850, %v846
    %v919 = vpack.c.b16 %v851, %v847
    %v920 = vpack.c.b16 %v852, %v848
    %v921 = vpack.c.b16 %v853, %v849
    %v922 = vpack.c.b16 %v858, %v854
    %v923 = vpack.c.b16 %v859, %v855
    %v924 = vpack.c.b16 %v860, %v856
    %v925 = vpack.c.b16 %v861, %v857
    %990 = vmatprep.subr.bf16.mxu0 %v863
    %991 = vmatpush1.bf16.msra.mxu0 %v862
    %992 = vmatprep.subr.bf16.mxu0 %v867
    %993 = vmatpush1.bf16.msra.mxu0 %v866
    %994 = vmatprep.subr.bf16.mxu0 %v871
    %995 = vmatpush1.bf16.msra.mxu0 %v870
    %996 = vmatprep.subr.bf16.mxu0 %v875
    %997 = vmatpush1.bf16.msra.mxu0 %v874
    %998 = vmatprep.subr.bf16.mxu0 %v879
    %999 = vmatpush1.bf16.msra.mxu0 %v878
    %1000 = vmatprep.subr.bf16.mxu0 %v883
    %1001 = vmatpush1.bf16.msra.mxu0 %v882
    %1002 = vmatprep.subr.bf16.mxu0 %v887
    %1003 = vmatpush1.bf16.msra.mxu0 %v886
    %1004 = vmatprep.subr.bf16.mxu0 %v891
    %1005 = vmatpush1.bf16.msra.mxu0 %v890
    %1006 = vmatprep.subr.bf16.mxu0 %v895
    %1007 = vmatpush1.bf16.msra.mxu0 %v894
    %1008 = vmatprep.subr.bf16.mxu0 %v899
    %1009 = vmatpush1.bf16.msra.mxu0 %v898
    %1010 = vmatprep.subr.bf16.mxu0 %v903
    %1011 = vmatpush1.bf16.msra.mxu0 %v902
    %1012 = vmatprep.subr.bf16.mxu0 %v907
    %1013 = vmatpush1.bf16.msra.mxu0 %v906
    %1014 = vmatprep.subr.bf16.mxu0 %v911
    %1015 = vmatpush1.bf16.msra.mxu0 %v910
    %1016 = vmatprep.subr.bf16.mxu0 %v915
    %1017 = vmatpush1.bf16.msra.mxu0 %v914
    %1018 = vmatprep.subr.bf16.mxu0 %v919
    %1019 = vmatpush1.bf16.msra.mxu0 %v918
    %1020 = vmatprep.subr.bf16.mxu0 %v923
    %1021 = vmatpush1.bf16.msra.mxu0 %v922
    %1022 = vmatprep.mubr.bf16.mxu0 %v187
    %1023 = vmatmul.mubr.bf16.gmra.mrb[0].mxu0 %v186
    %v1024 = vpop.f32.mrb[0].mxu0
    %v1025 = vadd.f32 0.0, %v1024
    %v1026 = vpop.f32.mrb[0].mxu0
    %v1027 = vadd.f32 0.0, %v1026
    %v1028 = vpop.f32.mrb[0].mxu0
    %v1029 = vadd.f32 0.0, %v1028
    %v1030 = vpop.f32.mrb[0].mxu0
    %v1031 = vadd.f32 0.0, %v1030
    %1032 = vmatprep.mubr.bf16.mxu0 %v189
    %1033 = vmatmul.mubr.bf16.gmra.mrb[0].mxu0 %v188
    %v1034 = vpop.f32.mrb[0].mxu0
    %v1035 = vadd.f32 0.0, %v1034
    %v1036 = vpop.f32.mrb[0].mxu0
    %v1037 = vadd.f32 0.0, %v1036
    %v1038 = vpop.f32.mrb[0].mxu0
    %v1039 = vadd.f32 0.0, %v1038
    %v1040 = vpop.f32.mrb[0].mxu0
    %v1041 = vadd.f32 0.0, %v1040
    %1042 = vmatprep.mubr.bf16.mxu0 %v191
    %1043 = vmatmul.mubr.bf16.gmra.mrb[0].mxu0 %v190
    %v1044 = vpop.f32.mrb[0].mxu0
    %v1045 = vadd.f32 0.0, %v1044
    %v1046 = vpop.f32.mrb[0].mxu0
    %v1047 = vadd.f32 0.0, %v1046
    %v1048 = vpop.f32.mrb[0].mxu0
    %v1049 = vadd.f32 0.0, %v1048
    %v1050 = vpop.f32.mrb[0].mxu0
    %v1051 = vadd.f32 0.0, %v1050
    %1052 = vmatprep.mubr.bf16.mxu0 %v193
    %1053 = vmatmul.mubr.bf16.gmra.mrb[0].mxu0 %v192
    %v1054 = vpop.f32.mrb[0].mxu0
    %v1055 = vadd.f32 0.0, %v1054
    %v1056 = vpop.f32.mrb[0].mxu0
    %v1057 = vadd.f32 0.0, %v1056
    %v1058 = vpop.f32.mrb[0].mxu0
    %v1059 = vadd.f32 0.0, %v1058
    %v1060 = vpop.f32.mrb[0].mxu0
    %v1061 = vadd.f32 0.0, %v1060
    %1062 = vmatprep.mubr.bf16.mxu0 %v195
    %1063 = vmatmul.mubr.bf16.gmra.mrb[0].mxu0 %v194
    %v1064 = vpop.f32.mrb[0].mxu0
    %v1065 = vadd.f32 0.0, %v1064
    %v1066 = vpop.f32.mrb[0].mxu0
    %v1067 = vadd.f32 0.0, %v1066
    %v1068 = vpop.f32.mrb[0].mxu0
    %v1069 = vadd.f32 0.0, %v1068
    %v1070 = vpop.f32.mrb[0].mxu0
    %v1071 = vadd.f32 0.0, %v1070
    %1072 = vmatprep.mubr.bf16.mxu0 %v197
    %1073 = vmatmul.mubr.bf16.gmra.mrb[0].mxu0 %v196
    %v1074 = vpop.f32.mrb[0].mxu0
    %v1075 = vadd.f32 0.0, %v1074
    %v1076 = vpop.f32.mrb[0].mxu0
    %v1077 = vadd.f32 0.0, %v1076
    %v1078 = vpop.f32.mrb[0].mxu0
    %v1079 = vadd.f32 0.0, %v1078
    %v1080 = vpop.f32.mrb[0].mxu0
    %v1081 = vadd.f32 0.0, %v1080
    %1082 = vmatprep.mubr.bf16.mxu0 %v199
    %1083 = vmatmul.mubr.bf16.gmra.mrb[0].mxu0 %v198
    %v1084 = vpop.f32.mrb[0].mxu0
    %v1085 = vadd.f32 0.0, %v1084
    %v1086 = vpop.f32.mrb[0].mxu0
    %v1087 = vadd.f32 0.0, %v1086
    %v1088 = vpop.f32.mrb[0].mxu0
    %v1089 = vadd.f32 0.0, %v1088
    %v1090 = vpop.f32.mrb[0].mxu0
    %v1091 = vadd.f32 0.0, %v1090
    %1092 = vmatprep.mubr.bf16.mxu0 %v201
    %1093 = vmatmul.mubr.bf16.gmra.mrb[0].mxu0 %v200
    %v1094 = vpop.f32.mrb[0].mxu0
    %v1095 = vadd.f32 0.0, %v1094
    %v1096 = vpop.f32.mrb[0].mxu0
    %v1097 = vadd.f32 0.0, %v1096
    %v1098 = vpop.f32.mrb[0].mxu0
    %v1099 = vadd.f32 0.0, %v1098
    %v1100 = vpop.f32.mrb[0].mxu0
    %v1101 = vadd.f32 0.0, %v1100
    %1102 = vdwg.mxu0
    %1103 = vmatprep.subr.bf16.mxu0 %v865
    %1104 = vmatpush1.bf16.msra.mxu0 %v864
    %1105 = vmatprep.subr.bf16.mxu0 %v869
    %1106 = vmatpush1.bf16.msra.mxu0 %v868
    %1107 = vmatprep.subr.bf16.mxu0 %v873
    %1108 = vmatpush1.bf16.msra.mxu0 %v872
    %1109 = vmatprep.subr.bf16.mxu0 %v877
    %1110 = vmatpush1.bf16.msra.mxu0 %v876
    %1111 = vmatprep.subr.bf16.mxu0 %v881
    %1112 = vmatpush1.bf16.msra.mxu0 %v880
    %1113 = vmatprep.subr.bf16.mxu0 %v885
    %1114 = vmatpush1.bf16.msra.mxu0 %v884
    %1115 = vmatprep.subr.bf16.mxu0 %v889
    %1116 = vmatpush1.bf16.msra.mxu0 %v888
    %1117 = vmatprep.subr.bf16.mxu0 %v893
    %1118 = vmatpush1.bf16.msra.mxu0 %v892
    %1119 = vmatprep.subr.bf16.mxu0 %v897
    %1120 = vmatpush1.bf16.msra.mxu0 %v896
    %1121 = vmatprep.subr.bf16.mxu0 %v901
    %1122 = vmatpush1.bf16.msra.mxu0 %v900
    %1123 = vmatprep.subr.bf16.mxu0 %v905
    %1124 = vmatpush1.bf16.msra.mxu0 %v904
    %1125 = vmatprep.subr.bf16.mxu0 %v909
    %1126 = vmatpush1.bf16.msra.mxu0 %v908
    %1127 = vmatprep.subr.bf16.mxu0 %v913
    %1128 = vmatpush1.bf16.msra.mxu0 %v912
    %1129 = vmatprep.subr.bf16.mxu0 %v917
    %1130 = vmatpush1.bf16.msra.mxu0 %v916
    %1131 = vmatprep.subr.bf16.mxu0 %v921
    %1132 = vmatpush1.bf16.msra.mxu0 %v920
    %1133 = vmatprep.subr.bf16.mxu0 %v925
    %1134 = vmatpush1.bf16.msra.mxu0 %v924
    %1135 = vmatprep.mubr.bf16.mxu0 %v187
    %1136 = vmatmul.mubr.bf16.gmra.mrb[0].mxu0 %v186
    %v1137 = vpop.f32.mrb[0].mxu0
    %v1138 = vadd.f32 0.0, %v1137
    %v1139 = vpop.f32.mrb[0].mxu0
    %v1140 = vadd.f32 0.0, %v1139
    %v1141 = vpop.f32.mrb[0].mxu0
    %v1142 = vadd.f32 0.0, %v1141
    %v1143 = vpop.f32.mrb[0].mxu0
    %v1144 = vadd.f32 0.0, %v1143
    %1145 = vmatprep.mubr.bf16.mxu0 %v189
    %1146 = vmatmul.mubr.bf16.gmra.mrb[0].mxu0 %v188
    %v1147 = vpop.f32.mrb[0].mxu0
    %v1148 = vadd.f32 0.0, %v1147
    %v1149 = vpop.f32.mrb[0].mxu0
    %v1150 = vadd.f32 0.0, %v1149
    %v1151 = vpop.f32.mrb[0].mxu0
    %v1152 = vadd.f32 0.0, %v1151
    %v1153 = vpop.f32.mrb[0].mxu0
    %v1154 = vadd.f32 0.0, %v1153
    %1155 = vmatprep.mubr.bf16.mxu0 %v191
    %1156 = vmatmul.mubr.bf16.gmra.mrb[0].mxu0 %v190
    %v1157 = vpop.f32.mrb[0].mxu0
    %v1158 = vadd.f32 0.0, %v1157
    %v1159 = vpop.f32.mrb[0].mxu0
    %v1160 = vadd.f32 0.0, %v1159
    %v1161 = vpop.f32.mrb[0].mxu0
    %v1162 = vadd.f32 0.0, %v1161
    %v1163 = vpop.f32.mrb[0].mxu0
    %v1164 = vadd.f32 0.0, %v1163
    %1165 = vmatprep.mubr.bf16.mxu0 %v193
    %1166 = vmatmul.mubr.bf16.gmra.mrb[0].mxu0 %v192
    %v1167 = vpop.f32.mrb[0].mxu0
    %v1168 = vadd.f32 0.0, %v1167
    %v1169 = vpop.f32.mrb[0].mxu0
    %v1170 = vadd.f32 0.0, %v1169
    %v1171 = vpop.f32.mrb[0].mxu0
    %v1172 = vadd.f32 0.0, %v1171
    %v1173 = vpop.f32.mrb[0].mxu0
    %v1174 = vadd.f32 0.0, %v1173
    %1175 = vmatprep.mubr.bf16.mxu0 %v195
    %1176 = vmatmul.mubr.bf16.gmra.mrb[0].mxu0 %v194
    %v1177 = vpop.f32.mrb[0].mxu0
    %v1178 = vadd.f32 0.0, %v1177
    %v1179 = vpop.f32.mrb[0].mxu0
    %v1180 = vadd.f32 0.0, %v1179
    %v1181 = vpop.f32.mrb[0].mxu0
    %v1182 = vadd.f32 0.0, %v1181
    %v1183 = vpop.f32.mrb[0].mxu0
    %v1184 = vadd.f32 0.0, %v1183
    %1185 = vmatprep.mubr.bf16.mxu0 %v197
    %1186 = vmatmul.mubr.bf16.gmra.mrb[0].mxu0 %v196
    %v1187 = vpop.f32.mrb[0].mxu0
    %v1188 = vadd.f32 0.0, %v1187
    %v1189 = vpop.f32.mrb[0].mxu0
    %v1190 = vadd.f32 0.0, %v1189
    %v1191 = vpop.f32.mrb[0].mxu0
    %v1192 = vadd.f32 0.0, %v1191
    %v1193 = vpop.f32.mrb[0].mxu0
    %v1194 = vadd.f32 0.0, %v1193
    %1195 = vmatprep.mubr.bf16.mxu0 %v199
    %1196 = vmatmul.mubr.bf16.gmra.mrb[0].mxu0 %v198
    %v1197 = vpop.f32.mrb[0].mxu0
    %v1198 = vadd.f32 0.0, %v1197
    %v1199 = vpop.f32.mrb[0].mxu0
    %v1200 = vadd.f32 0.0, %v1199
    %v1201 = vpop.f32.mrb[0].mxu0
    %v1202 = vadd.f32 0.0, %v1201
    %v1203 = vpop.f32.mrb[0].mxu0
    %v1204 = vadd.f32 0.0, %v1203
    %1205 = vmatprep.mubr.bf16.mxu0 %v201
    %1206 = vmatmul.mubr.bf16.gmra.mrb[0].mxu0 %v200
    %v1207 = vpop.f32.mrb[0].mxu0
    %v1208 = vadd.f32 0.0, %v1207
    %v1209 = vpop.f32.mrb[0].mxu0
    %v1210 = vadd.f32 0.0, %v1209
    %v1211 = vpop.f32.mrb[0].mxu0
    %v1212 = vadd.f32 0.0, %v1211
    %v1213 = vpop.f32.mrb[0].mxu0
    %v1214 = vadd.f32 0.0, %v1213
    %1215 = vdwg.mxu0
    %v1280 = vunpack.c.l.b16 %v541
    %v1281 = vunpack.c.h.b16 %v541
    %v1282 = vunpack.c.l.b16 %v542
    %v1283 = vunpack.c.h.b16 %v542
    %v1284 = vunpack.c.l.b16 %v543
    %v1285 = vunpack.c.h.b16 %v543
    %v1286 = vunpack.c.l.b16 %v544
    %v1287 = vunpack.c.h.b16 %v544
    %v1288 = vunpack.c.l.b16 %v545
    %v1289 = vunpack.c.h.b16 %v545
    %v1290 = vunpack.c.l.b16 %v546
    %v1291 = vunpack.c.h.b16 %v546
    %v1292 = vunpack.c.l.b16 %v547
    %v1293 = vunpack.c.h.b16 %v547
    %v1294 = vunpack.c.l.b16 %v548
    %v1295 = vunpack.c.h.b16 %v548
    %v1296 = vunpack.c.l.b16 %v549
    %v1297 = vunpack.c.h.b16 %v549
    %v1298 = vunpack.c.l.b16 %v550
    %v1299 = vunpack.c.h.b16 %v550
    %v1300 = vunpack.c.l.b16 %v551
    %v1301 = vunpack.c.h.b16 %v551
    %v1302 = vunpack.c.l.b16 %v552
    %v1303 = vunpack.c.h.b16 %v552
    %v1304 = vunpack.c.l.b16 %v553
    %v1305 = vunpack.c.h.b16 %v553
    %v1306 = vunpack.c.l.b16 %v554
    %v1307 = vunpack.c.h.b16 %v554
    %v1308 = vunpack.c.l.b16 %v555
    %v1309 = vunpack.c.h.b16 %v555
    %v1310 = vunpack.c.l.b16 %v556
    %v1311 = vunpack.c.h.b16 %v556
    %v1312 = vunpack.c.l.b16 %v557
    %v1313 = vunpack.c.h.b16 %v557
    %v1314 = vunpack.c.l.b16 %v558
    %v1315 = vunpack.c.h.b16 %v558
    %v1316 = vunpack.c.l.b16 %v559
    %v1317 = vunpack.c.h.b16 %v559
    %v1318 = vunpack.c.l.b16 %v560
    %v1319 = vunpack.c.h.b16 %v560
    %v1320 = vunpack.c.l.b16 %v561
    %v1321 = vunpack.c.h.b16 %v561
    %v1322 = vunpack.c.l.b16 %v562
    %v1323 = vunpack.c.h.b16 %v562
    %v1324 = vunpack.c.l.b16 %v563
    %v1325 = vunpack.c.h.b16 %v563
    %v1326 = vunpack.c.l.b16 %v564
    %v1327 = vunpack.c.h.b16 %v564
    %v1328 = vunpack.c.l.b16 %v565
    %v1329 = vunpack.c.h.b16 %v565
    %v1330 = vunpack.c.l.b16 %v566
    %v1331 = vunpack.c.h.b16 %v566
    %v1332 = vunpack.c.l.b16 %v567
    %v1333 = vunpack.c.h.b16 %v567
    %v1334 = vunpack.c.l.b16 %v568
    %v1335 = vunpack.c.h.b16 %v568
    %v1336 = vunpack.c.l.b16 %v569
    %v1337 = vunpack.c.h.b16 %v569
    %v1338 = vunpack.c.l.b16 %v570
    %v1339 = vunpack.c.h.b16 %v570
    %v1340 = vunpack.c.l.b16 %v571
    %v1341 = vunpack.c.h.b16 %v571
    %v1342 = vunpack.c.l.b16 %v572
    %v1343 = vunpack.c.h.b16 %v572
    %v1344 = vunpack.c.l.b16 %v573
    %v1345 = vunpack.c.h.b16 %v573
    %v1346 = vunpack.c.l.b16 %v574
    %v1347 = vunpack.c.h.b16 %v574
    %v1348 = vunpack.c.l.b16 %v575
    %v1349 = vunpack.c.h.b16 %v575
    %v1350 = vunpack.c.l.b16 %v576
    %v1351 = vunpack.c.h.b16 %v576
    %v1352 = vunpack.c.l.b16 %v577
    %v1353 = vunpack.c.h.b16 %v577
    %v1354 = vunpack.c.l.b16 %v578
    %v1355 = vunpack.c.h.b16 %v578
    %v1356 = vunpack.c.l.b16 %v579
    %v1357 = vunpack.c.h.b16 %v579
    %v1358 = vunpack.c.l.b16 %v580
    %v1359 = vunpack.c.h.b16 %v580
    %v1360 = vunpack.c.l.b16 %v581
    %v1361 = vunpack.c.h.b16 %v581
    %v1362 = vunpack.c.l.b16 %v582
    %v1363 = vunpack.c.h.b16 %v582
    %v1364 = vunpack.c.l.b16 %v583
    %v1365 = vunpack.c.h.b16 %v583
    %v1366 = vunpack.c.l.b16 %v584
    %v1367 = vunpack.c.h.b16 %v584
    %v1368 = vunpack.c.l.b16 %v585
    %v1369 = vunpack.c.h.b16 %v585
    %v1370 = vunpack.c.l.b16 %v586
    %v1371 = vunpack.c.h.b16 %v586
    %v1372 = vunpack.c.l.b16 %v587
    %v1373 = vunpack.c.h.b16 %v587
    %v1374 = vunpack.c.l.b16 %v588
    %v1375 = vunpack.c.h.b16 %v588
    %v1376 = vunpack.c.l.b16 %v589
    %v1377 = vunpack.c.h.b16 %v589
    %v1378 = vunpack.c.l.b16 %v590
    %v1379 = vunpack.c.h.b16 %v590
    %v1380 = vunpack.c.l.b16 %v591
    %v1381 = vunpack.c.h.b16 %v591
    %v1382 = vunpack.c.l.b16 %v592
    %v1383 = vunpack.c.h.b16 %v592
    %v1384 = vunpack.c.l.b16 %v593
    %v1385 = vunpack.c.h.b16 %v593
    %v1386 = vunpack.c.l.b16 %v594
    %v1387 = vunpack.c.h.b16 %v594
    %v1388 = vunpack.c.l.b16 %v595
    %v1389 = vunpack.c.h.b16 %v595
    %v1390 = vunpack.c.l.b16 %v596
    %v1391 = vunpack.c.h.b16 %v596
    %v1392 = vunpack.c.l.b16 %v597
    %v1393 = vunpack.c.h.b16 %v597
    %v1394 = vunpack.c.l.b16 %v598
    %v1395 = vunpack.c.h.b16 %v598
    %v1396 = vunpack.c.l.b16 %v599
    %v1397 = vunpack.c.h.b16 %v599
    %v1398 = vunpack.c.l.b16 %v600
    %v1399 = vunpack.c.h.b16 %v600
    %v1400 = vunpack.c.l.b16 %v601
    %v1401 = vunpack.c.h.b16 %v601
    %v1402 = vunpack.c.l.b16 %v602
    %v1403 = vunpack.c.h.b16 %v602
    %v1404 = vunpack.c.l.b16 %v603
    %v1405 = vunpack.c.h.b16 %v603
    %v1406 = vunpack.c.l.b16 %v604
    %v1407 = vunpack.c.h.b16 %v604
    %v1408 = vpack.c.b16 %v1284, %v1280
    %v1409 = vpack.c.b16 %v1285, %v1281
    %v1410 = vpack.c.b16 %v1286, %v1282
    %v1411 = vpack.c.b16 %v1287, %v1283
    %v1412 = vpack.c.b16 %v1292, %v1288
    %v1413 = vpack.c.b16 %v1293, %v1289
    %v1414 = vpack.c.b16 %v1294, %v1290
    %v1415 = vpack.c.b16 %v1295, %v1291
    %v1416 = vpack.c.b16 %v1300, %v1296
    %v1417 = vpack.c.b16 %v1301, %v1297
    %v1418 = vpack.c.b16 %v1302, %v1298
    %v1419 = vpack.c.b16 %v1303, %v1299
    %v1420 = vpack.c.b16 %v1308, %v1304
    %v1421 = vpack.c.b16 %v1309, %v1305
    %v1422 = vpack.c.b16 %v1310, %v1306
    %v1423 = vpack.c.b16 %v1311, %v1307
    %v1424 = vpack.c.b16 %v1316, %v1312
    %v1425 = vpack.c.b16 %v1317, %v1313
    %v1426 = vpack.c.b16 %v1318, %v1314
    %v1427 = vpack.c.b16 %v1319, %v1315
    %v1428 = vpack.c.b16 %v1324, %v1320
    %v1429 = vpack.c.b16 %v1325, %v1321
    %v1430 = vpack.c.b16 %v1326, %v1322
    %v1431 = vpack.c.b16 %v1327, %v1323
    %v1432 = vpack.c.b16 %v1332, %v1328
    %v1433 = vpack.c.b16 %v1333, %v1329
    %v1434 = vpack.c.b16 %v1334, %v1330
    %v1435 = vpack.c.b16 %v1335, %v1331
    %v1436 = vpack.c.b16 %v1340, %v1336
    %v1437 = vpack.c.b16 %v1341, %v1337
    %v1438 = vpack.c.b16 %v1342, %v1338
    %v1439 = vpack.c.b16 %v1343, %v1339
    %v1440 = vpack.c.b16 %v1348, %v1344
    %v1441 = vpack.c.b16 %v1349, %v1345
    %v1442 = vpack.c.b16 %v1350, %v1346
    %v1443 = vpack.c.b16 %v1351, %v1347
    %v1444 = vpack.c.b16 %v1356, %v1352
    %v1445 = vpack.c.b16 %v1357, %v1353
    %v1446 = vpack.c.b16 %v1358, %v1354
    %v1447 = vpack.c.b16 %v1359, %v1355
    %v1448 = vpack.c.b16 %v1364, %v1360
    %v1449 = vpack.c.b16 %v1365, %v1361
    %v1450 = vpack.c.b16 %v1366, %v1362
    %v1451 = vpack.c.b16 %v1367, %v1363
    %v1452 = vpack.c.b16 %v1372, %v1368
    %v1453 = vpack.c.b16 %v1373, %v1369
    %v1454 = vpack.c.b16 %v1374, %v1370
    %v1455 = vpack.c.b16 %v1375, %v1371
    %v1456 = vpack.c.b16 %v1380, %v1376
    %v1457 = vpack.c.b16 %v1381, %v1377
    %v1458 = vpack.c.b16 %v1382, %v1378
    %v1459 = vpack.c.b16 %v1383, %v1379
    %v1460 = vpack.c.b16 %v1388, %v1384
    %v1461 = vpack.c.b16 %v1389, %v1385
    %v1462 = vpack.c.b16 %v1390, %v1386
    %v1463 = vpack.c.b16 %v1391, %v1387
    %v1464 = vpack.c.b16 %v1396, %v1392
    %v1465 = vpack.c.b16 %v1397, %v1393
    %v1466 = vpack.c.b16 %v1398, %v1394
    %v1467 = vpack.c.b16 %v1399, %v1395
    %v1468 = vpack.c.b16 %v1404, %v1400
    %v1469 = vpack.c.b16 %v1405, %v1401
    %v1470 = vpack.c.b16 %v1406, %v1402
    %v1471 = vpack.c.b16 %v1407, %v1403
    %1536 = vmatprep.subr.bf16.mxu0 %v1409
    %1537 = vmatpush1.bf16.msra.mxu0 %v1408
    %1538 = vmatprep.subr.bf16.mxu0 %v1413
    %1539 = vmatpush1.bf16.msra.mxu0 %v1412
    %1540 = vmatprep.subr.bf16.mxu0 %v1417
    %1541 = vmatpush1.bf16.msra.mxu0 %v1416
    %1542 = vmatprep.subr.bf16.mxu0 %v1421
    %1543 = vmatpush1.bf16.msra.mxu0 %v1420
    %1544 = vmatprep.subr.bf16.mxu0 %v1425
    %1545 = vmatpush1.bf16.msra.mxu0 %v1424
    %1546 = vmatprep.subr.bf16.mxu0 %v1429
    %1547 = vmatpush1.bf16.msra.mxu0 %v1428
    %1548 = vmatprep.subr.bf16.mxu0 %v1433
    %1549 = vmatpush1.bf16.msra.mxu0 %v1432
    %1550 = vmatprep.subr.bf16.mxu0 %v1437
    %1551 = vmatpush1.bf16.msra.mxu0 %v1436
    %1552 = vmatprep.subr.bf16.mxu0 %v1441
    %1553 = vmatpush1.bf16.msra.mxu0 %v1440
    %1554 = vmatprep.subr.bf16.mxu0 %v1445
    %1555 = vmatpush1.bf16.msra.mxu0 %v1444
    %1556 = vmatprep.subr.bf16.mxu0 %v1449
    %1557 = vmatpush1.bf16.msra.mxu0 %v1448
    %1558 = vmatprep.subr.bf16.mxu0 %v1453
    %1559 = vmatpush1.bf16.msra.mxu0 %v1452
    %1560 = vmatprep.subr.bf16.mxu0 %v1457
    %1561 = vmatpush1.bf16.msra.mxu0 %v1456
    %1562 = vmatprep.subr.bf16.mxu0 %v1461
    %1563 = vmatpush1.bf16.msra.mxu0 %v1460
    %1564 = vmatprep.subr.bf16.mxu0 %v1465
    %1565 = vmatpush1.bf16.msra.mxu0 %v1464
    %1566 = vmatprep.subr.bf16.mxu0 %v1469
    %1567 = vmatpush1.bf16.msra.mxu0 %v1468
    %1568 = vmatprep.mubr.bf16.mxu0 %v332
    %1569 = vmatmul.mubr.bf16.gmra.mrb[0].mxu0 %v331
    %v1570 = vpop.f32.mrb[0].mxu0
    %v1571 = vadd.f32 %v1025, %v1570
    %v1572 = vpop.f32.mrb[0].mxu0
    %v1573 = vadd.f32 %v1027, %v1572
    %v1574 = vpop.f32.mrb[0].mxu0
    %v1575 = vadd.f32 %v1029, %v1574
    %v1576 = vpop.f32.mrb[0].mxu0
    %v1577 = vadd.f32 %v1031, %v1576
    %1578 = vmatprep.mubr.bf16.mxu0 %v334
    %1579 = vmatmul.mubr.bf16.gmra.mrb[0].mxu0 %v333
    %v1580 = vpop.f32.mrb[0].mxu0
    %v1581 = vadd.f32 %v1035, %v1580
    %v1582 = vpop.f32.mrb[0].mxu0
    %v1583 = vadd.f32 %v1037, %v1582
    %v1584 = vpop.f32.mrb[0].mxu0
    %v1585 = vadd.f32 %v1039, %v1584
    %v1586 = vpop.f32.mrb[0].mxu0
    %v1587 = vadd.f32 %v1041, %v1586
    %1588 = vmatprep.mubr.bf16.mxu0 %v336
    %1589 = vmatmul.mubr.bf16.gmra.mrb[0].mxu0 %v335
    %v1590 = vpop.f32.mrb[0].mxu0
    %v1591 = vadd.f32 %v1045, %v1590
    %v1592 = vpop.f32.mrb[0].mxu0
    %v1593 = vadd.f32 %v1047, %v1592
    %v1594 = vpop.f32.mrb[0].mxu0
    %v1595 = vadd.f32 %v1049, %v1594
    %v1596 = vpop.f32.mrb[0].mxu0
    %v1597 = vadd.f32 %v1051, %v1596
    %1598 = vmatprep.mubr.bf16.mxu0 %v338
    %1599 = vmatmul.mubr.bf16.gmra.mrb[0].mxu0 %v337
    %v1600 = vpop.f32.mrb[0].mxu0
    %v1601 = vadd.f32 %v1055, %v1600
    %v1602 = vpop.f32.mrb[0].mxu0
    %v1603 = vadd.f32 %v1057, %v1602
    %v1604 = vpop.f32.mrb[0].mxu0
    %v1605 = vadd.f32 %v1059, %v1604
    %v1606 = vpop.f32.mrb[0].mxu0
    %v1607 = vadd.f32 %v1061, %v1606
    %1608 = vmatprep.mubr.bf16.mxu0 %v340
    %1609 = vmatmul.mubr.bf16.gmra.mrb[0].mxu0 %v339
    %v1610 = vpop.f32.mrb[0].mxu0
    %v1611 = vadd.f32 %v1065, %v1610
    %v1612 = vpop.f32.mrb[0].mxu0
    %v1613 = vadd.f32 %v1067, %v1612
    %v1614 = vpop.f32.mrb[0].mxu0
    %v1615 = vadd.f32 %v1069, %v1614
    %v1616 = vpop.f32.mrb[0].mxu0
    %v1617 = vadd.f32 %v1071, %v1616
    %1618 = vmatprep.mubr.bf16.mxu0 %v342
    %1619 = vmatmul.mubr.bf16.gmra.mrb[0].mxu0 %v341
    %v1620 = vpop.f32.mrb[0].mxu0
    %v1621 = vadd.f32 %v1075, %v1620
    %v1622 = vpop.f32.mrb[0].mxu0
    %v1623 = vadd.f32 %v1077, %v1622
    %v1624 = vpop.f32.mrb[0].mxu0
    %v1625 = vadd.f32 %v1079, %v1624
    %v1626 = vpop.f32.mrb[0].mxu0
    %v1627 = vadd.f32 %v1081, %v1626
    %1628 = vmatprep.mubr.bf16.mxu0 %v344
    %1629 = vmatmul.mubr.bf16.gmra.mrb[0].mxu0 %v343
    %v1630 = vpop.f32.mrb[0].mxu0
    %v1631 = vadd.f32 %v1085, %v1630
    %v1632 = vpop.f32.mrb[0].mxu0
    %v1633 = vadd.f32 %v1087, %v1632
    %v1634 = vpop.f32.mrb[0].mxu0
    %v1635 = vadd.f32 %v1089, %v1634
    %v1636 = vpop.f32.mrb[0].mxu0
    %v1637 = vadd.f32 %v1091, %v1636
    %1638 = vmatprep.mubr.bf16.mxu0 %v346
    %1639 = vmatmul.mubr.bf16.gmra.mrb[0].mxu0 %v345
    %v1640 = vpop.f32.mrb[0].mxu0
    %v1641 = vadd.f32 %v1095, %v1640
    %v1642 = vpop.f32.mrb[0].mxu0
    %v1643 = vadd.f32 %v1097, %v1642
    %v1644 = vpop.f32.mrb[0].mxu0
    %v1645 = vadd.f32 %v1099, %v1644
    %v1646 = vpop.f32.mrb[0].mxu0
    %v1647 = vadd.f32 %v1101, %v1646
    %1648 = vdwg.mxu0
    %1649 = vmatprep.subr.bf16.mxu0 %v1411
    %1650 = vmatpush1.bf16.msra.mxu0 %v1410
    %1651 = vmatprep.subr.bf16.mxu0 %v1415
    %1652 = vmatpush1.bf16.msra.mxu0 %v1414
    %1653 = vmatprep.subr.bf16.mxu0 %v1419
    %1654 = vmatpush1.bf16.msra.mxu0 %v1418
    %1655 = vmatprep.subr.bf16.mxu0 %v1423
    %1656 = vmatpush1.bf16.msra.mxu0 %v1422
    %1657 = vmatprep.subr.bf16.mxu0 %v1427
    %1658 = vmatpush1.bf16.msra.mxu0 %v1426
    %1659 = vmatprep.subr.bf16.mxu0 %v1431
    %1660 = vmatpush1.bf16.msra.mxu0 %v1430
    %1661 = vmatprep.subr.bf16.mxu0 %v1435
    %1662 = vmatpush1.bf16.msra.mxu0 %v1434
    %1663 = vmatprep.subr.bf16.mxu0 %v1439
    %1664 = vmatpush1.bf16.msra.mxu0 %v1438
    %1665 = vmatprep.subr.bf16.mxu0 %v1443
    %1666 = vmatpush1.bf16.msra.mxu0 %v1442
    %1667 = vmatprep.subr.bf16.mxu0 %v1447
    %1668 = vmatpush1.bf16.msra.mxu0 %v1446
    %1669 = vmatprep.subr.bf16.mxu0 %v1451
    %1670 = vmatpush1.bf16.msra.mxu0 %v1450
    %1671 = vmatprep.subr.bf16.mxu0 %v1455
    %1672 = vmatpush1.bf16.msra.mxu0 %v1454
    %1673 = vmatprep.subr.bf16.mxu0 %v1459
    %1674 = vmatpush1.bf16.msra.mxu0 %v1458
    %1675 = vmatprep.subr.bf16.mxu0 %v1463
    %1676 = vmatpush1.bf16.msra.mxu0 %v1462
    %1677 = vmatprep.subr.bf16.mxu0 %v1467
    %1678 = vmatpush1.bf16.msra.mxu0 %v1466
    %1679 = vmatprep.subr.bf16.mxu0 %v1471
    %1680 = vmatpush1.bf16.msra.mxu0 %v1470
    %1681 = vmatprep.mubr.bf16.mxu0 %v332
    %1682 = vmatmul.mubr.bf16.gmra.mrb[0].mxu0 %v331
    %v1683 = vpop.f32.mrb[0].mxu0
    %v1684 = vadd.f32 %v1138, %v1683
    %v1685 = vpop.f32.mrb[0].mxu0
    %v1686 = vadd.f32 %v1140, %v1685
    %v1687 = vpop.f32.mrb[0].mxu0
    %v1688 = vadd.f32 %v1142, %v1687
    %v1689 = vpop.f32.mrb[0].mxu0
    %v1690 = vadd.f32 %v1144, %v1689
    %1691 = vmatprep.mubr.bf16.mxu0 %v334
    %1692 = vmatmul.mubr.bf16.gmra.mrb[0].mxu0 %v333
    %v1693 = vpop.f32.mrb[0].mxu0
    %v1694 = vadd.f32 %v1148, %v1693
    %v1695 = vpop.f32.mrb[0].mxu0
    %v1696 = vadd.f32 %v1150, %v1695
    %v1697 = vpop.f32.mrb[0].mxu0
    %v1698 = vadd.f32 %v1152, %v1697
    %v1699 = vpop.f32.mrb[0].mxu0
    %v1700 = vadd.f32 %v1154, %v1699
    %1701 = vmatprep.mubr.bf16.mxu0 %v336
    %1702 = vmatmul.mubr.bf16.gmra.mrb[0].mxu0 %v335
    %v1703 = vpop.f32.mrb[0].mxu0
    %v1704 = vadd.f32 %v1158, %v1703
    %v1705 = vpop.f32.mrb[0].mxu0
    %v1706 = vadd.f32 %v1160, %v1705
    %v1707 = vpop.f32.mrb[0].mxu0
    %v1708 = vadd.f32 %v1162, %v1707
    %v1709 = vpop.f32.mrb[0].mxu0
    %v1710 = vadd.f32 %v1164, %v1709
    %1711 = vmatprep.mubr.bf16.mxu0 %v338
    %1712 = vmatmul.mubr.bf16.gmra.mrb[0].mxu0 %v337
    %v1713 = vpop.f32.mrb[0].mxu0
    %v1714 = vadd.f32 %v1168, %v1713
    %v1715 = vpop.f32.mrb[0].mxu0
    %v1716 = vadd.f32 %v1170, %v1715
    %v1717 = vpop.f32.mrb[0].mxu0
    %v1718 = vadd.f32 %v1172, %v1717
    %v1719 = vpop.f32.mrb[0].mxu0
    %v1720 = vadd.f32 %v1174, %v1719
    %1721 = vmatprep.mubr.bf16.mxu0 %v340
    %1722 = vmatmul.mubr.bf16.gmra.mrb[0].mxu0 %v339
    %v1723 = vpop.f32.mrb[0].mxu0
    %v1724 = vadd.f32 %v1178, %v1723
    %v1725 = vpop.f32.mrb[0].mxu0
    %v1726 = vadd.f32 %v1180, %v1725
    %v1727 = vpop.f32.mrb[0].mxu0
    %v1728 = vadd.f32 %v1182, %v1727
    %v1729 = vpop.f32.mrb[0].mxu0
    %v1730 = vadd.f32 %v1184, %v1729
    %1731 = vmatprep.mubr.bf16.mxu0 %v342
    %1732 = vmatmul.mubr.bf16.gmra.mrb[0].mxu0 %v341
    %v1733 = vpop.f32.mrb[0].mxu0
    %v1734 = vadd.f32 %v1188, %v1733
    %v1735 = vpop.f32.mrb[0].mxu0
    %v1736 = vadd.f32 %v1190, %v1735
    %v1737 = vpop.f32.mrb[0].mxu0
    %v1738 = vadd.f32 %v1192, %v1737
    %v1739 = vpop.f32.mrb[0].mxu0
    %v1740 = vadd.f32 %v1194, %v1739
    %1741 = vmatprep.mubr.bf16.mxu0 %v344
    %1742 = vmatmul.mubr.bf16.gmra.mrb[0].mxu0 %v343
    %v1743 = vpop.f32.mrb[0].mxu0
    %v1744 = vadd.f32 %v1198, %v1743
    %v1745 = vpop.f32.mrb[0].mxu0
    %v1746 = vadd.f32 %v1200, %v1745
    %v1747 = vpop.f32.mrb[0].mxu0
    %v1748 = vadd.f32 %v1202, %v1747
    %v1749 = vpop.f32.mrb[0].mxu0
    %v1750 = vadd.f32 %v1204, %v1749
    %1751 = vmatprep.mubr.bf16.mxu0 %v346
    %1752 = vmatmul.mubr.bf16.gmra.mrb[0].mxu0 %v345
    %v1753 = vpop.f32.mrb[0].mxu0
    %v1754 = vadd.f32 %v1208, %v1753
    %v1755 = vpop.f32.mrb[0].mxu0
    %v1756 = vadd.f32 %v1210, %v1755
    %v1757 = vpop.f32.mrb[0].mxu0
    %v1758 = vadd.f32 %v1212, %v1757
    %v1759 = vpop.f32.mrb[0].mxu0
    %v1760 = vadd.f32 %v1214, %v1759
    %1761 = vdwg.mxu0
    %s1762 = scalar_lea.vmem %s1, 1024
    %v1763 = vld [vmem:[%s1762] sm:$0xff]
    %v1764 = vld [vmem:[%s1762 + $0x8] sm:$0xff]
    %v1765 = vld [vmem:[%s1762 + $0x10] sm:$0xff]
    %v1766 = vld [vmem:[%s1762 + $0x18] sm:$0xff]
    %v1767 = vld [vmem:[%s1762 + $0x20] sm:$0xff]
    %v1768 = vld [vmem:[%s1762 + $0x28] sm:$0xff]
    %v1769 = vld [vmem:[%s1762 + $0x30] sm:$0xff]
    %v1770 = vld [vmem:[%s1762 + $0x38] sm:$0xff]
    %v1771 = vld [vmem:[%s1762 + $0x40] sm:$0xff]
    %v1772 = vld [vmem:[%s1762 + $0x48] sm:$0xff]
    %v1773 = vld [vmem:[%s1762 + $0x50] sm:$0xff]
    %v1774 = vld [vmem:[%s1762 + $0x58] sm:$0xff]
    %v1775 = vld [vmem:[%s1762 + $0x60] sm:$0xff]
    %v1776 = vld [vmem:[%s1762 + $0x68] sm:$0xff]
    %v1777 = vld [vmem:[%s1762 + $0x70] sm:$0xff]
    %v1778 = vld [vmem:[%s1762 + $0x78] sm:$0xff]
    %v1779 = vld [vmem:[%s1762 + $0x80] sm:$0xff]
    %v1780 = vld [vmem:[%s1762 + $0x88] sm:$0xff]
    %v1781 = vld [vmem:[%s1762 + $0x90] sm:$0xff]
    %v1782 = vld [vmem:[%s1762 + $0x98] sm:$0xff]
    %v1783 = vld [vmem:[%s1762 + $0xa0] sm:$0xff]
    %v1784 = vld [vmem:[%s1762 + $0xa8] sm:$0xff]
    %v1785 = vld [vmem:[%s1762 + $0xb0] sm:$0xff]
    %v1786 = vld [vmem:[%s1762 + $0xb8] sm:$0xff]
    %v1787 = vld [vmem:[%s1762 + $0xc0] sm:$0xff]
    %v1788 = vld [vmem:[%s1762 + $0xc8] sm:$0xff]
    %v1789 = vld [vmem:[%s1762 + $0xd0] sm:$0xff]
    %v1790 = vld [vmem:[%s1762 + $0xd8] sm:$0xff]
    %v1791 = vld [vmem:[%s1762 + $0xe0] sm:$0xff]
    %v1792 = vld [vmem:[%s1762 + $0xe8] sm:$0xff]
    %v1793 = vld [vmem:[%s1762 + $0xf0] sm:$0xff]
    %v1794 = vld [vmem:[%s1762 + $0xf8] sm:$0xff]
    %v1795 = vld [vmem:[%s1762 + $0x100] sm:$0xff]
    %v1796 = vld [vmem:[%s1762 + $0x108] sm:$0xff]
    %v1797 = vld [vmem:[%s1762 + $0x110] sm:$0xff]
    %v1798 = vld [vmem:[%s1762 + $0x118] sm:$0xff]
    %v1799 = vld [vmem:[%s1762 + $0x120] sm:$0xff]
    %v1800 = vld [vmem:[%s1762 + $0x128] sm:$0xff]
    %v1801 = vld [vmem:[%s1762 + $0x130] sm:$0xff]
    %v1802 = vld [vmem:[%s1762 + $0x138] sm:$0xff]
    %v1803 = vld [vmem:[%s1762 + $0x140] sm:$0xff]
    %v1804 = vld [vmem:[%s1762 + $0x148] sm:$0xff]
    %v1805 = vld [vmem:[%s1762 + $0x150] sm:$0xff]
    %v1806 = vld [vmem:[%s1762 + $0x158] sm:$0xff]
    %v1807 = vld [vmem:[%s1762 + $0x160] sm:$0xff]
    %v1808 = vld [vmem:[%s1762 + $0x168] sm:$0xff]
    %v1809 = vld [vmem:[%s1762 + $0x170] sm:$0xff]
    %v1810 = vld [vmem:[%s1762 + $0x178] sm:$0xff]
    %v1811 = vld [vmem:[%s1762 + $0x180] sm:$0xff]
    %v1812 = vld [vmem:[%s1762 + $0x188] sm:$0xff]
    %v1813 = vld [vmem:[%s1762 + $0x190] sm:$0xff]
    %v1814 = vld [vmem:[%s1762 + $0x198] sm:$0xff]
    %v1815 = vld [vmem:[%s1762 + $0x1a0] sm:$0xff]
    %v1816 = vld [vmem:[%s1762 + $0x1a8] sm:$0xff]
    %v1817 = vld [vmem:[%s1762 + $0x1b0] sm:$0xff]
    %v1818 = vld [vmem:[%s1762 + $0x1b8] sm:$0xff]
    %v1819 = vld [vmem:[%s1762 + $0x1c0] sm:$0xff]
    %v1820 = vld [vmem:[%s1762 + $0x1c8] sm:$0xff]
    %v1821 = vld [vmem:[%s1762 + $0x1d0] sm:$0xff]
    %v1822 = vld [vmem:[%s1762 + $0x1d8] sm:$0xff]
    %v1823 = vld [vmem:[%s1762 + $0x1e0] sm:$0xff]
    %v1824 = vld [vmem:[%s1762 + $0x1e8] sm:$0xff]
    %v1825 = vld [vmem:[%s1762 + $0x1f0] sm:$0xff]
    %v1826 = vld [vmem:[%s1762 + $0x1f8] sm:$0xff]
    %v1891 = vunpack.c.l.b16 %v1763
    %v1892 = vunpack.c.h.b16 %v1763
    %v1893 = vunpack.c.l.b16 %v1764
    %v1894 = vunpack.c.h.b16 %v1764
    %v1895 = vunpack.c.l.b16 %v1765
    %v1896 = vunpack.c.h.b16 %v1765
    %v1897 = vunpack.c.l.b16 %v1766
    %v1898 = vunpack.c.h.b16 %v1766
    %v1899 = vunpack.c.l.b16 %v1767
    %v1900 = vunpack.c.h.b16 %v1767
    %v1901 = vunpack.c.l.b16 %v1768
    %v1902 = vunpack.c.h.b16 %v1768
    %v1903 = vunpack.c.l.b16 %v1769
    %v1904 = vunpack.c.h.b16 %v1769
    %v1905 = vunpack.c.l.b16 %v1770
    %v1906 = vunpack.c.h.b16 %v1770
    %v1907 = vunpack.c.l.b16 %v1771
    %v1908 = vunpack.c.h.b16 %v1771
    %v1909 = vunpack.c.l.b16 %v1772
    %v1910 = vunpack.c.h.b16 %v1772
    %v1911 = vunpack.c.l.b16 %v1773
    %v1912 = vunpack.c.h.b16 %v1773
    %v1913 = vunpack.c.l.b16 %v1774
    %v1914 = vunpack.c.h.b16 %v1774
    %v1915 = vunpack.c.l.b16 %v1775
    %v1916 = vunpack.c.h.b16 %v1775
    %v1917 = vunpack.c.l.b16 %v1776
    %v1918 = vunpack.c.h.b16 %v1776
    %v1919 = vunpack.c.l.b16 %v1777
    %v1920 = vunpack.c.h.b16 %v1777
    %v1921 = vunpack.c.l.b16 %v1778
    %v1922 = vunpack.c.h.b16 %v1778
    %v1923 = vunpack.c.l.b16 %v1779
    %v1924 = vunpack.c.h.b16 %v1779
    %v1925 = vunpack.c.l.b16 %v1780
    %v1926 = vunpack.c.h.b16 %v1780
    %v1927 = vunpack.c.l.b16 %v1781
    %v1928 = vunpack.c.h.b16 %v1781
    %v1929 = vunpack.c.l.b16 %v1782
    %v1930 = vunpack.c.h.b16 %v1782
    %v1931 = vunpack.c.l.b16 %v1783
    %v1932 = vunpack.c.h.b16 %v1783
    %v1933 = vunpack.c.l.b16 %v1784
    %v1934 = vunpack.c.h.b16 %v1784
    %v1935 = vunpack.c.l.b16 %v1785
    %v1936 = vunpack.c.h.b16 %v1785
    %v1937 = vunpack.c.l.b16 %v1786
    %v1938 = vunpack.c.h.b16 %v1786
    %v1939 = vunpack.c.l.b16 %v1787
    %v1940 = vunpack.c.h.b16 %v1787
    %v1941 = vunpack.c.l.b16 %v1788
    %v1942 = vunpack.c.h.b16 %v1788
    %v1943 = vunpack.c.l.b16 %v1789
    %v1944 = vunpack.c.h.b16 %v1789
    %v1945 = vunpack.c.l.b16 %v1790
    %v1946 = vunpack.c.h.b16 %v1790
    %v1947 = vunpack.c.l.b16 %v1791
    %v1948 = vunpack.c.h.b16 %v1791
    %v1949 = vunpack.c.l.b16 %v1792
    %v1950 = vunpack.c.h.b16 %v1792
    %v1951 = vunpack.c.l.b16 %v1793
    %v1952 = vunpack.c.h.b16 %v1793
    %v1953 = vunpack.c.l.b16 %v1794
    %v1954 = vunpack.c.h.b16 %v1794
    %v1955 = vunpack.c.l.b16 %v1795
    %v1956 = vunpack.c.h.b16 %v1795
    %v1957 = vunpack.c.l.b16 %v1796
    %v1958 = vunpack.c.h.b16 %v1796
    %v1959 = vunpack.c.l.b16 %v1797
    %v1960 = vunpack.c.h.b16 %v1797
    %v1961 = vunpack.c.l.b16 %v1798
    %v1962 = vunpack.c.h.b16 %v1798
    %v1963 = vunpack.c.l.b16 %v1799
    %v1964 = vunpack.c.h.b16 %v1799
    %v1965 = vunpack.c.l.b16 %v1800
    %v1966 = vunpack.c.h.b16 %v1800
    %v1967 = vunpack.c.l.b16 %v1801
    %v1968 = vunpack.c.h.b16 %v1801
    %v1969 = vunpack.c.l.b16 %v1802
    %v1970 = vunpack.c.h.b16 %v1802
    %v1971 = vunpack.c.l.b16 %v1803
    %v1972 = vunpack.c.h.b16 %v1803
    %v1973 = vunpack.c.l.b16 %v1804
    %v1974 = vunpack.c.h.b16 %v1804
    %v1975 = vunpack.c.l.b16 %v1805
    %v1976 = vunpack.c.h.b16 %v1805
    %v1977 = vunpack.c.l.b16 %v1806
    %v1978 = vunpack.c.h.b16 %v1806
    %v1979 = vunpack.c.l.b16 %v1807
    %v1980 = vunpack.c.h.b16 %v1807
    %v1981 = vunpack.c.l.b16 %v1808
    %v1982 = vunpack.c.h.b16 %v1808
    %v1983 = vunpack.c.l.b16 %v1809
    %v1984 = vunpack.c.h.b16 %v1809
    %v1985 = vunpack.c.l.b16 %v1810
    %v1986 = vunpack.c.h.b16 %v1810
    %v1987 = vunpack.c.l.b16 %v1811
    %v1988 = vunpack.c.h.b16 %v1811
    %v1989 = vunpack.c.l.b16 %v1812
    %v1990 = vunpack.c.h.b16 %v1812
    %v1991 = vunpack.c.l.b16 %v1813
    %v1992 = vunpack.c.h.b16 %v1813
    %v1993 = vunpack.c.l.b16 %v1814
    %v1994 = vunpack.c.h.b16 %v1814
    %v1995 = vunpack.c.l.b16 %v1815
    %v1996 = vunpack.c.h.b16 %v1815
    %v1997 = vunpack.c.l.b16 %v1816
    %v1998 = vunpack.c.h.b16 %v1816
    %v1999 = vunpack.c.l.b16 %v1817
    %v2000 = vunpack.c.h.b16 %v1817
    %v2001 = vunpack.c.l.b16 %v1818
    %v2002 = vunpack.c.h.b16 %v1818
    %v2003 = vunpack.c.l.b16 %v1819
    %v2004 = vunpack.c.h.b16 %v1819
    %v2005 = vunpack.c.l.b16 %v1820
    %v2006 = vunpack.c.h.b16 %v1820
    %v2007 = vunpack.c.l.b16 %v1821
    %v2008 = vunpack.c.h.b16 %v1821
    %v2009 = vunpack.c.l.b16 %v1822
    %v2010 = vunpack.c.h.b16 %v1822
    %v2011 = vunpack.c.l.b16 %v1823
    %v2012 = vunpack.c.h.b16 %v1823
    %v2013 = vunpack.c.l.b16 %v1824
    %v2014 = vunpack.c.h.b16 %v1824
    %v2015 = vunpack.c.l.b16 %v1825
    %v2016 = vunpack.c.h.b16 %v1825
    %v2017 = vunpack.c.l.b16 %v1826
    %v2018 = vunpack.c.h.b16 %v1826
    %v2019 = vpack.c.b16 %v1895, %v1891
    %v2020 = vpack.c.b16 %v1896, %v1892
    %v2021 = vpack.c.b16 %v1897, %v1893
    %v2022 = vpack.c.b16 %v1898, %v1894
    %v2023 = vpack.c.b16 %v1903, %v1899
    %v2024 = vpack.c.b16 %v1904, %v1900
    %v2025 = vpack.c.b16 %v1905, %v1901
    %v2026 = vpack.c.b16 %v1906, %v1902
    %v2027 = vpack.c.b16 %v1911, %v1907
    %v2028 = vpack.c.b16 %v1912, %v1908
    %v2029 = vpack.c.b16 %v1913, %v1909
    %v2030 = vpack.c.b16 %v1914, %v1910
    %v2031 = vpack.c.b16 %v1919, %v1915
    %v2032 = vpack.c.b16 %v1920, %v1916
    %v2033 = vpack.c.b16 %v1921, %v1917
    %v2034 = vpack.c.b16 %v1922, %v1918
    %v2035 = vpack.c.b16 %v1927, %v1923
    %v2036 = vpack.c.b16 %v1928, %v1924
    %v2037 = vpack.c.b16 %v1929, %v1925
    %v2038 = vpack.c.b16 %v1930, %v1926
    %v2039 = vpack.c.b16 %v1935, %v1931
    %v2040 = vpack.c.b16 %v1936, %v1932
    %v2041 = vpack.c.b16 %v1937, %v1933
    %v2042 = vpack.c.b16 %v1938, %v1934
    %v2043 = vpack.c.b16 %v1943, %v1939
    %v2044 = vpack.c.b16 %v1944, %v1940
    %v2045 = vpack.c.b16 %v1945, %v1941
    %v2046 = vpack.c.b16 %v1946, %v1942
    %v2047 = vpack.c.b16 %v1951, %v1947
    %v2048 = vpack.c.b16 %v1952, %v1948
    %v2049 = vpack.c.b16 %v1953, %v1949
    %v2050 = vpack.c.b16 %v1954, %v1950
    %v2051 = vpack.c.b16 %v1959, %v1955
    %v2052 = vpack.c.b16 %v1960, %v1956
    %v2053 = vpack.c.b16 %v1961, %v1957
    %v2054 = vpack.c.b16 %v1962, %v1958
    %v2055 = vpack.c.b16 %v1967, %v1963
    %v2056 = vpack.c.b16 %v1968, %v1964
    %v2057 = vpack.c.b16 %v1969, %v1965
    %v2058 = vpack.c.b16 %v1970, %v1966
    %v2059 = vpack.c.b16 %v1975, %v1971
    %v2060 = vpack.c.b16 %v1976, %v1972
    %v2061 = vpack.c.b16 %v1977, %v1973
    %v2062 = vpack.c.b16 %v1978, %v1974
    %v2063 = vpack.c.b16 %v1983, %v1979
    %v2064 = vpack.c.b16 %v1984, %v1980
    %v2065 = vpack.c.b16 %v1985, %v1981
    %v2066 = vpack.c.b16 %v1986, %v1982
    %v2067 = vpack.c.b16 %v1991, %v1987
    %v2068 = vpack.c.b16 %v1992, %v1988
    %v2069 = vpack.c.b16 %v1993, %v1989
    %v2070 = vpack.c.b16 %v1994, %v1990
    %v2071 = vpack.c.b16 %v1999, %v1995
    %v2072 = vpack.c.b16 %v2000, %v1996
    %v2073 = vpack.c.b16 %v2001, %v1997
    %v2074 = vpack.c.b16 %v2002, %v1998
    %v2075 = vpack.c.b16 %v2007, %v2003
    %v2076 = vpack.c.b16 %v2008, %v2004
    %v2077 = vpack.c.b16 %v2009, %v2005
    %v2078 = vpack.c.b16 %v2010, %v2006
    %v2079 = vpack.c.b16 %v2015, %v2011
    %v2080 = vpack.c.b16 %v2016, %v2012
    %v2081 = vpack.c.b16 %v2017, %v2013
    %v2082 = vpack.c.b16 %v2018, %v2014
    %2147 = vmatprep.subr.bf16.mxu0 %v2020
    %2148 = vmatpush1.bf16.msra.mxu0 %v2019
    %2149 = vmatprep.subr.bf16.mxu0 %v2024
    %2150 = vmatpush1.bf16.msra.mxu0 %v2023
    %2151 = vmatprep.subr.bf16.mxu0 %v2028
    %2152 = vmatpush1.bf16.msra.mxu0 %v2027
    %2153 = vmatprep.subr.bf16.mxu0 %v2032
    %2154 = vmatpush1.bf16.msra.mxu0 %v2031
    %2155 = vmatprep.subr.bf16.mxu0 %v2036
    %2156 = vmatpush1.bf16.msra.mxu0 %v2035
    %2157 = vmatprep.subr.bf16.mxu0 %v2040
    %2158 = vmatpush1.bf16.msra.mxu0 %v2039
    %2159 = vmatprep.subr.bf16.mxu0 %v2044
    %2160 = vmatpush1.bf16.msra.mxu0 %v2043
    %2161 = vmatprep.subr.bf16.mxu0 %v2048
    %2162 = vmatpush1.bf16.msra.mxu0 %v2047
    %2163 = vmatprep.subr.bf16.mxu0 %v2052
    %2164 = vmatpush1.bf16.msra.mxu0 %v2051
    %2165 = vmatprep.subr.bf16.mxu0 %v2056
    %2166 = vmatpush1.bf16.msra.mxu0 %v2055
    %2167 = vmatprep.subr.bf16.mxu0 %v2060
    %2168 = vmatpush1.bf16.msra.mxu0 %v2059
    %2169 = vmatprep.subr.bf16.mxu0 %v2064
    %2170 = vmatpush1.bf16.msra.mxu0 %v2063
    %2171 = vmatprep.subr.bf16.mxu0 %v2068
    %2172 = vmatpush1.bf16.msra.mxu0 %v2067
    %2173 = vmatprep.subr.bf16.mxu0 %v2072
    %2174 = vmatpush1.bf16.msra.mxu0 %v2071
    %2175 = vmatprep.subr.bf16.mxu0 %v2076
    %2176 = vmatpush1.bf16.msra.mxu0 %v2075
    %2177 = vmatprep.subr.bf16.mxu0 %v2080
    %2178 = vmatpush1.bf16.msra.mxu0 %v2079
    %2179 = vmatprep.mubr.bf16.mxu0 %v526
    %2180 = vmatmul.mubr.bf16.gmra.mrb[0].mxu0 %v525
    %v2181 = vpop.f32.mrb[0].mxu0
    %v2182 = vadd.f32 0.0, %v2181
    %v2183 = vpop.f32.mrb[0].mxu0
    %v2184 = vadd.f32 0.0, %v2183
    %v2185 = vpop.f32.mrb[0].mxu0
    %v2186 = vadd.f32 0.0, %v2185
    %v2187 = vpop.f32.mrb[0].mxu0
    %v2188 = vadd.f32 0.0, %v2187
    %2189 = vmatprep.mubr.bf16.mxu0 %v528
    %2190 = vmatmul.mubr.bf16.gmra.mrb[0].mxu0 %v527
    %v2191 = vpop.f32.mrb[0].mxu0
    %v2192 = vadd.f32 0.0, %v2191
    %v2193 = vpop.f32.mrb[0].mxu0
    %v2194 = vadd.f32 0.0, %v2193
    %v2195 = vpop.f32.mrb[0].mxu0
    %v2196 = vadd.f32 0.0, %v2195
    %v2197 = vpop.f32.mrb[0].mxu0
    %v2198 = vadd.f32 0.0, %v2197
    %2199 = vmatprep.mubr.bf16.mxu0 %v530
    %2200 = vmatmul.mubr.bf16.gmra.mrb[0].mxu0 %v529
    %v2201 = vpop.f32.mrb[0].mxu0
    %v2202 = vadd.f32 0.0, %v2201
    %v2203 = vpop.f32.mrb[0].mxu0
    %v2204 = vadd.f32 0.0, %v2203
    %v2205 = vpop.f32.mrb[0].mxu0
    %v2206 = vadd.f32 0.0, %v2205
    %v2207 = vpop.f32.mrb[0].mxu0
    %v2208 = vadd.f32 0.0, %v2207
    %2209 = vmatprep.mubr.bf16.mxu0 %v532
    %2210 = vmatmul.mubr.bf16.gmra.mrb[0].mxu0 %v531
    %v2211 = vpop.f32.mrb[0].mxu0
    %v2212 = vadd.f32 0.0, %v2211
    %v2213 = vpop.f32.mrb[0].mxu0
    %v2214 = vadd.f32 0.0, %v2213
    %v2215 = vpop.f32.mrb[0].mxu0
    %v2216 = vadd.f32 0.0, %v2215
    %v2217 = vpop.f32.mrb[0].mxu0
    %v2218 = vadd.f32 0.0, %v2217
    %2219 = vmatprep.mubr.bf16.mxu0 %v534
    %2220 = vmatmul.mubr.bf16.gmra.mrb[0].mxu0 %v533
    %v2221 = vpop.f32.mrb[0].mxu0
    %v2222 = vadd.f32 0.0, %v2221
    %v2223 = vpop.f32.mrb[0].mxu0
    %v2224 = vadd.f32 0.0, %v2223
    %v2225 = vpop.f32.mrb[0].mxu0
    %v2226 = vadd.f32 0.0, %v2225
    %v2227 = vpop.f32.mrb[0].mxu0
    %v2228 = vadd.f32 0.0, %v2227
    %2229 = vmatprep.mubr.bf16.mxu0 %v536
    %2230 = vmatmul.mubr.bf16.gmra.mrb[0].mxu0 %v535
    %v2231 = vpop.f32.mrb[0].mxu0
    %v2232 = vadd.f32 0.0, %v2231
    %v2233 = vpop.f32.mrb[0].mxu0
    %v2234 = vadd.f32 0.0, %v2233
    %v2235 = vpop.f32.mrb[0].mxu0
    %v2236 = vadd.f32 0.0, %v2235
    %v2237 = vpop.f32.mrb[0].mxu0
    %v2238 = vadd.f32 0.0, %v2237
    %2239 = vmatprep.mubr.bf16.mxu0 %v538
    %2240 = vmatmul.mubr.bf16.gmra.mrb[0].mxu0 %v537
    %v2241 = vpop.f32.mrb[0].mxu0
    %v2242 = vadd.f32 0.0, %v2241
    %v2243 = vpop.f32.mrb[0].mxu0
    %v2244 = vadd.f32 0.0, %v2243
    %v2245 = vpop.f32.mrb[0].mxu0
    %v2246 = vadd.f32 0.0, %v2245
    %v2247 = vpop.f32.mrb[0].mxu0
    %v2248 = vadd.f32 0.0, %v2247
    %2249 = vmatprep.mubr.bf16.mxu0 %v540
    %2250 = vmatmul.mubr.bf16.gmra.mrb[0].mxu0 %v539
    %v2251 = vpop.f32.mrb[0].mxu0
    %v2252 = vadd.f32 0.0, %v2251
    %v2253 = vpop.f32.mrb[0].mxu0
    %v2254 = vadd.f32 0.0, %v2253
    %v2255 = vpop.f32.mrb[0].mxu0
    %v2256 = vadd.f32 0.0, %v2255
    %v2257 = vpop.f32.mrb[0].mxu0
    %v2258 = vadd.f32 0.0, %v2257
    %2259 = vdwg.mxu0
    %2260 = vmatprep.subr.bf16.mxu0 %v2022
    %2261 = vmatpush1.bf16.msra.mxu0 %v2021
    %2262 = vmatprep.subr.bf16.mxu0 %v2026
    %2263 = vmatpush1.bf16.msra.mxu0 %v2025
    %2264 = vmatprep.subr.bf16.mxu0 %v2030
    %2265 = vmatpush1.bf16.msra.mxu0 %v2029
    %2266 = vmatprep.subr.bf16.mxu0 %v2034
    %2267 = vmatpush1.bf16.msra.mxu0 %v2033
    %2268 = vmatprep.subr.bf16.mxu0 %v2038
    %2269 = vmatpush1.bf16.msra.mxu0 %v2037
    %2270 = vmatprep.subr.bf16.mxu0 %v2042
    %2271 = vmatpush1.bf16.msra.mxu0 %v2041
    %2272 = vmatprep.subr.bf16.mxu0 %v2046
    %2273 = vmatpush1.bf16.msra.mxu0 %v2045
    %2274 = vmatprep.subr.bf16.mxu0 %v2050
    %2275 = vmatpush1.bf16.msra.mxu0 %v2049
    %2276 = vmatprep.subr.bf16.mxu0 %v2054
    %2277 = vmatpush1.bf16.msra.mxu0 %v2053
    %2278 = vmatprep.subr.bf16.mxu0 %v2058
    %2279 = vmatpush1.bf16.msra.mxu0 %v2057
    %2280 = vmatprep.subr.bf16.mxu0 %v2062
    %2281 = vmatpush1.bf16.msra.mxu0 %v2061
    %2282 = vmatprep.subr.bf16.mxu0 %v2066
    %2283 = vmatpush1.bf16.msra.mxu0 %v2065
    %2284 = vmatprep.subr.bf16.mxu0 %v2070
    %2285 = vmatpush1.bf16.msra.mxu0 %v2069
    %2286 = vmatprep.subr.bf16.mxu0 %v2074
    %2287 = vmatpush1.bf16.msra.mxu0 %v2073
    %2288 = vmatprep.subr.bf16.mxu0 %v2078
    %2289 = vmatpush1.bf16.msra.mxu0 %v2077
    %2290 = vmatprep.subr.bf16.mxu0 %v2082
    %2291 = vmatpush1.bf16.msra.mxu0 %v2081
    %2292 = vmatprep.mubr.bf16.mxu0 %v526
    %2293 = vmatmul.mubr.bf16.gmra.mrb[0].mxu0 %v525
    %v2294 = vpop.f32.mrb[0].mxu0
    %v2295 = vadd.f32 0.0, %v2294
    %v2296 = vpop.f32.mrb[0].mxu0
    %v2297 = vadd.f32 0.0, %v2296
    %v2298 = vpop.f32.mrb[0].mxu0
    %v2299 = vadd.f32 0.0, %v2298
    %v2300 = vpop.f32.mrb[0].mxu0
    %v2301 = vadd.f32 0.0, %v2300
    %2302 = vmatprep.mubr.bf16.mxu0 %v528
    %2303 = vmatmul.mubr.bf16.gmra.mrb[0].mxu0 %v527
    %v2304 = vpop.f32.mrb[0].mxu0
    %v2305 = vadd.f32 0.0, %v2304
    %v2306 = vpop.f32.mrb[0].mxu0
    %v2307 = vadd.f32 0.0, %v2306
    %v2308 = vpop.f32.mrb[0].mxu0
    %v2309 = vadd.f32 0.0, %v2308
    %v2310 = vpop.f32.mrb[0].mxu0
    %v2311 = vadd.f32 0.0, %v2310
    %2312 = vmatprep.mubr.bf16.mxu0 %v530
    %2313 = vmatmul.mubr.bf16.gmra.mrb[0].mxu0 %v529
    %v2314 = vpop.f32.mrb[0].mxu0
    %v2315 = vadd.f32 0.0, %v2314
    %v2316 = vpop.f32.mrb[0].mxu0
    %v2317 = vadd.f32 0.0, %v2316
    %v2318 = vpop.f32.mrb[0].mxu0
    %v2319 = vadd.f32 0.0, %v2318
    %v2320 = vpop.f32.mrb[0].mxu0
    %v2321 = vadd.f32 0.0, %v2320
    %2322 = vmatprep.mubr.bf16.mxu0 %v532
    %2323 = vmatmul.mubr.bf16.gmra.mrb[0].mxu0 %v531
    %v2324 = vpop.f32.mrb[0].mxu0
    %v2325 = vadd.f32 0.0, %v2324
    %v2326 = vpop.f32.mrb[0].mxu0
    %v2327 = vadd.f32 0.0, %v2326
    %v2328 = vpop.f32.mrb[0].mxu0
    %v2329 = vadd.f32 0.0, %v2328
    %v2330 = vpop.f32.mrb[0].mxu0
    %v2331 = vadd.f32 0.0, %v2330
    %2332 = vmatprep.mubr.bf16.mxu0 %v534
    %2333 = vmatmul.mubr.bf16.gmra.mrb[0].mxu0 %v533
    %v2334 = vpop.f32.mrb[0].mxu0
    %v2335 = vadd.f32 0.0, %v2334
    %v2336 = vpop.f32.mrb[0].mxu0
    %v2337 = vadd.f32 0.0, %v2336
    %v2338 = vpop.f32.mrb[0].mxu0
    %v2339 = vadd.f32 0.0, %v2338
    %v2340 = vpop.f32.mrb[0].mxu0
    %v2341 = vadd.f32 0.0, %v2340
    %2342 = vmatprep.mubr.bf16.mxu0 %v536
    %2343 = vmatmul.mubr.bf16.gmra.mrb[0].mxu0 %v535
    %v2344 = vpop.f32.mrb[0].mxu0
    %v2345 = vadd.f32 0.0, %v2344
    %v2346 = vpop.f32.mrb[0].mxu0
    %v2347 = vadd.f32 0.0, %v2346
    %v2348 = vpop.f32.mrb[0].mxu0
    %v2349 = vadd.f32 0.0, %v2348
    %v2350 = vpop.f32.mrb[0].mxu0
    %v2351 = vadd.f32 0.0, %v2350
    %2352 = vmatprep.mubr.bf16.mxu0 %v538
    %2353 = vmatmul.mubr.bf16.gmra.mrb[0].mxu0 %v537
    %v2354 = vpop.f32.mrb[0].mxu0
    %v2355 = vadd.f32 0.0, %v2354
    %v2356 = vpop.f32.mrb[0].mxu0
    %v2357 = vadd.f32 0.0, %v2356
    %v2358 = vpop.f32.mrb[0].mxu0
    %v2359 = vadd.f32 0.0, %v2358
    %v2360 = vpop.f32.mrb[0].mxu0
    %v2361 = vadd.f32 0.0, %v2360
    %2362 = vmatprep.mubr.bf16.mxu0 %v540
    %2363 = vmatmul.mubr.bf16.gmra.mrb[0].mxu0 %v539
    %v2364 = vpop.f32.mrb[0].mxu0
    %v2365 = vadd.f32 0.0, %v2364
    %v2366 = vpop.f32.mrb[0].mxu0
    %v2367 = vadd.f32 0.0, %v2366
    %v2368 = vpop.f32.mrb[0].mxu0
    %v2369 = vadd.f32 0.0, %v2368
    %v2370 = vpop.f32.mrb[0].mxu0
    %v2371 = vadd.f32 0.0, %v2370
    %2372 = vdwg.mxu0
    %v2373 = vadd.f32 %v1571, %v2182
    %v2374 = vadd.f32 %v1573, %v2184
    %v2375 = vadd.f32 %v1684, %v2295
    %v2376 = vadd.f32 %v1686, %v2297
    %v2377 = vadd.f32 %v1575, %v2186
    %v2378 = vadd.f32 %v1577, %v2188
    %v2379 = vadd.f32 %v1688, %v2299
    %v2380 = vadd.f32 %v1690, %v2301
    %v2381 = vadd.f32 %v1581, %v2192
    %v2382 = vadd.f32 %v1583, %v2194
    %v2383 = vadd.f32 %v1694, %v2305
    %v2384 = vadd.f32 %v1696, %v2307
    %v2385 = vadd.f32 %v1585, %v2196
    %v2386 = vadd.f32 %v1587, %v2198
    %v2387 = vadd.f32 %v1698, %v2309
    %v2388 = vadd.f32 %v1700, %v2311
    %v2389 = vadd.f32 %v1591, %v2202
    %v2390 = vadd.f32 %v1593, %v2204
    %v2391 = vadd.f32 %v1704, %v2315
    %v2392 = vadd.f32 %v1706, %v2317
    %v2393 = vadd.f32 %v1595, %v2206
    %v2394 = vadd.f32 %v1597, %v2208
    %v2395 = vadd.f32 %v1708, %v2319
    %v2396 = vadd.f32 %v1710, %v2321
    %v2397 = vadd.f32 %v1601, %v2212
    %v2398 = vadd.f32 %v1603, %v2214
    %v2399 = vadd.f32 %v1714, %v2325
    %v2400 = vadd.f32 %v1716, %v2327
    %v2401 = vadd.f32 %v1605, %v2216
    %v2402 = vadd.f32 %v1607, %v2218
    %v2403 = vadd.f32 %v1718, %v2329
    %v2404 = vadd.f32 %v1720, %v2331
    %v2405 = vadd.f32 %v1611, %v2222
    %v2406 = vadd.f32 %v1613, %v2224
    %v2407 = vadd.f32 %v1724, %v2335
    %v2408 = vadd.f32 %v1726, %v2337
    %v2409 = vadd.f32 %v1615, %v2226
    %v2410 = vadd.f32 %v1617, %v2228
    %v2411 = vadd.f32 %v1728, %v2339
    %v2412 = vadd.f32 %v1730, %v2341
    %v2413 = vadd.f32 %v1621, %v2232
    %v2414 = vadd.f32 %v1623, %v2234
    %v2415 = vadd.f32 %v1734, %v2345
    %v2416 = vadd.f32 %v1736, %v2347
    %v2417 = vadd.f32 %v1625, %v2236
    %v2418 = vadd.f32 %v1627, %v2238
    %v2419 = vadd.f32 %v1738, %v2349
    %v2420 = vadd.f32 %v1740, %v2351
    %v2421 = vadd.f32 %v1631, %v2242
    %v2422 = vadd.f32 %v1633, %v2244
    %v2423 = vadd.f32 %v1744, %v2355
    %v2424 = vadd.f32 %v1746, %v2357
    %v2425 = vadd.f32 %v1635, %v2246
    %v2426 = vadd.f32 %v1637, %v2248
    %v2427 = vadd.f32 %v1748, %v2359
    %v2428 = vadd.f32 %v1750, %v2361
    %v2429 = vadd.f32 %v1641, %v2252
    %v2430 = vadd.f32 %v1643, %v2254
    %v2431 = vadd.f32 %v1754, %v2365
    %v2432 = vadd.f32 %v1756, %v2367
    %v2433 = vadd.f32 %v1645, %v2256
    %v2434 = vadd.f32 %v1647, %v2258
    %v2435 = vadd.f32 %v1758, %v2369
    %v2436 = vadd.f32 %v1760, %v2371
    %v2437 = vld [vmem:[%s2] sm:$0xf]
    %v2439 = vlaneseq
    %v2440 = vshrl.u32 %v2439, 7
    %v2441 = vsub.s32 0, %v2440
    %v2442 = vrot.slane %v2437, %v2441
    %v2443 = vlaneseq
    %v2444 = vshrl.u32 %v2443, 7
    %v2445 = vsub.s32 1, %v2444
    %v2446 = vrot.slane %v2437, %v2445
    %v2447 = vlaneseq
    %v2448 = vshrl.u32 %v2447, 7
    %v2449 = vsub.s32 2, %v2448
    %v2450 = vrot.slane %v2437, %v2449
    %v2451 = vlaneseq
    %v2452 = vshrl.u32 %v2451, 7
    %v2453 = vsub.s32 3, %v2452
    %v2454 = vrot.slane %v2437, %v2453
    %v2459 = vadd.f32 %v2373, %v2442
    %v2460 = vadd.f32 %v2374, %v2446
    %v2461 = vadd.f32 %v2375, %v2450
    %v2462 = vadd.f32 %v2376, %v2454
    %v2463 = vadd.f32 %v2377, %v2442
    %v2464 = vadd.f32 %v2378, %v2446
    %v2465 = vadd.f32 %v2379, %v2450
    %v2466 = vadd.f32 %v2380, %v2454
    %v2467 = vadd.f32 %v2381, %v2442
    %v2468 = vadd.f32 %v2382, %v2446
    %v2469 = vadd.f32 %v2383, %v2450
    %v2470 = vadd.f32 %v2384, %v2454
    %v2471 = vadd.f32 %v2385, %v2442
    %v2472 = vadd.f32 %v2386, %v2446
    %v2473 = vadd.f32 %v2387, %v2450
    %v2474 = vadd.f32 %v2388, %v2454
    %v2475 = vadd.f32 %v2389, %v2442
    %v2476 = vadd.f32 %v2390, %v2446
    %v2477 = vadd.f32 %v2391, %v2450
    %v2478 = vadd.f32 %v2392, %v2454
    %v2479 = vadd.f32 %v2393, %v2442
    %v2480 = vadd.f32 %v2394, %v2446
    %v2481 = vadd.f32 %v2395, %v2450
    %v2482 = vadd.f32 %v2396, %v2454
    %v2483 = vadd.f32 %v2397, %v2442
    %v2484 = vadd.f32 %v2398, %v2446
    %v2485 = vadd.f32 %v2399, %v2450
    %v2486 = vadd.f32 %v2400, %v2454
    %v2487 = vadd.f32 %v2401, %v2442
    %v2488 = vadd.f32 %v2402, %v2446
    %v2489 = vadd.f32 %v2403, %v2450
    %v2490 = vadd.f32 %v2404, %v2454
    %v2491 = vadd.f32 %v2405, %v2442
    %v2492 = vadd.f32 %v2406, %v2446
    %v2493 = vadd.f32 %v2407, %v2450
    %v2494 = vadd.f32 %v2408, %v2454
    %v2495 = vadd.f32 %v2409, %v2442
    %v2496 = vadd.f32 %v2410, %v2446
    %v2497 = vadd.f32 %v2411, %v2450
    %v2498 = vadd.f32 %v2412, %v2454
    %v2499 = vadd.f32 %v2413, %v2442
    %v2500 = vadd.f32 %v2414, %v2446
    %v2501 = vadd.f32 %v2415, %v2450
    %v2502 = vadd.f32 %v2416, %v2454
    %v2503 = vadd.f32 %v2417, %v2442
    %v2504 = vadd.f32 %v2418, %v2446
    %v2505 = vadd.f32 %v2419, %v2450
    %v2506 = vadd.f32 %v2420, %v2454
    %v2507 = vadd.f32 %v2421, %v2442
    %v2508 = vadd.f32 %v2422, %v2446
    %v2509 = vadd.f32 %v2423, %v2450
    %v2510 = vadd.f32 %v2424, %v2454
    %v2511 = vadd.f32 %v2425, %v2442
    %v2512 = vadd.f32 %v2426, %v2446
    %v2513 = vadd.f32 %v2427, %v2450
    %v2514 = vadd.f32 %v2428, %v2454
    %v2515 = vadd.f32 %v2429, %v2442
    %v2516 = vadd.f32 %v2430, %v2446
    %v2517 = vadd.f32 %v2431, %v2450
    %v2518 = vadd.f32 %v2432, %v2454
    %v2519 = vadd.f32 %v2433, %v2442
    %v2520 = vadd.f32 %v2434, %v2446
    %v2521 = vadd.f32 %v2435, %v2450
    %v2522 = vadd.f32 %v2436, %v2454
    %v2523 = vmax.f32 %v2459, 0.0
    %v2524 = vmax.f32 %v2460, 0.0
    %v2525 = vmax.f32 %v2461, 0.0
    %v2526 = vmax.f32 %v2462, 0.0
    %v2527 = vmax.f32 %v2463, 0.0
    %v2528 = vmax.f32 %v2464, 0.0
    %v2529 = vmax.f32 %v2465, 0.0
    %v2530 = vmax.f32 %v2466, 0.0
    %v2531 = vmax.f32 %v2467, 0.0
    %v2532 = vmax.f32 %v2468, 0.0
    %v2533 = vmax.f32 %v2469, 0.0
    %v2534 = vmax.f32 %v2470, 0.0
    %v2535 = vmax.f32 %v2471, 0.0
    %v2536 = vmax.f32 %v2472, 0.0
    %v2537 = vmax.f32 %v2473, 0.0
    %v2538 = vmax.f32 %v2474, 0.0
    %v2539 = vmax.f32 %v2475, 0.0
    %v2540 = vmax.f32 %v2476, 0.0
    %v2541 = vmax.f32 %v2477, 0.0
    %v2542 = vmax.f32 %v2478, 0.0
    %v2543 = vmax.f32 %v2479, 0.0
    %v2544 = vmax.f32 %v2480, 0.0
    %v2545 = vmax.f32 %v2481, 0.0
    %v2546 = vmax.f32 %v2482, 0.0
    %v2547 = vmax.f32 %v2483, 0.0
    %v2548 = vmax.f32 %v2484, 0.0
    %v2549 = vmax.f32 %v2485, 0.0
    %v2550 = vmax.f32 %v2486, 0.0
    %v2551 = vmax.f32 %v2487, 0.0
    %v2552 = vmax.f32 %v2488, 0.0
    %v2553 = vmax.f32 %v2489, 0.0
    %v2554 = vmax.f32 %v2490, 0.0
    %v2555 = vmax.f32 %v2491, 0.0
    %v2556 = vmax.f32 %v2492, 0.0
    %v2557 = vmax.f32 %v2493, 0.0
    %v2558 = vmax.f32 %v2494, 0.0
    %v2559 = vmax.f32 %v2495, 0.0
    %v2560 = vmax.f32 %v2496, 0.0
    %v2561 = vmax.f32 %v2497, 0.0
    %v2562 = vmax.f32 %v2498, 0.0
    %v2563 = vmax.f32 %v2499, 0.0
    %v2564 = vmax.f32 %v2500, 0.0
    %v2565 = vmax.f32 %v2501, 0.0
    %v2566 = vmax.f32 %v2502, 0.0
    %v2567 = vmax.f32 %v2503, 0.0
    %v2568 = vmax.f32 %v2504, 0.0
    %v2569 = vmax.f32 %v2505, 0.0
    %v2570 = vmax.f32 %v2506, 0.0
    %v2571 = vmax.f32 %v2507, 0.0
    %v2572 = vmax.f32 %v2508, 0.0
    %v2573 = vmax.f32 %v2509, 0.0
    %v2574 = vmax.f32 %v2510, 0.0
    %v2575 = vmax.f32 %v2511, 0.0
    %v2576 = vmax.f32 %v2512, 0.0
    %v2577 = vmax.f32 %v2513, 0.0
    %v2578 = vmax.f32 %v2514, 0.0
    %v2579 = vmax.f32 %v2515, 0.0
    %v2580 = vmax.f32 %v2516, 0.0
    %v2581 = vmax.f32 %v2517, 0.0
    %v2582 = vmax.f32 %v2518, 0.0
    %v2583 = vmax.f32 %v2519, 0.0
    %v2584 = vmax.f32 %v2520, 0.0
    %v2585 = vmax.f32 %v2521, 0.0
    %v2586 = vmax.f32 %v2522, 0.0
    %v2587 = vpack.c.bf16 %v2527, %v2523
    %v2588 = vpack.c.bf16 %v2528, %v2524
    %v2589 = vpack.c.bf16 %v2529, %v2525
    %v2590 = vpack.c.bf16 %v2530, %v2526
    %v2591 = vpack.c.bf16 %v2535, %v2531
    %v2592 = vpack.c.bf16 %v2536, %v2532
    %v2593 = vpack.c.bf16 %v2537, %v2533
    %v2594 = vpack.c.bf16 %v2538, %v2534
    %v2595 = vpack.c.bf16 %v2543, %v2539
    %v2596 = vpack.c.bf16 %v2544, %v2540
    %v2597 = vpack.c.bf16 %v2545, %v2541
    %v2598 = vpack.c.bf16 %v2546, %v2542
    %v2599 = vpack.c.bf16 %v2551, %v2547
    %v2600 = vpack.c.bf16 %v2552, %v2548
    %v2601 = vpack.c.bf16 %v2553, %v2549
    %v2602 = vpack.c.bf16 %v2554, %v2550
    %v2603 = vpack.c.bf16 %v2559, %v2555
    %v2604 = vpack.c.bf16 %v2560, %v2556
    %v2605 = vpack.c.bf16 %v2561, %v2557
    %v2606 = vpack.c.bf16 %v2562, %v2558
    %v2607 = vpack.c.bf16 %v2567, %v2563
    %v2608 = vpack.c.bf16 %v2568, %v2564
    %v2609 = vpack.c.bf16 %v2569, %v2565
    %v2610 = vpack.c.bf16 %v2570, %v2566
    %v2611 = vpack.c.bf16 %v2575, %v2571
    %v2612 = vpack.c.bf16 %v2576, %v2572
    %v2613 = vpack.c.bf16 %v2577, %v2573
    %v2614 = vpack.c.bf16 %v2578, %v2574
    %v2615 = vpack.c.bf16 %v2583, %v2579
    %v2616 = vpack.c.bf16 %v2584, %v2580
    %v2617 = vpack.c.bf16 %v2585, %v2581
    %v2618 = vpack.c.bf16 %v2586, %v2582
    %2619 = vmatprep.subr.bf16.mxu0 %v2588
    %2620 = vmatpush1.bf16.msra.mxu0 %v2587
    %2621 = vmatprep.subr.bf16.mxu0 %v2592
    %2622 = vmatpush1.bf16.msra.mxu0 %v2591
    %2623 = vmatprep.subr.bf16.mxu0 %v2596
    %2624 = vmatpush1.bf16.msra.mxu0 %v2595
    %2625 = vmatprep.subr.bf16.mxu0 %v2600
    %2626 = vmatpush1.bf16.msra.mxu0 %v2599
    %2627 = vmatprep.subr.bf16.mxu0 %v2604
    %2628 = vmatpush1.bf16.msra.mxu0 %v2603
    %2629 = vmatprep.subr.bf16.mxu0 %v2608
    %2630 = vmatpush1.bf16.msra.mxu0 %v2607
    %2631 = vmatprep.subr.bf16.mxu0 %v2612
    %2632 = vmatpush1.bf16.msra.mxu0 %v2611
    %2633 = vmatprep.subr.bf16.mxu0 %v2616
    %2634 = vmatpush1.bf16.msra.mxu0 %v2615
    %2635 = vmatprep.subr.bf16.mxu0 0
    %2636 = vmatpush1.bf16.msra.mxu0 0
    %2637 = vmatprep.subr.bf16.mxu0 0
    %2638 = vmatpush1.bf16.msra.mxu0 0
    %2639 = vmatprep.subr.bf16.mxu0 0
    %2640 = vmatpush1.bf16.msra.mxu0 0
    %2641 = vmatprep.subr.bf16.mxu0 0
    %2642 = vmatpush1.bf16.msra.mxu0 0
    %2643 = vmatprep.subr.bf16.mxu0 0
    %2644 = vmatpush1.bf16.msra.mxu0 0
    %2645 = vmatprep.subr.bf16.mxu0 0
    %2646 = vmatpush1.bf16.msra.mxu0 0
    %2647 = vmatprep.subr.bf16.mxu0 0
    %2648 = vmatpush1.bf16.msra.mxu0 0
    %2649 = vmatprep.subr.bf16.mxu0 0
    %2650 = vmatpush1.bf16.msra.mxu0 0
    %2651 = vmatprep.mubr.bf16.mxu0 0
    %2652 = vmatmul.mubr.bf16.gmra.mrb[0].mxu0 %v122
    %v2653 = vpop.f32.mrb[0].mxu0
    %v2654 = vadd.f32 0.0, %v2653
    %v2655 = vpop.f32.mrb[0].mxu0
    %v2656 = vadd.f32 0.0, %v2655
    %v2657 = vpop.f32.mrb[0].mxu0
    %v2658 = vadd.f32 0.0, %v2657
    %v2659 = vpop.f32.mrb[0].mxu0
    %v2660 = vadd.f32 0.0, %v2659
    %2661 = vmatprep.mubr.bf16.mxu0 0
    %2662 = vmatmul.mubr.bf16.gmra.mrb[0].mxu0 %v123
    %v2663 = vpop.f32.mrb[0].mxu0
    %v2664 = vadd.f32 0.0, %v2663
    %v2665 = vpop.f32.mrb[0].mxu0
    %v2666 = vadd.f32 0.0, %v2665
    %v2667 = vpop.f32.mrb[0].mxu0
    %v2668 = vadd.f32 0.0, %v2667
    %v2669 = vpop.f32.mrb[0].mxu0
    %v2670 = vadd.f32 0.0, %v2669
    %2671 = vmatprep.mubr.bf16.mxu0 0
    %2672 = vmatmul.mubr.bf16.gmra.mrb[0].mxu0 %v124
    %v2673 = vpop.f32.mrb[0].mxu0
    %v2674 = vadd.f32 0.0, %v2673
    %v2675 = vpop.f32.mrb[0].mxu0
    %v2676 = vadd.f32 0.0, %v2675
    %v2677 = vpop.f32.mrb[0].mxu0
    %v2678 = vadd.f32 0.0, %v2677
    %v2679 = vpop.f32.mrb[0].mxu0
    %v2680 = vadd.f32 0.0, %v2679
    %2681 = vmatprep.mubr.bf16.mxu0 0
    %2682 = vmatmul.mubr.bf16.gmra.mrb[0].mxu0 %v125
    %v2683 = vpop.f32.mrb[0].mxu0
    %v2684 = vadd.f32 0.0, %v2683
    %v2685 = vpop.f32.mrb[0].mxu0
    %v2686 = vadd.f32 0.0, %v2685
    %v2687 = vpop.f32.mrb[0].mxu0
    %v2688 = vadd.f32 0.0, %v2687
    %v2689 = vpop.f32.mrb[0].mxu0
    %v2690 = vadd.f32 0.0, %v2689
    %2691 = vmatprep.mubr.bf16.mxu0 0
    %2692 = vmatmul.mubr.bf16.gmra.mrb[0].mxu0 %v126
    %v2693 = vpop.f32.mrb[0].mxu0
    %v2694 = vadd.f32 0.0, %v2693
    %v2695 = vpop.f32.mrb[0].mxu0
    %v2696 = vadd.f32 0.0, %v2695
    %v2697 = vpop.f32.mrb[0].mxu0
    %v2698 = vadd.f32 0.0, %v2697
    %v2699 = vpop.f32.mrb[0].mxu0
    %v2700 = vadd.f32 0.0, %v2699
    %2701 = vmatprep.mubr.bf16.mxu0 0
    %2702 = vmatmul.mubr.bf16.gmra.mrb[0].mxu0 %v127
    %v2703 = vpop.f32.mrb[0].mxu0
    %v2704 = vadd.f32 0.0, %v2703
    %v2705 = vpop.f32.mrb[0].mxu0
    %v2706 = vadd.f32 0.0, %v2705
    %v2707 = vpop.f32.mrb[0].mxu0
    %v2708 = vadd.f32 0.0, %v2707
    %v2709 = vpop.f32.mrb[0].mxu0
    %v2710 = vadd.f32 0.0, %v2709
    %2711 = vmatprep.mubr.bf16.mxu0 0
    %2712 = vmatmul.mubr.bf16.gmra.mrb[0].mxu0 %v128
    %v2713 = vpop.f32.mrb[0].mxu0
    %v2714 = vadd.f32 0.0, %v2713
    %v2715 = vpop.f32.mrb[0].mxu0
    %v2716 = vadd.f32 0.0, %v2715
    %v2717 = vpop.f32.mrb[0].mxu0
    %v2718 = vadd.f32 0.0, %v2717
    %v2719 = vpop.f32.mrb[0].mxu0
    %v2720 = vadd.f32 0.0, %v2719
    %2721 = vmatprep.mubr.bf16.mxu0 0
    %2722 = vmatmul.mubr.bf16.gmra.mrb[0].mxu0 %v129
    %v2723 = vpop.f32.mrb[0].mxu0
    %v2724 = vadd.f32 0.0, %v2723
    %v2725 = vpop.f32.mrb[0].mxu0
    %v2726 = vadd.f32 0.0, %v2725
    %v2727 = vpop.f32.mrb[0].mxu0
    %v2728 = vadd.f32 0.0, %v2727
    %v2729 = vpop.f32.mrb[0].mxu0
    %v2730 = vadd.f32 0.0, %v2729
    %2731 = vdwg.mxu0
    %2732 = vmatprep.subr.bf16.mxu0 %v2590
    %2733 = vmatpush1.bf16.msra.mxu0 %v2589
    %2734 = vmatprep.subr.bf16.mxu0 %v2594
    %2735 = vmatpush1.bf16.msra.mxu0 %v2593
    %2736 = vmatprep.subr.bf16.mxu0 %v2598
    %2737 = vmatpush1.bf16.msra.mxu0 %v2597
    %2738 = vmatprep.subr.bf16.mxu0 %v2602
    %2739 = vmatpush1.bf16.msra.mxu0 %v2601
    %2740 = vmatprep.subr.bf16.mxu0 %v2606
    %2741 = vmatpush1.bf16.msra.mxu0 %v2605
    %2742 = vmatprep.subr.bf16.mxu0 %v2610
    %2743 = vmatpush1.bf16.msra.mxu0 %v2609
    %2744 = vmatprep.subr.bf16.mxu0 %v2614
    %2745 = vmatpush1.bf16.msra.mxu0 %v2613
    %2746 = vmatprep.subr.bf16.mxu0 %v2618
    %2747 = vmatpush1.bf16.msra.mxu0 %v2617
    %2748 = vmatprep.subr.bf16.mxu0 0
    %2749 = vmatpush1.bf16.msra.mxu0 0
    %2750 = vmatprep.subr.bf16.mxu0 0
    %2751 = vmatpush1.bf16.msra.mxu0 0
    %2752 = vmatprep.subr.bf16.mxu0 0
    %2753 = vmatpush1.bf16.msra.mxu0 0
    %2754 = vmatprep.subr.bf16.mxu0 0
    %2755 = vmatpush1.bf16.msra.mxu0 0
    %2756 = vmatprep.subr.bf16.mxu0 0
    %2757 = vmatpush1.bf16.msra.mxu0 0
    %2758 = vmatprep.subr.bf16.mxu0 0
    %2759 = vmatpush1.bf16.msra.mxu0 0
    %2760 = vmatprep.subr.bf16.mxu0 0
    %2761 = vmatpush1.bf16.msra.mxu0 0
    %2762 = vmatprep.subr.bf16.mxu0 0
    %2763 = vmatpush1.bf16.msra.mxu0 0
    %2764 = vmatprep.mubr.bf16.mxu0 0
    %2765 = vmatmul.mubr.bf16.gmra.mrb[0].mxu0 %v122
    %v2766 = vpop.f32.mrb[0].mxu0
    %v2767 = vadd.f32 0.0, %v2766
    %v2768 = vpop.f32.mrb[0].mxu0
    %v2769 = vadd.f32 0.0, %v2768
    %v2770 = vpop.f32.mrb[0].mxu0
    %v2771 = vadd.f32 0.0, %v2770
    %v2772 = vpop.f32.mrb[0].mxu0
    %v2773 = vadd.f32 0.0, %v2772
    %2774 = vmatprep.mubr.bf16.mxu0 0
    %2775 = vmatmul.mubr.bf16.gmra.mrb[0].mxu0 %v123
    %v2776 = vpop.f32.mrb[0].mxu0
    %v2777 = vadd.f32 0.0, %v2776
    %v2778 = vpop.f32.mrb[0].mxu0
    %v2779 = vadd.f32 0.0, %v2778
    %v2780 = vpop.f32.mrb[0].mxu0
    %v2781 = vadd.f32 0.0, %v2780
    %v2782 = vpop.f32.mrb[0].mxu0
    %v2783 = vadd.f32 0.0, %v2782
    %2784 = vmatprep.mubr.bf16.mxu0 0
    %2785 = vmatmul.mubr.bf16.gmra.mrb[0].mxu0 %v124
    %v2786 = vpop.f32.mrb[0].mxu0
    %v2787 = vadd.f32 0.0, %v2786
    %v2788 = vpop.f32.mrb[0].mxu0
    %v2789 = vadd.f32 0.0, %v2788
    %v2790 = vpop.f32.mrb[0].mxu0
    %v2791 = vadd.f32 0.0, %v2790
    %v2792 = vpop.f32.mrb[0].mxu0
    %v2793 = vadd.f32 0.0, %v2792
    %2794 = vmatprep.mubr.bf16.mxu0 0
    %2795 = vmatmul.mubr.bf16.gmra.mrb[0].mxu0 %v125
    %v2796 = vpop.f32.mrb[0].mxu0
    %v2797 = vadd.f32 0.0, %v2796
    %v2798 = vpop.f32.mrb[0].mxu0
    %v2799 = vadd.f32 0.0, %v2798
    %v2800 = vpop.f32.mrb[0].mxu0
    %v2801 = vadd.f32 0.0, %v2800
    %v2802 = vpop.f32.mrb[0].mxu0
    %v2803 = vadd.f32 0.0, %v2802
    %2804 = vmatprep.mubr.bf16.mxu0 0
    %2805 = vmatmul.mubr.bf16.gmra.mrb[0].mxu0 %v126
    %v2806 = vpop.f32.mrb[0].mxu0
    %v2807 = vadd.f32 0.0, %v2806
    %v2808 = vpop.f32.mrb[0].mxu0
    %v2809 = vadd.f32 0.0, %v2808
    %v2810 = vpop.f32.mrb[0].mxu0
    %v2811 = vadd.f32 0.0, %v2810
    %v2812 = vpop.f32.mrb[0].mxu0
    %v2813 = vadd.f32 0.0, %v2812
    %2814 = vmatprep.mubr.bf16.mxu0 0
    %2815 = vmatmul.mubr.bf16.gmra.mrb[0].mxu0 %v127
    %v2816 = vpop.f32.mrb[0].mxu0
    %v2817 = vadd.f32 0.0, %v2816
    %v2818 = vpop.f32.mrb[0].mxu0
    %v2819 = vadd.f32 0.0, %v2818
    %v2820 = vpop.f32.mrb[0].mxu0
    %v2821 = vadd.f32 0.0, %v2820
    %v2822 = vpop.f32.mrb[0].mxu0
    %v2823 = vadd.f32 0.0, %v2822
    %2824 = vmatprep.mubr.bf16.mxu0 0
    %2825 = vmatmul.mubr.bf16.gmra.mrb[0].mxu0 %v128
    %v2826 = vpop.f32.mrb[0].mxu0
    %v2827 = vadd.f32 0.0, %v2826
    %v2828 = vpop.f32.mrb[0].mxu0
    %v2829 = vadd.f32 0.0, %v2828
    %v2830 = vpop.f32.mrb[0].mxu0
    %v2831 = vadd.f32 0.0, %v2830
    %v2832 = vpop.f32.mrb[0].mxu0
    %v2833 = vadd.f32 0.0, %v2832
    %2834 = vmatprep.mubr.bf16.mxu0 0
    %2835 = vmatmul.mubr.bf16.gmra.mrb[0].mxu0 %v129
    %v2836 = vpop.f32.mrb[0].mxu0
    %v2837 = vadd.f32 0.0, %v2836
    %v2838 = vpop.f32.mrb[0].mxu0
    %v2839 = vadd.f32 0.0, %v2838
    %v2840 = vpop.f32.mrb[0].mxu0
    %v2841 = vadd.f32 0.0, %v2840
    %v2842 = vpop.f32.mrb[0].mxu0
    %v2843 = vadd.f32 0.0, %v2842
    %2844 = vdwg.mxu0
    %v2845 = vpack.c.bf16 %v2658, %v2654
    %v2846 = vpack.c.bf16 %v2660, %v2656
    %v2847 = vpack.c.bf16 %v2771, %v2767
    %v2848 = vpack.c.bf16 %v2773, %v2769
    %v2849 = vpack.c.bf16 %v2668, %v2664
    %v2850 = vpack.c.bf16 %v2670, %v2666
    %v2851 = vpack.c.bf16 %v2781, %v2777
    %v2852 = vpack.c.bf16 %v2783, %v2779
    %v2853 = vpack.c.bf16 %v2678, %v2674
    %v2854 = vpack.c.bf16 %v2680, %v2676
    %v2855 = vpack.c.bf16 %v2791, %v2787
    %v2856 = vpack.c.bf16 %v2793, %v2789
    %v2857 = vpack.c.bf16 %v2688, %v2684
    %v2858 = vpack.c.bf16 %v2690, %v2686
    %v2859 = vpack.c.bf16 %v2801, %v2797
    %v2860 = vpack.c.bf16 %v2803, %v2799
    %v2861 = vpack.c.bf16 %v2698, %v2694
    %v2862 = vpack.c.bf16 %v2700, %v2696
    %v2863 = vpack.c.bf16 %v2811, %v2807
    %v2864 = vpack.c.bf16 %v2813, %v2809
    %v2865 = vpack.c.bf16 %v2708, %v2704
    %v2866 = vpack.c.bf16 %v2710, %v2706
    %v2867 = vpack.c.bf16 %v2821, %v2817
    %v2868 = vpack.c.bf16 %v2823, %v2819
    %v2869 = vpack.c.bf16 %v2718, %v2714
    %v2870 = vpack.c.bf16 %v2720, %v2716
    %v2871 = vpack.c.bf16 %v2831, %v2827
    %v2872 = vpack.c.bf16 %v2833, %v2829
    %v2873 = vpack.c.bf16 %v2728, %v2724
    %v2874 = vpack.c.bf16 %v2730, %v2726
    %v2875 = vpack.c.bf16 %v2841, %v2837
    %v2876 = vpack.c.bf16 %v2843, %v2839
    %2877 = vmatprep.subr.bf16.mxu0 %v2588
    %2878 = vmatpush1.bf16.msra.mxu0 %v2587
    %2879 = vmatprep.subr.bf16.mxu0 %v2592
    %2880 = vmatpush1.bf16.msra.mxu0 %v2591
    %2881 = vmatprep.subr.bf16.mxu0 %v2596
    %2882 = vmatpush1.bf16.msra.mxu0 %v2595
    %2883 = vmatprep.subr.bf16.mxu0 %v2600
    %2884 = vmatpush1.bf16.msra.mxu0 %v2599
    %2885 = vmatprep.subr.bf16.mxu0 %v2604
    %2886 = vmatpush1.bf16.msra.mxu0 %v2603
    %2887 = vmatprep.subr.bf16.mxu0 %v2608
    %2888 = vmatpush1.bf16.msra.mxu0 %v2607
    %2889 = vmatprep.subr.bf16.mxu0 %v2612
    %2890 = vmatpush1.bf16.msra.mxu0 %v2611
    %2891 = vmatprep.subr.bf16.mxu0 %v2616
    %2892 = vmatpush1.bf16.msra.mxu0 %v2615
    %2893 = vmatprep.subr.bf16.mxu0 0
    %2894 = vmatpush1.bf16.msra.mxu0 0
    %2895 = vmatprep.subr.bf16.mxu0 0
    %2896 = vmatpush1.bf16.msra.mxu0 0
    %2897 = vmatprep.subr.bf16.mxu0 0
    %2898 = vmatpush1.bf16.msra.mxu0 0
    %2899 = vmatprep.subr.bf16.mxu0 0
    %2900 = vmatpush1.bf16.msra.mxu0 0
    %2901 = vmatprep.subr.bf16.mxu0 0
    %2902 = vmatpush1.bf16.msra.mxu0 0
    %2903 = vmatprep.subr.bf16.mxu0 0
    %2904 = vmatpush1.bf16.msra.mxu0 0
    %2905 = vmatprep.subr.bf16.mxu0 0
    %2906 = vmatpush1.bf16.msra.mxu0 0
    %2907 = vmatprep.subr.bf16.mxu0 0
    %2908 = vmatpush1.bf16.msra.mxu0 0
    %2909 = vmatprep.mubr.bf16.mxu0 0
    %2910 = vmatmul.mubr.bf16.gmra.mrb[0].mxu0 %v396
    %v2911 = vpop.f32.mrb[0].mxu0
    %v2912 = vadd.f32 0.0, %v2911
    %v2913 = vpop.f32.mrb[0].mxu0
    %v2914 = vadd.f32 0.0, %v2913
    %v2915 = vpop.f32.mrb[0].mxu0
    %v2916 = vadd.f32 0.0, %v2915
    %v2917 = vpop.f32.mrb[0].mxu0
    %v2918 = vadd.f32 0.0, %v2917
    %2919 = vmatprep.mubr.bf16.mxu0 0
    %2920 = vmatmul.mubr.bf16.gmra.mrb[0].mxu0 %v397
    %v2921 = vpop.f32.mrb[0].mxu0
    %v2922 = vadd.f32 0.0, %v2921
    %v2923 = vpop.f32.mrb[0].mxu0
    %v2924 = vadd.f32 0.0, %v2923
    %v2925 = vpop.f32.mrb[0].mxu0
    %v2926 = vadd.f32 0.0, %v2925
    %v2927 = vpop.f32.mrb[0].mxu0
    %v2928 = vadd.f32 0.0, %v2927
    %2929 = vmatprep.mubr.bf16.mxu0 0
    %2930 = vmatmul.mubr.bf16.gmra.mrb[0].mxu0 %v398
    %v2931 = vpop.f32.mrb[0].mxu0
    %v2932 = vadd.f32 0.0, %v2931
    %v2933 = vpop.f32.mrb[0].mxu0
    %v2934 = vadd.f32 0.0, %v2933
    %v2935 = vpop.f32.mrb[0].mxu0
    %v2936 = vadd.f32 0.0, %v2935
    %v2937 = vpop.f32.mrb[0].mxu0
    %v2938 = vadd.f32 0.0, %v2937
    %2939 = vmatprep.mubr.bf16.mxu0 0
    %2940 = vmatmul.mubr.bf16.gmra.mrb[0].mxu0 %v399
    %v2941 = vpop.f32.mrb[0].mxu0
    %v2942 = vadd.f32 0.0, %v2941
    %v2943 = vpop.f32.mrb[0].mxu0
    %v2944 = vadd.f32 0.0, %v2943
    %v2945 = vpop.f32.mrb[0].mxu0
    %v2946 = vadd.f32 0.0, %v2945
    %v2947 = vpop.f32.mrb[0].mxu0
    %v2948 = vadd.f32 0.0, %v2947
    %2949 = vmatprep.mubr.bf16.mxu0 0
    %2950 = vmatmul.mubr.bf16.gmra.mrb[0].mxu0 %v400
    %v2951 = vpop.f32.mrb[0].mxu0
    %v2952 = vadd.f32 0.0, %v2951
    %v2953 = vpop.f32.mrb[0].mxu0
    %v2954 = vadd.f32 0.0, %v2953
    %v2955 = vpop.f32.mrb[0].mxu0
    %v2956 = vadd.f32 0.0, %v2955
    %v2957 = vpop.f32.mrb[0].mxu0
    %v2958 = vadd.f32 0.0, %v2957
    %2959 = vmatprep.mubr.bf16.mxu0 0
    %2960 = vmatmul.mubr.bf16.gmra.mrb[0].mxu0 %v401
    %v2961 = vpop.f32.mrb[0].mxu0
    %v2962 = vadd.f32 0.0, %v2961
    %v2963 = vpop.f32.mrb[0].mxu0
    %v2964 = vadd.f32 0.0, %v2963
    %v2965 = vpop.f32.mrb[0].mxu0
    %v2966 = vadd.f32 0.0, %v2965
    %v2967 = vpop.f32.mrb[0].mxu0
    %v2968 = vadd.f32 0.0, %v2967
    %2969 = vmatprep.mubr.bf16.mxu0 0
    %2970 = vmatmul.mubr.bf16.gmra.mrb[0].mxu0 %v402
    %v2971 = vpop.f32.mrb[0].mxu0
    %v2972 = vadd.f32 0.0, %v2971
    %v2973 = vpop.f32.mrb[0].mxu0
    %v2974 = vadd.f32 0.0, %v2973
    %v2975 = vpop.f32.mrb[0].mxu0
    %v2976 = vadd.f32 0.0, %v2975
    %v2977 = vpop.f32.mrb[0].mxu0
    %v2978 = vadd.f32 0.0, %v2977
    %2979 = vmatprep.mubr.bf16.mxu0 0
    %2980 = vmatmul.mubr.bf16.gmra.mrb[0].mxu0 %v403
    %v2981 = vpop.f32.mrb[0].mxu0
    %v2982 = vadd.f32 0.0, %v2981
    %v2983 = vpop.f32.mrb[0].mxu0
    %v2984 = vadd.f32 0.0, %v2983
    %v2985 = vpop.f32.mrb[0].mxu0
    %v2986 = vadd.f32 0.0, %v2985
    %v2987 = vpop.f32.mrb[0].mxu0
    %v2988 = vadd.f32 0.0, %v2987
    %2989 = vdwg.mxu0
    %2990 = vmatprep.subr.bf16.mxu0 %v2590
    %2991 = vmatpush1.bf16.msra.mxu0 %v2589
    %2992 = vmatprep.subr.bf16.mxu0 %v2594
    %2993 = vmatpush1.bf16.msra.mxu0 %v2593
    %2994 = vmatprep.subr.bf16.mxu0 %v2598
    %2995 = vmatpush1.bf16.msra.mxu0 %v2597
    %2996 = vmatprep.subr.bf16.mxu0 %v2602
    %2997 = vmatpush1.bf16.msra.mxu0 %v2601
    %2998 = vmatprep.subr.bf16.mxu0 %v2606
    %2999 = vmatpush1.bf16.msra.mxu0 %v2605
    %3000 = vmatprep.subr.bf16.mxu0 %v2610
    %3001 = vmatpush1.bf16.msra.mxu0 %v2609
    %3002 = vmatprep.subr.bf16.mxu0 %v2614
    %3003 = vmatpush1.bf16.msra.mxu0 %v2613
    %3004 = vmatprep.subr.bf16.mxu0 %v2618
    %3005 = vmatpush1.bf16.msra.mxu0 %v2617
    %3006 = vmatprep.subr.bf16.mxu0 0
    %3007 = vmatpush1.bf16.msra.mxu0 0
    %3008 = vmatprep.subr.bf16.mxu0 0
    %3009 = vmatpush1.bf16.msra.mxu0 0
    %3010 = vmatprep.subr.bf16.mxu0 0
    %3011 = vmatpush1.bf16.msra.mxu0 0
    %3012 = vmatprep.subr.bf16.mxu0 0
    %3013 = vmatpush1.bf16.msra.mxu0 0
    %3014 = vmatprep.subr.bf16.mxu0 0
    %3015 = vmatpush1.bf16.msra.mxu0 0
    %3016 = vmatprep.subr.bf16.mxu0 0
    %3017 = vmatpush1.bf16.msra.mxu0 0
    %3018 = vmatprep.subr.bf16.mxu0 0
    %3019 = vmatpush1.bf16.msra.mxu0 0
    %3020 = vmatprep.subr.bf16.mxu0 0
    %3021 = vmatpush1.bf16.msra.mxu0 0
    %3022 = vmatprep.mubr.bf16.mxu0 0
    %3023 = vmatmul.mubr.bf16.gmra.mrb[0].mxu0 %v396
    %v3024 = vpop.f32.mrb[0].mxu0
    %v3025 = vadd.f32 0.0, %v3024
    %v3026 = vpop.f32.mrb[0].mxu0
    %v3027 = vadd.f32 0.0, %v3026
    %v3028 = vpop.f32.mrb[0].mxu0
    %v3029 = vadd.f32 0.0, %v3028
    %v3030 = vpop.f32.mrb[0].mxu0
    %v3031 = vadd.f32 0.0, %v3030
    %3032 = vmatprep.mubr.bf16.mxu0 0
    %3033 = vmatmul.mubr.bf16.gmra.mrb[0].mxu0 %v397
    %v3034 = vpop.f32.mrb[0].mxu0
    %v3035 = vadd.f32 0.0, %v3034
    %v3036 = vpop.f32.mrb[0].mxu0
    %v3037 = vadd.f32 0.0, %v3036
    %v3038 = vpop.f32.mrb[0].mxu0
    %v3039 = vadd.f32 0.0, %v3038
    %v3040 = vpop.f32.mrb[0].mxu0
    %v3041 = vadd.f32 0.0, %v3040
    %3042 = vmatprep.mubr.bf16.mxu0 0
    %3043 = vmatmul.mubr.bf16.gmra.mrb[0].mxu0 %v398
    %v3044 = vpop.f32.mrb[0].mxu0
    %v3045 = vadd.f32 0.0, %v3044
    %v3046 = vpop.f32.mrb[0].mxu0
    %v3047 = vadd.f32 0.0, %v3046
    %v3048 = vpop.f32.mrb[0].mxu0
    %v3049 = vadd.f32 0.0, %v3048
    %v3050 = vpop.f32.mrb[0].mxu0
    %v3051 = vadd.f32 0.0, %v3050
    %3052 = vmatprep.mubr.bf16.mxu0 0
    %3053 = vmatmul.mubr.bf16.gmra.mrb[0].mxu0 %v399
    %v3054 = vpop.f32.mrb[0].mxu0
    %v3055 = vadd.f32 0.0, %v3054
    %v3056 = vpop.f32.mrb[0].mxu0
    %v3057 = vadd.f32 0.0, %v3056
    %v3058 = vpop.f32.mrb[0].mxu0
    %v3059 = vadd.f32 0.0, %v3058
    %v3060 = vpop.f32.mrb[0].mxu0
    %v3061 = vadd.f32 0.0, %v3060
    %3062 = vmatprep.mubr.bf16.mxu0 0
    %3063 = vmatmul.mubr.bf16.gmra.mrb[0].mxu0 %v400
    %v3064 = vpop.f32.mrb[0].mxu0
    %v3065 = vadd.f32 0.0, %v3064
    %v3066 = vpop.f32.mrb[0].mxu0
    %v3067 = vadd.f32 0.0, %v3066
    %v3068 = vpop.f32.mrb[0].mxu0
    %v3069 = vadd.f32 0.0, %v3068
    %v3070 = vpop.f32.mrb[0].mxu0
    %v3071 = vadd.f32 0.0, %v3070
    %3072 = vmatprep.mubr.bf16.mxu0 0
    %3073 = vmatmul.mubr.bf16.gmra.mrb[0].mxu0 %v401
    %v3074 = vpop.f32.mrb[0].mxu0
    %v3075 = vadd.f32 0.0, %v3074
    %v3076 = vpop.f32.mrb[0].mxu0
    %v3077 = vadd.f32 0.0, %v3076
    %v3078 = vpop.f32.mrb[0].mxu0
    %v3079 = vadd.f32 0.0, %v3078
    %v3080 = vpop.f32.mrb[0].mxu0
    %v3081 = vadd.f32 0.0, %v3080
    %3082 = vmatprep.mubr.bf16.mxu0 0
    %3083 = vmatmul.mubr.bf16.gmra.mrb[0].mxu0 %v402
    %v3084 = vpop.f32.mrb[0].mxu0
    %v3085 = vadd.f32 0.0, %v3084
    %v3086 = vpop.f32.mrb[0].mxu0
    %v3087 = vadd.f32 0.0, %v3086
    %v3088 = vpop.f32.mrb[0].mxu0
    %v3089 = vadd.f32 0.0, %v3088
    %v3090 = vpop.f32.mrb[0].mxu0
    %v3091 = vadd.f32 0.0, %v3090
    %3092 = vmatprep.mubr.bf16.mxu0 0
    %3093 = vmatmul.mubr.bf16.gmra.mrb[0].mxu0 %v403
    %v3094 = vpop.f32.mrb[0].mxu0
    %v3095 = vadd.f32 0.0, %v3094
    %v3096 = vpop.f32.mrb[0].mxu0
    %v3097 = vadd.f32 0.0, %v3096
    %v3098 = vpop.f32.mrb[0].mxu0
    %v3099 = vadd.f32 0.0, %v3098
    %v3100 = vpop.f32.mrb[0].mxu0
    %v3101 = vadd.f32 0.0, %v3100
    %3102 = vdwg.mxu0
    %v3103 = vpack.c.bf16 %v2916, %v2912
    %v3104 = vpack.c.bf16 %v2918, %v2914
    %v3105 = vpack.c.bf16 %v3029, %v3025
    %v3106 = vpack.c.bf16 %v3031, %v3027
    %v3107 = vpack.c.bf16 %v2926, %v2922
    %v3108 = vpack.c.bf16 %v2928, %v2924
    %v3109 = vpack.c.bf16 %v3039, %v3035
    %v3110 = vpack.c.bf16 %v3041, %v3037
    %v3111 = vpack.c.bf16 %v2936, %v2932
    %v3112 = vpack.c.bf16 %v2938, %v2934
    %v3113 = vpack.c.bf16 %v3049, %v3045
    %v3114 = vpack.c.bf16 %v3051, %v3047
    %v3115 = vpack.c.bf16 %v2946, %v2942
    %v3116 = vpack.c.bf16 %v2948, %v2944
    %v3117 = vpack.c.bf16 %v3059, %v3055
    %v3118 = vpack.c.bf16 %v3061, %v3057
    %v3119 = vpack.c.bf16 %v2956, %v2952
    %v3120 = vpack.c.bf16 %v2958, %v2954
    %v3121 = vpack.c.bf16 %v3069, %v3065
    %v3122 = vpack.c.bf16 %v3071, %v3067
    %v3123 = vpack.c.bf16 %v2966, %v2962
    %v3124 = vpack.c.bf16 %v2968, %v2964
    %v3125 = vpack.c.bf16 %v3079, %v3075
    %v3126 = vpack.c.bf16 %v3081, %v3077
    %v3127 = vpack.c.bf16 %v2976, %v2972
    %v3128 = vpack.c.bf16 %v2978, %v2974
    %v3129 = vpack.c.bf16 %v3089, %v3085
    %v3130 = vpack.c.bf16 %v3091, %v3087
    %v3131 = vpack.c.bf16 %v2986, %v2982
    %v3132 = vpack.c.bf16 %v2988, %v2984
    %v3133 = vpack.c.bf16 %v3099, %v3095
    %v3134 = vpack.c.bf16 %v3101, %v3097
    %v3135 = vld [vmem:[%s3] sm:$0xff]
    %v3136 = vld [vmem:[%s3 + $0x8] sm:$0xff]
    %v3137 = vld [vmem:[%s3 + $0x10] sm:$0xff]
    %v3138 = vld [vmem:[%s3 + $0x18] sm:$0xff]
    %v3139 = vld [vmem:[%s3 + $0x20] sm:$0xff]
    %v3140 = vld [vmem:[%s3 + $0x28] sm:$0xff]
    %v3141 = vld [vmem:[%s3 + $0x30] sm:$0xff]
    %v3142 = vld [vmem:[%s3 + $0x38] sm:$0xff]
    %v3143 = vld [vmem:[%s3 + $0x40] sm:$0xff]
    %v3144 = vld [vmem:[%s3 + $0x48] sm:$0xff]
    %v3145 = vld [vmem:[%s3 + $0x50] sm:$0xff]
    %v3146 = vld [vmem:[%s3 + $0x58] sm:$0xff]
    %v3147 = vld [vmem:[%s3 + $0x60] sm:$0xff]
    %v3148 = vld [vmem:[%s3 + $0x68] sm:$0xff]
    %v3149 = vld [vmem:[%s3 + $0x70] sm:$0xff]
    %v3150 = vld [vmem:[%s3 + $0x78] sm:$0xff]
    %v3151 = vld [vmem:[%s3 + $0x80] sm:$0xff]
    %v3152 = vld [vmem:[%s3 + $0x88] sm:$0xff]
    %v3153 = vld [vmem:[%s3 + $0x90] sm:$0xff]
    %v3154 = vld [vmem:[%s3 + $0x98] sm:$0xff]
    %v3155 = vld [vmem:[%s3 + $0xa0] sm:$0xff]
    %v3156 = vld [vmem:[%s3 + $0xa8] sm:$0xff]
    %v3157 = vld [vmem:[%s3 + $0xb0] sm:$0xff]
    %v3158 = vld [vmem:[%s3 + $0xb8] sm:$0xff]
    %v3159 = vld [vmem:[%s3 + $0xc0] sm:$0xff]
    %v3160 = vld [vmem:[%s3 + $0xc8] sm:$0xff]
    %v3161 = vld [vmem:[%s3 + $0xd0] sm:$0xff]
    %v3162 = vld [vmem:[%s3 + $0xd8] sm:$0xff]
    %v3163 = vld [vmem:[%s3 + $0xe0] sm:$0xff]
    %v3164 = vld [vmem:[%s3 + $0xe8] sm:$0xff]
    %v3165 = vld [vmem:[%s3 + $0xf0] sm:$0xff]
    %v3166 = vld [vmem:[%s3 + $0xf8] sm:$0xff]
    %v3167 = vld [vmem:[%s3 + $0x100] sm:$0xff]
    %v3168 = vld [vmem:[%s3 + $0x108] sm:$0xff]
    %v3169 = vld [vmem:[%s3 + $0x110] sm:$0xff]
    %v3170 = vld [vmem:[%s3 + $0x118] sm:$0xff]
    %v3171 = vld [vmem:[%s3 + $0x120] sm:$0xff]
    %v3172 = vld [vmem:[%s3 + $0x128] sm:$0xff]
    %v3173 = vld [vmem:[%s3 + $0x130] sm:$0xff]
    %v3174 = vld [vmem:[%s3 + $0x138] sm:$0xff]
    %v3175 = vld [vmem:[%s3 + $0x140] sm:$0xff]
    %v3176 = vld [vmem:[%s3 + $0x148] sm:$0xff]
    %v3177 = vld [vmem:[%s3 + $0x150] sm:$0xff]
    %v3178 = vld [vmem:[%s3 + $0x158] sm:$0xff]
    %v3179 = vld [vmem:[%s3 + $0x160] sm:$0xff]
    %v3180 = vld [vmem:[%s3 + $0x168] sm:$0xff]
    %v3181 = vld [vmem:[%s3 + $0x170] sm:$0xff]
    %v3182 = vld [vmem:[%s3 + $0x178] sm:$0xff]
    %v3183 = vld [vmem:[%s3 + $0x180] sm:$0xff]
    %v3184 = vld [vmem:[%s3 + $0x188] sm:$0xff]
    %v3185 = vld [vmem:[%s3 + $0x190] sm:$0xff]
    %v3186 = vld [vmem:[%s3 + $0x198] sm:$0xff]
    %v3187 = vld [vmem:[%s3 + $0x1a0] sm:$0xff]
    %v3188 = vld [vmem:[%s3 + $0x1a8] sm:$0xff]
    %v3189 = vld [vmem:[%s3 + $0x1b0] sm:$0xff]
    %v3190 = vld [vmem:[%s3 + $0x1b8] sm:$0xff]
    %v3191 = vld [vmem:[%s3 + $0x1c0] sm:$0xff]
    %v3192 = vld [vmem:[%s3 + $0x1c8] sm:$0xff]
    %v3193 = vld [vmem:[%s3 + $0x1d0] sm:$0xff]
    %v3194 = vld [vmem:[%s3 + $0x1d8] sm:$0xff]
    %v3195 = vld [vmem:[%s3 + $0x1e0] sm:$0xff]
    %v3196 = vld [vmem:[%s3 + $0x1e8] sm:$0xff]
    %v3197 = vld [vmem:[%s3 + $0x1f0] sm:$0xff]
    %v3198 = vld [vmem:[%s3 + $0x1f8] sm:$0xff]
    %s3199 = scalar_lea.vmem %s3, 512
    %v3200 = vld [vmem:[%s3199] sm:$0xff]
    %v3201 = vld [vmem:[%s3199 + $0x8] sm:$0xff]
    %v3202 = vld [vmem:[%s3199 + $0x10] sm:$0xff]
    %v3203 = vld [vmem:[%s3199 + $0x18] sm:$0xff]
    %v3204 = vld [vmem:[%s3199 + $0x20] sm:$0xff]
    %v3205 = vld [vmem:[%s3199 + $0x28] sm:$0xff]
    %v3206 = vld [vmem:[%s3199 + $0x30] sm:$0xff]
    %v3207 = vld [vmem:[%s3199 + $0x38] sm:$0xff]
    %v3208 = vld [vmem:[%s3199 + $0x40] sm:$0xff]
    %v3209 = vld [vmem:[%s3199 + $0x48] sm:$0xff]
    %v3210 = vld [vmem:[%s3199 + $0x50] sm:$0xff]
    %v3211 = vld [vmem:[%s3199 + $0x58] sm:$0xff]
    %v3212 = vld [vmem:[%s3199 + $0x60] sm:$0xff]
    %v3213 = vld [vmem:[%s3199 + $0x68] sm:$0xff]
    %v3214 = vld [vmem:[%s3199 + $0x70] sm:$0xff]
    %v3215 = vld [vmem:[%s3199 + $0x78] sm:$0xff]
    %v3216 = vld [vmem:[%s3199 + $0x80] sm:$0xff]
    %v3217 = vld [vmem:[%s3199 + $0x88] sm:$0xff]
    %v3218 = vld [vmem:[%s3199 + $0x90] sm:$0xff]
    %v3219 = vld [vmem:[%s3199 + $0x98] sm:$0xff]
    %v3220 = vld [vmem:[%s3199 + $0xa0] sm:$0xff]
    %v3221 = vld [vmem:[%s3199 + $0xa8] sm:$0xff]
    %v3222 = vld [vmem:[%s3199 + $0xb0] sm:$0xff]
    %v3223 = vld [vmem:[%s3199 + $0xb8] sm:$0xff]
    %v3224 = vld [vmem:[%s3199 + $0xc0] sm:$0xff]
    %v3225 = vld [vmem:[%s3199 + $0xc8] sm:$0xff]
    %v3226 = vld [vmem:[%s3199 + $0xd0] sm:$0xff]
    %v3227 = vld [vmem:[%s3199 + $0xd8] sm:$0xff]
    %v3228 = vld [vmem:[%s3199 + $0xe0] sm:$0xff]
    %v3229 = vld [vmem:[%s3199 + $0xe8] sm:$0xff]
    %v3230 = vld [vmem:[%s3199 + $0xf0] sm:$0xff]
    %v3231 = vld [vmem:[%s3199 + $0xf8] sm:$0xff]
    %v3232 = vld [vmem:[%s3199 + $0x100] sm:$0xff]
    %v3233 = vld [vmem:[%s3199 + $0x108] sm:$0xff]
    %v3234 = vld [vmem:[%s3199 + $0x110] sm:$0xff]
    %v3235 = vld [vmem:[%s3199 + $0x118] sm:$0xff]
    %v3236 = vld [vmem:[%s3199 + $0x120] sm:$0xff]
    %v3237 = vld [vmem:[%s3199 + $0x128] sm:$0xff]
    %v3238 = vld [vmem:[%s3199 + $0x130] sm:$0xff]
    %v3239 = vld [vmem:[%s3199 + $0x138] sm:$0xff]
    %v3240 = vld [vmem:[%s3199 + $0x140] sm:$0xff]
    %v3241 = vld [vmem:[%s3199 + $0x148] sm:$0xff]
    %v3242 = vld [vmem:[%s3199 + $0x150] sm:$0xff]
    %v3243 = vld [vmem:[%s3199 + $0x158] sm:$0xff]
    %v3244 = vld [vmem:[%s3199 + $0x160] sm:$0xff]
    %v3245 = vld [vmem:[%s3199 + $0x168] sm:$0xff]
    %v3246 = vld [vmem:[%s3199 + $0x170] sm:$0xff]
    %v3247 = vld [vmem:[%s3199 + $0x178] sm:$0xff]
    %v3248 = vld [vmem:[%s3199 + $0x180] sm:$0xff]
    %v3249 = vld [vmem:[%s3199 + $0x188] sm:$0xff]
    %v3250 = vld [vmem:[%s3199 + $0x190] sm:$0xff]
    %v3251 = vld [vmem:[%s3199 + $0x198] sm:$0xff]
    %v3252 = vld [vmem:[%s3199 + $0x1a0] sm:$0xff]
    %v3253 = vld [vmem:[%s3199 + $0x1a8] sm:$0xff]
    %v3254 = vld [vmem:[%s3199 + $0x1b0] sm:$0xff]
    %v3255 = vld [vmem:[%s3199 + $0x1b8] sm:$0xff]
    %v3256 = vld [vmem:[%s3199 + $0x1c0] sm:$0xff]
    %v3257 = vld [vmem:[%s3199 + $0x1c8] sm:$0xff]
    %v3258 = vld [vmem:[%s3199 + $0x1d0] sm:$0xff]
    %v3259 = vld [vmem:[%s3199 + $0x1d8] sm:$0xff]
    %v3260 = vld [vmem:[%s3199 + $0x1e0] sm:$0xff]
    %v3261 = vld [vmem:[%s3199 + $0x1e8] sm:$0xff]
    %v3262 = vld [vmem:[%s3199 + $0x1f0] sm:$0xff]
    %v3263 = vld [vmem:[%s3199 + $0x1f8] sm:$0xff]
    %v3328 = vunpack.c.l.b16 %v3200
    %v3329 = vunpack.c.h.b16 %v3200
    %v3330 = vunpack.c.l.b16 %v3201
    %v3331 = vunpack.c.h.b16 %v3201
    %v3332 = vunpack.c.l.b16 %v3202
    %v3333 = vunpack.c.h.b16 %v3202
    %v3334 = vunpack.c.l.b16 %v3203
    %v3335 = vunpack.c.h.b16 %v3203
    %v3336 = vunpack.c.l.b16 %v3204
    %v3337 = vunpack.c.h.b16 %v3204
    %v3338 = vunpack.c.l.b16 %v3205
    %v3339 = vunpack.c.h.b16 %v3205
    %v3340 = vunpack.c.l.b16 %v3206
    %v3341 = vunpack.c.h.b16 %v3206
    %v3342 = vunpack.c.l.b16 %v3207
    %v3343 = vunpack.c.h.b16 %v3207
    %v3344 = vunpack.c.l.b16 %v3208
    %v3345 = vunpack.c.h.b16 %v3208
    %v3346 = vunpack.c.l.b16 %v3209
    %v3347 = vunpack.c.h.b16 %v3209
    %v3348 = vunpack.c.l.b16 %v3210
    %v3349 = vunpack.c.h.b16 %v3210
    %v3350 = vunpack.c.l.b16 %v3211
    %v3351 = vunpack.c.h.b16 %v3211
    %v3352 = vunpack.c.l.b16 %v3212
    %v3353 = vunpack.c.h.b16 %v3212
    %v3354 = vunpack.c.l.b16 %v3213
    %v3355 = vunpack.c.h.b16 %v3213
    %v3356 = vunpack.c.l.b16 %v3214
    %v3357 = vunpack.c.h.b16 %v3214
    %v3358 = vunpack.c.l.b16 %v3215
    %v3359 = vunpack.c.h.b16 %v3215
    %v3360 = vunpack.c.l.b16 %v3216
    %v3361 = vunpack.c.h.b16 %v3216
    %v3362 = vunpack.c.l.b16 %v3217
    %v3363 = vunpack.c.h.b16 %v3217
    %v3364 = vunpack.c.l.b16 %v3218
    %v3365 = vunpack.c.h.b16 %v3218
    %v3366 = vunpack.c.l.b16 %v3219
    %v3367 = vunpack.c.h.b16 %v3219
    %v3368 = vunpack.c.l.b16 %v3220
    %v3369 = vunpack.c.h.b16 %v3220
    %v3370 = vunpack.c.l.b16 %v3221
    %v3371 = vunpack.c.h.b16 %v3221
    %v3372 = vunpack.c.l.b16 %v3222
    %v3373 = vunpack.c.h.b16 %v3222
    %v3374 = vunpack.c.l.b16 %v3223
    %v3375 = vunpack.c.h.b16 %v3223
    %v3376 = vunpack.c.l.b16 %v3224
    %v3377 = vunpack.c.h.b16 %v3224
    %v3378 = vunpack.c.l.b16 %v3225
    %v3379 = vunpack.c.h.b16 %v3225
    %v3380 = vunpack.c.l.b16 %v3226
    %v3381 = vunpack.c.h.b16 %v3226
    %v3382 = vunpack.c.l.b16 %v3227
    %v3383 = vunpack.c.h.b16 %v3227
    %v3384 = vunpack.c.l.b16 %v3228
    %v3385 = vunpack.c.h.b16 %v3228
    %v3386 = vunpack.c.l.b16 %v3229
    %v3387 = vunpack.c.h.b16 %v3229
    %v3388 = vunpack.c.l.b16 %v3230
    %v3389 = vunpack.c.h.b16 %v3230
    %v3390 = vunpack.c.l.b16 %v3231
    %v3391 = vunpack.c.h.b16 %v3231
    %v3392 = vunpack.c.l.b16 %v3232
    %v3393 = vunpack.c.h.b16 %v3232
    %v3394 = vunpack.c.l.b16 %v3233
    %v3395 = vunpack.c.h.b16 %v3233
    %v3396 = vunpack.c.l.b16 %v3234
    %v3397 = vunpack.c.h.b16 %v3234
    %v3398 = vunpack.c.l.b16 %v3235
    %v3399 = vunpack.c.h.b16 %v3235
    %v3400 = vunpack.c.l.b16 %v3236
    %v3401 = vunpack.c.h.b16 %v3236
    %v3402 = vunpack.c.l.b16 %v3237
    %v3403 = vunpack.c.h.b16 %v3237
    %v3404 = vunpack.c.l.b16 %v3238
    %v3405 = vunpack.c.h.b16 %v3238
    %v3406 = vunpack.c.l.b16 %v3239
    %v3407 = vunpack.c.h.b16 %v3239
    %v3408 = vunpack.c.l.b16 %v3240
    %v3409 = vunpack.c.h.b16 %v3240
    %v3410 = vunpack.c.l.b16 %v3241
    %v3411 = vunpack.c.h.b16 %v3241
    %v3412 = vunpack.c.l.b16 %v3242
    %v3413 = vunpack.c.h.b16 %v3242
    %v3414 = vunpack.c.l.b16 %v3243
    %v3415 = vunpack.c.h.b16 %v3243
    %v3416 = vunpack.c.l.b16 %v3244
    %v3417 = vunpack.c.h.b16 %v3244
    %v3418 = vunpack.c.l.b16 %v3245
    %v3419 = vunpack.c.h.b16 %v3245
    %v3420 = vunpack.c.l.b16 %v3246
    %v3421 = vunpack.c.h.b16 %v3246
    %v3422 = vunpack.c.l.b16 %v3247
    %v3423 = vunpack.c.h.b16 %v3247
    %v3424 = vunpack.c.l.b16 %v3248
    %v3425 = vunpack.c.h.b16 %v3248
    %v3426 = vunpack.c.l.b16 %v3249
    %v3427 = vunpack.c.h.b16 %v3249
    %v3428 = vunpack.c.l.b16 %v3250
    %v3429 = vunpack.c.h.b16 %v3250
    %v3430 = vunpack.c.l.b16 %v3251
    %v3431 = vunpack.c.h.b16 %v3251
    %v3432 = vunpack.c.l.b16 %v3252
    %v3433 = vunpack.c.h.b16 %v3252
    %v3434 = vunpack.c.l.b16 %v3253
    %v3435 = vunpack.c.h.b16 %v3253
    %v3436 = vunpack.c.l.b16 %v3254
    %v3437 = vunpack.c.h.b16 %v3254
    %v3438 = vunpack.c.l.b16 %v3255
    %v3439 = vunpack.c.h.b16 %v3255
    %v3440 = vunpack.c.l.b16 %v3256
    %v3441 = vunpack.c.h.b16 %v3256
    %v3442 = vunpack.c.l.b16 %v3257
    %v3443 = vunpack.c.h.b16 %v3257
    %v3444 = vunpack.c.l.b16 %v3258
    %v3445 = vunpack.c.h.b16 %v3258
    %v3446 = vunpack.c.l.b16 %v3259
    %v3447 = vunpack.c.h.b16 %v3259
    %v3448 = vunpack.c.l.b16 %v3260
    %v3449 = vunpack.c.h.b16 %v3260
    %v3450 = vunpack.c.l.b16 %v3261
    %v3451 = vunpack.c.h.b16 %v3261
    %v3452 = vunpack.c.l.b16 %v3262
    %v3453 = vunpack.c.h.b16 %v3262
    %v3454 = vunpack.c.l.b16 %v3263
    %v3455 = vunpack.c.h.b16 %v3263
    %v3456 = vpack.c.b16 %v3330, %v3328
    %v3457 = vpack.c.b16 %v3331, %v3329
    %v3458 = vpack.c.b16 %v3334, %v3332
    %v3459 = vpack.c.b16 %v3335, %v3333
    %v3460 = vpack.c.b16 %v3338, %v3336
    %v3461 = vpack.c.b16 %v3339, %v3337
    %v3462 = vpack.c.b16 %v3342, %v3340
    %v3463 = vpack.c.b16 %v3343, %v3341
    %v3464 = vpack.c.b16 %v3346, %v3344
    %v3465 = vpack.c.b16 %v3347, %v3345
    %v3466 = vpack.c.b16 %v3350, %v3348
    %v3467 = vpack.c.b16 %v3351, %v3349
    %v3468 = vpack.c.b16 %v3354, %v3352
    %v3469 = vpack.c.b16 %v3355, %v3353
    %v3470 = vpack.c.b16 %v3358, %v3356
    %v3471 = vpack.c.b16 %v3359, %v3357
    %v3472 = vpack.c.b16 %v3362, %v3360
    %v3473 = vpack.c.b16 %v3363, %v3361
    %v3474 = vpack.c.b16 %v3366, %v3364
    %v3475 = vpack.c.b16 %v3367, %v3365
    %v3476 = vpack.c.b16 %v3370, %v3368
    %v3477 = vpack.c.b16 %v3371, %v3369
    %v3478 = vpack.c.b16 %v3374, %v3372
    %v3479 = vpack.c.b16 %v3375, %v3373
    %v3480 = vpack.c.b16 %v3378, %v3376
    %v3481 = vpack.c.b16 %v3379, %v3377
    %v3482 = vpack.c.b16 %v3382, %v3380
    %v3483 = vpack.c.b16 %v3383, %v3381
    %v3484 = vpack.c.b16 %v3386, %v3384
    %v3485 = vpack.c.b16 %v3387, %v3385
    %v3486 = vpack.c.b16 %v3390, %v3388
    %v3487 = vpack.c.b16 %v3391, %v3389
    %v3488 = vpack.c.b16 %v3394, %v3392
    %v3489 = vpack.c.b16 %v3395, %v3393
    %v3490 = vpack.c.b16 %v3398, %v3396
    %v3491 = vpack.c.b16 %v3399, %v3397
    %v3492 = vpack.c.b16 %v3402, %v3400
    %v3493 = vpack.c.b16 %v3403, %v3401
    %v3494 = vpack.c.b16 %v3406, %v3404
    %v3495 = vpack.c.b16 %v3407, %v3405
    %v3496 = vpack.c.b16 %v3410, %v3408
    %v3497 = vpack.c.b16 %v3411, %v3409
    %v3498 = vpack.c.b16 %v3414, %v3412
    %v3499 = vpack.c.b16 %v3415, %v3413
    %v3500 = vpack.c.b16 %v3418, %v3416
    %v3501 = vpack.c.b16 %v3419, %v3417
    %v3502 = vpack.c.b16 %v3422, %v3420
    %v3503 = vpack.c.b16 %v3423, %v3421
    %v3504 = vpack.c.b16 %v3426, %v3424
    %v3505 = vpack.c.b16 %v3427, %v3425
    %v3506 = vpack.c.b16 %v3430, %v3428
    %v3507 = vpack.c.b16 %v3431, %v3429
    %v3508 = vpack.c.b16 %v3434, %v3432
    %v3509 = vpack.c.b16 %v3435, %v3433
    %v3510 = vpack.c.b16 %v3438, %v3436
    %v3511 = vpack.c.b16 %v3439, %v3437
    %v3512 = vpack.c.b16 %v3442, %v3440
    %v3513 = vpack.c.b16 %v3443, %v3441
    %v3514 = vpack.c.b16 %v3446, %v3444
    %v3515 = vpack.c.b16 %v3447, %v3445
    %v3516 = vpack.c.b16 %v3450, %v3448
    %v3517 = vpack.c.b16 %v3451, %v3449
    %v3518 = vpack.c.b16 %v3454, %v3452
    %v3519 = vpack.c.b16 %v3455, %v3453
    %3584 = vmatprep.subr.bf16.mxu0 %v3457
    %3585 = vmatpush1.bf16.msra.mxu0 %v3456
    %3586 = vmatprep.subr.bf16.mxu0 %v3459
    %3587 = vmatpush1.bf16.msra.mxu0 %v3458
    %3588 = vmatprep.subr.bf16.mxu0 %v3461
    %3589 = vmatpush1.bf16.msra.mxu0 %v3460
    %3590 = vmatprep.subr.bf16.mxu0 %v3463
    %3591 = vmatpush1.bf16.msra.mxu0 %v3462
    %3592 = vmatprep.subr.bf16.mxu0 %v3465
    %3593 = vmatpush1.bf16.msra.mxu0 %v3464
    %3594 = vmatprep.subr.bf16.mxu0 %v3467
    %3595 = vmatpush1.bf16.msra.mxu0 %v3466
    %3596 = vmatprep.subr.bf16.mxu0 %v3469
    %3597 = vmatpush1.bf16.msra.mxu0 %v3468
    %3598 = vmatprep.subr.bf16.mxu0 %v3471
    %3599 = vmatpush1.bf16.msra.mxu0 %v3470
    %3600 = vmatprep.subr.bf16.mxu0 %v3473
    %3601 = vmatpush1.bf16.msra.mxu0 %v3472
    %3602 = vmatprep.subr.bf16.mxu0 %v3475
    %3603 = vmatpush1.bf16.msra.mxu0 %v3474
    %3604 = vmatprep.subr.bf16.mxu0 %v3477
    %3605 = vmatpush1.bf16.msra.mxu0 %v3476
    %3606 = vmatprep.subr.bf16.mxu0 %v3479
    %3607 = vmatpush1.bf16.msra.mxu0 %v3478
    %3608 = vmatprep.subr.bf16.mxu0 %v3481
    %3609 = vmatpush1.bf16.msra.mxu0 %v3480
    %3610 = vmatprep.subr.bf16.mxu0 %v3483
    %3611 = vmatpush1.bf16.msra.mxu0 %v3482
    %3612 = vmatprep.subr.bf16.mxu0 %v3485
    %3613 = vmatpush1.bf16.msra.mxu0 %v3484
    %3614 = vmatprep.subr.bf16.mxu0 %v3487
    %3615 = vmatpush1.bf16.msra.mxu0 %v3486
    %3616 = vmatprep.mubr.bf16.mxu0 %v2588
    %3617 = vmatmul.mubr.bf16.gmra.mrb[0].mxu0 %v2587
    %v3618 = vpop.f32.mrb[0].mxu0
    %v3619 = vadd.f32 0.0, %v3618
    %v3620 = vpop.f32.mrb[0].mxu0
    %v3621 = vadd.f32 0.0, %v3620
    %v3622 = vpop.f32.mrb[0].mxu0
    %v3623 = vadd.f32 0.0, %v3622
    %v3624 = vpop.f32.mrb[0].mxu0
    %v3625 = vadd.f32 0.0, %v3624
    %3626 = vmatprep.mubr.bf16.mxu0 %v2592
    %3627 = vmatmul.mubr.bf16.gmra.mrb[0].mxu0 %v2591
    %v3628 = vpop.f32.mrb[0].mxu0
    %v3629 = vadd.f32 0.0, %v3628
    %v3630 = vpop.f32.mrb[0].mxu0
    %v3631 = vadd.f32 0.0, %v3630
    %v3632 = vpop.f32.mrb[0].mxu0
    %v3633 = vadd.f32 0.0, %v3632
    %v3634 = vpop.f32.mrb[0].mxu0
    %v3635 = vadd.f32 0.0, %v3634
    %3636 = vmatprep.mubr.bf16.mxu0 %v2596
    %3637 = vmatmul.mubr.bf16.gmra.mrb[0].mxu0 %v2595
    %v3638 = vpop.f32.mrb[0].mxu0
    %v3639 = vadd.f32 0.0, %v3638
    %v3640 = vpop.f32.mrb[0].mxu0
    %v3641 = vadd.f32 0.0, %v3640
    %v3642 = vpop.f32.mrb[0].mxu0
    %v3643 = vadd.f32 0.0, %v3642
    %v3644 = vpop.f32.mrb[0].mxu0
    %v3645 = vadd.f32 0.0, %v3644
    %3646 = vmatprep.mubr.bf16.mxu0 %v2600
    %3647 = vmatmul.mubr.bf16.gmra.mrb[0].mxu0 %v2599
    %v3648 = vpop.f32.mrb[0].mxu0
    %v3649 = vadd.f32 0.0, %v3648
    %v3650 = vpop.f32.mrb[0].mxu0
    %v3651 = vadd.f32 0.0, %v3650
    %v3652 = vpop.f32.mrb[0].mxu0
    %v3653 = vadd.f32 0.0, %v3652
    %v3654 = vpop.f32.mrb[0].mxu0
    %v3655 = vadd.f32 0.0, %v3654
    %3656 = vmatprep.mubr.bf16.mxu0 %v2604
    %3657 = vmatmul.mubr.bf16.gmra.mrb[0].mxu0 %v2603
    %v3658 = vpop.f32.mrb[0].mxu0
    %v3659 = vadd.f32 0.0, %v3658
    %v3660 = vpop.f32.mrb[0].mxu0
    %v3661 = vadd.f32 0.0, %v3660
    %v3662 = vpop.f32.mrb[0].mxu0
    %v3663 = vadd.f32 0.0, %v3662
    %v3664 = vpop.f32.mrb[0].mxu0
    %v3665 = vadd.f32 0.0, %v3664
    %3666 = vmatprep.mubr.bf16.mxu0 %v2608
    %3667 = vmatmul.mubr.bf16.gmra.mrb[0].mxu0 %v2607
    %v3668 = vpop.f32.mrb[0].mxu0
    %v3669 = vadd.f32 0.0, %v3668
    %v3670 = vpop.f32.mrb[0].mxu0
    %v3671 = vadd.f32 0.0, %v3670
    %v3672 = vpop.f32.mrb[0].mxu0
    %v3673 = vadd.f32 0.0, %v3672
    %v3674 = vpop.f32.mrb[0].mxu0
    %v3675 = vadd.f32 0.0, %v3674
    %3676 = vmatprep.mubr.bf16.mxu0 %v2612
    %3677 = vmatmul.mubr.bf16.gmra.mrb[0].mxu0 %v2611
    %v3678 = vpop.f32.mrb[0].mxu0
    %v3679 = vadd.f32 0.0, %v3678
    %v3680 = vpop.f32.mrb[0].mxu0
    %v3681 = vadd.f32 0.0, %v3680
    %v3682 = vpop.f32.mrb[0].mxu0
    %v3683 = vadd.f32 0.0, %v3682
    %v3684 = vpop.f32.mrb[0].mxu0
    %v3685 = vadd.f32 0.0, %v3684
    %3686 = vmatprep.mubr.bf16.mxu0 %v2616
    %3687 = vmatmul.mubr.bf16.gmra.mrb[0].mxu0 %v2615
    %v3688 = vpop.f32.mrb[0].mxu0
    %v3689 = vadd.f32 0.0, %v3688
    %v3690 = vpop.f32.mrb[0].mxu0
    %v3691 = vadd.f32 0.0, %v3690
    %v3692 = vpop.f32.mrb[0].mxu0
    %v3693 = vadd.f32 0.0, %v3692
    %v3694 = vpop.f32.mrb[0].mxu0
    %v3695 = vadd.f32 0.0, %v3694
    %3696 = vdwg.mxu0
    %3697 = vmatprep.subr.bf16.mxu0 %v3489
    %3698 = vmatpush1.bf16.msra.mxu0 %v3488
    %3699 = vmatprep.subr.bf16.mxu0 %v3491
    %3700 = vmatpush1.bf16.msra.mxu0 %v3490
    %3701 = vmatprep.subr.bf16.mxu0 %v3493
    %3702 = vmatpush1.bf16.msra.mxu0 %v3492
    %3703 = vmatprep.subr.bf16.mxu0 %v3495
    %3704 = vmatpush1.bf16.msra.mxu0 %v3494
    %3705 = vmatprep.subr.bf16.mxu0 %v3497
    %3706 = vmatpush1.bf16.msra.mxu0 %v3496
    %3707 = vmatprep.subr.bf16.mxu0 %v3499
    %3708 = vmatpush1.bf16.msra.mxu0 %v3498
    %3709 = vmatprep.subr.bf16.mxu0 %v3501
    %3710 = vmatpush1.bf16.msra.mxu0 %v3500
    %3711 = vmatprep.subr.bf16.mxu0 %v3503
    %3712 = vmatpush1.bf16.msra.mxu0 %v3502
    %3713 = vmatprep.subr.bf16.mxu0 %v3505
    %3714 = vmatpush1.bf16.msra.mxu0 %v3504
    %3715 = vmatprep.subr.bf16.mxu0 %v3507
    %3716 = vmatpush1.bf16.msra.mxu0 %v3506
    %3717 = vmatprep.subr.bf16.mxu0 %v3509
    %3718 = vmatpush1.bf16.msra.mxu0 %v3508
    %3719 = vmatprep.subr.bf16.mxu0 %v3511
    %3720 = vmatpush1.bf16.msra.mxu0 %v3510
    %3721 = vmatprep.subr.bf16.mxu0 %v3513
    %3722 = vmatpush1.bf16.msra.mxu0 %v3512
    %3723 = vmatprep.subr.bf16.mxu0 %v3515
    %3724 = vmatpush1.bf16.msra.mxu0 %v3514
    %3725 = vmatprep.subr.bf16.mxu0 %v3517
    %3726 = vmatpush1.bf16.msra.mxu0 %v3516
    %3727 = vmatprep.subr.bf16.mxu0 %v3519
    %3728 = vmatpush1.bf16.msra.mxu0 %v3518
    %3729 = vmatprep.mubr.bf16.mxu0 %v2590
    %3730 = vmatmul.mubr.bf16.gmra.mrb[0].mxu0 %v2589
    %v3731 = vpop.f32.mrb[0].mxu0
    %v3732 = vadd.f32 %v3619, %v3731
    %v3733 = vpop.f32.mrb[0].mxu0
    %v3734 = vadd.f32 %v3621, %v3733
    %v3735 = vpop.f32.mrb[0].mxu0
    %v3736 = vadd.f32 %v3623, %v3735
    %v3737 = vpop.f32.mrb[0].mxu0
    %v3738 = vadd.f32 %v3625, %v3737
    %3739 = vmatprep.mubr.bf16.mxu0 %v2594
    %3740 = vmatmul.mubr.bf16.gmra.mrb[0].mxu0 %v2593
    %v3741 = vpop.f32.mrb[0].mxu0
    %v3742 = vadd.f32 %v3629, %v3741
    %v3743 = vpop.f32.mrb[0].mxu0
    %v3744 = vadd.f32 %v3631, %v3743
    %v3745 = vpop.f32.mrb[0].mxu0
    %v3746 = vadd.f32 %v3633, %v3745
    %v3747 = vpop.f32.mrb[0].mxu0
    %v3748 = vadd.f32 %v3635, %v3747
    %3749 = vmatprep.mubr.bf16.mxu0 %v2598
    %3750 = vmatmul.mubr.bf16.gmra.mrb[0].mxu0 %v2597
    %v3751 = vpop.f32.mrb[0].mxu0
    %v3752 = vadd.f32 %v3639, %v3751
    %v3753 = vpop.f32.mrb[0].mxu0
    %v3754 = vadd.f32 %v3641, %v3753
    %v3755 = vpop.f32.mrb[0].mxu0
    %v3756 = vadd.f32 %v3643, %v3755
    %v3757 = vpop.f32.mrb[0].mxu0
    %v3758 = vadd.f32 %v3645, %v3757
    %3759 = vmatprep.mubr.bf16.mxu0 %v2602
    %3760 = vmatmul.mubr.bf16.gmra.mrb[0].mxu0 %v2601
    %v3761 = vpop.f32.mrb[0].mxu0
    %v3762 = vadd.f32 %v3649, %v3761
    %v3763 = vpop.f32.mrb[0].mxu0
    %v3764 = vadd.f32 %v3651, %v3763
    %v3765 = vpop.f32.mrb[0].mxu0
    %v3766 = vadd.f32 %v3653, %v3765
    %v3767 = vpop.f32.mrb[0].mxu0
    %v3768 = vadd.f32 %v3655, %v3767
    %3769 = vmatprep.mubr.bf16.mxu0 %v2606
    %3770 = vmatmul.mubr.bf16.gmra.mrb[0].mxu0 %v2605
    %v3771 = vpop.f32.mrb[0].mxu0
    %v3772 = vadd.f32 %v3659, %v3771
    %v3773 = vpop.f32.mrb[0].mxu0
    %v3774 = vadd.f32 %v3661, %v3773
    %v3775 = vpop.f32.mrb[0].mxu0
    %v3776 = vadd.f32 %v3663, %v3775
    %v3777 = vpop.f32.mrb[0].mxu0
    %v3778 = vadd.f32 %v3665, %v3777
    %3779 = vmatprep.mubr.bf16.mxu0 %v2610
    %3780 = vmatmul.mubr.bf16.gmra.mrb[0].mxu0 %v2609
    %v3781 = vpop.f32.mrb[0].mxu0
    %v3782 = vadd.f32 %v3669, %v3781
    %v3783 = vpop.f32.mrb[0].mxu0
    %v3784 = vadd.f32 %v3671, %v3783
    %v3785 = vpop.f32.mrb[0].mxu0
    %v3786 = vadd.f32 %v3673, %v3785
    %v3787 = vpop.f32.mrb[0].mxu0
    %v3788 = vadd.f32 %v3675, %v3787
    %3789 = vmatprep.mubr.bf16.mxu0 %v2614
    %3790 = vmatmul.mubr.bf16.gmra.mrb[0].mxu0 %v2613
    %v3791 = vpop.f32.mrb[0].mxu0
    %v3792 = vadd.f32 %v3679, %v3791
    %v3793 = vpop.f32.mrb[0].mxu0
    %v3794 = vadd.f32 %v3681, %v3793
    %v3795 = vpop.f32.mrb[0].mxu0
    %v3796 = vadd.f32 %v3683, %v3795
    %v3797 = vpop.f32.mrb[0].mxu0
    %v3798 = vadd.f32 %v3685, %v3797
    %3799 = vmatprep.mubr.bf16.mxu0 %v2618
    %3800 = vmatmul.mubr.bf16.gmra.mrb[0].mxu0 %v2617
    %v3801 = vpop.f32.mrb[0].mxu0
    %v3802 = vadd.f32 %v3689, %v3801
    %v3803 = vpop.f32.mrb[0].mxu0
    %v3804 = vadd.f32 %v3691, %v3803
    %v3805 = vpop.f32.mrb[0].mxu0
    %v3806 = vadd.f32 %v3693, %v3805
    %v3807 = vpop.f32.mrb[0].mxu0
    %v3808 = vadd.f32 %v3695, %v3807
    %3809 = vdwg.mxu0
    %v3874 = vunpack.c.l.b16 %v3135
    %v3875 = vunpack.c.h.b16 %v3135
    %v3876 = vunpack.c.l.b16 %v3136
    %v3877 = vunpack.c.h.b16 %v3136
    %v3878 = vunpack.c.l.b16 %v3137
    %v3879 = vunpack.c.h.b16 %v3137
    %v3880 = vunpack.c.l.b16 %v3138
    %v3881 = vunpack.c.h.b16 %v3138
    %v3882 = vunpack.c.l.b16 %v3139
    %v3883 = vunpack.c.h.b16 %v3139
    %v3884 = vunpack.c.l.b16 %v3140
    %v3885 = vunpack.c.h.b16 %v3140
    %v3886 = vunpack.c.l.b16 %v3141
    %v3887 = vunpack.c.h.b16 %v3141
    %v3888 = vunpack.c.l.b16 %v3142
    %v3889 = vunpack.c.h.b16 %v3142
    %v3890 = vunpack.c.l.b16 %v3143
    %v3891 = vunpack.c.h.b16 %v3143
    %v3892 = vunpack.c.l.b16 %v3144
    %v3893 = vunpack.c.h.b16 %v3144
    %v3894 = vunpack.c.l.b16 %v3145
    %v3895 = vunpack.c.h.b16 %v3145
    %v3896 = vunpack.c.l.b16 %v3146
    %v3897 = vunpack.c.h.b16 %v3146
    %v3898 = vunpack.c.l.b16 %v3147
    %v3899 = vunpack.c.h.b16 %v3147
    %v3900 = vunpack.c.l.b16 %v3148
    %v3901 = vunpack.c.h.b16 %v3148
    %v3902 = vunpack.c.l.b16 %v3149
    %v3903 = vunpack.c.h.b16 %v3149
    %v3904 = vunpack.c.l.b16 %v3150
    %v3905 = vunpack.c.h.b16 %v3150
    %v3906 = vunpack.c.l.b16 %v3151
    %v3907 = vunpack.c.h.b16 %v3151
    %v3908 = vunpack.c.l.b16 %v3152
    %v3909 = vunpack.c.h.b16 %v3152
    %v3910 = vunpack.c.l.b16 %v3153
    %v3911 = vunpack.c.h.b16 %v3153
    %v3912 = vunpack.c.l.b16 %v3154
    %v3913 = vunpack.c.h.b16 %v3154
    %v3914 = vunpack.c.l.b16 %v3155
    %v3915 = vunpack.c.h.b16 %v3155
    %v3916 = vunpack.c.l.b16 %v3156
    %v3917 = vunpack.c.h.b16 %v3156
    %v3918 = vunpack.c.l.b16 %v3157
    %v3919 = vunpack.c.h.b16 %v3157
    %v3920 = vunpack.c.l.b16 %v3158
    %v3921 = vunpack.c.h.b16 %v3158
    %v3922 = vunpack.c.l.b16 %v3159
    %v3923 = vunpack.c.h.b16 %v3159
    %v3924 = vunpack.c.l.b16 %v3160
    %v3925 = vunpack.c.h.b16 %v3160
    %v3926 = vunpack.c.l.b16 %v3161
    %v3927 = vunpack.c.h.b16 %v3161
    %v3928 = vunpack.c.l.b16 %v3162
    %v3929 = vunpack.c.h.b16 %v3162
    %v3930 = vunpack.c.l.b16 %v3163
    %v3931 = vunpack.c.h.b16 %v3163
    %v3932 = vunpack.c.l.b16 %v3164
    %v3933 = vunpack.c.h.b16 %v3164
    %v3934 = vunpack.c.l.b16 %v3165
    %v3935 = vunpack.c.h.b16 %v3165
    %v3936 = vunpack.c.l.b16 %v3166
    %v3937 = vunpack.c.h.b16 %v3166
    %v3938 = vunpack.c.l.b16 %v3167
    %v3939 = vunpack.c.h.b16 %v3167
    %v3940 = vunpack.c.l.b16 %v3168
    %v3941 = vunpack.c.h.b16 %v3168
    %v3942 = vunpack.c.l.b16 %v3169
    %v3943 = vunpack.c.h.b16 %v3169
    %v3944 = vunpack.c.l.b16 %v3170
    %v3945 = vunpack.c.h.b16 %v3170
    %v3946 = vunpack.c.l.b16 %v3171
    %v3947 = vunpack.c.h.b16 %v3171
    %v3948 = vunpack.c.l.b16 %v3172
    %v3949 = vunpack.c.h.b16 %v3172
    %v3950 = vunpack.c.l.b16 %v3173
    %v3951 = vunpack.c.h.b16 %v3173
    %v3952 = vunpack.c.l.b16 %v3174
    %v3953 = vunpack.c.h.b16 %v3174
    %v3954 = vunpack.c.l.b16 %v3175
    %v3955 = vunpack.c.h.b16 %v3175
    %v3956 = vunpack.c.l.b16 %v3176
    %v3957 = vunpack.c.h.b16 %v3176
    %v3958 = vunpack.c.l.b16 %v3177
    %v3959 = vunpack.c.h.b16 %v3177
    %v3960 = vunpack.c.l.b16 %v3178
    %v3961 = vunpack.c.h.b16 %v3178
    %v3962 = vunpack.c.l.b16 %v3179
    %v3963 = vunpack.c.h.b16 %v3179
    %v3964 = vunpack.c.l.b16 %v3180
    %v3965 = vunpack.c.h.b16 %v3180
    %v3966 = vunpack.c.l.b16 %v3181
    %v3967 = vunpack.c.h.b16 %v3181
    %v3968 = vunpack.c.l.b16 %v3182
    %v3969 = vunpack.c.h.b16 %v3182
    %v3970 = vunpack.c.l.b16 %v3183
    %v3971 = vunpack.c.h.b16 %v3183
    %v3972 = vunpack.c.l.b16 %v3184
    %v3973 = vunpack.c.h.b16 %v3184
    %v3974 = vunpack.c.l.b16 %v3185
    %v3975 = vunpack.c.h.b16 %v3185
    %v3976 = vunpack.c.l.b16 %v3186
    %v3977 = vunpack.c.h.b16 %v3186
    %v3978 = vunpack.c.l.b16 %v3187
    %v3979 = vunpack.c.h.b16 %v3187
    %v3980 = vunpack.c.l.b16 %v3188
    %v3981 = vunpack.c.h.b16 %v3188
    %v3982 = vunpack.c.l.b16 %v3189
    %v3983 = vunpack.c.h.b16 %v3189
    %v3984 = vunpack.c.l.b16 %v3190
    %v3985 = vunpack.c.h.b16 %v3190
    %v3986 = vunpack.c.l.b16 %v3191
    %v3987 = vunpack.c.h.b16 %v3191
    %v3988 = vunpack.c.l.b16 %v3192
    %v3989 = vunpack.c.h.b16 %v3192
    %v3990 = vunpack.c.l.b16 %v3193
    %v3991 = vunpack.c.h.b16 %v3193
    %v3992 = vunpack.c.l.b16 %v3194
    %v3993 = vunpack.c.h.b16 %v3194
    %v3994 = vunpack.c.l.b16 %v3195
    %v3995 = vunpack.c.h.b16 %v3195
    %v3996 = vunpack.c.l.b16 %v3196
    %v3997 = vunpack.c.h.b16 %v3196
    %v3998 = vunpack.c.l.b16 %v3197
    %v3999 = vunpack.c.h.b16 %v3197
    %v4000 = vunpack.c.l.b16 %v3198
    %v4001 = vunpack.c.h.b16 %v3198
    %v4002 = vpack.c.b16 %v3876, %v3874
    %v4003 = vpack.c.b16 %v3877, %v3875
    %v4004 = vpack.c.b16 %v3880, %v3878
    %v4005 = vpack.c.b16 %v3881, %v3879
    %v4006 = vpack.c.b16 %v3884, %v3882
    %v4007 = vpack.c.b16 %v3885, %v3883
    %v4008 = vpack.c.b16 %v3888, %v3886
    %v4009 = vpack.c.b16 %v3889, %v3887
    %v4010 = vpack.c.b16 %v3892, %v3890
    %v4011 = vpack.c.b16 %v3893, %v3891
    %v4012 = vpack.c.b16 %v3896, %v3894
    %v4013 = vpack.c.b16 %v3897, %v3895
    %v4014 = vpack.c.b16 %v3900, %v3898
    %v4015 = vpack.c.b16 %v3901, %v3899
    %v4016 = vpack.c.b16 %v3904, %v3902
    %v4017 = vpack.c.b16 %v3905, %v3903
    %v4018 = vpack.c.b16 %v3908, %v3906
    %v4019 = vpack.c.b16 %v3909, %v3907
    %v4020 = vpack.c.b16 %v3912, %v3910
    %v4021 = vpack.c.b16 %v3913, %v3911
    %v4022 = vpack.c.b16 %v3916, %v3914
    %v4023 = vpack.c.b16 %v3917, %v3915
    %v4024 = vpack.c.b16 %v3920, %v3918
    %v4025 = vpack.c.b16 %v3921, %v3919
    %v4026 = vpack.c.b16 %v3924, %v3922
    %v4027 = vpack.c.b16 %v3925, %v3923
    %v4028 = vpack.c.b16 %v3928, %v3926
    %v4029 = vpack.c.b16 %v3929, %v3927
    %v4030 = vpack.c.b16 %v3932, %v3930
    %v4031 = vpack.c.b16 %v3933, %v3931
    %v4032 = vpack.c.b16 %v3936, %v3934
    %v4033 = vpack.c.b16 %v3937, %v3935
    %v4034 = vpack.c.b16 %v3940, %v3938
    %v4035 = vpack.c.b16 %v3941, %v3939
    %v4036 = vpack.c.b16 %v3944, %v3942
    %v4037 = vpack.c.b16 %v3945, %v3943
    %v4038 = vpack.c.b16 %v3948, %v3946
    %v4039 = vpack.c.b16 %v3949, %v3947
    %v4040 = vpack.c.b16 %v3952, %v3950
    %v4041 = vpack.c.b16 %v3953, %v3951
    %v4042 = vpack.c.b16 %v3956, %v3954
    %v4043 = vpack.c.b16 %v3957, %v3955
    %v4044 = vpack.c.b16 %v3960, %v3958
    %v4045 = vpack.c.b16 %v3961, %v3959
    %v4046 = vpack.c.b16 %v3964, %v3962
    %v4047 = vpack.c.b16 %v3965, %v3963
    %v4048 = vpack.c.b16 %v3968, %v3966
    %v4049 = vpack.c.b16 %v3969, %v3967
    %v4050 = vpack.c.b16 %v3972, %v3970
    %v4051 = vpack.c.b16 %v3973, %v3971
    %v4052 = vpack.c.b16 %v3976, %v3974
    %v4053 = vpack.c.b16 %v3977, %v3975
    %v4054 = vpack.c.b16 %v3980, %v3978
    %v4055 = vpack.c.b16 %v3981, %v3979
    %v4056 = vpack.c.b16 %v3984, %v3982
    %v4057 = vpack.c.b16 %v3985, %v3983
    %v4058 = vpack.c.b16 %v3988, %v3986
    %v4059 = vpack.c.b16 %v3989, %v3987
    %v4060 = vpack.c.b16 %v3992, %v3990
    %v4061 = vpack.c.b16 %v3993, %v3991
    %v4062 = vpack.c.b16 %v3996, %v3994
    %v4063 = vpack.c.b16 %v3997, %v3995
    %v4064 = vpack.c.b16 %v4000, %v3998
    %v4065 = vpack.c.b16 %v4001, %v3999
    %4130 = vmatprep.subr.bf16.mxu0 %v4003
    %4131 = vmatpush1.bf16.msra.mxu0 %v4002
    %4132 = vmatprep.subr.bf16.mxu0 %v4005
    %4133 = vmatpush1.bf16.msra.mxu0 %v4004
    %4134 = vmatprep.subr.bf16.mxu0 %v4007
    %4135 = vmatpush1.bf16.msra.mxu0 %v4006
    %4136 = vmatprep.subr.bf16.mxu0 %v4009
    %4137 = vmatpush1.bf16.msra.mxu0 %v4008
    %4138 = vmatprep.subr.bf16.mxu0 %v4011
    %4139 = vmatpush1.bf16.msra.mxu0 %v4010
    %4140 = vmatprep.subr.bf16.mxu0 %v4013
    %4141 = vmatpush1.bf16.msra.mxu0 %v4012
    %4142 = vmatprep.subr.bf16.mxu0 %v4015
    %4143 = vmatpush1.bf16.msra.mxu0 %v4014
    %4144 = vmatprep.subr.bf16.mxu0 %v4017
    %4145 = vmatpush1.bf16.msra.mxu0 %v4016
    %4146 = vmatprep.subr.bf16.mxu0 %v4019
    %4147 = vmatpush1.bf16.msra.mxu0 %v4018
    %4148 = vmatprep.subr.bf16.mxu0 %v4021
    %4149 = vmatpush1.bf16.msra.mxu0 %v4020
    %4150 = vmatprep.subr.bf16.mxu0 %v4023
    %4151 = vmatpush1.bf16.msra.mxu0 %v4022
    %4152 = vmatprep.subr.bf16.mxu0 %v4025
    %4153 = vmatpush1.bf16.msra.mxu0 %v4024
    %4154 = vmatprep.subr.bf16.mxu0 %v4027
    %4155 = vmatpush1.bf16.msra.mxu0 %v4026
    %4156 = vmatprep.subr.bf16.mxu0 %v4029
    %4157 = vmatpush1.bf16.msra.mxu0 %v4028
    %4158 = vmatprep.subr.bf16.mxu0 %v4031
    %4159 = vmatpush1.bf16.msra.mxu0 %v4030
    %4160 = vmatprep.subr.bf16.mxu0 %v4033
    %4161 = vmatpush1.bf16.msra.mxu0 %v4032
    %4162 = vmatprep.mubr.bf16.mxu0 %v2846
    %4163 = vmatmul.mubr.bf16.gmra.mrb[0].mxu0 %v2845
    %v4164 = vpop.f32.mrb[0].mxu0
    %v4165 = vadd.f32 %v3732, %v4164
    %v4166 = vpop.f32.mrb[0].mxu0
    %v4167 = vadd.f32 %v3734, %v4166
    %v4168 = vpop.f32.mrb[0].mxu0
    %v4169 = vadd.f32 %v3736, %v4168
    %v4170 = vpop.f32.mrb[0].mxu0
    %v4171 = vadd.f32 %v3738, %v4170
    %4172 = vmatprep.mubr.bf16.mxu0 %v2850
    %4173 = vmatmul.mubr.bf16.gmra.mrb[0].mxu0 %v2849
    %v4174 = vpop.f32.mrb[0].mxu0
    %v4175 = vadd.f32 %v3742, %v4174
    %v4176 = vpop.f32.mrb[0].mxu0
    %v4177 = vadd.f32 %v3744, %v4176
    %v4178 = vpop.f32.mrb[0].mxu0
    %v4179 = vadd.f32 %v3746, %v4178
    %v4180 = vpop.f32.mrb[0].mxu0
    %v4181 = vadd.f32 %v3748, %v4180
    %4182 = vmatprep.mubr.bf16.mxu0 %v2854
    %4183 = vmatmul.mubr.bf16.gmra.mrb[0].mxu0 %v2853
    %v4184 = vpop.f32.mrb[0].mxu0
    %v4185 = vadd.f32 %v3752, %v4184
    %v4186 = vpop.f32.mrb[0].mxu0
    %v4187 = vadd.f32 %v3754, %v4186
    %v4188 = vpop.f32.mrb[0].mxu0
    %v4189 = vadd.f32 %v3756, %v4188
    %v4190 = vpop.f32.mrb[0].mxu0
    %v4191 = vadd.f32 %v3758, %v4190
    %4192 = vmatprep.mubr.bf16.mxu0 %v2858
    %4193 = vmatmul.mubr.bf16.gmra.mrb[0].mxu0 %v2857
    %v4194 = vpop.f32.mrb[0].mxu0
    %v4195 = vadd.f32 %v3762, %v4194
    %v4196 = vpop.f32.mrb[0].mxu0
    %v4197 = vadd.f32 %v3764, %v4196
    %v4198 = vpop.f32.mrb[0].mxu0
    %v4199 = vadd.f32 %v3766, %v4198
    %v4200 = vpop.f32.mrb[0].mxu0
    %v4201 = vadd.f32 %v3768, %v4200
    %4202 = vmatprep.mubr.bf16.mxu0 %v2862
    %4203 = vmatmul.mubr.bf16.gmra.mrb[0].mxu0 %v2861
    %v4204 = vpop.f32.mrb[0].mxu0
    %v4205 = vadd.f32 %v3772, %v4204
    %v4206 = vpop.f32.mrb[0].mxu0
    %v4207 = vadd.f32 %v3774, %v4206
    %v4208 = vpop.f32.mrb[0].mxu0
    %v4209 = vadd.f32 %v3776, %v4208
    %v4210 = vpop.f32.mrb[0].mxu0
    %v4211 = vadd.f32 %v3778, %v4210
    %4212 = vmatprep.mubr.bf16.mxu0 %v2866
    %4213 = vmatmul.mubr.bf16.gmra.mrb[0].mxu0 %v2865
    %v4214 = vpop.f32.mrb[0].mxu0
    %v4215 = vadd.f32 %v3782, %v4214
    %v4216 = vpop.f32.mrb[0].mxu0
    %v4217 = vadd.f32 %v3784, %v4216
    %v4218 = vpop.f32.mrb[0].mxu0
    %v4219 = vadd.f32 %v3786, %v4218
    %v4220 = vpop.f32.mrb[0].mxu0
    %v4221 = vadd.f32 %v3788, %v4220
    %4222 = vmatprep.mubr.bf16.mxu0 %v2870
    %4223 = vmatmul.mubr.bf16.gmra.mrb[0].mxu0 %v2869
    %v4224 = vpop.f32.mrb[0].mxu0
    %v4225 = vadd.f32 %v3792, %v4224
    %v4226 = vpop.f32.mrb[0].mxu0
    %v4227 = vadd.f32 %v3794, %v4226
    %v4228 = vpop.f32.mrb[0].mxu0
    %v4229 = vadd.f32 %v3796, %v4228
    %v4230 = vpop.f32.mrb[0].mxu0
    %v4231 = vadd.f32 %v3798, %v4230
    %4232 = vmatprep.mubr.bf16.mxu0 %v2874
    %4233 = vmatmul.mubr.bf16.gmra.mrb[0].mxu0 %v2873
    %v4234 = vpop.f32.mrb[0].mxu0
    %v4235 = vadd.f32 %v3802, %v4234
    %v4236 = vpop.f32.mrb[0].mxu0
    %v4237 = vadd.f32 %v3804, %v4236
    %v4238 = vpop.f32.mrb[0].mxu0
    %v4239 = vadd.f32 %v3806, %v4238
    %v4240 = vpop.f32.mrb[0].mxu0
    %v4241 = vadd.f32 %v3808, %v4240
    %4242 = vdwg.mxu0
    %4243 = vmatprep.subr.bf16.mxu0 %v4035
    %4244 = vmatpush1.bf16.msra.mxu0 %v4034
    %4245 = vmatprep.subr.bf16.mxu0 %v4037
    %4246 = vmatpush1.bf16.msra.mxu0 %v4036
    %4247 = vmatprep.subr.bf16.mxu0 %v4039
    %4248 = vmatpush1.bf16.msra.mxu0 %v4038
    %4249 = vmatprep.subr.bf16.mxu0 %v4041
    %4250 = vmatpush1.bf16.msra.mxu0 %v4040
    %4251 = vmatprep.subr.bf16.mxu0 %v4043
    %4252 = vmatpush1.bf16.msra.mxu0 %v4042
    %4253 = vmatprep.subr.bf16.mxu0 %v4045
    %4254 = vmatpush1.bf16.msra.mxu0 %v4044
    %4255 = vmatprep.subr.bf16.mxu0 %v4047
    %4256 = vmatpush1.bf16.msra.mxu0 %v4046
    %4257 = vmatprep.subr.bf16.mxu0 %v4049
    %4258 = vmatpush1.bf16.msra.mxu0 %v4048
    %4259 = vmatprep.subr.bf16.mxu0 %v4051
    %4260 = vmatpush1.bf16.msra.mxu0 %v4050
    %4261 = vmatprep.subr.bf16.mxu0 %v4053
    %4262 = vmatpush1.bf16.msra.mxu0 %v4052
    %4263 = vmatprep.subr.bf16.mxu0 %v4055
    %4264 = vmatpush1.bf16.msra.mxu0 %v4054
    %4265 = vmatprep.subr.bf16.mxu0 %v4057
    %4266 = vmatpush1.bf16.msra.mxu0 %v4056
    %4267 = vmatprep.subr.bf16.mxu0 %v4059
    %4268 = vmatpush1.bf16.msra.mxu0 %v4058
    %4269 = vmatprep.subr.bf16.mxu0 %v4061
    %4270 = vmatpush1.bf16.msra.mxu0 %v4060
    %4271 = vmatprep.subr.bf16.mxu0 %v4063
    %4272 = vmatpush1.bf16.msra.mxu0 %v4062
    %4273 = vmatprep.subr.bf16.mxu0 %v4065
    %4274 = vmatpush1.bf16.msra.mxu0 %v4064
    %4275 = vmatprep.mubr.bf16.mxu0 %v2848
    %4276 = vmatmul.mubr.bf16.gmra.mrb[0].mxu0 %v2847
    %v4277 = vpop.f32.mrb[0].mxu0
    %v4278 = vadd.f32 %v4165, %v4277
    %v4279 = vpop.f32.mrb[0].mxu0
    %v4280 = vadd.f32 %v4167, %v4279
    %v4281 = vpop.f32.mrb[0].mxu0
    %v4282 = vadd.f32 %v4169, %v4281
    %v4283 = vpop.f32.mrb[0].mxu0
    %v4284 = vadd.f32 %v4171, %v4283
    %4285 = vmatprep.mubr.bf16.mxu0 %v2852
    %4286 = vmatmul.mubr.bf16.gmra.mrb[0].mxu0 %v2851
    %v4287 = vpop.f32.mrb[0].mxu0
    %v4288 = vadd.f32 %v4175, %v4287
    %v4289 = vpop.f32.mrb[0].mxu0
    %v4290 = vadd.f32 %v4177, %v4289
    %v4291 = vpop.f32.mrb[0].mxu0
    %v4292 = vadd.f32 %v4179, %v4291
    %v4293 = vpop.f32.mrb[0].mxu0
    %v4294 = vadd.f32 %v4181, %v4293
    %4295 = vmatprep.mubr.bf16.mxu0 %v2856
    %4296 = vmatmul.mubr.bf16.gmra.mrb[0].mxu0 %v2855
    %v4297 = vpop.f32.mrb[0].mxu0
    %v4298 = vadd.f32 %v4185, %v4297
    %v4299 = vpop.f32.mrb[0].mxu0
    %v4300 = vadd.f32 %v4187, %v4299
    %v4301 = vpop.f32.mrb[0].mxu0
    %v4302 = vadd.f32 %v4189, %v4301
    %v4303 = vpop.f32.mrb[0].mxu0
    %v4304 = vadd.f32 %v4191, %v4303
    %4305 = vmatprep.mubr.bf16.mxu0 %v2860
    %4306 = vmatmul.mubr.bf16.gmra.mrb[0].mxu0 %v2859
    %v4307 = vpop.f32.mrb[0].mxu0
    %v4308 = vadd.f32 %v4195, %v4307
    %v4309 = vpop.f32.mrb[0].mxu0
    %v4310 = vadd.f32 %v4197, %v4309
    %v4311 = vpop.f32.mrb[0].mxu0
    %v4312 = vadd.f32 %v4199, %v4311
    %v4313 = vpop.f32.mrb[0].mxu0
    %v4314 = vadd.f32 %v4201, %v4313
    %4315 = vmatprep.mubr.bf16.mxu0 %v2864
    %4316 = vmatmul.mubr.bf16.gmra.mrb[0].mxu0 %v2863
    %v4317 = vpop.f32.mrb[0].mxu0
    %v4318 = vadd.f32 %v4205, %v4317
    %v4319 = vpop.f32.mrb[0].mxu0
    %v4320 = vadd.f32 %v4207, %v4319
    %v4321 = vpop.f32.mrb[0].mxu0
    %v4322 = vadd.f32 %v4209, %v4321
    %v4323 = vpop.f32.mrb[0].mxu0
    %v4324 = vadd.f32 %v4211, %v4323
    %4325 = vmatprep.mubr.bf16.mxu0 %v2868
    %4326 = vmatmul.mubr.bf16.gmra.mrb[0].mxu0 %v2867
    %v4327 = vpop.f32.mrb[0].mxu0
    %v4328 = vadd.f32 %v4215, %v4327
    %v4329 = vpop.f32.mrb[0].mxu0
    %v4330 = vadd.f32 %v4217, %v4329
    %v4331 = vpop.f32.mrb[0].mxu0
    %v4332 = vadd.f32 %v4219, %v4331
    %v4333 = vpop.f32.mrb[0].mxu0
    %v4334 = vadd.f32 %v4221, %v4333
    %4335 = vmatprep.mubr.bf16.mxu0 %v2872
    %4336 = vmatmul.mubr.bf16.gmra.mrb[0].mxu0 %v2871
    %v4337 = vpop.f32.mrb[0].mxu0
    %v4338 = vadd.f32 %v4225, %v4337
    %v4339 = vpop.f32.mrb[0].mxu0
    %v4340 = vadd.f32 %v4227, %v4339
    %v4341 = vpop.f32.mrb[0].mxu0
    %v4342 = vadd.f32 %v4229, %v4341
    %v4343 = vpop.f32.mrb[0].mxu0
    %v4344 = vadd.f32 %v4231, %v4343
    %4345 = vmatprep.mubr.bf16.mxu0 %v2876
    %4346 = vmatmul.mubr.bf16.gmra.mrb[0].mxu0 %v2875
    %v4347 = vpop.f32.mrb[0].mxu0
    %v4348 = vadd.f32 %v4235, %v4347
    %v4349 = vpop.f32.mrb[0].mxu0
    %v4350 = vadd.f32 %v4237, %v4349
    %v4351 = vpop.f32.mrb[0].mxu0
    %v4352 = vadd.f32 %v4239, %v4351
    %v4353 = vpop.f32.mrb[0].mxu0
    %v4354 = vadd.f32 %v4241, %v4353
    %4355 = vdwg.mxu0
    %s4356 = scalar_lea.vmem %s3, 1024
    %v4357 = vld [vmem:[%s4356] sm:$0xff]
    %v4358 = vld [vmem:[%s4356 + $0x8] sm:$0xff]
    %v4359 = vld [vmem:[%s4356 + $0x10] sm:$0xff]
    %v4360 = vld [vmem:[%s4356 + $0x18] sm:$0xff]
    %v4361 = vld [vmem:[%s4356 + $0x20] sm:$0xff]
    %v4362 = vld [vmem:[%s4356 + $0x28] sm:$0xff]
    %v4363 = vld [vmem:[%s4356 + $0x30] sm:$0xff]
    %v4364 = vld [vmem:[%s4356 + $0x38] sm:$0xff]
    %v4365 = vld [vmem:[%s4356 + $0x40] sm:$0xff]
    %v4366 = vld [vmem:[%s4356 + $0x48] sm:$0xff]
    %v4367 = vld [vmem:[%s4356 + $0x50] sm:$0xff]
    %v4368 = vld [vmem:[%s4356 + $0x58] sm:$0xff]
    %v4369 = vld [vmem:[%s4356 + $0x60] sm:$0xff]
    %v4370 = vld [vmem:[%s4356 + $0x68] sm:$0xff]
    %v4371 = vld [vmem:[%s4356 + $0x70] sm:$0xff]
    %v4372 = vld [vmem:[%s4356 + $0x78] sm:$0xff]
    %v4373 = vld [vmem:[%s4356 + $0x80] sm:$0xff]
    %v4374 = vld [vmem:[%s4356 + $0x88] sm:$0xff]
    %v4375 = vld [vmem:[%s4356 + $0x90] sm:$0xff]
    %v4376 = vld [vmem:[%s4356 + $0x98] sm:$0xff]
    %v4377 = vld [vmem:[%s4356 + $0xa0] sm:$0xff]
    %v4378 = vld [vmem:[%s4356 + $0xa8] sm:$0xff]
    %v4379 = vld [vmem:[%s4356 + $0xb0] sm:$0xff]
    %v4380 = vld [vmem:[%s4356 + $0xb8] sm:$0xff]
    %v4381 = vld [vmem:[%s4356 + $0xc0] sm:$0xff]
    %v4382 = vld [vmem:[%s4356 + $0xc8] sm:$0xff]
    %v4383 = vld [vmem:[%s4356 + $0xd0] sm:$0xff]
    %v4384 = vld [vmem:[%s4356 + $0xd8] sm:$0xff]
    %v4385 = vld [vmem:[%s4356 + $0xe0] sm:$0xff]
    %v4386 = vld [vmem:[%s4356 + $0xe8] sm:$0xff]
    %v4387 = vld [vmem:[%s4356 + $0xf0] sm:$0xff]
    %v4388 = vld [vmem:[%s4356 + $0xf8] sm:$0xff]
    %v4389 = vld [vmem:[%s4356 + $0x100] sm:$0xff]
    %v4390 = vld [vmem:[%s4356 + $0x108] sm:$0xff]
    %v4391 = vld [vmem:[%s4356 + $0x110] sm:$0xff]
    %v4392 = vld [vmem:[%s4356 + $0x118] sm:$0xff]
    %v4393 = vld [vmem:[%s4356 + $0x120] sm:$0xff]
    %v4394 = vld [vmem:[%s4356 + $0x128] sm:$0xff]
    %v4395 = vld [vmem:[%s4356 + $0x130] sm:$0xff]
    %v4396 = vld [vmem:[%s4356 + $0x138] sm:$0xff]
    %v4397 = vld [vmem:[%s4356 + $0x140] sm:$0xff]
    %v4398 = vld [vmem:[%s4356 + $0x148] sm:$0xff]
    %v4399 = vld [vmem:[%s4356 + $0x150] sm:$0xff]
    %v4400 = vld [vmem:[%s4356 + $0x158] sm:$0xff]
    %v4401 = vld [vmem:[%s4356 + $0x160] sm:$0xff]
    %v4402 = vld [vmem:[%s4356 + $0x168] sm:$0xff]
    %v4403 = vld [vmem:[%s4356 + $0x170] sm:$0xff]
    %v4404 = vld [vmem:[%s4356 + $0x178] sm:$0xff]
    %v4405 = vld [vmem:[%s4356 + $0x180] sm:$0xff]
    %v4406 = vld [vmem:[%s4356 + $0x188] sm:$0xff]
    %v4407 = vld [vmem:[%s4356 + $0x190] sm:$0xff]
    %v4408 = vld [vmem:[%s4356 + $0x198] sm:$0xff]
    %v4409 = vld [vmem:[%s4356 + $0x1a0] sm:$0xff]
    %v4410 = vld [vmem:[%s4356 + $0x1a8] sm:$0xff]
    %v4411 = vld [vmem:[%s4356 + $0x1b0] sm:$0xff]
    %v4412 = vld [vmem:[%s4356 + $0x1b8] sm:$0xff]
    %v4413 = vld [vmem:[%s4356 + $0x1c0] sm:$0xff]
    %v4414 = vld [vmem:[%s4356 + $0x1c8] sm:$0xff]
    %v4415 = vld [vmem:[%s4356 + $0x1d0] sm:$0xff]
    %v4416 = vld [vmem:[%s4356 + $0x1d8] sm:$0xff]
    %v4417 = vld [vmem:[%s4356 + $0x1e0] sm:$0xff]
    %v4418 = vld [vmem:[%s4356 + $0x1e8] sm:$0xff]
    %v4419 = vld [vmem:[%s4356 + $0x1f0] sm:$0xff]
    %v4420 = vld [vmem:[%s4356 + $0x1f8] sm:$0xff]
    %v4485 = vunpack.c.l.b16 %v4357
    %v4486 = vunpack.c.h.b16 %v4357
    %v4487 = vunpack.c.l.b16 %v4358
    %v4488 = vunpack.c.h.b16 %v4358
    %v4489 = vunpack.c.l.b16 %v4359
    %v4490 = vunpack.c.h.b16 %v4359
    %v4491 = vunpack.c.l.b16 %v4360
    %v4492 = vunpack.c.h.b16 %v4360
    %v4493 = vunpack.c.l.b16 %v4361
    %v4494 = vunpack.c.h.b16 %v4361
    %v4495 = vunpack.c.l.b16 %v4362
    %v4496 = vunpack.c.h.b16 %v4362
    %v4497 = vunpack.c.l.b16 %v4363
    %v4498 = vunpack.c.h.b16 %v4363
    %v4499 = vunpack.c.l.b16 %v4364
    %v4500 = vunpack.c.h.b16 %v4364
    %v4501 = vunpack.c.l.b16 %v4365
    %v4502 = vunpack.c.h.b16 %v4365
    %v4503 = vunpack.c.l.b16 %v4366
    %v4504 = vunpack.c.h.b16 %v4366
    %v4505 = vunpack.c.l.b16 %v4367
    %v4506 = vunpack.c.h.b16 %v4367
    %v4507 = vunpack.c.l.b16 %v4368
    %v4508 = vunpack.c.h.b16 %v4368
    %v4509 = vunpack.c.l.b16 %v4369
    %v4510 = vunpack.c.h.b16 %v4369
    %v4511 = vunpack.c.l.b16 %v4370
    %v4512 = vunpack.c.h.b16 %v4370
    %v4513 = vunpack.c.l.b16 %v4371
    %v4514 = vunpack.c.h.b16 %v4371
    %v4515 = vunpack.c.l.b16 %v4372
    %v4516 = vunpack.c.h.b16 %v4372
    %v4517 = vunpack.c.l.b16 %v4373
    %v4518 = vunpack.c.h.b16 %v4373
    %v4519 = vunpack.c.l.b16 %v4374
    %v4520 = vunpack.c.h.b16 %v4374
    %v4521 = vunpack.c.l.b16 %v4375
    %v4522 = vunpack.c.h.b16 %v4375
    %v4523 = vunpack.c.l.b16 %v4376
    %v4524 = vunpack.c.h.b16 %v4376
    %v4525 = vunpack.c.l.b16 %v4377
    %v4526 = vunpack.c.h.b16 %v4377
    %v4527 = vunpack.c.l.b16 %v4378
    %v4528 = vunpack.c.h.b16 %v4378
    %v4529 = vunpack.c.l.b16 %v4379
    %v4530 = vunpack.c.h.b16 %v4379
    %v4531 = vunpack.c.l.b16 %v4380
    %v4532 = vunpack.c.h.b16 %v4380
    %v4533 = vunpack.c.l.b16 %v4381
    %v4534 = vunpack.c.h.b16 %v4381
    %v4535 = vunpack.c.l.b16 %v4382
    %v4536 = vunpack.c.h.b16 %v4382
    %v4537 = vunpack.c.l.b16 %v4383
    %v4538 = vunpack.c.h.b16 %v4383
    %v4539 = vunpack.c.l.b16 %v4384
    %v4540 = vunpack.c.h.b16 %v4384
    %v4541 = vunpack.c.l.b16 %v4385
    %v4542 = vunpack.c.h.b16 %v4385
    %v4543 = vunpack.c.l.b16 %v4386
    %v4544 = vunpack.c.h.b16 %v4386
    %v4545 = vunpack.c.l.b16 %v4387
    %v4546 = vunpack.c.h.b16 %v4387
    %v4547 = vunpack.c.l.b16 %v4388
    %v4548 = vunpack.c.h.b16 %v4388
    %v4549 = vunpack.c.l.b16 %v4389
    %v4550 = vunpack.c.h.b16 %v4389
    %v4551 = vunpack.c.l.b16 %v4390
    %v4552 = vunpack.c.h.b16 %v4390
    %v4553 = vunpack.c.l.b16 %v4391
    %v4554 = vunpack.c.h.b16 %v4391
    %v4555 = vunpack.c.l.b16 %v4392
    %v4556 = vunpack.c.h.b16 %v4392
    %v4557 = vunpack.c.l.b16 %v4393
    %v4558 = vunpack.c.h.b16 %v4393
    %v4559 = vunpack.c.l.b16 %v4394
    %v4560 = vunpack.c.h.b16 %v4394
    %v4561 = vunpack.c.l.b16 %v4395
    %v4562 = vunpack.c.h.b16 %v4395
    %v4563 = vunpack.c.l.b16 %v4396
    %v4564 = vunpack.c.h.b16 %v4396
    %v4565 = vunpack.c.l.b16 %v4397
    %v4566 = vunpack.c.h.b16 %v4397
    %v4567 = vunpack.c.l.b16 %v4398
    %v4568 = vunpack.c.h.b16 %v4398
    %v4569 = vunpack.c.l.b16 %v4399
    %v4570 = vunpack.c.h.b16 %v4399
    %v4571 = vunpack.c.l.b16 %v4400
    %v4572 = vunpack.c.h.b16 %v4400
    %v4573 = vunpack.c.l.b16 %v4401
    %v4574 = vunpack.c.h.b16 %v4401
    %v4575 = vunpack.c.l.b16 %v4402
    %v4576 = vunpack.c.h.b16 %v4402
    %v4577 = vunpack.c.l.b16 %v4403
    %v4578 = vunpack.c.h.b16 %v4403
    %v4579 = vunpack.c.l.b16 %v4404
    %v4580 = vunpack.c.h.b16 %v4404
    %v4581 = vunpack.c.l.b16 %v4405
    %v4582 = vunpack.c.h.b16 %v4405
    %v4583 = vunpack.c.l.b16 %v4406
    %v4584 = vunpack.c.h.b16 %v4406
    %v4585 = vunpack.c.l.b16 %v4407
    %v4586 = vunpack.c.h.b16 %v4407
    %v4587 = vunpack.c.l.b16 %v4408
    %v4588 = vunpack.c.h.b16 %v4408
    %v4589 = vunpack.c.l.b16 %v4409
    %v4590 = vunpack.c.h.b16 %v4409
    %v4591 = vunpack.c.l.b16 %v4410
    %v4592 = vunpack.c.h.b16 %v4410
    %v4593 = vunpack.c.l.b16 %v4411
    %v4594 = vunpack.c.h.b16 %v4411
    %v4595 = vunpack.c.l.b16 %v4412
    %v4596 = vunpack.c.h.b16 %v4412
    %v4597 = vunpack.c.l.b16 %v4413
    %v4598 = vunpack.c.h.b16 %v4413
    %v4599 = vunpack.c.l.b16 %v4414
    %v4600 = vunpack.c.h.b16 %v4414
    %v4601 = vunpack.c.l.b16 %v4415
    %v4602 = vunpack.c.h.b16 %v4415
    %v4603 = vunpack.c.l.b16 %v4416
    %v4604 = vunpack.c.h.b16 %v4416
    %v4605 = vunpack.c.l.b16 %v4417
    %v4606 = vunpack.c.h.b16 %v4417
    %v4607 = vunpack.c.l.b16 %v4418
    %v4608 = vunpack.c.h.b16 %v4418
    %v4609 = vunpack.c.l.b16 %v4419
    %v4610 = vunpack.c.h.b16 %v4419
    %v4611 = vunpack.c.l.b16 %v4420
    %v4612 = vunpack.c.h.b16 %v4420
    %v4613 = vpack.c.b16 %v4487, %v4485
    %v4614 = vpack.c.b16 %v4488, %v4486
    %v4615 = vpack.c.b16 %v4491, %v4489
    %v4616 = vpack.c.b16 %v4492, %v4490
    %v4617 = vpack.c.b16 %v4495, %v4493
    %v4618 = vpack.c.b16 %v4496, %v4494
    %v4619 = vpack.c.b16 %v4499, %v4497
    %v4620 = vpack.c.b16 %v4500, %v4498
    %v4621 = vpack.c.b16 %v4503, %v4501
    %v4622 = vpack.c.b16 %v4504, %v4502
    %v4623 = vpack.c.b16 %v4507, %v4505
    %v4624 = vpack.c.b16 %v4508, %v4506
    %v4625 = vpack.c.b16 %v4511, %v4509
    %v4626 = vpack.c.b16 %v4512, %v4510
    %v4627 = vpack.c.b16 %v4515, %v4513
    %v4628 = vpack.c.b16 %v4516, %v4514
    %v4629 = vpack.c.b16 %v4519, %v4517
    %v4630 = vpack.c.b16 %v4520, %v4518
    %v4631 = vpack.c.b16 %v4523, %v4521
    %v4632 = vpack.c.b16 %v4524, %v4522
    %v4633 = vpack.c.b16 %v4527, %v4525
    %v4634 = vpack.c.b16 %v4528, %v4526
    %v4635 = vpack.c.b16 %v4531, %v4529
    %v4636 = vpack.c.b16 %v4532, %v4530
    %v4637 = vpack.c.b16 %v4535, %v4533
    %v4638 = vpack.c.b16 %v4536, %v4534
    %v4639 = vpack.c.b16 %v4539, %v4537
    %v4640 = vpack.c.b16 %v4540, %v4538
    %v4641 = vpack.c.b16 %v4543, %v4541
    %v4642 = vpack.c.b16 %v4544, %v4542
    %v4643 = vpack.c.b16 %v4547, %v4545
    %v4644 = vpack.c.b16 %v4548, %v4546
    %v4645 = vpack.c.b16 %v4551, %v4549
    %v4646 = vpack.c.b16 %v4552, %v4550
    %v4647 = vpack.c.b16 %v4555, %v4553
    %v4648 = vpack.c.b16 %v4556, %v4554
    %v4649 = vpack.c.b16 %v4559, %v4557
    %v4650 = vpack.c.b16 %v4560, %v4558
    %v4651 = vpack.c.b16 %v4563, %v4561
    %v4652 = vpack.c.b16 %v4564, %v4562
    %v4653 = vpack.c.b16 %v4567, %v4565
    %v4654 = vpack.c.b16 %v4568, %v4566
    %v4655 = vpack.c.b16 %v4571, %v4569
    %v4656 = vpack.c.b16 %v4572, %v4570
    %v4657 = vpack.c.b16 %v4575, %v4573
    %v4658 = vpack.c.b16 %v4576, %v4574
    %v4659 = vpack.c.b16 %v4579, %v4577
    %v4660 = vpack.c.b16 %v4580, %v4578
    %v4661 = vpack.c.b16 %v4583, %v4581
    %v4662 = vpack.c.b16 %v4584, %v4582
    %v4663 = vpack.c.b16 %v4587, %v4585
    %v4664 = vpack.c.b16 %v4588, %v4586
    %v4665 = vpack.c.b16 %v4591, %v4589
    %v4666 = vpack.c.b16 %v4592, %v4590
    %v4667 = vpack.c.b16 %v4595, %v4593
    %v4668 = vpack.c.b16 %v4596, %v4594
    %v4669 = vpack.c.b16 %v4599, %v4597
    %v4670 = vpack.c.b16 %v4600, %v4598
    %v4671 = vpack.c.b16 %v4603, %v4601
    %v4672 = vpack.c.b16 %v4604, %v4602
    %v4673 = vpack.c.b16 %v4607, %v4605
    %v4674 = vpack.c.b16 %v4608, %v4606
    %v4675 = vpack.c.b16 %v4611, %v4609
    %v4676 = vpack.c.b16 %v4612, %v4610
    %4741 = vmatprep.subr.bf16.mxu0 %v4614
    %4742 = vmatpush1.bf16.msra.mxu0 %v4613
    %4743 = vmatprep.subr.bf16.mxu0 %v4616
    %4744 = vmatpush1.bf16.msra.mxu0 %v4615
    %4745 = vmatprep.subr.bf16.mxu0 %v4618
    %4746 = vmatpush1.bf16.msra.mxu0 %v4617
    %4747 = vmatprep.subr.bf16.mxu0 %v4620
    %4748 = vmatpush1.bf16.msra.mxu0 %v4619
    %4749 = vmatprep.subr.bf16.mxu0 %v4622
    %4750 = vmatpush1.bf16.msra.mxu0 %v4621
    %4751 = vmatprep.subr.bf16.mxu0 %v4624
    %4752 = vmatpush1.bf16.msra.mxu0 %v4623
    %4753 = vmatprep.subr.bf16.mxu0 %v4626
    %4754 = vmatpush1.bf16.msra.mxu0 %v4625
    %4755 = vmatprep.subr.bf16.mxu0 %v4628
    %4756 = vmatpush1.bf16.msra.mxu0 %v4627
    %4757 = vmatprep.subr.bf16.mxu0 %v4630
    %4758 = vmatpush1.bf16.msra.mxu0 %v4629
    %4759 = vmatprep.subr.bf16.mxu0 %v4632
    %4760 = vmatpush1.bf16.msra.mxu0 %v4631
    %4761 = vmatprep.subr.bf16.mxu0 %v4634
    %4762 = vmatpush1.bf16.msra.mxu0 %v4633
    %4763 = vmatprep.subr.bf16.mxu0 %v4636
    %4764 = vmatpush1.bf16.msra.mxu0 %v4635
    %4765 = vmatprep.subr.bf16.mxu0 %v4638
    %4766 = vmatpush1.bf16.msra.mxu0 %v4637
    %4767 = vmatprep.subr.bf16.mxu0 %v4640
    %4768 = vmatpush1.bf16.msra.mxu0 %v4639
    %4769 = vmatprep.subr.bf16.mxu0 %v4642
    %4770 = vmatpush1.bf16.msra.mxu0 %v4641
    %4771 = vmatprep.subr.bf16.mxu0 %v4644
    %4772 = vmatpush1.bf16.msra.mxu0 %v4643
    %4773 = vmatprep.mubr.bf16.mxu0 %v3104
    %4774 = vmatmul.mubr.bf16.gmra.mrb[0].mxu0 %v3103
    %v4775 = vpop.f32.mrb[0].mxu0
    %v4776 = vadd.f32 0.0, %v4775
    %v4777 = vpop.f32.mrb[0].mxu0
    %v4778 = vadd.f32 0.0, %v4777
    %v4779 = vpop.f32.mrb[0].mxu0
    %v4780 = vadd.f32 0.0, %v4779
    %v4781 = vpop.f32.mrb[0].mxu0
    %v4782 = vadd.f32 0.0, %v4781
    %4783 = vmatprep.mubr.bf16.mxu0 %v3108
    %4784 = vmatmul.mubr.bf16.gmra.mrb[0].mxu0 %v3107
    %v4785 = vpop.f32.mrb[0].mxu0
    %v4786 = vadd.f32 0.0, %v4785
    %v4787 = vpop.f32.mrb[0].mxu0
    %v4788 = vadd.f32 0.0, %v4787
    %v4789 = vpop.f32.mrb[0].mxu0
    %v4790 = vadd.f32 0.0, %v4789
    %v4791 = vpop.f32.mrb[0].mxu0
    %v4792 = vadd.f32 0.0, %v4791
    %4793 = vmatprep.mubr.bf16.mxu0 %v3112
    %4794 = vmatmul.mubr.bf16.gmra.mrb[0].mxu0 %v3111
    %v4795 = vpop.f32.mrb[0].mxu0
    %v4796 = vadd.f32 0.0, %v4795
    %v4797 = vpop.f32.mrb[0].mxu0
    %v4798 = vadd.f32 0.0, %v4797
    %v4799 = vpop.f32.mrb[0].mxu0
    %v4800 = vadd.f32 0.0, %v4799
    %v4801 = vpop.f32.mrb[0].mxu0
    %v4802 = vadd.f32 0.0, %v4801
    %4803 = vmatprep.mubr.bf16.mxu0 %v3116
    %4804 = vmatmul.mubr.bf16.gmra.mrb[0].mxu0 %v3115
    %v4805 = vpop.f32.mrb[0].mxu0
    %v4806 = vadd.f32 0.0, %v4805
    %v4807 = vpop.f32.mrb[0].mxu0
    %v4808 = vadd.f32 0.0, %v4807
    %v4809 = vpop.f32.mrb[0].mxu0
    %v4810 = vadd.f32 0.0, %v4809
    %v4811 = vpop.f32.mrb[0].mxu0
    %v4812 = vadd.f32 0.0, %v4811
    %4813 = vmatprep.mubr.bf16.mxu0 %v3120
    %4814 = vmatmul.mubr.bf16.gmra.mrb[0].mxu0 %v3119
    %v4815 = vpop.f32.mrb[0].mxu0
    %v4816 = vadd.f32 0.0, %v4815
    %v4817 = vpop.f32.mrb[0].mxu0
    %v4818 = vadd.f32 0.0, %v4817
    %v4819 = vpop.f32.mrb[0].mxu0
    %v4820 = vadd.f32 0.0, %v4819
    %v4821 = vpop.f32.mrb[0].mxu0
    %v4822 = vadd.f32 0.0, %v4821
    %4823 = vmatprep.mubr.bf16.mxu0 %v3124
    %4824 = vmatmul.mubr.bf16.gmra.mrb[0].mxu0 %v3123
    %v4825 = vpop.f32.mrb[0].mxu0
    %v4826 = vadd.f32 0.0, %v4825
    %v4827 = vpop.f32.mrb[0].mxu0
    %v4828 = vadd.f32 0.0, %v4827
    %v4829 = vpop.f32.mrb[0].mxu0
    %v4830 = vadd.f32 0.0, %v4829
    %v4831 = vpop.f32.mrb[0].mxu0
    %v4832 = vadd.f32 0.0, %v4831
    %4833 = vmatprep.mubr.bf16.mxu0 %v3128
    %4834 = vmatmul.mubr.bf16.gmra.mrb[0].mxu0 %v3127
    %v4835 = vpop.f32.mrb[0].mxu0
    %v4836 = vadd.f32 0.0, %v4835
    %v4837 = vpop.f32.mrb[0].mxu0
    %v4838 = vadd.f32 0.0, %v4837
    %v4839 = vpop.f32.mrb[0].mxu0
    %v4840 = vadd.f32 0.0, %v4839
    %v4841 = vpop.f32.mrb[0].mxu0
    %v4842 = vadd.f32 0.0, %v4841
    %4843 = vmatprep.mubr.bf16.mxu0 %v3132
    %4844 = vmatmul.mubr.bf16.gmra.mrb[0].mxu0 %v3131
    %v4845 = vpop.f32.mrb[0].mxu0
    %v4846 = vadd.f32 0.0, %v4845
    %v4847 = vpop.f32.mrb[0].mxu0
    %v4848 = vadd.f32 0.0, %v4847
    %v4849 = vpop.f32.mrb[0].mxu0
    %v4850 = vadd.f32 0.0, %v4849
    %v4851 = vpop.f32.mrb[0].mxu0
    %v4852 = vadd.f32 0.0, %v4851
    %4853 = vdwg.mxu0
    %4854 = vmatprep.subr.bf16.mxu0 %v4646
    %4855 = vmatpush1.bf16.msra.mxu0 %v4645
    %4856 = vmatprep.subr.bf16.mxu0 %v4648
    %4857 = vmatpush1.bf16.msra.mxu0 %v4647
    %4858 = vmatprep.subr.bf16.mxu0 %v4650
    %4859 = vmatpush1.bf16.msra.mxu0 %v4649
    %4860 = vmatprep.subr.bf16.mxu0 %v4652
    %4861 = vmatpush1.bf16.msra.mxu0 %v4651
    %4862 = vmatprep.subr.bf16.mxu0 %v4654
    %4863 = vmatpush1.bf16.msra.mxu0 %v4653
    %4864 = vmatprep.subr.bf16.mxu0 %v4656
    %4865 = vmatpush1.bf16.msra.mxu0 %v4655
    %4866 = vmatprep.subr.bf16.mxu0 %v4658
    %4867 = vmatpush1.bf16.msra.mxu0 %v4657
    %4868 = vmatprep.subr.bf16.mxu0 %v4660
    %4869 = vmatpush1.bf16.msra.mxu0 %v4659
    %4870 = vmatprep.subr.bf16.mxu0 %v4662
    %4871 = vmatpush1.bf16.msra.mxu0 %v4661
    %4872 = vmatprep.subr.bf16.mxu0 %v4664
    %4873 = vmatpush1.bf16.msra.mxu0 %v4663
    %4874 = vmatprep.subr.bf16.mxu0 %v4666
    %4875 = vmatpush1.bf16.msra.mxu0 %v4665
    %4876 = vmatprep.subr.bf16.mxu0 %v4668
    %4877 = vmatpush1.bf16.msra.mxu0 %v4667
    %4878 = vmatprep.subr.bf16.mxu0 %v4670
    %4879 = vmatpush1.bf16.msra.mxu0 %v4669
    %4880 = vmatprep.subr.bf16.mxu0 %v4672
    %4881 = vmatpush1.bf16.msra.mxu0 %v4671
    %4882 = vmatprep.subr.bf16.mxu0 %v4674
    %4883 = vmatpush1.bf16.msra.mxu0 %v4673
    %4884 = vmatprep.subr.bf16.mxu0 %v4676
    %4885 = vmatpush1.bf16.msra.mxu0 %v4675
    %4886 = vmatprep.mubr.bf16.mxu0 %v3106
    %4887 = vmatmul.mubr.bf16.gmra.mrb[0].mxu0 %v3105
    %v4888 = vpop.f32.mrb[0].mxu0
    %v4889 = vadd.f32 %v4776, %v4888
    %v4890 = vpop.f32.mrb[0].mxu0
    %v4891 = vadd.f32 %v4778, %v4890
    %v4892 = vpop.f32.mrb[0].mxu0
    %v4893 = vadd.f32 %v4780, %v4892
    %v4894 = vpop.f32.mrb[0].mxu0
    %v4895 = vadd.f32 %v4782, %v4894
    %4896 = vmatprep.mubr.bf16.mxu0 %v3110
    %4897 = vmatmul.mubr.bf16.gmra.mrb[0].mxu0 %v3109
    %v4898 = vpop.f32.mrb[0].mxu0
    %v4899 = vadd.f32 %v4786, %v4898
    %v4900 = vpop.f32.mrb[0].mxu0
    %v4901 = vadd.f32 %v4788, %v4900
    %v4902 = vpop.f32.mrb[0].mxu0
    %v4903 = vadd.f32 %v4790, %v4902
    %v4904 = vpop.f32.mrb[0].mxu0
    %v4905 = vadd.f32 %v4792, %v4904
    %4906 = vmatprep.mubr.bf16.mxu0 %v3114
    %4907 = vmatmul.mubr.bf16.gmra.mrb[0].mxu0 %v3113
    %v4908 = vpop.f32.mrb[0].mxu0
    %v4909 = vadd.f32 %v4796, %v4908
    %v4910 = vpop.f32.mrb[0].mxu0
    %v4911 = vadd.f32 %v4798, %v4910
    %v4912 = vpop.f32.mrb[0].mxu0
    %v4913 = vadd.f32 %v4800, %v4912
    %v4914 = vpop.f32.mrb[0].mxu0
    %v4915 = vadd.f32 %v4802, %v4914
    %4916 = vmatprep.mubr.bf16.mxu0 %v3118
    %4917 = vmatmul.mubr.bf16.gmra.mrb[0].mxu0 %v3117
    %v4918 = vpop.f32.mrb[0].mxu0
    %v4919 = vadd.f32 %v4806, %v4918
    %v4920 = vpop.f32.mrb[0].mxu0
    %v4921 = vadd.f32 %v4808, %v4920
    %v4922 = vpop.f32.mrb[0].mxu0
    %v4923 = vadd.f32 %v4810, %v4922
    %v4924 = vpop.f32.mrb[0].mxu0
    %v4925 = vadd.f32 %v4812, %v4924
    %4926 = vmatprep.mubr.bf16.mxu0 %v3122
    %4927 = vmatmul.mubr.bf16.gmra.mrb[0].mxu0 %v3121
    %v4928 = vpop.f32.mrb[0].mxu0
    %v4929 = vadd.f32 %v4816, %v4928
    %v4930 = vpop.f32.mrb[0].mxu0
    %v4931 = vadd.f32 %v4818, %v4930
    %v4932 = vpop.f32.mrb[0].mxu0
    %v4933 = vadd.f32 %v4820, %v4932
    %v4934 = vpop.f32.mrb[0].mxu0
    %v4935 = vadd.f32 %v4822, %v4934
    %4936 = vmatprep.mubr.bf16.mxu0 %v3126
    %4937 = vmatmul.mubr.bf16.gmra.mrb[0].mxu0 %v3125
    %v4938 = vpop.f32.mrb[0].mxu0
    %v4939 = vadd.f32 %v4826, %v4938
    %v4940 = vpop.f32.mrb[0].mxu0
    %v4941 = vadd.f32 %v4828, %v4940
    %v4942 = vpop.f32.mrb[0].mxu0
    %v4943 = vadd.f32 %v4830, %v4942
    %v4944 = vpop.f32.mrb[0].mxu0
    %v4945 = vadd.f32 %v4832, %v4944
    %4946 = vmatprep.mubr.bf16.mxu0 %v3130
    %4947 = vmatmul.mubr.bf16.gmra.mrb[0].mxu0 %v3129
    %v4948 = vpop.f32.mrb[0].mxu0
    %v4949 = vadd.f32 %v4836, %v4948
    %v4950 = vpop.f32.mrb[0].mxu0
    %v4951 = vadd.f32 %v4838, %v4950
    %v4952 = vpop.f32.mrb[0].mxu0
    %v4953 = vadd.f32 %v4840, %v4952
    %v4954 = vpop.f32.mrb[0].mxu0
    %v4955 = vadd.f32 %v4842, %v4954
    %4956 = vmatprep.mubr.bf16.mxu0 %v3134
    %4957 = vmatmul.mubr.bf16.gmra.mrb[0].mxu0 %v3133
    %v4958 = vpop.f32.mrb[0].mxu0
    %v4959 = vadd.f32 %v4846, %v4958
    %v4960 = vpop.f32.mrb[0].mxu0
    %v4961 = vadd.f32 %v4848, %v4960
    %v4962 = vpop.f32.mrb[0].mxu0
    %v4963 = vadd.f32 %v4850, %v4962
    %v4964 = vpop.f32.mrb[0].mxu0
    %v4965 = vadd.f32 %v4852, %v4964
    %4966 = vdwg.mxu0
    %v4967 = vadd.f32 %v4278, %v4889
    %v4968 = vadd.f32 %v4280, %v4891
    %v4969 = vadd.f32 %v4282, %v4893
    %v4970 = vadd.f32 %v4284, %v4895
    %v4971 = vadd.f32 %v4288, %v4899
    %v4972 = vadd.f32 %v4290, %v4901
    %v4973 = vadd.f32 %v4292, %v4903
    %v4974 = vadd.f32 %v4294, %v4905
    %v4975 = vadd.f32 %v4298, %v4909
    %v4976 = vadd.f32 %v4300, %v4911
    %v4977 = vadd.f32 %v4302, %v4913
    %v4978 = vadd.f32 %v4304, %v4915
    %v4979 = vadd.f32 %v4308, %v4919
    %v4980 = vadd.f32 %v4310, %v4921
    %v4981 = vadd.f32 %v4312, %v4923
    %v4982 = vadd.f32 %v4314, %v4925
    %v4983 = vadd.f32 %v4318, %v4929
    %v4984 = vadd.f32 %v4320, %v4931
    %v4985 = vadd.f32 %v4322, %v4933
    %v4986 = vadd.f32 %v4324, %v4935
    %v4987 = vadd.f32 %v4328, %v4939
    %v4988 = vadd.f32 %v4330, %v4941
    %v4989 = vadd.f32 %v4332, %v4943
    %v4990 = vadd.f32 %v4334, %v4945
    %v4991 = vadd.f32 %v4338, %v4949
    %v4992 = vadd.f32 %v4340, %v4951
    %v4993 = vadd.f32 %v4342, %v4953
    %v4994 = vadd.f32 %v4344, %v4955
    %v4995 = vadd.f32 %v4348, %v4959
    %v4996 = vadd.f32 %v4350, %v4961
    %v4997 = vadd.f32 %v4352, %v4963
    %v4998 = vadd.f32 %v4354, %v4965
    %v4999 = vld [vmem:[%s4] sm:$0xff]
    %v5000 = vld [vmem:[%s4 + $0x8] sm:$0xff]
    %v5001 = vld [vmem:[%s4 + $0x10] sm:$0xff]
    %v5002 = vld [vmem:[%s4 + $0x18] sm:$0xff]
    %v5003 = vld [vmem:[%s4 + $0x20] sm:$0xff]
    %v5004 = vld [vmem:[%s4 + $0x28] sm:$0xff]
    %v5005 = vld [vmem:[%s4 + $0x30] sm:$0xff]
    %v5006 = vld [vmem:[%s4 + $0x38] sm:$0xff]
    %v5007 = vld [vmem:[%s4 + $0x40] sm:$0xff]
    %v5008 = vld [vmem:[%s4 + $0x48] sm:$0xff]
    %v5009 = vld [vmem:[%s4 + $0x50] sm:$0xff]
    %v5010 = vld [vmem:[%s4 + $0x58] sm:$0xff]
    %v5011 = vld [vmem:[%s4 + $0x60] sm:$0xff]
    %v5012 = vld [vmem:[%s4 + $0x68] sm:$0xff]
    %v5013 = vld [vmem:[%s4 + $0x70] sm:$0xff]
    %v5014 = vld [vmem:[%s4 + $0x78] sm:$0xff]
    %v5015 = vld [vmem:[%s4 + $0x80] sm:$0xff]
    %v5016 = vld [vmem:[%s4 + $0x88] sm:$0xff]
    %v5017 = vld [vmem:[%s4 + $0x90] sm:$0xff]
    %v5018 = vld [vmem:[%s4 + $0x98] sm:$0xff]
    %v5019 = vld [vmem:[%s4 + $0xa0] sm:$0xff]
    %v5020 = vld [vmem:[%s4 + $0xa8] sm:$0xff]
    %v5021 = vld [vmem:[%s4 + $0xb0] sm:$0xff]
    %v5022 = vld [vmem:[%s4 + $0xb8] sm:$0xff]
    %v5023 = vld [vmem:[%s4 + $0xc0] sm:$0xff]
    %v5024 = vld [vmem:[%s4 + $0xc8] sm:$0xff]
    %v5025 = vld [vmem:[%s4 + $0xd0] sm:$0xff]
    %v5026 = vld [vmem:[%s4 + $0xd8] sm:$0xff]
    %v5027 = vld [vmem:[%s4 + $0xe0] sm:$0xff]
    %v5028 = vld [vmem:[%s4 + $0xe8] sm:$0xff]
    %v5029 = vld [vmem:[%s4 + $0xf0] sm:$0xff]
    %v5030 = vld [vmem:[%s4 + $0xf8] sm:$0xff]
    %v5031 = vld [vmem:[%s4 + $0x100] sm:$0xff]
    %v5032 = vld [vmem:[%s4 + $0x108] sm:$0xff]
    %v5033 = vld [vmem:[%s4 + $0x110] sm:$0xff]
    %v5034 = vld [vmem:[%s4 + $0x118] sm:$0xff]
    %v5035 = vld [vmem:[%s4 + $0x120] sm:$0xff]
    %v5036 = vld [vmem:[%s4 + $0x128] sm:$0xff]
    %v5037 = vld [vmem:[%s4 + $0x130] sm:$0xff]
    %v5038 = vld [vmem:[%s4 + $0x138] sm:$0xff]
    %v5039 = vld [vmem:[%s4 + $0x140] sm:$0xff]
    %v5040 = vld [vmem:[%s4 + $0x148] sm:$0xff]
    %v5041 = vld [vmem:[%s4 + $0x150] sm:$0xff]
    %v5042 = vld [vmem:[%s4 + $0x158] sm:$0xff]
    %v5043 = vld [vmem:[%s4 + $0x160] sm:$0xff]
    %v5044 = vld [vmem:[%s4 + $0x168] sm:$0xff]
    %v5045 = vld [vmem:[%s4 + $0x170] sm:$0xff]
    %v5046 = vld [vmem:[%s4 + $0x178] sm:$0xff]
    %v5047 = vld [vmem:[%s4 + $0x180] sm:$0xff]
    %v5048 = vld [vmem:[%s4 + $0x188] sm:$0xff]
    %v5049 = vld [vmem:[%s4 + $0x190] sm:$0xff]
    %v5050 = vld [vmem:[%s4 + $0x198] sm:$0xff]
    %v5051 = vld [vmem:[%s4 + $0x1a0] sm:$0xff]
    %v5052 = vld [vmem:[%s4 + $0x1a8] sm:$0xff]
    %v5053 = vld [vmem:[%s4 + $0x1b0] sm:$0xff]
    %v5054 = vld [vmem:[%s4 + $0x1b8] sm:$0xff]
    %v5055 = vld [vmem:[%s4 + $0x1c0] sm:$0xff]
    %v5056 = vld [vmem:[%s4 + $0x1c8] sm:$0xff]
    %v5057 = vld [vmem:[%s4 + $0x1d0] sm:$0xff]
    %v5058 = vld [vmem:[%s4 + $0x1d8] sm:$0xff]
    %v5059 = vld [vmem:[%s4 + $0x1e0] sm:$0xff]
    %v5060 = vld [vmem:[%s4 + $0x1e8] sm:$0xff]
    %v5061 = vld [vmem:[%s4 + $0x1f0] sm:$0xff]
    %v5062 = vld [vmem:[%s4 + $0x1f8] sm:$0xff]
    %s5063 = scalar_lea.vmem %s4, 512
    %v5064 = vld [vmem:[%s5063] sm:$0xff]
    %v5065 = vld [vmem:[%s5063 + $0x8] sm:$0xff]
    %v5066 = vld [vmem:[%s5063 + $0x10] sm:$0xff]
    %v5067 = vld [vmem:[%s5063 + $0x18] sm:$0xff]
    %v5068 = vld [vmem:[%s5063 + $0x20] sm:$0xff]
    %v5069 = vld [vmem:[%s5063 + $0x28] sm:$0xff]
    %v5070 = vld [vmem:[%s5063 + $0x30] sm:$0xff]
    %v5071 = vld [vmem:[%s5063 + $0x38] sm:$0xff]
    %v5072 = vld [vmem:[%s5063 + $0x40] sm:$0xff]
    %v5073 = vld [vmem:[%s5063 + $0x48] sm:$0xff]
    %v5074 = vld [vmem:[%s5063 + $0x50] sm:$0xff]
    %v5075 = vld [vmem:[%s5063 + $0x58] sm:$0xff]
    %v5076 = vld [vmem:[%s5063 + $0x60] sm:$0xff]
    %v5077 = vld [vmem:[%s5063 + $0x68] sm:$0xff]
    %v5078 = vld [vmem:[%s5063 + $0x70] sm:$0xff]
    %v5079 = vld [vmem:[%s5063 + $0x78] sm:$0xff]
    %v5080 = vld [vmem:[%s5063 + $0x80] sm:$0xff]
    %v5081 = vld [vmem:[%s5063 + $0x88] sm:$0xff]
    %v5082 = vld [vmem:[%s5063 + $0x90] sm:$0xff]
    %v5083 = vld [vmem:[%s5063 + $0x98] sm:$0xff]
    %v5084 = vld [vmem:[%s5063 + $0xa0] sm:$0xff]
    %v5085 = vld [vmem:[%s5063 + $0xa8] sm:$0xff]
    %v5086 = vld [vmem:[%s5063 + $0xb0] sm:$0xff]
    %v5087 = vld [vmem:[%s5063 + $0xb8] sm:$0xff]
    %v5088 = vld [vmem:[%s5063 + $0xc0] sm:$0xff]
    %v5089 = vld [vmem:[%s5063 + $0xc8] sm:$0xff]
    %v5090 = vld [vmem:[%s5063 + $0xd0] sm:$0xff]
    %v5091 = vld [vmem:[%s5063 + $0xd8] sm:$0xff]
    %v5092 = vld [vmem:[%s5063 + $0xe0] sm:$0xff]
    %v5093 = vld [vmem:[%s5063 + $0xe8] sm:$0xff]
    %v5094 = vld [vmem:[%s5063 + $0xf0] sm:$0xff]
    %v5095 = vld [vmem:[%s5063 + $0xf8] sm:$0xff]
    %v5096 = vld [vmem:[%s5063 + $0x100] sm:$0xff]
    %v5097 = vld [vmem:[%s5063 + $0x108] sm:$0xff]
    %v5098 = vld [vmem:[%s5063 + $0x110] sm:$0xff]
    %v5099 = vld [vmem:[%s5063 + $0x118] sm:$0xff]
    %v5100 = vld [vmem:[%s5063 + $0x120] sm:$0xff]
    %v5101 = vld [vmem:[%s5063 + $0x128] sm:$0xff]
    %v5102 = vld [vmem:[%s5063 + $0x130] sm:$0xff]
    %v5103 = vld [vmem:[%s5063 + $0x138] sm:$0xff]
    %v5104 = vld [vmem:[%s5063 + $0x140] sm:$0xff]
    %v5105 = vld [vmem:[%s5063 + $0x148] sm:$0xff]
    %v5106 = vld [vmem:[%s5063 + $0x150] sm:$0xff]
    %v5107 = vld [vmem:[%s5063 + $0x158] sm:$0xff]
    %v5108 = vld [vmem:[%s5063 + $0x160] sm:$0xff]
    %v5109 = vld [vmem:[%s5063 + $0x168] sm:$0xff]
    %v5110 = vld [vmem:[%s5063 + $0x170] sm:$0xff]
    %v5111 = vld [vmem:[%s5063 + $0x178] sm:$0xff]
    %v5112 = vld [vmem:[%s5063 + $0x180] sm:$0xff]
    %v5113 = vld [vmem:[%s5063 + $0x188] sm:$0xff]
    %v5114 = vld [vmem:[%s5063 + $0x190] sm:$0xff]
    %v5115 = vld [vmem:[%s5063 + $0x198] sm:$0xff]
    %v5116 = vld [vmem:[%s5063 + $0x1a0] sm:$0xff]
    %v5117 = vld [vmem:[%s5063 + $0x1a8] sm:$0xff]
    %v5118 = vld [vmem:[%s5063 + $0x1b0] sm:$0xff]
    %v5119 = vld [vmem:[%s5063 + $0x1b8] sm:$0xff]
    %v5120 = vld [vmem:[%s5063 + $0x1c0] sm:$0xff]
    %v5121 = vld [vmem:[%s5063 + $0x1c8] sm:$0xff]
    %v5122 = vld [vmem:[%s5063 + $0x1d0] sm:$0xff]
    %v5123 = vld [vmem:[%s5063 + $0x1d8] sm:$0xff]
    %v5124 = vld [vmem:[%s5063 + $0x1e0] sm:$0xff]
    %v5125 = vld [vmem:[%s5063 + $0x1e8] sm:$0xff]
    %v5126 = vld [vmem:[%s5063 + $0x1f0] sm:$0xff]
    %v5127 = vld [vmem:[%s5063 + $0x1f8] sm:$0xff]
    %v5192 = vunpack.c.l.b16 %v5064
    %v5193 = vunpack.c.h.b16 %v5064
    %v5194 = vunpack.c.l.b16 %v5065
    %v5195 = vunpack.c.h.b16 %v5065
    %v5196 = vunpack.c.l.b16 %v5066
    %v5197 = vunpack.c.h.b16 %v5066
    %v5198 = vunpack.c.l.b16 %v5067
    %v5199 = vunpack.c.h.b16 %v5067
    %v5200 = vunpack.c.l.b16 %v5068
    %v5201 = vunpack.c.h.b16 %v5068
    %v5202 = vunpack.c.l.b16 %v5069
    %v5203 = vunpack.c.h.b16 %v5069
    %v5204 = vunpack.c.l.b16 %v5070
    %v5205 = vunpack.c.h.b16 %v5070
    %v5206 = vunpack.c.l.b16 %v5071
    %v5207 = vunpack.c.h.b16 %v5071
    %v5208 = vunpack.c.l.b16 %v5072
    %v5209 = vunpack.c.h.b16 %v5072
    %v5210 = vunpack.c.l.b16 %v5073
    %v5211 = vunpack.c.h.b16 %v5073
    %v5212 = vunpack.c.l.b16 %v5074
    %v5213 = vunpack.c.h.b16 %v5074
    %v5214 = vunpack.c.l.b16 %v5075
    %v5215 = vunpack.c.h.b16 %v5075
    %v5216 = vunpack.c.l.b16 %v5076
    %v5217 = vunpack.c.h.b16 %v5076
    %v5218 = vunpack.c.l.b16 %v5077
    %v5219 = vunpack.c.h.b16 %v5077
    %v5220 = vunpack.c.l.b16 %v5078
    %v5221 = vunpack.c.h.b16 %v5078
    %v5222 = vunpack.c.l.b16 %v5079
    %v5223 = vunpack.c.h.b16 %v5079
    %v5224 = vunpack.c.l.b16 %v5080
    %v5225 = vunpack.c.h.b16 %v5080
    %v5226 = vunpack.c.l.b16 %v5081
    %v5227 = vunpack.c.h.b16 %v5081
    %v5228 = vunpack.c.l.b16 %v5082
    %v5229 = vunpack.c.h.b16 %v5082
    %v5230 = vunpack.c.l.b16 %v5083
    %v5231 = vunpack.c.h.b16 %v5083
    %v5232 = vunpack.c.l.b16 %v5084
    %v5233 = vunpack.c.h.b16 %v5084
    %v5234 = vunpack.c.l.b16 %v5085
    %v5235 = vunpack.c.h.b16 %v5085
    %v5236 = vunpack.c.l.b16 %v5086
    %v5237 = vunpack.c.h.b16 %v5086
    %v5238 = vunpack.c.l.b16 %v5087
    %v5239 = vunpack.c.h.b16 %v5087
    %v5240 = vunpack.c.l.b16 %v5088
    %v5241 = vunpack.c.h.b16 %v5088
    %v5242 = vunpack.c.l.b16 %v5089
    %v5243 = vunpack.c.h.b16 %v5089
    %v5244 = vunpack.c.l.b16 %v5090
    %v5245 = vunpack.c.h.b16 %v5090
    %v5246 = vunpack.c.l.b16 %v5091
    %v5247 = vunpack.c.h.b16 %v5091
    %v5248 = vunpack.c.l.b16 %v5092
    %v5249 = vunpack.c.h.b16 %v5092
    %v5250 = vunpack.c.l.b16 %v5093
    %v5251 = vunpack.c.h.b16 %v5093
    %v5252 = vunpack.c.l.b16 %v5094
    %v5253 = vunpack.c.h.b16 %v5094
    %v5254 = vunpack.c.l.b16 %v5095
    %v5255 = vunpack.c.h.b16 %v5095
    %v5256 = vunpack.c.l.b16 %v5096
    %v5257 = vunpack.c.h.b16 %v5096
    %v5258 = vunpack.c.l.b16 %v5097
    %v5259 = vunpack.c.h.b16 %v5097
    %v5260 = vunpack.c.l.b16 %v5098
    %v5261 = vunpack.c.h.b16 %v5098
    %v5262 = vunpack.c.l.b16 %v5099
    %v5263 = vunpack.c.h.b16 %v5099
    %v5264 = vunpack.c.l.b16 %v5100
    %v5265 = vunpack.c.h.b16 %v5100
    %v5266 = vunpack.c.l.b16 %v5101
    %v5267 = vunpack.c.h.b16 %v5101
    %v5268 = vunpack.c.l.b16 %v5102
    %v5269 = vunpack.c.h.b16 %v5102
    %v5270 = vunpack.c.l.b16 %v5103
    %v5271 = vunpack.c.h.b16 %v5103
    %v5272 = vunpack.c.l.b16 %v5104
    %v5273 = vunpack.c.h.b16 %v5104
    %v5274 = vunpack.c.l.b16 %v5105
    %v5275 = vunpack.c.h.b16 %v5105
    %v5276 = vunpack.c.l.b16 %v5106
    %v5277 = vunpack.c.h.b16 %v5106
    %v5278 = vunpack.c.l.b16 %v5107
    %v5279 = vunpack.c.h.b16 %v5107
    %v5280 = vunpack.c.l.b16 %v5108
    %v5281 = vunpack.c.h.b16 %v5108
    %v5282 = vunpack.c.l.b16 %v5109
    %v5283 = vunpack.c.h.b16 %v5109
    %v5284 = vunpack.c.l.b16 %v5110
    %v5285 = vunpack.c.h.b16 %v5110
    %v5286 = vunpack.c.l.b16 %v5111
    %v5287 = vunpack.c.h.b16 %v5111
    %v5288 = vunpack.c.l.b16 %v5112
    %v5289 = vunpack.c.h.b16 %v5112
    %v5290 = vunpack.c.l.b16 %v5113
    %v5291 = vunpack.c.h.b16 %v5113
    %v5292 = vunpack.c.l.b16 %v5114
    %v5293 = vunpack.c.h.b16 %v5114
    %v5294 = vunpack.c.l.b16 %v5115
    %v5295 = vunpack.c.h.b16 %v5115
    %v5296 = vunpack.c.l.b16 %v5116
    %v5297 = vunpack.c.h.b16 %v5116
    %v5298 = vunpack.c.l.b16 %v5117
    %v5299 = vunpack.c.h.b16 %v5117
    %v5300 = vunpack.c.l.b16 %v5118
    %v5301 = vunpack.c.h.b16 %v5118
    %v5302 = vunpack.c.l.b16 %v5119
    %v5303 = vunpack.c.h.b16 %v5119
    %v5304 = vunpack.c.l.b16 %v5120
    %v5305 = vunpack.c.h.b16 %v5120
    %v5306 = vunpack.c.l.b16 %v5121
    %v5307 = vunpack.c.h.b16 %v5121
    %v5308 = vunpack.c.l.b16 %v5122
    %v5309 = vunpack.c.h.b16 %v5122
    %v5310 = vunpack.c.l.b16 %v5123
    %v5311 = vunpack.c.h.b16 %v5123
    %v5312 = vunpack.c.l.b16 %v5124
    %v5313 = vunpack.c.h.b16 %v5124
    %v5314 = vunpack.c.l.b16 %v5125
    %v5315 = vunpack.c.h.b16 %v5125
    %v5316 = vunpack.c.l.b16 %v5126
    %v5317 = vunpack.c.h.b16 %v5126
    %v5318 = vunpack.c.l.b16 %v5127
    %v5319 = vunpack.c.h.b16 %v5127
    %v5320 = vpack.c.b16 %v5194, %v5192
    %v5321 = vpack.c.b16 %v5195, %v5193
    %v5322 = vpack.c.b16 %v5198, %v5196
    %v5323 = vpack.c.b16 %v5199, %v5197
    %v5324 = vpack.c.b16 %v5202, %v5200
    %v5325 = vpack.c.b16 %v5203, %v5201
    %v5326 = vpack.c.b16 %v5206, %v5204
    %v5327 = vpack.c.b16 %v5207, %v5205
    %v5328 = vpack.c.b16 %v5210, %v5208
    %v5329 = vpack.c.b16 %v5211, %v5209
    %v5330 = vpack.c.b16 %v5214, %v5212
    %v5331 = vpack.c.b16 %v5215, %v5213
    %v5332 = vpack.c.b16 %v5218, %v5216
    %v5333 = vpack.c.b16 %v5219, %v5217
    %v5334 = vpack.c.b16 %v5222, %v5220
    %v5335 = vpack.c.b16 %v5223, %v5221
    %v5336 = vpack.c.b16 %v5226, %v5224
    %v5337 = vpack.c.b16 %v5227, %v5225
    %v5338 = vpack.c.b16 %v5230, %v5228
    %v5339 = vpack.c.b16 %v5231, %v5229
    %v5340 = vpack.c.b16 %v5234, %v5232
    %v5341 = vpack.c.b16 %v5235, %v5233
    %v5342 = vpack.c.b16 %v5238, %v5236
    %v5343 = vpack.c.b16 %v5239, %v5237
    %v5344 = vpack.c.b16 %v5242, %v5240
    %v5345 = vpack.c.b16 %v5243, %v5241
    %v5346 = vpack.c.b16 %v5246, %v5244
    %v5347 = vpack.c.b16 %v5247, %v5245
    %v5348 = vpack.c.b16 %v5250, %v5248
    %v5349 = vpack.c.b16 %v5251, %v5249
    %v5350 = vpack.c.b16 %v5254, %v5252
    %v5351 = vpack.c.b16 %v5255, %v5253
    %v5352 = vpack.c.b16 %v5258, %v5256
    %v5353 = vpack.c.b16 %v5259, %v5257
    %v5354 = vpack.c.b16 %v5262, %v5260
    %v5355 = vpack.c.b16 %v5263, %v5261
    %v5356 = vpack.c.b16 %v5266, %v5264
    %v5357 = vpack.c.b16 %v5267, %v5265
    %v5358 = vpack.c.b16 %v5270, %v5268
    %v5359 = vpack.c.b16 %v5271, %v5269
    %v5360 = vpack.c.b16 %v5274, %v5272
    %v5361 = vpack.c.b16 %v5275, %v5273
    %v5362 = vpack.c.b16 %v5278, %v5276
    %v5363 = vpack.c.b16 %v5279, %v5277
    %v5364 = vpack.c.b16 %v5282, %v5280
    %v5365 = vpack.c.b16 %v5283, %v5281
    %v5366 = vpack.c.b16 %v5286, %v5284
    %v5367 = vpack.c.b16 %v5287, %v5285
    %v5368 = vpack.c.b16 %v5290, %v5288
    %v5369 = vpack.c.b16 %v5291, %v5289
    %v5370 = vpack.c.b16 %v5294, %v5292
    %v5371 = vpack.c.b16 %v5295, %v5293
    %v5372 = vpack.c.b16 %v5298, %v5296
    %v5373 = vpack.c.b16 %v5299, %v5297
    %v5374 = vpack.c.b16 %v5302, %v5300
    %v5375 = vpack.c.b16 %v5303, %v5301
    %v5376 = vpack.c.b16 %v5306, %v5304
    %v5377 = vpack.c.b16 %v5307, %v5305
    %v5378 = vpack.c.b16 %v5310, %v5308
    %v5379 = vpack.c.b16 %v5311, %v5309
    %v5380 = vpack.c.b16 %v5314, %v5312
    %v5381 = vpack.c.b16 %v5315, %v5313
    %v5382 = vpack.c.b16 %v5318, %v5316
    %v5383 = vpack.c.b16 %v5319, %v5317
    %5448 = vmatprep.subr.bf16.mxu0 %v5321
    %5449 = vmatpush1.bf16.msra.mxu0 %v5320
    %5450 = vmatprep.subr.bf16.mxu0 %v5323
    %5451 = vmatpush1.bf16.msra.mxu0 %v5322
    %5452 = vmatprep.subr.bf16.mxu0 %v5325
    %5453 = vmatpush1.bf16.msra.mxu0 %v5324
    %5454 = vmatprep.subr.bf16.mxu0 %v5327
    %5455 = vmatpush1.bf16.msra.mxu0 %v5326
    %5456 = vmatprep.subr.bf16.mxu0 %v5329
    %5457 = vmatpush1.bf16.msra.mxu0 %v5328
    %5458 = vmatprep.subr.bf16.mxu0 %v5331
    %5459 = vmatpush1.bf16.msra.mxu0 %v5330
    %5460 = vmatprep.subr.bf16.mxu0 %v5333
    %5461 = vmatpush1.bf16.msra.mxu0 %v5332
    %5462 = vmatprep.subr.bf16.mxu0 %v5335
    %5463 = vmatpush1.bf16.msra.mxu0 %v5334
    %5464 = vmatprep.subr.bf16.mxu0 %v5337
    %5465 = vmatpush1.bf16.msra.mxu0 %v5336
    %5466 = vmatprep.subr.bf16.mxu0 %v5339
    %5467 = vmatpush1.bf16.msra.mxu0 %v5338
    %5468 = vmatprep.subr.bf16.mxu0 %v5341
    %5469 = vmatpush1.bf16.msra.mxu0 %v5340
    %5470 = vmatprep.subr.bf16.mxu0 %v5343
    %5471 = vmatpush1.bf16.msra.mxu0 %v5342
    %5472 = vmatprep.subr.bf16.mxu0 %v5345
    %5473 = vmatpush1.bf16.msra.mxu0 %v5344
    %5474 = vmatprep.subr.bf16.mxu0 %v5347
    %5475 = vmatpush1.bf16.msra.mxu0 %v5346
    %5476 = vmatprep.subr.bf16.mxu0 %v5349
    %5477 = vmatpush1.bf16.msra.mxu0 %v5348
    %5478 = vmatprep.subr.bf16.mxu0 %v5351
    %5479 = vmatpush1.bf16.msra.mxu0 %v5350
    %5480 = vmatprep.mubr.bf16.mxu0 %v2588
    %5481 = vmatmul.mubr.bf16.gmra.mrb[0].mxu0 %v2587
    %v5482 = vpop.f32.mrb[0].mxu0
    %v5483 = vadd.f32 0.0, %v5482
    %v5484 = vpop.f32.mrb[0].mxu0
    %v5485 = vadd.f32 0.0, %v5484
    %v5486 = vpop.f32.mrb[0].mxu0
    %v5487 = vadd.f32 0.0, %v5486
    %v5488 = vpop.f32.mrb[0].mxu0
    %v5489 = vadd.f32 0.0, %v5488
    %5490 = vmatprep.mubr.bf16.mxu0 %v2592
    %5491 = vmatmul.mubr.bf16.gmra.mrb[0].mxu0 %v2591
    %v5492 = vpop.f32.mrb[0].mxu0
    %v5493 = vadd.f32 0.0, %v5492
    %v5494 = vpop.f32.mrb[0].mxu0
    %v5495 = vadd.f32 0.0, %v5494
    %v5496 = vpop.f32.mrb[0].mxu0
    %v5497 = vadd.f32 0.0, %v5496
    %v5498 = vpop.f32.mrb[0].mxu0
    %v5499 = vadd.f32 0.0, %v5498
    %5500 = vmatprep.mubr.bf16.mxu0 %v2596
    %5501 = vmatmul.mubr.bf16.gmra.mrb[0].mxu0 %v2595
    %v5502 = vpop.f32.mrb[0].mxu0
    %v5503 = vadd.f32 0.0, %v5502
    %v5504 = vpop.f32.mrb[0].mxu0
    %v5505 = vadd.f32 0.0, %v5504
    %v5506 = vpop.f32.mrb[0].mxu0
    %v5507 = vadd.f32 0.0, %v5506
    %v5508 = vpop.f32.mrb[0].mxu0
    %v5509 = vadd.f32 0.0, %v5508
    %5510 = vmatprep.mubr.bf16.mxu0 %v2600
    %5511 = vmatmul.mubr.bf16.gmra.mrb[0].mxu0 %v2599
    %v5512 = vpop.f32.mrb[0].mxu0
    %v5513 = vadd.f32 0.0, %v5512
    %v5514 = vpop.f32.mrb[0].mxu0
    %v5515 = vadd.f32 0.0, %v5514
    %v5516 = vpop.f32.mrb[0].mxu0
    %v5517 = vadd.f32 0.0, %v5516
    %v5518 = vpop.f32.mrb[0].mxu0
    %v5519 = vadd.f32 0.0, %v5518
    %5520 = vmatprep.mubr.bf16.mxu0 %v2604
    %5521 = vmatmul.mubr.bf16.gmra.mrb[0].mxu0 %v2603
    %v5522 = vpop.f32.mrb[0].mxu0
    %v5523 = vadd.f32 0.0, %v5522
    %v5524 = vpop.f32.mrb[0].mxu0
    %v5525 = vadd.f32 0.0, %v5524
    %v5526 = vpop.f32.mrb[0].mxu0
    %v5527 = vadd.f32 0.0, %v5526
    %v5528 = vpop.f32.mrb[0].mxu0
    %v5529 = vadd.f32 0.0, %v5528
    %5530 = vmatprep.mubr.bf16.mxu0 %v2608
    %5531 = vmatmul.mubr.bf16.gmra.mrb[0].mxu0 %v2607
    %v5532 = vpop.f32.mrb[0].mxu0
    %v5533 = vadd.f32 0.0, %v5532
    %v5534 = vpop.f32.mrb[0].mxu0
    %v5535 = vadd.f32 0.0, %v5534
    %v5536 = vpop.f32.mrb[0].mxu0
    %v5537 = vadd.f32 0.0, %v5536
    %v5538 = vpop.f32.mrb[0].mxu0
    %v5539 = vadd.f32 0.0, %v5538
    %5540 = vmatprep.mubr.bf16.mxu0 %v2612
    %5541 = vmatmul.mubr.bf16.gmra.mrb[0].mxu0 %v2611
    %v5542 = vpop.f32.mrb[0].mxu0
    %v5543 = vadd.f32 0.0, %v5542
    %v5544 = vpop.f32.mrb[0].mxu0
    %v5545 = vadd.f32 0.0, %v5544
    %v5546 = vpop.f32.mrb[0].mxu0
    %v5547 = vadd.f32 0.0, %v5546
    %v5548 = vpop.f32.mrb[0].mxu0
    %v5549 = vadd.f32 0.0, %v5548
    %5550 = vmatprep.mubr.bf16.mxu0 %v2616
    %5551 = vmatmul.mubr.bf16.gmra.mrb[0].mxu0 %v2615
    %v5552 = vpop.f32.mrb[0].mxu0
    %v5553 = vadd.f32 0.0, %v5552
    %v5554 = vpop.f32.mrb[0].mxu0
    %v5555 = vadd.f32 0.0, %v5554
    %v5556 = vpop.f32.mrb[0].mxu0
    %v5557 = vadd.f32 0.0, %v5556
    %v5558 = vpop.f32.mrb[0].mxu0
    %v5559 = vadd.f32 0.0, %v5558
    %5560 = vdwg.mxu0
    %5561 = vmatprep.subr.bf16.mxu0 %v5353
    %5562 = vmatpush1.bf16.msra.mxu0 %v5352
    %5563 = vmatprep.subr.bf16.mxu0 %v5355
    %5564 = vmatpush1.bf16.msra.mxu0 %v5354
    %5565 = vmatprep.subr.bf16.mxu0 %v5357
    %5566 = vmatpush1.bf16.msra.mxu0 %v5356
    %5567 = vmatprep.subr.bf16.mxu0 %v5359
    %5568 = vmatpush1.bf16.msra.mxu0 %v5358
    %5569 = vmatprep.subr.bf16.mxu0 %v5361
    %5570 = vmatpush1.bf16.msra.mxu0 %v5360
    %5571 = vmatprep.subr.bf16.mxu0 %v5363
    %5572 = vmatpush1.bf16.msra.mxu0 %v5362
    %5573 = vmatprep.subr.bf16.mxu0 %v5365
    %5574 = vmatpush1.bf16.msra.mxu0 %v5364
    %5575 = vmatprep.subr.bf16.mxu0 %v5367
    %5576 = vmatpush1.bf16.msra.mxu0 %v5366
    %5577 = vmatprep.subr.bf16.mxu0 %v5369
    %5578 = vmatpush1.bf16.msra.mxu0 %v5368
    %5579 = vmatprep.subr.bf16.mxu0 %v5371
    %5580 = vmatpush1.bf16.msra.mxu0 %v5370
    %5581 = vmatprep.subr.bf16.mxu0 %v5373
    %5582 = vmatpush1.bf16.msra.mxu0 %v5372
    %5583 = vmatprep.subr.bf16.mxu0 %v5375
    %5584 = vmatpush1.bf16.msra.mxu0 %v5374
    %5585 = vmatprep.subr.bf16.mxu0 %v5377
    %5586 = vmatpush1.bf16.msra.mxu0 %v5376
    %5587 = vmatprep.subr.bf16.mxu0 %v5379
    %5588 = vmatpush1.bf16.msra.mxu0 %v5378
    %5589 = vmatprep.subr.bf16.mxu0 %v5381
    %5590 = vmatpush1.bf16.msra.mxu0 %v5380
    %5591 = vmatprep.subr.bf16.mxu0 %v5383
    %5592 = vmatpush1.bf16.msra.mxu0 %v5382
    %5593 = vmatprep.mubr.bf16.mxu0 %v2590
    %5594 = vmatmul.mubr.bf16.gmra.mrb[0].mxu0 %v2589
    %v5595 = vpop.f32.mrb[0].mxu0
    %v5596 = vadd.f32 %v5483, %v5595
    %v5597 = vpop.f32.mrb[0].mxu0
    %v5598 = vadd.f32 %v5485, %v5597
    %v5599 = vpop.f32.mrb[0].mxu0
    %v5600 = vadd.f32 %v5487, %v5599
    %v5601 = vpop.f32.mrb[0].mxu0
    %v5602 = vadd.f32 %v5489, %v5601
    %5603 = vmatprep.mubr.bf16.mxu0 %v2594
    %5604 = vmatmul.mubr.bf16.gmra.mrb[0].mxu0 %v2593
    %v5605 = vpop.f32.mrb[0].mxu0
    %v5606 = vadd.f32 %v5493, %v5605
    %v5607 = vpop.f32.mrb[0].mxu0
    %v5608 = vadd.f32 %v5495, %v5607
    %v5609 = vpop.f32.mrb[0].mxu0
    %v5610 = vadd.f32 %v5497, %v5609
    %v5611 = vpop.f32.mrb[0].mxu0
    %v5612 = vadd.f32 %v5499, %v5611
    %5613 = vmatprep.mubr.bf16.mxu0 %v2598
    %5614 = vmatmul.mubr.bf16.gmra.mrb[0].mxu0 %v2597
    %v5615 = vpop.f32.mrb[0].mxu0
    %v5616 = vadd.f32 %v5503, %v5615
    %v5617 = vpop.f32.mrb[0].mxu0
    %v5618 = vadd.f32 %v5505, %v5617
    %v5619 = vpop.f32.mrb[0].mxu0
    %v5620 = vadd.f32 %v5507, %v5619
    %v5621 = vpop.f32.mrb[0].mxu0
    %v5622 = vadd.f32 %v5509, %v5621
    %5623 = vmatprep.mubr.bf16.mxu0 %v2602
    %5624 = vmatmul.mubr.bf16.gmra.mrb[0].mxu0 %v2601
    %v5625 = vpop.f32.mrb[0].mxu0
    %v5626 = vadd.f32 %v5513, %v5625
    %v5627 = vpop.f32.mrb[0].mxu0
    %v5628 = vadd.f32 %v5515, %v5627
    %v5629 = vpop.f32.mrb[0].mxu0
    %v5630 = vadd.f32 %v5517, %v5629
    %v5631 = vpop.f32.mrb[0].mxu0
    %v5632 = vadd.f32 %v5519, %v5631
    %5633 = vmatprep.mubr.bf16.mxu0 %v2606
    %5634 = vmatmul.mubr.bf16.gmra.mrb[0].mxu0 %v2605
    %v5635 = vpop.f32.mrb[0].mxu0
    %v5636 = vadd.f32 %v5523, %v5635
    %v5637 = vpop.f32.mrb[0].mxu0
    %v5638 = vadd.f32 %v5525, %v5637
    %v5639 = vpop.f32.mrb[0].mxu0
    %v5640 = vadd.f32 %v5527, %v5639
    %v5641 = vpop.f32.mrb[0].mxu0
    %v5642 = vadd.f32 %v5529, %v5641
    %5643 = vmatprep.mubr.bf16.mxu0 %v2610
    %5644 = vmatmul.mubr.bf16.gmra.mrb[0].mxu0 %v2609
    %v5645 = vpop.f32.mrb[0].mxu0
    %v5646 = vadd.f32 %v5533, %v5645
    %v5647 = vpop.f32.mrb[0].mxu0
    %v5648 = vadd.f32 %v5535, %v5647
    %v5649 = vpop.f32.mrb[0].mxu0
    %v5650 = vadd.f32 %v5537, %v5649
    %v5651 = vpop.f32.mrb[0].mxu0
    %v5652 = vadd.f32 %v5539, %v5651
    %5653 = vmatprep.mubr.bf16.mxu0 %v2614
    %5654 = vmatmul.mubr.bf16.gmra.mrb[0].mxu0 %v2613
    %v5655 = vpop.f32.mrb[0].mxu0
    %v5656 = vadd.f32 %v5543, %v5655
    %v5657 = vpop.f32.mrb[0].mxu0
    %v5658 = vadd.f32 %v5545, %v5657
    %v5659 = vpop.f32.mrb[0].mxu0
    %v5660 = vadd.f32 %v5547, %v5659
    %v5661 = vpop.f32.mrb[0].mxu0
    %v5662 = vadd.f32 %v5549, %v5661
    %5663 = vmatprep.mubr.bf16.mxu0 %v2618
    %5664 = vmatmul.mubr.bf16.gmra.mrb[0].mxu0 %v2617
    %v5665 = vpop.f32.mrb[0].mxu0
    %v5666 = vadd.f32 %v5553, %v5665
    %v5667 = vpop.f32.mrb[0].mxu0
    %v5668 = vadd.f32 %v5555, %v5667
    %v5669 = vpop.f32.mrb[0].mxu0
    %v5670 = vadd.f32 %v5557, %v5669
    %v5671 = vpop.f32.mrb[0].mxu0
    %v5672 = vadd.f32 %v5559, %v5671
    %5673 = vdwg.mxu0
    %v5738 = vunpack.c.l.b16 %v4999
    %v5739 = vunpack.c.h.b16 %v4999
    %v5740 = vunpack.c.l.b16 %v5000
    %v5741 = vunpack.c.h.b16 %v5000
    %v5742 = vunpack.c.l.b16 %v5001
    %v5743 = vunpack.c.h.b16 %v5001
    %v5744 = vunpack.c.l.b16 %v5002
    %v5745 = vunpack.c.h.b16 %v5002
    %v5746 = vunpack.c.l.b16 %v5003
    %v5747 = vunpack.c.h.b16 %v5003
    %v5748 = vunpack.c.l.b16 %v5004
    %v5749 = vunpack.c.h.b16 %v5004
    %v5750 = vunpack.c.l.b16 %v5005
    %v5751 = vunpack.c.h.b16 %v5005
    %v5752 = vunpack.c.l.b16 %v5006
    %v5753 = vunpack.c.h.b16 %v5006
    %v5754 = vunpack.c.l.b16 %v5007
    %v5755 = vunpack.c.h.b16 %v5007
    %v5756 = vunpack.c.l.b16 %v5008
    %v5757 = vunpack.c.h.b16 %v5008
    %v5758 = vunpack.c.l.b16 %v5009
    %v5759 = vunpack.c.h.b16 %v5009
    %v5760 = vunpack.c.l.b16 %v5010
    %v5761 = vunpack.c.h.b16 %v5010
    %v5762 = vunpack.c.l.b16 %v5011
    %v5763 = vunpack.c.h.b16 %v5011
    %v5764 = vunpack.c.l.b16 %v5012
    %v5765 = vunpack.c.h.b16 %v5012
    %v5766 = vunpack.c.l.b16 %v5013
    %v5767 = vunpack.c.h.b16 %v5013
    %v5768 = vunpack.c.l.b16 %v5014
    %v5769 = vunpack.c.h.b16 %v5014
    %v5770 = vunpack.c.l.b16 %v5015
    %v5771 = vunpack.c.h.b16 %v5015
    %v5772 = vunpack.c.l.b16 %v5016
    %v5773 = vunpack.c.h.b16 %v5016
    %v5774 = vunpack.c.l.b16 %v5017
    %v5775 = vunpack.c.h.b16 %v5017
    %v5776 = vunpack.c.l.b16 %v5018
    %v5777 = vunpack.c.h.b16 %v5018
    %v5778 = vunpack.c.l.b16 %v5019
    %v5779 = vunpack.c.h.b16 %v5019
    %v5780 = vunpack.c.l.b16 %v5020
    %v5781 = vunpack.c.h.b16 %v5020
    %v5782 = vunpack.c.l.b16 %v5021
    %v5783 = vunpack.c.h.b16 %v5021
    %v5784 = vunpack.c.l.b16 %v5022
    %v5785 = vunpack.c.h.b16 %v5022
    %v5786 = vunpack.c.l.b16 %v5023
    %v5787 = vunpack.c.h.b16 %v5023
    %v5788 = vunpack.c.l.b16 %v5024
    %v5789 = vunpack.c.h.b16 %v5024
    %v5790 = vunpack.c.l.b16 %v5025
    %v5791 = vunpack.c.h.b16 %v5025
    %v5792 = vunpack.c.l.b16 %v5026
    %v5793 = vunpack.c.h.b16 %v5026
    %v5794 = vunpack.c.l.b16 %v5027
    %v5795 = vunpack.c.h.b16 %v5027
    %v5796 = vunpack.c.l.b16 %v5028
    %v5797 = vunpack.c.h.b16 %v5028
    %v5798 = vunpack.c.l.b16 %v5029
    %v5799 = vunpack.c.h.b16 %v5029
    %v5800 = vunpack.c.l.b16 %v5030
    %v5801 = vunpack.c.h.b16 %v5030
    %v5802 = vunpack.c.l.b16 %v5031
    %v5803 = vunpack.c.h.b16 %v5031
    %v5804 = vunpack.c.l.b16 %v5032
    %v5805 = vunpack.c.h.b16 %v5032
    %v5806 = vunpack.c.l.b16 %v5033
    %v5807 = vunpack.c.h.b16 %v5033
    %v5808 = vunpack.c.l.b16 %v5034
    %v5809 = vunpack.c.h.b16 %v5034
    %v5810 = vunpack.c.l.b16 %v5035
    %v5811 = vunpack.c.h.b16 %v5035
    %v5812 = vunpack.c.l.b16 %v5036
    %v5813 = vunpack.c.h.b16 %v5036
    %v5814 = vunpack.c.l.b16 %v5037
    %v5815 = vunpack.c.h.b16 %v5037
    %v5816 = vunpack.c.l.b16 %v5038
    %v5817 = vunpack.c.h.b16 %v5038
    %v5818 = vunpack.c.l.b16 %v5039
    %v5819 = vunpack.c.h.b16 %v5039
    %v5820 = vunpack.c.l.b16 %v5040
    %v5821 = vunpack.c.h.b16 %v5040
    %v5822 = vunpack.c.l.b16 %v5041
    %v5823 = vunpack.c.h.b16 %v5041
    %v5824 = vunpack.c.l.b16 %v5042
    %v5825 = vunpack.c.h.b16 %v5042
    %v5826 = vunpack.c.l.b16 %v5043
    %v5827 = vunpack.c.h.b16 %v5043
    %v5828 = vunpack.c.l.b16 %v5044
    %v5829 = vunpack.c.h.b16 %v5044
    %v5830 = vunpack.c.l.b16 %v5045
    %v5831 = vunpack.c.h.b16 %v5045
    %v5832 = vunpack.c.l.b16 %v5046
    %v5833 = vunpack.c.h.b16 %v5046
    %v5834 = vunpack.c.l.b16 %v5047
    %v5835 = vunpack.c.h.b16 %v5047
    %v5836 = vunpack.c.l.b16 %v5048
    %v5837 = vunpack.c.h.b16 %v5048
    %v5838 = vunpack.c.l.b16 %v5049
    %v5839 = vunpack.c.h.b16 %v5049
    %v5840 = vunpack.c.l.b16 %v5050
    %v5841 = vunpack.c.h.b16 %v5050
    %v5842 = vunpack.c.l.b16 %v5051
    %v5843 = vunpack.c.h.b16 %v5051
    %v5844 = vunpack.c.l.b16 %v5052
    %v5845 = vunpack.c.h.b16 %v5052
    %v5846 = vunpack.c.l.b16 %v5053
    %v5847 = vunpack.c.h.b16 %v5053
    %v5848 = vunpack.c.l.b16 %v5054
    %v5849 = vunpack.c.h.b16 %v5054
    %v5850 = vunpack.c.l.b16 %v5055
    %v5851 = vunpack.c.h.b16 %v5055
    %v5852 = vunpack.c.l.b16 %v5056
    %v5853 = vunpack.c.h.b16 %v5056
    %v5854 = vunpack.c.l.b16 %v5057
    %v5855 = vunpack.c.h.b16 %v5057
    %v5856 = vunpack.c.l.b16 %v5058
    %v5857 = vunpack.c.h.b16 %v5058
    %v5858 = vunpack.c.l.b16 %v5059
    %v5859 = vunpack.c.h.b16 %v5059
    %v5860 = vunpack.c.l.b16 %v5060
    %v5861 = vunpack.c.h.b16 %v5060
    %v5862 = vunpack.c.l.b16 %v5061
    %v5863 = vunpack.c.h.b16 %v5061
    %v5864 = vunpack.c.l.b16 %v5062
    %v5865 = vunpack.c.h.b16 %v5062
    %v5866 = vpack.c.b16 %v5740, %v5738
    %v5867 = vpack.c.b16 %v5741, %v5739
    %v5868 = vpack.c.b16 %v5744, %v5742
    %v5869 = vpack.c.b16 %v5745, %v5743
    %v5870 = vpack.c.b16 %v5748, %v5746
    %v5871 = vpack.c.b16 %v5749, %v5747
    %v5872 = vpack.c.b16 %v5752, %v5750
    %v5873 = vpack.c.b16 %v5753, %v5751
    %v5874 = vpack.c.b16 %v5756, %v5754
    %v5875 = vpack.c.b16 %v5757, %v5755
    %v5876 = vpack.c.b16 %v5760, %v5758
    %v5877 = vpack.c.b16 %v5761, %v5759
    %v5878 = vpack.c.b16 %v5764, %v5762
    %v5879 = vpack.c.b16 %v5765, %v5763
    %v5880 = vpack.c.b16 %v5768, %v5766
    %v5881 = vpack.c.b16 %v5769, %v5767
    %v5882 = vpack.c.b16 %v5772, %v5770
    %v5883 = vpack.c.b16 %v5773, %v5771
    %v5884 = vpack.c.b16 %v5776, %v5774
    %v5885 = vpack.c.b16 %v5777, %v5775
    %v5886 = vpack.c.b16 %v5780, %v5778
    %v5887 = vpack.c.b16 %v5781, %v5779
    %v5888 = vpack.c.b16 %v5784, %v5782
    %v5889 = vpack.c.b16 %v5785, %v5783
    %v5890 = vpack.c.b16 %v5788, %v5786
    %v5891 = vpack.c.b16 %v5789, %v5787
    %v5892 = vpack.c.b16 %v5792, %v5790
    %v5893 = vpack.c.b16 %v5793, %v5791
    %v5894 = vpack.c.b16 %v5796, %v5794
    %v5895 = vpack.c.b16 %v5797, %v5795
    %v5896 = vpack.c.b16 %v5800, %v5798
    %v5897 = vpack.c.b16 %v5801, %v5799
    %v5898 = vpack.c.b16 %v5804, %v5802
    %v5899 = vpack.c.b16 %v5805, %v5803
    %v5900 = vpack.c.b16 %v5808, %v5806
    %v5901 = vpack.c.b16 %v5809, %v5807
    %v5902 = vpack.c.b16 %v5812, %v5810
    %v5903 = vpack.c.b16 %v5813, %v5811
    %v5904 = vpack.c.b16 %v5816, %v5814
    %v5905 = vpack.c.b16 %v5817, %v5815
    %v5906 = vpack.c.b16 %v5820, %v5818
    %v5907 = vpack.c.b16 %v5821, %v5819
    %v5908 = vpack.c.b16 %v5824, %v5822
    %v5909 = vpack.c.b16 %v5825, %v5823
    %v5910 = vpack.c.b16 %v5828, %v5826
    %v5911 = vpack.c.b16 %v5829, %v5827
    %v5912 = vpack.c.b16 %v5832, %v5830
    %v5913 = vpack.c.b16 %v5833, %v5831
    %v5914 = vpack.c.b16 %v5836, %v5834
    %v5915 = vpack.c.b16 %v5837, %v5835
    %v5916 = vpack.c.b16 %v5840, %v5838
    %v5917 = vpack.c.b16 %v5841, %v5839
    %v5918 = vpack.c.b16 %v5844, %v5842
    %v5919 = vpack.c.b16 %v5845, %v5843
    %v5920 = vpack.c.b16 %v5848, %v5846
    %v5921 = vpack.c.b16 %v5849, %v5847
    %v5922 = vpack.c.b16 %v5852, %v5850
    %v5923 = vpack.c.b16 %v5853, %v5851
    %v5924 = vpack.c.b16 %v5856, %v5854
    %v5925 = vpack.c.b16 %v5857, %v5855
    %v5926 = vpack.c.b16 %v5860, %v5858
    %v5927 = vpack.c.b16 %v5861, %v5859
    %v5928 = vpack.c.b16 %v5864, %v5862
    %v5929 = vpack.c.b16 %v5865, %v5863
    %5994 = vmatprep.subr.bf16.mxu0 %v5867
    %5995 = vmatpush1.bf16.msra.mxu0 %v5866
    %5996 = vmatprep.subr.bf16.mxu0 %v5869
    %5997 = vmatpush1.bf16.msra.mxu0 %v5868
    %5998 = vmatprep.subr.bf16.mxu0 %v5871
    %5999 = vmatpush1.bf16.msra.mxu0 %v5870
    %6000 = vmatprep.subr.bf16.mxu0 %v5873
    %6001 = vmatpush1.bf16.msra.mxu0 %v5872
    %6002 = vmatprep.subr.bf16.mxu0 %v5875
    %6003 = vmatpush1.bf16.msra.mxu0 %v5874
    %6004 = vmatprep.subr.bf16.mxu0 %v5877
    %6005 = vmatpush1.bf16.msra.mxu0 %v5876
    %6006 = vmatprep.subr.bf16.mxu0 %v5879
    %6007 = vmatpush1.bf16.msra.mxu0 %v5878
    %6008 = vmatprep.subr.bf16.mxu0 %v5881
    %6009 = vmatpush1.bf16.msra.mxu0 %v5880
    %6010 = vmatprep.subr.bf16.mxu0 %v5883
    %6011 = vmatpush1.bf16.msra.mxu0 %v5882
    %6012 = vmatprep.subr.bf16.mxu0 %v5885
    %6013 = vmatpush1.bf16.msra.mxu0 %v5884
    %6014 = vmatprep.subr.bf16.mxu0 %v5887
    %6015 = vmatpush1.bf16.msra.mxu0 %v5886
    %6016 = vmatprep.subr.bf16.mxu0 %v5889
    %6017 = vmatpush1.bf16.msra.mxu0 %v5888
    %6018 = vmatprep.subr.bf16.mxu0 %v5891
    %6019 = vmatpush1.bf16.msra.mxu0 %v5890
    %6020 = vmatprep.subr.bf16.mxu0 %v5893
    %6021 = vmatpush1.bf16.msra.mxu0 %v5892
    %6022 = vmatprep.subr.bf16.mxu0 %v5895
    %6023 = vmatpush1.bf16.msra.mxu0 %v5894
    %6024 = vmatprep.subr.bf16.mxu0 %v5897
    %6025 = vmatpush1.bf16.msra.mxu0 %v5896
    %6026 = vmatprep.mubr.bf16.mxu0 %v2846
    %6027 = vmatmul.mubr.bf16.gmra.mrb[0].mxu0 %v2845
    %v6028 = vpop.f32.mrb[0].mxu0
    %v6029 = vadd.f32 %v5596, %v6028
    %v6030 = vpop.f32.mrb[0].mxu0
    %v6031 = vadd.f32 %v5598, %v6030
    %v6032 = vpop.f32.mrb[0].mxu0
    %v6033 = vadd.f32 %v5600, %v6032
    %v6034 = vpop.f32.mrb[0].mxu0
    %v6035 = vadd.f32 %v5602, %v6034
    %6036 = vmatprep.mubr.bf16.mxu0 %v2850
    %6037 = vmatmul.mubr.bf16.gmra.mrb[0].mxu0 %v2849
    %v6038 = vpop.f32.mrb[0].mxu0
    %v6039 = vadd.f32 %v5606, %v6038
    %v6040 = vpop.f32.mrb[0].mxu0
    %v6041 = vadd.f32 %v5608, %v6040
    %v6042 = vpop.f32.mrb[0].mxu0
    %v6043 = vadd.f32 %v5610, %v6042
    %v6044 = vpop.f32.mrb[0].mxu0
    %v6045 = vadd.f32 %v5612, %v6044
    %6046 = vmatprep.mubr.bf16.mxu0 %v2854
    %6047 = vmatmul.mubr.bf16.gmra.mrb[0].mxu0 %v2853
    %v6048 = vpop.f32.mrb[0].mxu0
    %v6049 = vadd.f32 %v5616, %v6048
    %v6050 = vpop.f32.mrb[0].mxu0
    %v6051 = vadd.f32 %v5618, %v6050
    %v6052 = vpop.f32.mrb[0].mxu0
    %v6053 = vadd.f32 %v5620, %v6052
    %v6054 = vpop.f32.mrb[0].mxu0
    %v6055 = vadd.f32 %v5622, %v6054
    %6056 = vmatprep.mubr.bf16.mxu0 %v2858
    %6057 = vmatmul.mubr.bf16.gmra.mrb[0].mxu0 %v2857
    %v6058 = vpop.f32.mrb[0].mxu0
    %v6059 = vadd.f32 %v5626, %v6058
    %v6060 = vpop.f32.mrb[0].mxu0
    %v6061 = vadd.f32 %v5628, %v6060
    %v6062 = vpop.f32.mrb[0].mxu0
    %v6063 = vadd.f32 %v5630, %v6062
    %v6064 = vpop.f32.mrb[0].mxu0
    %v6065 = vadd.f32 %v5632, %v6064
    %6066 = vmatprep.mubr.bf16.mxu0 %v2862
    %6067 = vmatmul.mubr.bf16.gmra.mrb[0].mxu0 %v2861
    %v6068 = vpop.f32.mrb[0].mxu0
    %v6069 = vadd.f32 %v5636, %v6068
    %v6070 = vpop.f32.mrb[0].mxu0
    %v6071 = vadd.f32 %v5638, %v6070
    %v6072 = vpop.f32.mrb[0].mxu0
    %v6073 = vadd.f32 %v5640, %v6072
    %v6074 = vpop.f32.mrb[0].mxu0
    %v6075 = vadd.f32 %v5642, %v6074
    %6076 = vmatprep.mubr.bf16.mxu0 %v2866
    %6077 = vmatmul.mubr.bf16.gmra.mrb[0].mxu0 %v2865
    %v6078 = vpop.f32.mrb[0].mxu0
    %v6079 = vadd.f32 %v5646, %v6078
    %v6080 = vpop.f32.mrb[0].mxu0
    %v6081 = vadd.f32 %v5648, %v6080
    %v6082 = vpop.f32.mrb[0].mxu0
    %v6083 = vadd.f32 %v5650, %v6082
    %v6084 = vpop.f32.mrb[0].mxu0
    %v6085 = vadd.f32 %v5652, %v6084
    %6086 = vmatprep.mubr.bf16.mxu0 %v2870
    %6087 = vmatmul.mubr.bf16.gmra.mrb[0].mxu0 %v2869
    %v6088 = vpop.f32.mrb[0].mxu0
    %v6089 = vadd.f32 %v5656, %v6088
    %v6090 = vpop.f32.mrb[0].mxu0
    %v6091 = vadd.f32 %v5658, %v6090
    %v6092 = vpop.f32.mrb[0].mxu0
    %v6093 = vadd.f32 %v5660, %v6092
    %v6094 = vpop.f32.mrb[0].mxu0
    %v6095 = vadd.f32 %v5662, %v6094
    %6096 = vmatprep.mubr.bf16.mxu0 %v2874
    %6097 = vmatmul.mubr.bf16.gmra.mrb[0].mxu0 %v2873
    %v6098 = vpop.f32.mrb[0].mxu0
    %v6099 = vadd.f32 %v5666, %v6098
    %v6100 = vpop.f32.mrb[0].mxu0
    %v6101 = vadd.f32 %v5668, %v6100
    %v6102 = vpop.f32.mrb[0].mxu0
    %v6103 = vadd.f32 %v5670, %v6102
    %v6104 = vpop.f32.mrb[0].mxu0
    %v6105 = vadd.f32 %v5672, %v6104
    %6106 = vdwg.mxu0
    %6107 = vmatprep.subr.bf16.mxu0 %v5899
    %6108 = vmatpush1.bf16.msra.mxu0 %v5898
    %6109 = vmatprep.subr.bf16.mxu0 %v5901
    %6110 = vmatpush1.bf16.msra.mxu0 %v5900
    %6111 = vmatprep.subr.bf16.mxu0 %v5903
    %6112 = vmatpush1.bf16.msra.mxu0 %v5902
    %6113 = vmatprep.subr.bf16.mxu0 %v5905
    %6114 = vmatpush1.bf16.msra.mxu0 %v5904
    %6115 = vmatprep.subr.bf16.mxu0 %v5907
    %6116 = vmatpush1.bf16.msra.mxu0 %v5906
    %6117 = vmatprep.subr.bf16.mxu0 %v5909
    %6118 = vmatpush1.bf16.msra.mxu0 %v5908
    %6119 = vmatprep.subr.bf16.mxu0 %v5911
    %6120 = vmatpush1.bf16.msra.mxu0 %v5910
    %6121 = vmatprep.subr.bf16.mxu0 %v5913
    %6122 = vmatpush1.bf16.msra.mxu0 %v5912
    %6123 = vmatprep.subr.bf16.mxu0 %v5915
    %6124 = vmatpush1.bf16.msra.mxu0 %v5914
    %6125 = vmatprep.subr.bf16.mxu0 %v5917
    %6126 = vmatpush1.bf16.msra.mxu0 %v5916
    %6127 = vmatprep.subr.bf16.mxu0 %v5919
    %6128 = vmatpush1.bf16.msra.mxu0 %v5918
    %6129 = vmatprep.subr.bf16.mxu0 %v5921
    %6130 = vmatpush1.bf16.msra.mxu0 %v5920
    %6131 = vmatprep.subr.bf16.mxu0 %v5923
    %6132 = vmatpush1.bf16.msra.mxu0 %v5922
    %6133 = vmatprep.subr.bf16.mxu0 %v5925
    %6134 = vmatpush1.bf16.msra.mxu0 %v5924
    %6135 = vmatprep.subr.bf16.mxu0 %v5927
    %6136 = vmatpush1.bf16.msra.mxu0 %v5926
    %6137 = vmatprep.subr.bf16.mxu0 %v5929
    %6138 = vmatpush1.bf16.msra.mxu0 %v5928
    %6139 = vmatprep.mubr.bf16.mxu0 %v2848
    %6140 = vmatmul.mubr.bf16.gmra.mrb[0].mxu0 %v2847
    %v6141 = vpop.f32.mrb[0].mxu0
    %v6142 = vadd.f32 %v6029, %v6141
    %v6143 = vpop.f32.mrb[0].mxu0
    %v6144 = vadd.f32 %v6031, %v6143
    %v6145 = vpop.f32.mrb[0].mxu0
    %v6146 = vadd.f32 %v6033, %v6145
    %v6147 = vpop.f32.mrb[0].mxu0
    %v6148 = vadd.f32 %v6035, %v6147
    %6149 = vmatprep.mubr.bf16.mxu0 %v2852
    %6150 = vmatmul.mubr.bf16.gmra.mrb[0].mxu0 %v2851
    %v6151 = vpop.f32.mrb[0].mxu0
    %v6152 = vadd.f32 %v6039, %v6151
    %v6153 = vpop.f32.mrb[0].mxu0
    %v6154 = vadd.f32 %v6041, %v6153
    %v6155 = vpop.f32.mrb[0].mxu0
    %v6156 = vadd.f32 %v6043, %v6155
    %v6157 = vpop.f32.mrb[0].mxu0
    %v6158 = vadd.f32 %v6045, %v6157
    %6159 = vmatprep.mubr.bf16.mxu0 %v2856
    %6160 = vmatmul.mubr.bf16.gmra.mrb[0].mxu0 %v2855
    %v6161 = vpop.f32.mrb[0].mxu0
    %v6162 = vadd.f32 %v6049, %v6161
    %v6163 = vpop.f32.mrb[0].mxu0
    %v6164 = vadd.f32 %v6051, %v6163
    %v6165 = vpop.f32.mrb[0].mxu0
    %v6166 = vadd.f32 %v6053, %v6165
    %v6167 = vpop.f32.mrb[0].mxu0
    %v6168 = vadd.f32 %v6055, %v6167
    %6169 = vmatprep.mubr.bf16.mxu0 %v2860
    %6170 = vmatmul.mubr.bf16.gmra.mrb[0].mxu0 %v2859
    %v6171 = vpop.f32.mrb[0].mxu0
    %v6172 = vadd.f32 %v6059, %v6171
    %v6173 = vpop.f32.mrb[0].mxu0
    %v6174 = vadd.f32 %v6061, %v6173
    %v6175 = vpop.f32.mrb[0].mxu0
    %v6176 = vadd.f32 %v6063, %v6175
    %v6177 = vpop.f32.mrb[0].mxu0
    %v6178 = vadd.f32 %v6065, %v6177
    %6179 = vmatprep.mubr.bf16.mxu0 %v2864
    %6180 = vmatmul.mubr.bf16.gmra.mrb[0].mxu0 %v2863
    %v6181 = vpop.f32.mrb[0].mxu0
    %v6182 = vadd.f32 %v6069, %v6181
    %v6183 = vpop.f32.mrb[0].mxu0
    %v6184 = vadd.f32 %v6071, %v6183
    %v6185 = vpop.f32.mrb[0].mxu0
    %v6186 = vadd.f32 %v6073, %v6185
    %v6187 = vpop.f32.mrb[0].mxu0
    %v6188 = vadd.f32 %v6075, %v6187
    %6189 = vmatprep.mubr.bf16.mxu0 %v2868
    %6190 = vmatmul.mubr.bf16.gmra.mrb[0].mxu0 %v2867
    %v6191 = vpop.f32.mrb[0].mxu0
    %v6192 = vadd.f32 %v6079, %v6191
    %v6193 = vpop.f32.mrb[0].mxu0
    %v6194 = vadd.f32 %v6081, %v6193
    %v6195 = vpop.f32.mrb[0].mxu0
    %v6196 = vadd.f32 %v6083, %v6195
    %v6197 = vpop.f32.mrb[0].mxu0
    %v6198 = vadd.f32 %v6085, %v6197
    %6199 = vmatprep.mubr.bf16.mxu0 %v2872
    %6200 = vmatmul.mubr.bf16.gmra.mrb[0].mxu0 %v2871
    %v6201 = vpop.f32.mrb[0].mxu0
    %v6202 = vadd.f32 %v6089, %v6201
    %v6203 = vpop.f32.mrb[0].mxu0
    %v6204 = vadd.f32 %v6091, %v6203
    %v6205 = vpop.f32.mrb[0].mxu0
    %v6206 = vadd.f32 %v6093, %v6205
    %v6207 = vpop.f32.mrb[0].mxu0
    %v6208 = vadd.f32 %v6095, %v6207
    %6209 = vmatprep.mubr.bf16.mxu0 %v2876
    %6210 = vmatmul.mubr.bf16.gmra.mrb[0].mxu0 %v2875
    %v6211 = vpop.f32.mrb[0].mxu0
    %v6212 = vadd.f32 %v6099, %v6211
    %v6213 = vpop.f32.mrb[0].mxu0
    %v6214 = vadd.f32 %v6101, %v6213
    %v6215 = vpop.f32.mrb[0].mxu0
    %v6216 = vadd.f32 %v6103, %v6215
    %v6217 = vpop.f32.mrb[0].mxu0
    %v6218 = vadd.f32 %v6105, %v6217
    %6219 = vdwg.mxu0
    %s6220 = scalar_lea.vmem %s4, 1024
    %v6221 = vld [vmem:[%s6220] sm:$0xff]
    %v6222 = vld [vmem:[%s6220 + $0x8] sm:$0xff]
    %v6223 = vld [vmem:[%s6220 + $0x10] sm:$0xff]
    %v6224 = vld [vmem:[%s6220 + $0x18] sm:$0xff]
    %v6225 = vld [vmem:[%s6220 + $0x20] sm:$0xff]
    %v6226 = vld [vmem:[%s6220 + $0x28] sm:$0xff]
    %v6227 = vld [vmem:[%s6220 + $0x30] sm:$0xff]
    %v6228 = vld [vmem:[%s6220 + $0x38] sm:$0xff]
    %v6229 = vld [vmem:[%s6220 + $0x40] sm:$0xff]
    %v6230 = vld [vmem:[%s6220 + $0x48] sm:$0xff]
    %v6231 = vld [vmem:[%s6220 + $0x50] sm:$0xff]
    %v6232 = vld [vmem:[%s6220 + $0x58] sm:$0xff]
    %v6233 = vld [vmem:[%s6220 + $0x60] sm:$0xff]
    %v6234 = vld [vmem:[%s6220 + $0x68] sm:$0xff]
    %v6235 = vld [vmem:[%s6220 + $0x70] sm:$0xff]
    %v6236 = vld [vmem:[%s6220 + $0x78] sm:$0xff]
    %v6237 = vld [vmem:[%s6220 + $0x80] sm:$0xff]
    %v6238 = vld [vmem:[%s6220 + $0x88] sm:$0xff]
    %v6239 = vld [vmem:[%s6220 + $0x90] sm:$0xff]
    %v6240 = vld [vmem:[%s6220 + $0x98] sm:$0xff]
    %v6241 = vld [vmem:[%s6220 + $0xa0] sm:$0xff]
    %v6242 = vld [vmem:[%s6220 + $0xa8] sm:$0xff]
    %v6243 = vld [vmem:[%s6220 + $0xb0] sm:$0xff]
    %v6244 = vld [vmem:[%s6220 + $0xb8] sm:$0xff]
    %v6245 = vld [vmem:[%s6220 + $0xc0] sm:$0xff]
    %v6246 = vld [vmem:[%s6220 + $0xc8] sm:$0xff]
    %v6247 = vld [vmem:[%s6220 + $0xd0] sm:$0xff]
    %v6248 = vld [vmem:[%s6220 + $0xd8] sm:$0xff]
    %v6249 = vld [vmem:[%s6220 + $0xe0] sm:$0xff]
    %v6250 = vld [vmem:[%s6220 + $0xe8] sm:$0xff]
    %v6251 = vld [vmem:[%s6220 + $0xf0] sm:$0xff]
    %v6252 = vld [vmem:[%s6220 + $0xf8] sm:$0xff]
    %v6253 = vld [vmem:[%s6220 + $0x100] sm:$0xff]
    %v6254 = vld [vmem:[%s6220 + $0x108] sm:$0xff]
    %v6255 = vld [vmem:[%s6220 + $0x110] sm:$0xff]
    %v6256 = vld [vmem:[%s6220 + $0x118] sm:$0xff]
    %v6257 = vld [vmem:[%s6220 + $0x120] sm:$0xff]
    %v6258 = vld [vmem:[%s6220 + $0x128] sm:$0xff]
    %v6259 = vld [vmem:[%s6220 + $0x130] sm:$0xff]
    %v6260 = vld [vmem:[%s6220 + $0x138] sm:$0xff]
    %v6261 = vld [vmem:[%s6220 + $0x140] sm:$0xff]
    %v6262 = vld [vmem:[%s6220 + $0x148] sm:$0xff]
    %v6263 = vld [vmem:[%s6220 + $0x150] sm:$0xff]
    %v6264 = vld [vmem:[%s6220 + $0x158] sm:$0xff]
    %v6265 = vld [vmem:[%s6220 + $0x160] sm:$0xff]
    %v6266 = vld [vmem:[%s6220 + $0x168] sm:$0xff]
    %v6267 = vld [vmem:[%s6220 + $0x170] sm:$0xff]
    %v6268 = vld [vmem:[%s6220 + $0x178] sm:$0xff]
    %v6269 = vld [vmem:[%s6220 + $0x180] sm:$0xff]
    %v6270 = vld [vmem:[%s6220 + $0x188] sm:$0xff]
    %v6271 = vld [vmem:[%s6220 + $0x190] sm:$0xff]
    %v6272 = vld [vmem:[%s6220 + $0x198] sm:$0xff]
    %v6273 = vld [vmem:[%s6220 + $0x1a0] sm:$0xff]
    %v6274 = vld [vmem:[%s6220 + $0x1a8] sm:$0xff]
    %v6275 = vld [vmem:[%s6220 + $0x1b0] sm:$0xff]
    %v6276 = vld [vmem:[%s6220 + $0x1b8] sm:$0xff]
    %v6277 = vld [vmem:[%s6220 + $0x1c0] sm:$0xff]
    %v6278 = vld [vmem:[%s6220 + $0x1c8] sm:$0xff]
    %v6279 = vld [vmem:[%s6220 + $0x1d0] sm:$0xff]
    %v6280 = vld [vmem:[%s6220 + $0x1d8] sm:$0xff]
    %v6281 = vld [vmem:[%s6220 + $0x1e0] sm:$0xff]
    %v6282 = vld [vmem:[%s6220 + $0x1e8] sm:$0xff]
    %v6283 = vld [vmem:[%s6220 + $0x1f0] sm:$0xff]
    %v6284 = vld [vmem:[%s6220 + $0x1f8] sm:$0xff]
    %v6349 = vunpack.c.l.b16 %v6221
    %v6350 = vunpack.c.h.b16 %v6221
    %v6351 = vunpack.c.l.b16 %v6222
    %v6352 = vunpack.c.h.b16 %v6222
    %v6353 = vunpack.c.l.b16 %v6223
    %v6354 = vunpack.c.h.b16 %v6223
    %v6355 = vunpack.c.l.b16 %v6224
    %v6356 = vunpack.c.h.b16 %v6224
    %v6357 = vunpack.c.l.b16 %v6225
    %v6358 = vunpack.c.h.b16 %v6225
    %v6359 = vunpack.c.l.b16 %v6226
    %v6360 = vunpack.c.h.b16 %v6226
    %v6361 = vunpack.c.l.b16 %v6227
    %v6362 = vunpack.c.h.b16 %v6227
    %v6363 = vunpack.c.l.b16 %v6228
    %v6364 = vunpack.c.h.b16 %v6228
    %v6365 = vunpack.c.l.b16 %v6229
    %v6366 = vunpack.c.h.b16 %v6229
    %v6367 = vunpack.c.l.b16 %v6230
    %v6368 = vunpack.c.h.b16 %v6230
    %v6369 = vunpack.c.l.b16 %v6231
    %v6370 = vunpack.c.h.b16 %v6231
    %v6371 = vunpack.c.l.b16 %v6232
    %v6372 = vunpack.c.h.b16 %v6232
    %v6373 = vunpack.c.l.b16 %v6233
    %v6374 = vunpack.c.h.b16 %v6233
    %v6375 = vunpack.c.l.b16 %v6234
    %v6376 = vunpack.c.h.b16 %v6234
    %v6377 = vunpack.c.l.b16 %v6235
    %v6378 = vunpack.c.h.b16 %v6235
    %v6379 = vunpack.c.l.b16 %v6236
    %v6380 = vunpack.c.h.b16 %v6236
    %v6381 = vunpack.c.l.b16 %v6237
    %v6382 = vunpack.c.h.b16 %v6237
    %v6383 = vunpack.c.l.b16 %v6238
    %v6384 = vunpack.c.h.b16 %v6238
    %v6385 = vunpack.c.l.b16 %v6239
    %v6386 = vunpack.c.h.b16 %v6239
    %v6387 = vunpack.c.l.b16 %v6240
    %v6388 = vunpack.c.h.b16 %v6240
    %v6389 = vunpack.c.l.b16 %v6241
    %v6390 = vunpack.c.h.b16 %v6241
    %v6391 = vunpack.c.l.b16 %v6242
    %v6392 = vunpack.c.h.b16 %v6242
    %v6393 = vunpack.c.l.b16 %v6243
    %v6394 = vunpack.c.h.b16 %v6243
    %v6395 = vunpack.c.l.b16 %v6244
    %v6396 = vunpack.c.h.b16 %v6244
    %v6397 = vunpack.c.l.b16 %v6245
    %v6398 = vunpack.c.h.b16 %v6245
    %v6399 = vunpack.c.l.b16 %v6246
    %v6400 = vunpack.c.h.b16 %v6246
    %v6401 = vunpack.c.l.b16 %v6247
    %v6402 = vunpack.c.h.b16 %v6247
    %v6403 = vunpack.c.l.b16 %v6248
    %v6404 = vunpack.c.h.b16 %v6248
    %v6405 = vunpack.c.l.b16 %v6249
    %v6406 = vunpack.c.h.b16 %v6249
    %v6407 = vunpack.c.l.b16 %v6250
    %v6408 = vunpack.c.h.b16 %v6250
    %v6409 = vunpack.c.l.b16 %v6251
    %v6410 = vunpack.c.h.b16 %v6251
    %v6411 = vunpack.c.l.b16 %v6252
    %v6412 = vunpack.c.h.b16 %v6252
    %v6413 = vunpack.c.l.b16 %v6253
    %v6414 = vunpack.c.h.b16 %v6253
    %v6415 = vunpack.c.l.b16 %v6254
    %v6416 = vunpack.c.h.b16 %v6254
    %v6417 = vunpack.c.l.b16 %v6255
    %v6418 = vunpack.c.h.b16 %v6255
    %v6419 = vunpack.c.l.b16 %v6256
    %v6420 = vunpack.c.h.b16 %v6256
    %v6421 = vunpack.c.l.b16 %v6257
    %v6422 = vunpack.c.h.b16 %v6257
    %v6423 = vunpack.c.l.b16 %v6258
    %v6424 = vunpack.c.h.b16 %v6258
    %v6425 = vunpack.c.l.b16 %v6259
    %v6426 = vunpack.c.h.b16 %v6259
    %v6427 = vunpack.c.l.b16 %v6260
    %v6428 = vunpack.c.h.b16 %v6260
    %v6429 = vunpack.c.l.b16 %v6261
    %v6430 = vunpack.c.h.b16 %v6261
    %v6431 = vunpack.c.l.b16 %v6262
    %v6432 = vunpack.c.h.b16 %v6262
    %v6433 = vunpack.c.l.b16 %v6263
    %v6434 = vunpack.c.h.b16 %v6263
    %v6435 = vunpack.c.l.b16 %v6264
    %v6436 = vunpack.c.h.b16 %v6264
    %v6437 = vunpack.c.l.b16 %v6265
    %v6438 = vunpack.c.h.b16 %v6265
    %v6439 = vunpack.c.l.b16 %v6266
    %v6440 = vunpack.c.h.b16 %v6266
    %v6441 = vunpack.c.l.b16 %v6267
    %v6442 = vunpack.c.h.b16 %v6267
    %v6443 = vunpack.c.l.b16 %v6268
    %v6444 = vunpack.c.h.b16 %v6268
    %v6445 = vunpack.c.l.b16 %v6269
    %v6446 = vunpack.c.h.b16 %v6269
    %v6447 = vunpack.c.l.b16 %v6270
    %v6448 = vunpack.c.h.b16 %v6270
    %v6449 = vunpack.c.l.b16 %v6271
    %v6450 = vunpack.c.h.b16 %v6271
    %v6451 = vunpack.c.l.b16 %v6272
    %v6452 = vunpack.c.h.b16 %v6272
    %v6453 = vunpack.c.l.b16 %v6273
    %v6454 = vunpack.c.h.b16 %v6273
    %v6455 = vunpack.c.l.b16 %v6274
    %v6456 = vunpack.c.h.b16 %v6274
    %v6457 = vunpack.c.l.b16 %v6275
    %v6458 = vunpack.c.h.b16 %v6275
    %v6459 = vunpack.c.l.b16 %v6276
    %v6460 = vunpack.c.h.b16 %v6276
    %v6461 = vunpack.c.l.b16 %v6277
    %v6462 = vunpack.c.h.b16 %v6277
    %v6463 = vunpack.c.l.b16 %v6278
    %v6464 = vunpack.c.h.b16 %v6278
    %v6465 = vunpack.c.l.b16 %v6279
    %v6466 = vunpack.c.h.b16 %v6279
    %v6467 = vunpack.c.l.b16 %v6280
    %v6468 = vunpack.c.h.b16 %v6280
    %v6469 = vunpack.c.l.b16 %v6281
    %v6470 = vunpack.c.h.b16 %v6281
    %v6471 = vunpack.c.l.b16 %v6282
    %v6472 = vunpack.c.h.b16 %v6282
    %v6473 = vunpack.c.l.b16 %v6283
    %v6474 = vunpack.c.h.b16 %v6283
    %v6475 = vunpack.c.l.b16 %v6284
    %v6476 = vunpack.c.h.b16 %v6284
    %v6477 = vpack.c.b16 %v6351, %v6349
    %v6478 = vpack.c.b16 %v6352, %v6350
    %v6479 = vpack.c.b16 %v6355, %v6353
    %v6480 = vpack.c.b16 %v6356, %v6354
    %v6481 = vpack.c.b16 %v6359, %v6357
    %v6482 = vpack.c.b16 %v6360, %v6358
    %v6483 = vpack.c.b16 %v6363, %v6361
    %v6484 = vpack.c.b16 %v6364, %v6362
    %v6485 = vpack.c.b16 %v6367, %v6365
    %v6486 = vpack.c.b16 %v6368, %v6366
    %v6487 = vpack.c.b16 %v6371, %v6369
    %v6488 = vpack.c.b16 %v6372, %v6370
    %v6489 = vpack.c.b16 %v6375, %v6373
    %v6490 = vpack.c.b16 %v6376, %v6374
    %v6491 = vpack.c.b16 %v6379, %v6377
    %v6492 = vpack.c.b16 %v6380, %v6378
    %v6493 = vpack.c.b16 %v6383, %v6381
    %v6494 = vpack.c.b16 %v6384, %v6382
    %v6495 = vpack.c.b16 %v6387, %v6385
    %v6496 = vpack.c.b16 %v6388, %v6386
    %v6497 = vpack.c.b16 %v6391, %v6389
    %v6498 = vpack.c.b16 %v6392, %v6390
    %v6499 = vpack.c.b16 %v6395, %v6393
    %v6500 = vpack.c.b16 %v6396, %v6394
    %v6501 = vpack.c.b16 %v6399, %v6397
    %v6502 = vpack.c.b16 %v6400, %v6398
    %v6503 = vpack.c.b16 %v6403, %v6401
    %v6504 = vpack.c.b16 %v6404, %v6402
    %v6505 = vpack.c.b16 %v6407, %v6405
    %v6506 = vpack.c.b16 %v6408, %v6406
    %v6507 = vpack.c.b16 %v6411, %v6409
    %v6508 = vpack.c.b16 %v6412, %v6410
    %v6509 = vpack.c.b16 %v6415, %v6413
    %v6510 = vpack.c.b16 %v6416, %v6414
    %v6511 = vpack.c.b16 %v6419, %v6417
    %v6512 = vpack.c.b16 %v6420, %v6418
    %v6513 = vpack.c.b16 %v6423, %v6421
    %v6514 = vpack.c.b16 %v6424, %v6422
    %v6515 = vpack.c.b16 %v6427, %v6425
    %v6516 = vpack.c.b16 %v6428, %v6426
    %v6517 = vpack.c.b16 %v6431, %v6429
    %v6518 = vpack.c.b16 %v6432, %v6430
    %v6519 = vpack.c.b16 %v6435, %v6433
    %v6520 = vpack.c.b16 %v6436, %v6434
    %v6521 = vpack.c.b16 %v6439, %v6437
    %v6522 = vpack.c.b16 %v6440, %v6438
    %v6523 = vpack.c.b16 %v6443, %v6441
    %v6524 = vpack.c.b16 %v6444, %v6442
    %v6525 = vpack.c.b16 %v6447, %v6445
    %v6526 = vpack.c.b16 %v6448, %v6446
    %v6527 = vpack.c.b16 %v6451, %v6449
    %v6528 = vpack.c.b16 %v6452, %v6450
    %v6529 = vpack.c.b16 %v6455, %v6453
    %v6530 = vpack.c.b16 %v6456, %v6454
    %v6531 = vpack.c.b16 %v6459, %v6457
    %v6532 = vpack.c.b16 %v6460, %v6458
    %v6533 = vpack.c.b16 %v6463, %v6461
    %v6534 = vpack.c.b16 %v6464, %v6462
    %v6535 = vpack.c.b16 %v6467, %v6465
    %v6536 = vpack.c.b16 %v6468, %v6466
    %v6537 = vpack.c.b16 %v6471, %v6469
    %v6538 = vpack.c.b16 %v6472, %v6470
    %v6539 = vpack.c.b16 %v6475, %v6473
    %v6540 = vpack.c.b16 %v6476, %v6474
    %6605 = vmatprep.subr.bf16.mxu0 %v6478
    %6606 = vmatpush1.bf16.msra.mxu0 %v6477
    %6607 = vmatprep.subr.bf16.mxu0 %v6480
    %6608 = vmatpush1.bf16.msra.mxu0 %v6479
    %6609 = vmatprep.subr.bf16.mxu0 %v6482
    %6610 = vmatpush1.bf16.msra.mxu0 %v6481
    %6611 = vmatprep.subr.bf16.mxu0 %v6484
    %6612 = vmatpush1.bf16.msra.mxu0 %v6483
    %6613 = vmatprep.subr.bf16.mxu0 %v6486
    %6614 = vmatpush1.bf16.msra.mxu0 %v6485
    %6615 = vmatprep.subr.bf16.mxu0 %v6488
    %6616 = vmatpush1.bf16.msra.mxu0 %v6487
    %6617 = vmatprep.subr.bf16.mxu0 %v6490
    %6618 = vmatpush1.bf16.msra.mxu0 %v6489
    %6619 = vmatprep.subr.bf16.mxu0 %v6492
    %6620 = vmatpush1.bf16.msra.mxu0 %v6491
    %6621 = vmatprep.subr.bf16.mxu0 %v6494
    %6622 = vmatpush1.bf16.msra.mxu0 %v6493
    %6623 = vmatprep.subr.bf16.mxu0 %v6496
    %6624 = vmatpush1.bf16.msra.mxu0 %v6495
    %6625 = vmatprep.subr.bf16.mxu0 %v6498
    %6626 = vmatpush1.bf16.msra.mxu0 %v6497
    %6627 = vmatprep.subr.bf16.mxu0 %v6500
    %6628 = vmatpush1.bf16.msra.mxu0 %v6499
    %6629 = vmatprep.subr.bf16.mxu0 %v6502
    %6630 = vmatpush1.bf16.msra.mxu0 %v6501
    %6631 = vmatprep.subr.bf16.mxu0 %v6504
    %6632 = vmatpush1.bf16.msra.mxu0 %v6503
    %6633 = vmatprep.subr.bf16.mxu0 %v6506
    %6634 = vmatpush1.bf16.msra.mxu0 %v6505
    %6635 = vmatprep.subr.bf16.mxu0 %v6508
    %6636 = vmatpush1.bf16.msra.mxu0 %v6507
    %6637 = vmatprep.mubr.bf16.mxu0 %v3104
    %6638 = vmatmul.mubr.bf16.gmra.mrb[0].mxu0 %v3103
    %v6639 = vpop.f32.mrb[0].mxu0
    %v6640 = vadd.f32 0.0, %v6639
    %v6641 = vpop.f32.mrb[0].mxu0
    %v6642 = vadd.f32 0.0, %v6641
    %v6643 = vpop.f32.mrb[0].mxu0
    %v6644 = vadd.f32 0.0, %v6643
    %v6645 = vpop.f32.mrb[0].mxu0
    %v6646 = vadd.f32 0.0, %v6645
    %6647 = vmatprep.mubr.bf16.mxu0 %v3108
    %6648 = vmatmul.mubr.bf16.gmra.mrb[0].mxu0 %v3107
    %v6649 = vpop.f32.mrb[0].mxu0
    %v6650 = vadd.f32 0.0, %v6649
    %v6651 = vpop.f32.mrb[0].mxu0
    %v6652 = vadd.f32 0.0, %v6651
    %v6653 = vpop.f32.mrb[0].mxu0
    %v6654 = vadd.f32 0.0, %v6653
    %v6655 = vpop.f32.mrb[0].mxu0
    %v6656 = vadd.f32 0.0, %v6655
    %6657 = vmatprep.mubr.bf16.mxu0 %v3112
    %6658 = vmatmul.mubr.bf16.gmra.mrb[0].mxu0 %v3111
    %v6659 = vpop.f32.mrb[0].mxu0
    %v6660 = vadd.f32 0.0, %v6659
    %v6661 = vpop.f32.mrb[0].mxu0
    %v6662 = vadd.f32 0.0, %v6661
    %v6663 = vpop.f32.mrb[0].mxu0
    %v6664 = vadd.f32 0.0, %v6663
    %v6665 = vpop.f32.mrb[0].mxu0
    %v6666 = vadd.f32 0.0, %v6665
    %6667 = vmatprep.mubr.bf16.mxu0 %v3116
    %6668 = vmatmul.mubr.bf16.gmra.mrb[0].mxu0 %v3115
    %v6669 = vpop.f32.mrb[0].mxu0
    %v6670 = vadd.f32 0.0, %v6669
    %v6671 = vpop.f32.mrb[0].mxu0
    %v6672 = vadd.f32 0.0, %v6671
    %v6673 = vpop.f32.mrb[0].mxu0
    %v6674 = vadd.f32 0.0, %v6673
    %v6675 = vpop.f32.mrb[0].mxu0
    %v6676 = vadd.f32 0.0, %v6675
    %6677 = vmatprep.mubr.bf16.mxu0 %v3120
    %6678 = vmatmul.mubr.bf16.gmra.mrb[0].mxu0 %v3119
    %v6679 = vpop.f32.mrb[0].mxu0
    %v6680 = vadd.f32 0.0, %v6679
    %v6681 = vpop.f32.mrb[0].mxu0
    %v6682 = vadd.f32 0.0, %v6681
    %v6683 = vpop.f32.mrb[0].mxu0
    %v6684 = vadd.f32 0.0, %v6683
    %v6685 = vpop.f32.mrb[0].mxu0
    %v6686 = vadd.f32 0.0, %v6685
    %6687 = vmatprep.mubr.bf16.mxu0 %v3124
    %6688 = vmatmul.mubr.bf16.gmra.mrb[0].mxu0 %v3123
    %v6689 = vpop.f32.mrb[0].mxu0
    %v6690 = vadd.f32 0.0, %v6689
    %v6691 = vpop.f32.mrb[0].mxu0
    %v6692 = vadd.f32 0.0, %v6691
    %v6693 = vpop.f32.mrb[0].mxu0
    %v6694 = vadd.f32 0.0, %v6693
    %v6695 = vpop.f32.mrb[0].mxu0
    %v6696 = vadd.f32 0.0, %v6695
    %6697 = vmatprep.mubr.bf16.mxu0 %v3128
    %6698 = vmatmul.mubr.bf16.gmra.mrb[0].mxu0 %v3127
    %v6699 = vpop.f32.mrb[0].mxu0
    %v6700 = vadd.f32 0.0, %v6699
    %v6701 = vpop.f32.mrb[0].mxu0
    %v6702 = vadd.f32 0.0, %v6701
    %v6703 = vpop.f32.mrb[0].mxu0
    %v6704 = vadd.f32 0.0, %v6703
    %v6705 = vpop.f32.mrb[0].mxu0
    %v6706 = vadd.f32 0.0, %v6705
    %6707 = vmatprep.mubr.bf16.mxu0 %v3132
    %6708 = vmatmul.mubr.bf16.gmra.mrb[0].mxu0 %v3131
    %v6709 = vpop.f32.mrb[0].mxu0
    %v6710 = vadd.f32 0.0, %v6709
    %v6711 = vpop.f32.mrb[0].mxu0
    %v6712 = vadd.f32 0.0, %v6711
    %v6713 = vpop.f32.mrb[0].mxu0
    %v6714 = vadd.f32 0.0, %v6713
    %v6715 = vpop.f32.mrb[0].mxu0
    %v6716 = vadd.f32 0.0, %v6715
    %6717 = vdwg.mxu0
    %6718 = vmatprep.subr.bf16.mxu0 %v6510
    %6719 = vmatpush1.bf16.msra.mxu0 %v6509
    %6720 = vmatprep.subr.bf16.mxu0 %v6512
    %6721 = vmatpush1.bf16.msra.mxu0 %v6511
    %6722 = vmatprep.subr.bf16.mxu0 %v6514
    %6723 = vmatpush1.bf16.msra.mxu0 %v6513
    %6724 = vmatprep.subr.bf16.mxu0 %v6516
    %6725 = vmatpush1.bf16.msra.mxu0 %v6515
    %6726 = vmatprep.subr.bf16.mxu0 %v6518
    %6727 = vmatpush1.bf16.msra.mxu0 %v6517
    %6728 = vmatprep.subr.bf16.mxu0 %v6520
    %6729 = vmatpush1.bf16.msra.mxu0 %v6519
    %6730 = vmatprep.subr.bf16.mxu0 %v6522
    %6731 = vmatpush1.bf16.msra.mxu0 %v6521
    %6732 = vmatprep.subr.bf16.mxu0 %v6524
    %6733 = vmatpush1.bf16.msra.mxu0 %v6523
    %6734 = vmatprep.subr.bf16.mxu0 %v6526
    %6735 = vmatpush1.bf16.msra.mxu0 %v6525
    %6736 = vmatprep.subr.bf16.mxu0 %v6528
    %6737 = vmatpush1.bf16.msra.mxu0 %v6527
    %6738 = vmatprep.subr.bf16.mxu0 %v6530
    %6739 = vmatpush1.bf16.msra.mxu0 %v6529
    %6740 = vmatprep.subr.bf16.mxu0 %v6532
    %6741 = vmatpush1.bf16.msra.mxu0 %v6531
    %6742 = vmatprep.subr.bf16.mxu0 %v6534
    %6743 = vmatpush1.bf16.msra.mxu0 %v6533
    %6744 = vmatprep.subr.bf16.mxu0 %v6536
    %6745 = vmatpush1.bf16.msra.mxu0 %v6535
    %6746 = vmatprep.subr.bf16.mxu0 %v6538
    %6747 = vmatpush1.bf16.msra.mxu0 %v6537
    %6748 = vmatprep.subr.bf16.mxu0 %v6540
    %6749 = vmatpush1.bf16.msra.mxu0 %v6539
    %6750 = vmatprep.mubr.bf16.mxu0 %v3106
    %6751 = vmatmul.mubr.bf16.gmra.mrb[0].mxu0 %v3105
    %v6752 = vpop.f32.mrb[0].mxu0
    %v6753 = vadd.f32 %v6640, %v6752
    %v6754 = vpop.f32.mrb[0].mxu0
    %v6755 = vadd.f32 %v6642, %v6754
    %v6756 = vpop.f32.mrb[0].mxu0
    %v6757 = vadd.f32 %v6644, %v6756
    %v6758 = vpop.f32.mrb[0].mxu0
    %v6759 = vadd.f32 %v6646, %v6758
    %6760 = vmatprep.mubr.bf16.mxu0 %v3110
    %6761 = vmatmul.mubr.bf16.gmra.mrb[0].mxu0 %v3109
    %v6762 = vpop.f32.mrb[0].mxu0
    %v6763 = vadd.f32 %v6650, %v6762
    %v6764 = vpop.f32.mrb[0].mxu0
    %v6765 = vadd.f32 %v6652, %v6764
    %v6766 = vpop.f32.mrb[0].mxu0
    %v6767 = vadd.f32 %v6654, %v6766
    %v6768 = vpop.f32.mrb[0].mxu0
    %v6769 = vadd.f32 %v6656, %v6768
    %6770 = vmatprep.mubr.bf16.mxu0 %v3114
    %6771 = vmatmul.mubr.bf16.gmra.mrb[0].mxu0 %v3113
    %v6772 = vpop.f32.mrb[0].mxu0
    %v6773 = vadd.f32 %v6660, %v6772
    %v6774 = vpop.f32.mrb[0].mxu0
    %v6775 = vadd.f32 %v6662, %v6774
    %v6776 = vpop.f32.mrb[0].mxu0
    %v6777 = vadd.f32 %v6664, %v6776
    %v6778 = vpop.f32.mrb[0].mxu0
    %v6779 = vadd.f32 %v6666, %v6778
    %6780 = vmatprep.mubr.bf16.mxu0 %v3118
    %6781 = vmatmul.mubr.bf16.gmra.mrb[0].mxu0 %v3117
    %v6782 = vpop.f32.mrb[0].mxu0
    %v6783 = vadd.f32 %v6670, %v6782
    %v6784 = vpop.f32.mrb[0].mxu0
    %v6785 = vadd.f32 %v6672, %v6784
    %v6786 = vpop.f32.mrb[0].mxu0
    %v6787 = vadd.f32 %v6674, %v6786
    %v6788 = vpop.f32.mrb[0].mxu0
    %v6789 = vadd.f32 %v6676, %v6788
    %6790 = vmatprep.mubr.bf16.mxu0 %v3122
    %6791 = vmatmul.mubr.bf16.gmra.mrb[0].mxu0 %v3121
    %v6792 = vpop.f32.mrb[0].mxu0
    %v6793 = vadd.f32 %v6680, %v6792
    %v6794 = vpop.f32.mrb[0].mxu0
    %v6795 = vadd.f32 %v6682, %v6794
    %v6796 = vpop.f32.mrb[0].mxu0
    %v6797 = vadd.f32 %v6684, %v6796
    %v6798 = vpop.f32.mrb[0].mxu0
    %v6799 = vadd.f32 %v6686, %v6798
    %6800 = vmatprep.mubr.bf16.mxu0 %v3126
    %6801 = vmatmul.mubr.bf16.gmra.mrb[0].mxu0 %v3125
    %v6802 = vpop.f32.mrb[0].mxu0
    %v6803 = vadd.f32 %v6690, %v6802
    %v6804 = vpop.f32.mrb[0].mxu0
    %v6805 = vadd.f32 %v6692, %v6804
    %v6806 = vpop.f32.mrb[0].mxu0
    %v6807 = vadd.f32 %v6694, %v6806
    %v6808 = vpop.f32.mrb[0].mxu0
    %v6809 = vadd.f32 %v6696, %v6808
    %6810 = vmatprep.mubr.bf16.mxu0 %v3130
    %6811 = vmatmul.mubr.bf16.gmra.mrb[0].mxu0 %v3129
    %v6812 = vpop.f32.mrb[0].mxu0
    %v6813 = vadd.f32 %v6700, %v6812
    %v6814 = vpop.f32.mrb[0].mxu0
    %v6815 = vadd.f32 %v6702, %v6814
    %v6816 = vpop.f32.mrb[0].mxu0
    %v6817 = vadd.f32 %v6704, %v6816
    %v6818 = vpop.f32.mrb[0].mxu0
    %v6819 = vadd.f32 %v6706, %v6818
    %6820 = vmatprep.mubr.bf16.mxu0 %v3134
    %6821 = vmatmul.mubr.bf16.gmra.mrb[0].mxu0 %v3133
    %v6822 = vpop.f32.mrb[0].mxu0
    %v6823 = vadd.f32 %v6710, %v6822
    %v6824 = vpop.f32.mrb[0].mxu0
    %v6825 = vadd.f32 %v6712, %v6824
    %v6826 = vpop.f32.mrb[0].mxu0
    %v6827 = vadd.f32 %v6714, %v6826
    %v6828 = vpop.f32.mrb[0].mxu0
    %v6829 = vadd.f32 %v6716, %v6828
    %6830 = vdwg.mxu0
    %v6831 = vadd.f32 %v6142, %v6753
    %v6832 = vadd.f32 %v6144, %v6755
    %v6833 = vadd.f32 %v6146, %v6757
    %v6834 = vadd.f32 %v6148, %v6759
    %v6835 = vadd.f32 %v6152, %v6763
    %v6836 = vadd.f32 %v6154, %v6765
    %v6837 = vadd.f32 %v6156, %v6767
    %v6838 = vadd.f32 %v6158, %v6769
    %v6839 = vadd.f32 %v6162, %v6773
    %v6840 = vadd.f32 %v6164, %v6775
    %v6841 = vadd.f32 %v6166, %v6777
    %v6842 = vadd.f32 %v6168, %v6779
    %v6843 = vadd.f32 %v6172, %v6783
    %v6844 = vadd.f32 %v6174, %v6785
    %v6845 = vadd.f32 %v6176, %v6787
    %v6846 = vadd.f32 %v6178, %v6789
    %v6847 = vadd.f32 %v6182, %v6793
    %v6848 = vadd.f32 %v6184, %v6795
    %v6849 = vadd.f32 %v6186, %v6797
    %v6850 = vadd.f32 %v6188, %v6799
    %v6851 = vadd.f32 %v6192, %v6803
    %v6852 = vadd.f32 %v6194, %v6805
    %v6853 = vadd.f32 %v6196, %v6807
    %v6854 = vadd.f32 %v6198, %v6809
    %v6855 = vadd.f32 %v6202, %v6813
    %v6856 = vadd.f32 %v6204, %v6815
    %v6857 = vadd.f32 %v6206, %v6817
    %v6858 = vadd.f32 %v6208, %v6819
    %v6859 = vadd.f32 %v6212, %v6823
    %v6860 = vadd.f32 %v6214, %v6825
    %v6861 = vadd.f32 %v6216, %v6827
    %v6862 = vadd.f32 %v6218, %v6829
    %v6863 = vmax.f32 %v4967, %v6831
    %v6864 = vmax.f32 %v4968, %v6832
    %v6865 = vmax.f32 %v4969, %v6833
    %v6866 = vmax.f32 %v4970, %v6834
    %v6867 = vmax.f32 %v4971, %v6835
    %v6868 = vmax.f32 %v4972, %v6836
    %v6869 = vmax.f32 %v4973, %v6837
    %v6870 = vmax.f32 %v4974, %v6838
    %v6871 = vmax.f32 %v4975, %v6839
    %v6872 = vmax.f32 %v4976, %v6840
    %v6873 = vmax.f32 %v4977, %v6841
    %v6874 = vmax.f32 %v4978, %v6842
    %v6875 = vmax.f32 %v4979, %v6843
    %v6876 = vmax.f32 %v4980, %v6844
    %v6877 = vmax.f32 %v4981, %v6845
    %v6878 = vmax.f32 %v4982, %v6846
    %v6879 = vmax.f32 %v4983, %v6847
    %v6880 = vmax.f32 %v4984, %v6848
    %v6881 = vmax.f32 %v4985, %v6849
    %v6882 = vmax.f32 %v4986, %v6850
    %v6883 = vmax.f32 %v4987, %v6851
    %v6884 = vmax.f32 %v4988, %v6852
    %v6885 = vmax.f32 %v4989, %v6853
    %v6886 = vmax.f32 %v4990, %v6854
    %v6887 = vmax.f32 %v4991, %v6855
    %v6888 = vmax.f32 %v4992, %v6856
    %v6889 = vmax.f32 %v4993, %v6857
    %v6890 = vmax.f32 %v4994, %v6858
    %v6891 = vmax.f32 %v4995, %v6859
    %v6892 = vmax.f32 %v4996, %v6860
    %v6893 = vmax.f32 %v4997, %v6861
    %v6894 = vmax.f32 %v4998, %v6862
    %v6895 = vld [vmem:[%s5] sm:$0x3]
    %v6897 = vlaneseq
    %v6898 = vshrl.u32 %v6897, 7
    %v6899 = vsub.s32 0, %v6898
    %v6900 = vrot.slane %v6895, %v6899
    %v6901 = vlaneseq
    %v6902 = vshrl.u32 %v6901, 7
    %v6903 = vsub.s32 1, %v6902
    %v6904 = vrot.slane %v6895, %v6903
    %v6907 = vadd.f32 %v6863, %v6900
    %v6908 = vadd.f32 %v6864, %v6904
    %v6909 = vadd.f32 %v6865, %v6900
    %v6910 = vadd.f32 %v6866, %v6904
    %v6911 = vadd.f32 %v6867, %v6900
    %v6912 = vadd.f32 %v6868, %v6904
    %v6913 = vadd.f32 %v6869, %v6900
    %v6914 = vadd.f32 %v6870, %v6904
    %v6915 = vadd.f32 %v6871, %v6900
    %v6916 = vadd.f32 %v6872, %v6904
    %v6917 = vadd.f32 %v6873, %v6900
    %v6918 = vadd.f32 %v6874, %v6904
    %v6919 = vadd.f32 %v6875, %v6900
    %v6920 = vadd.f32 %v6876, %v6904
    %v6921 = vadd.f32 %v6877, %v6900
    %v6922 = vadd.f32 %v6878, %v6904
    %v6923 = vadd.f32 %v6879, %v6900
    %v6924 = vadd.f32 %v6880, %v6904
    %v6925 = vadd.f32 %v6881, %v6900
    %v6926 = vadd.f32 %v6882, %v6904
    %v6927 = vadd.f32 %v6883, %v6900
    %v6928 = vadd.f32 %v6884, %v6904
    %v6929 = vadd.f32 %v6885, %v6900
    %v6930 = vadd.f32 %v6886, %v6904
    %v6931 = vadd.f32 %v6887, %v6900
    %v6932 = vadd.f32 %v6888, %v6904
    %v6933 = vadd.f32 %v6889, %v6900
    %v6934 = vadd.f32 %v6890, %v6904
    %v6935 = vadd.f32 %v6891, %v6900
    %v6936 = vadd.f32 %v6892, %v6904
    %v6937 = vadd.f32 %v6893, %v6900
    %v6938 = vadd.f32 %v6894, %v6904
    %v6939 = vmax.f32 %v6907, 0.0
    %v6940 = vmax.f32 %v6908, 0.0
    %v6941 = vmax.f32 %v6909, 0.0
    %v6942 = vmax.f32 %v6910, 0.0
    %v6943 = vmax.f32 %v6911, 0.0
    %v6944 = vmax.f32 %v6912, 0.0
    %v6945 = vmax.f32 %v6913, 0.0
    %v6946 = vmax.f32 %v6914, 0.0
    %v6947 = vmax.f32 %v6915, 0.0
    %v6948 = vmax.f32 %v6916, 0.0
    %v6949 = vmax.f32 %v6917, 0.0
    %v6950 = vmax.f32 %v6918, 0.0
    %v6951 = vmax.f32 %v6919, 0.0
    %v6952 = vmax.f32 %v6920, 0.0
    %v6953 = vmax.f32 %v6921, 0.0
    %v6954 = vmax.f32 %v6922, 0.0
    %v6955 = vmax.f32 %v6923, 0.0
    %v6956 = vmax.f32 %v6924, 0.0
    %v6957 = vmax.f32 %v6925, 0.0
    %v6958 = vmax.f32 %v6926, 0.0
    %v6959 = vmax.f32 %v6927, 0.0
    %v6960 = vmax.f32 %v6928, 0.0
    %v6961 = vmax.f32 %v6929, 0.0
    %v6962 = vmax.f32 %v6930, 0.0
    %v6963 = vmax.f32 %v6931, 0.0
    %v6964 = vmax.f32 %v6932, 0.0
    %v6965 = vmax.f32 %v6933, 0.0
    %v6966 = vmax.f32 %v6934, 0.0
    %v6967 = vmax.f32 %v6935, 0.0
    %v6968 = vmax.f32 %v6936, 0.0
    %v6969 = vmax.f32 %v6937, 0.0
    %v6970 = vmax.f32 %v6938, 0.0
    %v6971 = vpack.c.bf16 %v6941, %v6939
    %v6972 = vpack.c.bf16 %v6942, %v6940
    %v6973 = vpack.c.bf16 %v6945, %v6943
    %v6974 = vpack.c.bf16 %v6946, %v6944
    %v6975 = vpack.c.bf16 %v6949, %v6947
    %v6976 = vpack.c.bf16 %v6950, %v6948
    %v6977 = vpack.c.bf16 %v6953, %v6951
    %v6978 = vpack.c.bf16 %v6954, %v6952
    %v6979 = vpack.c.bf16 %v6957, %v6955
    %v6980 = vpack.c.bf16 %v6958, %v6956
    %v6981 = vpack.c.bf16 %v6961, %v6959
    %v6982 = vpack.c.bf16 %v6962, %v6960
    %v6983 = vpack.c.bf16 %v6965, %v6963
    %v6984 = vpack.c.bf16 %v6966, %v6964
    %v6985 = vpack.c.bf16 %v6969, %v6967
    %v6986 = vpack.c.bf16 %v6970, %v6968
    %v6987 = vld [vmem:[%s13] sm:$0xf]
    %v6988 = vld [vmem:[%s13 + $0x4] sm:$0xf]
    %v6989 = vld [vmem:[%s13 + $0x8] sm:$0xf]
    %v6990 = vld [vmem:[%s13 + $0xc] sm:$0xf]
    %v6991 = vld [vmem:[%s13 + $0x10] sm:$0xf]
    %v6992 = vld [vmem:[%s13 + $0x14] sm:$0xf]
    %v6993 = vld [vmem:[%s13 + $0x18] sm:$0xf]
    %v6994 = vld [vmem:[%s13 + $0x1c] sm:$0xf]
    %v7003 = vunpack.c.l.b16 %v6987
    %v7004 = vunpack.c.l.b16 %v6988
    %v7005 = vunpack.c.l.b16 %v6989
    %v7006 = vunpack.c.l.b16 %v6990
    %v7007 = vunpack.c.l.b16 %v6991
    %v7008 = vunpack.c.l.b16 %v6992
    %v7009 = vunpack.c.l.b16 %v6993
    %v7010 = vunpack.c.l.b16 %v6994
    %v7011 = vpack.c.b16 %v7004, %v7003
    %v7012 = vpack.c.b16 %v7006, %v7005
    %v7013 = vpack.c.b16 %v7008, %v7007
    %v7014 = vpack.c.b16 %v7010, %v7009
    %7019 = vmatprep.subr.bf16.mxu0 %v6972
    %7020 = vmatpush1.bf16.msra.mxu0 %v6971
    %7021 = vmatprep.subr.bf16.mxu0 %v6974
    %7022 = vmatpush1.bf16.msra.mxu0 %v6973
    %7023 = vmatprep.subr.bf16.mxu0 %v6976
    %7024 = vmatpush1.bf16.msra.mxu0 %v6975
    %7025 = vmatprep.subr.bf16.mxu0 %v6978
    %7026 = vmatpush1.bf16.msra.mxu0 %v6977
    %7027 = vmatprep.subr.bf16.mxu0 %v6980
    %7028 = vmatpush1.bf16.msra.mxu0 %v6979
    %7029 = vmatprep.subr.bf16.mxu0 %v6982
    %7030 = vmatpush1.bf16.msra.mxu0 %v6981
    %7031 = vmatprep.subr.bf16.mxu0 %v6984
    %7032 = vmatpush1.bf16.msra.mxu0 %v6983
    %7033 = vmatprep.subr.bf16.mxu0 %v6986
    %7034 = vmatpush1.bf16.msra.mxu0 %v6985
    %7035 = vmatprep.subr.bf16.mxu0 0
    %7036 = vmatpush1.bf16.msra.mxu0 0
    %7037 = vmatprep.subr.bf16.mxu0 0
    %7038 = vmatpush1.bf16.msra.mxu0 0
    %7039 = vmatprep.subr.bf16.mxu0 0
    %7040 = vmatpush1.bf16.msra.mxu0 0
    %7041 = vmatprep.subr.bf16.mxu0 0
    %7042 = vmatpush1.bf16.msra.mxu0 0
    %7043 = vmatprep.subr.bf16.mxu0 0
    %7044 = vmatpush1.bf16.msra.mxu0 0
    %7045 = vmatprep.subr.bf16.mxu0 0
    %7046 = vmatpush1.bf16.msra.mxu0 0
    %7047 = vmatprep.subr.bf16.mxu0 0
    %7048 = vmatpush1.bf16.msra.mxu0 0
    %7049 = vmatprep.subr.bf16.mxu0 0
    %7050 = vmatpush1.bf16.msra.mxu0 0
    %7051 = vmatprep.mubr.bf16.mxu0 0
    %7052 = vmatmul.mubr.bf16.gmra.mrb[0].mxu0 %v7011
    %v7053 = vpop.f32.mrb[0].mxu0
    %v7054 = vadd.f32 0.0, %v7053
    %v7055 = vpop.f32.mrb[0].mxu0
    %v7056 = vadd.f32 0.0, %v7055
    %v7057 = vpop.f32.mrb[0].mxu0
    %v7058 = vadd.f32 0.0, %v7057
    %v7059 = vpop.f32.mrb[0].mxu0
    %v7060 = vadd.f32 0.0, %v7059
    %7061 = vmatprep.mubr.bf16.mxu0 0
    %7062 = vmatmul.mubr.bf16.gmra.mrb[0].mxu0 %v7012
    %v7063 = vpop.f32.mrb[0].mxu0
    %v7064 = vadd.f32 0.0, %v7063
    %v7065 = vpop.f32.mrb[0].mxu0
    %v7066 = vadd.f32 0.0, %v7065
    %v7067 = vpop.f32.mrb[0].mxu0
    %v7068 = vadd.f32 0.0, %v7067
    %v7069 = vpop.f32.mrb[0].mxu0
    %v7070 = vadd.f32 0.0, %v7069
    %7071 = vmatprep.mubr.bf16.mxu0 0
    %7072 = vmatmul.mubr.bf16.gmra.mrb[0].mxu0 %v7013
    %v7073 = vpop.f32.mrb[0].mxu0
    %v7074 = vadd.f32 0.0, %v7073
    %v7075 = vpop.f32.mrb[0].mxu0
    %v7076 = vadd.f32 0.0, %v7075
    %v7077 = vpop.f32.mrb[0].mxu0
    %v7078 = vadd.f32 0.0, %v7077
    %v7079 = vpop.f32.mrb[0].mxu0
    %v7080 = vadd.f32 0.0, %v7079
    %7081 = vmatprep.mubr.bf16.mxu0 0
    %7082 = vmatmul.mubr.bf16.gmra.mrb[0].mxu0 %v7014
    %v7083 = vpop.f32.mrb[0].mxu0
    %v7084 = vadd.f32 0.0, %v7083
    %v7085 = vpop.f32.mrb[0].mxu0
    %v7086 = vadd.f32 0.0, %v7085
    %v7087 = vpop.f32.mrb[0].mxu0
    %v7088 = vadd.f32 0.0, %v7087
    %v7089 = vpop.f32.mrb[0].mxu0
    %v7090 = vadd.f32 0.0, %v7089
    %7091 = vdwg.mxu0
    %s7092 = scalar_lea.vmem %s13, 32
    %v7093 = vld [vmem:[%s7092] sm:$0xf]
    %v7094 = vld [vmem:[%s7092 + $0x4] sm:$0xf]
    %v7095 = vld [vmem:[%s7092 + $0x8] sm:$0xf]
    %v7096 = vld [vmem:[%s7092 + $0xc] sm:$0xf]
    %v7097 = vld [vmem:[%s7092 + $0x10] sm:$0xf]
    %v7098 = vld [vmem:[%s7092 + $0x14] sm:$0xf]
    %v7099 = vld [vmem:[%s7092 + $0x18] sm:$0xf]
    %v7100 = vld [vmem:[%s7092 + $0x1c] sm:$0xf]
    %v7109 = vunpack.c.l.b16 %v7093
    %v7110 = vunpack.c.l.b16 %v7094
    %v7111 = vunpack.c.l.b16 %v7095
    %v7112 = vunpack.c.l.b16 %v7096
    %v7113 = vunpack.c.l.b16 %v7097
    %v7114 = vunpack.c.l.b16 %v7098
    %v7115 = vunpack.c.l.b16 %v7099
    %v7116 = vunpack.c.l.b16 %v7100
    %v7117 = vpack.c.b16 %v7110, %v7109
    %v7118 = vpack.c.b16 %v7112, %v7111
    %v7119 = vpack.c.b16 %v7114, %v7113
    %v7120 = vpack.c.b16 %v7116, %v7115
    %7125 = vmatprep.subr.bf16.mxu0 %v6972
    %7126 = vmatpush1.bf16.msra.mxu0 %v6971
    %7127 = vmatprep.subr.bf16.mxu0 %v6974
    %7128 = vmatpush1.bf16.msra.mxu0 %v6973
    %7129 = vmatprep.subr.bf16.mxu0 %v6976
    %7130 = vmatpush1.bf16.msra.mxu0 %v6975
    %7131 = vmatprep.subr.bf16.mxu0 %v6978
    %7132 = vmatpush1.bf16.msra.mxu0 %v6977
    %7133 = vmatprep.subr.bf16.mxu0 %v6980
    %7134 = vmatpush1.bf16.msra.mxu0 %v6979
    %7135 = vmatprep.subr.bf16.mxu0 %v6982
    %7136 = vmatpush1.bf16.msra.mxu0 %v6981
    %7137 = vmatprep.subr.bf16.mxu0 %v6984
    %7138 = vmatpush1.bf16.msra.mxu0 %v6983
    %7139 = vmatprep.subr.bf16.mxu0 %v6986
    %7140 = vmatpush1.bf16.msra.mxu0 %v6985
    %7141 = vmatprep.subr.bf16.mxu0 0
    %7142 = vmatpush1.bf16.msra.mxu0 0
    %7143 = vmatprep.subr.bf16.mxu0 0
    %7144 = vmatpush1.bf16.msra.mxu0 0
    %7145 = vmatprep.subr.bf16.mxu0 0
    %7146 = vmatpush1.bf16.msra.mxu0 0
    %7147 = vmatprep.subr.bf16.mxu0 0
    %7148 = vmatpush1.bf16.msra.mxu0 0
    %7149 = vmatprep.subr.bf16.mxu0 0
    %7150 = vmatpush1.bf16.msra.mxu0 0
    %7151 = vmatprep.subr.bf16.mxu0 0
    %7152 = vmatpush1.bf16.msra.mxu0 0
    %7153 = vmatprep.subr.bf16.mxu0 0
    %7154 = vmatpush1.bf16.msra.mxu0 0
    %7155 = vmatprep.subr.bf16.mxu0 0
    %7156 = vmatpush1.bf16.msra.mxu0 0
    %7157 = vmatprep.mubr.bf16.mxu0 0
    %7158 = vmatmul.mubr.bf16.gmra.mrb[0].mxu0 %v7117
    %v7159 = vpop.f32.mrb[0].mxu0
    %v7160 = vadd.f32 0.0, %v7159
    %v7161 = vpop.f32.mrb[0].mxu0
    %v7162 = vadd.f32 0.0, %v7161
    %v7163 = vpop.f32.mrb[0].mxu0
    %v7164 = vadd.f32 0.0, %v7163
    %v7165 = vpop.f32.mrb[0].mxu0
    %v7166 = vadd.f32 0.0, %v7165
    %7167 = vmatprep.mubr.bf16.mxu0 0
    %7168 = vmatmul.mubr.bf16.gmra.mrb[0].mxu0 %v7118
    %v7169 = vpop.f32.mrb[0].mxu0
    %v7170 = vadd.f32 0.0, %v7169
    %v7171 = vpop.f32.mrb[0].mxu0
    %v7172 = vadd.f32 0.0, %v7171
    %v7173 = vpop.f32.mrb[0].mxu0
    %v7174 = vadd.f32 0.0, %v7173
    %v7175 = vpop.f32.mrb[0].mxu0
    %v7176 = vadd.f32 0.0, %v7175
    %7177 = vmatprep.mubr.bf16.mxu0 0
    %7178 = vmatmul.mubr.bf16.gmra.mrb[0].mxu0 %v7119
    %v7179 = vpop.f32.mrb[0].mxu0
    %v7180 = vadd.f32 0.0, %v7179
    %v7181 = vpop.f32.mrb[0].mxu0
    %v7182 = vadd.f32 0.0, %v7181
    %v7183 = vpop.f32.mrb[0].mxu0
    %v7184 = vadd.f32 0.0, %v7183
    %v7185 = vpop.f32.mrb[0].mxu0
    %v7186 = vadd.f32 0.0, %v7185
    %7187 = vmatprep.mubr.bf16.mxu0 0
    %7188 = vmatmul.mubr.bf16.gmra.mrb[0].mxu0 %v7120
    %v7189 = vpop.f32.mrb[0].mxu0
    %v7190 = vadd.f32 0.0, %v7189
    %v7191 = vpop.f32.mrb[0].mxu0
    %v7192 = vadd.f32 0.0, %v7191
    %v7193 = vpop.f32.mrb[0].mxu0
    %v7194 = vadd.f32 0.0, %v7193
    %v7195 = vpop.f32.mrb[0].mxu0
    %v7196 = vadd.f32 0.0, %v7195
    %7197 = vdwg.mxu0
    %v7198 = vmax.f32 %v7054, %v7160
    %v7199 = vmax.f32 %v7056, %v7162
    %v7200 = vmax.f32 %v7058, %v7164
    %v7201 = vmax.f32 %v7060, %v7166
    %v7202 = vmax.f32 %v7064, %v7170
    %v7203 = vmax.f32 %v7066, %v7172
    %v7204 = vmax.f32 %v7068, %v7174
    %v7205 = vmax.f32 %v7070, %v7176
    %v7206 = vmax.f32 %v7074, %v7180
    %v7207 = vmax.f32 %v7076, %v7182
    %v7208 = vmax.f32 %v7078, %v7184
    %v7209 = vmax.f32 %v7080, %v7186
    %v7210 = vmax.f32 %v7084, %v7190
    %v7211 = vmax.f32 %v7086, %v7192
    %v7212 = vmax.f32 %v7088, %v7194
    %v7213 = vmax.f32 %v7090, %v7196
    %v7214 = vpack.c.bf16 %v7200, %v7198
    %v7215 = vpack.c.bf16 %v7201, %v7199
    %v7216 = vpack.c.bf16 %v7204, %v7202
    %v7217 = vpack.c.bf16 %v7205, %v7203
    %v7218 = vpack.c.bf16 %v7208, %v7206
    %v7219 = vpack.c.bf16 %v7209, %v7207
    %v7220 = vpack.c.bf16 %v7212, %v7210
    %v7221 = vpack.c.bf16 %v7213, %v7211
    %v7222 = vld [vmem:[%s12] sm:$0xf]
    %v7223 = vld [vmem:[%s12 + $0x4] sm:$0xf]
    %v7224 = vld [vmem:[%s12 + $0x8] sm:$0xf]
    %v7225 = vld [vmem:[%s12 + $0xc] sm:$0xf]
    %v7226 = vld [vmem:[%s12 + $0x10] sm:$0xf]
    %v7227 = vld [vmem:[%s12 + $0x14] sm:$0xf]
    %v7228 = vld [vmem:[%s12 + $0x18] sm:$0xf]
    %v7229 = vld [vmem:[%s12 + $0x1c] sm:$0xf]
    %v7238 = vunpack.c.l.b16 %v7222
    %v7239 = vunpack.c.l.b16 %v7223
    %v7240 = vunpack.c.l.b16 %v7224
    %v7241 = vunpack.c.l.b16 %v7225
    %v7242 = vunpack.c.l.b16 %v7226
    %v7243 = vunpack.c.l.b16 %v7227
    %v7244 = vunpack.c.l.b16 %v7228
    %v7245 = vunpack.c.l.b16 %v7229
    %v7246 = vpack.c.b16 %v7239, %v7238
    %v7247 = vpack.c.b16 %v7241, %v7240
    %v7248 = vpack.c.b16 %v7243, %v7242
    %v7249 = vpack.c.b16 %v7245, %v7244
    %vm7250 = vcmask 523264
    %v7252 = vsel %vm7250, %v7246, 0
    %v7255 = vsel %vm7250, %v7247, 0
    %v7258 = vsel %vm7250, %v7248, 0
    %v7261 = vsel %vm7250, %v7249, 0
    %7263 = vmatprep.subr.bf16.mxu0 %v7215
    %7264 = vmatpush1.bf16.msra.mxu0 %v7214
    %7265 = vmatprep.subr.bf16.mxu0 %v7217
    %7266 = vmatpush1.bf16.msra.mxu0 %v7216
    %7267 = vmatprep.subr.bf16.mxu0 %v7219
    %7268 = vmatpush1.bf16.msra.mxu0 %v7218
    %7269 = vmatprep.subr.bf16.mxu0 %v7221
    %7270 = vmatpush1.bf16.msra.mxu0 %v7220
    %7271 = vmatprep.subr.bf16.mxu0 0
    %7272 = vmatpush1.bf16.msra.mxu0 0
    %7273 = vmatprep.subr.bf16.mxu0 0
    %7274 = vmatpush1.bf16.msra.mxu0 0
    %7275 = vmatprep.subr.bf16.mxu0 0
    %7276 = vmatpush1.bf16.msra.mxu0 0
    %7277 = vmatprep.subr.bf16.mxu0 0
    %7278 = vmatpush1.bf16.msra.mxu0 0
    %7279 = vmatprep.subr.bf16.mxu0 0
    %7280 = vmatpush1.bf16.msra.mxu0 0
    %7281 = vmatprep.subr.bf16.mxu0 0
    %7282 = vmatpush1.bf16.msra.mxu0 0
    %7283 = vmatprep.subr.bf16.mxu0 0
    %7284 = vmatpush1.bf16.msra.mxu0 0
    %7285 = vmatprep.subr.bf16.mxu0 0
    %7286 = vmatpush1.bf16.msra.mxu0 0
    %7287 = vmatprep.subr.bf16.mxu0 0
    %7288 = vmatpush1.bf16.msra.mxu0 0
    %7289 = vmatprep.subr.bf16.mxu0 0
    %7290 = vmatpush1.bf16.msra.mxu0 0
    %7291 = vmatprep.subr.bf16.mxu0 0
    %7292 = vmatpush1.bf16.msra.mxu0 0
    %7293 = vmatprep.subr.bf16.mxu0 0
    %7294 = vmatpush1.bf16.msra.mxu0 0
    %7295 = vmatprep.mubr.bf16.mxu0 0
    %7296 = vmatmul.mubr.bf16.gmra.mrb[0].mxu0 %v7252
    %v7297 = vpop.f32.mrb[0].mxu0
    %v7298 = vadd.f32 0.0, %v7297
    %v7299 = vpop.f32.mrb[0].mxu0
    %v7300 = vadd.f32 0.0, %v7299
    %v7301 = vpop.f32.mrb[0].mxu0
    %v7302 = vadd.f32 0.0, %v7301
    %v7303 = vpop.f32.mrb[0].mxu0
    %v7304 = vadd.f32 0.0, %v7303
    %7305 = vmatprep.mubr.bf16.mxu0 0
    %7306 = vmatmul.mubr.bf16.gmra.mrb[0].mxu0 %v7255
    %v7307 = vpop.f32.mrb[0].mxu0
    %v7308 = vadd.f32 0.0, %v7307
    %v7309 = vpop.f32.mrb[0].mxu0
    %v7310 = vadd.f32 0.0, %v7309
    %v7311 = vpop.f32.mrb[0].mxu0
    %v7312 = vadd.f32 0.0, %v7311
    %v7313 = vpop.f32.mrb[0].mxu0
    %v7314 = vadd.f32 0.0, %v7313
    %7315 = vmatprep.mubr.bf16.mxu0 0
    %7316 = vmatmul.mubr.bf16.gmra.mrb[0].mxu0 %v7258
    %v7317 = vpop.f32.mrb[0].mxu0
    %v7318 = vadd.f32 0.0, %v7317
    %v7319 = vpop.f32.mrb[0].mxu0
    %v7320 = vadd.f32 0.0, %v7319
    %v7321 = vpop.f32.mrb[0].mxu0
    %v7322 = vadd.f32 0.0, %v7321
    %v7323 = vpop.f32.mrb[0].mxu0
    %v7324 = vadd.f32 0.0, %v7323
    %7325 = vmatprep.mubr.bf16.mxu0 0
    %7326 = vmatmul.mubr.bf16.gmra.mrb[0].mxu0 %v7261
    %v7327 = vpop.f32.mrb[0].mxu0
    %v7328 = vadd.f32 0.0, %v7327
    %v7329 = vpop.f32.mrb[0].mxu0
    %v7330 = vadd.f32 0.0, %v7329
    %v7331 = vpop.f32.mrb[0].mxu0
    %v7332 = vadd.f32 0.0, %v7331
    %v7333 = vpop.f32.mrb[0].mxu0
    %v7334 = vadd.f32 0.0, %v7333
    %7335 = vdwg.mxu0
    %v7336 = vpack.c.bf16 %v7302, %v7298
    %v7337 = vpack.c.bf16 %v7304, %v7300
    %v7338 = vpack.c.bf16 %v7312, %v7308
    %v7339 = vpack.c.bf16 %v7314, %v7310
    %v7340 = vpack.c.bf16 %v7322, %v7318
    %v7341 = vpack.c.bf16 %v7324, %v7320
    %v7342 = vpack.c.bf16 %v7332, %v7328
    %v7343 = vpack.c.bf16 %v7334, %v7330
    %s7344 = scalar_lea.vmem %s12, 32
    %v7345 = vld [vmem:[%s7344] sm:$0xf]
    %v7346 = vld [vmem:[%s7344 + $0x4] sm:$0xf]
    %v7347 = vld [vmem:[%s7344 + $0x8] sm:$0xf]
    %v7348 = vld [vmem:[%s7344 + $0xc] sm:$0xf]
    %v7349 = vld [vmem:[%s7344 + $0x10] sm:$0xf]
    %v7350 = vld [vmem:[%s7344 + $0x14] sm:$0xf]
    %v7351 = vld [vmem:[%s7344 + $0x18] sm:$0xf]
    %v7352 = vld [vmem:[%s7344 + $0x1c] sm:$0xf]
    %v7361 = vunpack.c.l.b16 %v7345
    %v7362 = vunpack.c.l.b16 %v7346
    %v7363 = vunpack.c.l.b16 %v7347
    %v7364 = vunpack.c.l.b16 %v7348
    %v7365 = vunpack.c.l.b16 %v7349
    %v7366 = vunpack.c.l.b16 %v7350
    %v7367 = vunpack.c.l.b16 %v7351
    %v7368 = vunpack.c.l.b16 %v7352
    %v7369 = vpack.c.b16 %v7362, %v7361
    %v7370 = vpack.c.b16 %v7364, %v7363
    %v7371 = vpack.c.b16 %v7366, %v7365
    %v7372 = vpack.c.b16 %v7368, %v7367
    %v7374 = vsel %vm7250, %v7369, 0
    %v7377 = vsel %vm7250, %v7370, 0
    %v7380 = vsel %vm7250, %v7371, 0
    %v7383 = vsel %vm7250, %v7372, 0
    %7385 = vmatprep.subr.bf16.mxu0 %v7215
    %7386 = vmatpush1.bf16.msra.mxu0 %v7214
    %7387 = vmatprep.subr.bf16.mxu0 %v7217
    %7388 = vmatpush1.bf16.msra.mxu0 %v7216
    %7389 = vmatprep.subr.bf16.mxu0 %v7219
    %7390 = vmatpush1.bf16.msra.mxu0 %v7218
    %7391 = vmatprep.subr.bf16.mxu0 %v7221
    %7392 = vmatpush1.bf16.msra.mxu0 %v7220
    %7393 = vmatprep.subr.bf16.mxu0 0
    %7394 = vmatpush1.bf16.msra.mxu0 0
    %7395 = vmatprep.subr.bf16.mxu0 0
    %7396 = vmatpush1.bf16.msra.mxu0 0
    %7397 = vmatprep.subr.bf16.mxu0 0
    %7398 = vmatpush1.bf16.msra.mxu0 0
    %7399 = vmatprep.subr.bf16.mxu0 0
    %7400 = vmatpush1.bf16.msra.mxu0 0
    %7401 = vmatprep.subr.bf16.mxu0 0
    %7402 = vmatpush1.bf16.msra.mxu0 0
    %7403 = vmatprep.subr.bf16.mxu0 0
    %7404 = vmatpush1.bf16.msra.mxu0 0
    %7405 = vmatprep.subr.bf16.mxu0 0
    %7406 = vmatpush1.bf16.msra.mxu0 0
    %7407 = vmatprep.subr.bf16.mxu0 0
    %7408 = vmatpush1.bf16.msra.mxu0 0
    %7409 = vmatprep.subr.bf16.mxu0 0
    %7410 = vmatpush1.bf16.msra.mxu0 0
    %7411 = vmatprep.subr.bf16.mxu0 0
    %7412 = vmatpush1.bf16.msra.mxu0 0
    %7413 = vmatprep.subr.bf16.mxu0 0
    %7414 = vmatpush1.bf16.msra.mxu0 0
    %7415 = vmatprep.subr.bf16.mxu0 0
    %7416 = vmatpush1.bf16.msra.mxu0 0
    %7417 = vmatprep.mubr.bf16.mxu0 0
    %7418 = vmatmul.mubr.bf16.gmra.mrb[0].mxu0 %v7374
    %v7419 = vpop.f32.mrb[0].mxu0
    %v7420 = vadd.f32 0.0, %v7419
    %v7421 = vpop.f32.mrb[0].mxu0
    %v7422 = vadd.f32 0.0, %v7421
    %v7423 = vpop.f32.mrb[0].mxu0
    %v7424 = vadd.f32 0.0, %v7423
    %v7425 = vpop.f32.mrb[0].mxu0
    %v7426 = vadd.f32 0.0, %v7425
    %7427 = vmatprep.mubr.bf16.mxu0 0
    %7428 = vmatmul.mubr.bf16.gmra.mrb[0].mxu0 %v7377
    %v7429 = vpop.f32.mrb[0].mxu0
    %v7430 = vadd.f32 0.0, %v7429
    %v7431 = vpop.f32.mrb[0].mxu0
    %v7432 = vadd.f32 0.0, %v7431
    %v7433 = vpop.f32.mrb[0].mxu0
    %v7434 = vadd.f32 0.0, %v7433
    %v7435 = vpop.f32.mrb[0].mxu0
    %v7436 = vadd.f32 0.0, %v7435
    %7437 = vmatprep.mubr.bf16.mxu0 0
    %7438 = vmatmul.mubr.bf16.gmra.mrb[0].mxu0 %v7380
    %v7439 = vpop.f32.mrb[0].mxu0
    %v7440 = vadd.f32 0.0, %v7439
    %v7441 = vpop.f32.mrb[0].mxu0
    %v7442 = vadd.f32 0.0, %v7441
    %v7443 = vpop.f32.mrb[0].mxu0
    %v7444 = vadd.f32 0.0, %v7443
    %v7445 = vpop.f32.mrb[0].mxu0
    %v7446 = vadd.f32 0.0, %v7445
    %7447 = vmatprep.mubr.bf16.mxu0 0
    %7448 = vmatmul.mubr.bf16.gmra.mrb[0].mxu0 %v7383
    %v7449 = vpop.f32.mrb[0].mxu0
    %v7450 = vadd.f32 0.0, %v7449
    %v7451 = vpop.f32.mrb[0].mxu0
    %v7452 = vadd.f32 0.0, %v7451
    %v7453 = vpop.f32.mrb[0].mxu0
    %v7454 = vadd.f32 0.0, %v7453
    %v7455 = vpop.f32.mrb[0].mxu0
    %v7456 = vadd.f32 0.0, %v7455
    %7457 = vdwg.mxu0
    %v7458 = vpack.c.bf16 %v7424, %v7420
    %v7459 = vpack.c.bf16 %v7426, %v7422
    %v7460 = vpack.c.bf16 %v7434, %v7430
    %v7461 = vpack.c.bf16 %v7436, %v7432
    %v7462 = vpack.c.bf16 %v7444, %v7440
    %v7463 = vpack.c.bf16 %v7446, %v7442
    %v7464 = vpack.c.bf16 %v7454, %v7450
    %v7465 = vpack.c.bf16 %v7456, %v7452
    %v7466 = vld [vmem:[%s6] sm:$0xff]
    %v7467 = vld [vmem:[%s6 + $0x8] sm:$0xff]
    %v7468 = vld [vmem:[%s6 + $0x10] sm:$0xff]
    %v7469 = vld [vmem:[%s6 + $0x18] sm:$0xff]
    %v7470 = vld [vmem:[%s6 + $0x20] sm:$0xff]
    %v7471 = vld [vmem:[%s6 + $0x28] sm:$0xff]
    %v7472 = vld [vmem:[%s6 + $0x30] sm:$0xff]
    %v7473 = vld [vmem:[%s6 + $0x38] sm:$0xff]
    %v7474 = vld [vmem:[%s6 + $0x40] sm:$0xff]
    %v7475 = vld [vmem:[%s6 + $0x48] sm:$0xff]
    %v7476 = vld [vmem:[%s6 + $0x50] sm:$0xff]
    %v7477 = vld [vmem:[%s6 + $0x58] sm:$0xff]
    %v7478 = vld [vmem:[%s6 + $0x60] sm:$0xff]
    %v7479 = vld [vmem:[%s6 + $0x68] sm:$0xff]
    %v7480 = vld [vmem:[%s6 + $0x70] sm:$0xff]
    %v7481 = vld [vmem:[%s6 + $0x78] sm:$0xff]
    %v7482 = vld [vmem:[%s6 + $0x80] sm:$0xff]
    %v7483 = vld [vmem:[%s6 + $0x88] sm:$0xff]
    %v7484 = vld [vmem:[%s6 + $0x90] sm:$0xff]
    %v7485 = vld [vmem:[%s6 + $0x98] sm:$0xff]
    %v7486 = vld [vmem:[%s6 + $0xa0] sm:$0xff]
    %v7487 = vld [vmem:[%s6 + $0xa8] sm:$0xff]
    %v7488 = vld [vmem:[%s6 + $0xb0] sm:$0xff]
    %v7489 = vld [vmem:[%s6 + $0xb8] sm:$0xff]
    %v7490 = vld [vmem:[%s6 + $0xc0] sm:$0xff]
    %v7491 = vld [vmem:[%s6 + $0xc8] sm:$0xff]
    %v7492 = vld [vmem:[%s6 + $0xd0] sm:$0xff]
    %v7493 = vld [vmem:[%s6 + $0xd8] sm:$0xff]
    %v7494 = vld [vmem:[%s6 + $0xe0] sm:$0xff]
    %v7495 = vld [vmem:[%s6 + $0xe8] sm:$0xff]
    %v7496 = vld [vmem:[%s6 + $0xf0] sm:$0xff]
    %v7497 = vld [vmem:[%s6 + $0xf8] sm:$0xff]
    %s7498 = scalar_lea.vmem %s6, 256
    %v7499 = vld [vmem:[%s7498] sm:$0xff]
    %v7500 = vld [vmem:[%s7498 + $0x8] sm:$0xff]
    %v7501 = vld [vmem:[%s7498 + $0x10] sm:$0xff]
    %v7502 = vld [vmem:[%s7498 + $0x18] sm:$0xff]
    %v7503 = vld [vmem:[%s7498 + $0x20] sm:$0xff]
    %v7504 = vld [vmem:[%s7498 + $0x28] sm:$0xff]
    %v7505 = vld [vmem:[%s7498 + $0x30] sm:$0xff]
    %v7506 = vld [vmem:[%s7498 + $0x38] sm:$0xff]
    %v7507 = vld [vmem:[%s7498 + $0x40] sm:$0xff]
    %v7508 = vld [vmem:[%s7498 + $0x48] sm:$0xff]
    %v7509 = vld [vmem:[%s7498 + $0x50] sm:$0xff]
    %v7510 = vld [vmem:[%s7498 + $0x58] sm:$0xff]
    %v7511 = vld [vmem:[%s7498 + $0x60] sm:$0xff]
    %v7512 = vld [vmem:[%s7498 + $0x68] sm:$0xff]
    %v7513 = vld [vmem:[%s7498 + $0x70] sm:$0xff]
    %v7514 = vld [vmem:[%s7498 + $0x78] sm:$0xff]
    %v7515 = vld [vmem:[%s7498 + $0x80] sm:$0xff]
    %v7516 = vld [vmem:[%s7498 + $0x88] sm:$0xff]
    %v7517 = vld [vmem:[%s7498 + $0x90] sm:$0xff]
    %v7518 = vld [vmem:[%s7498 + $0x98] sm:$0xff]
    %v7519 = vld [vmem:[%s7498 + $0xa0] sm:$0xff]
    %v7520 = vld [vmem:[%s7498 + $0xa8] sm:$0xff]
    %v7521 = vld [vmem:[%s7498 + $0xb0] sm:$0xff]
    %v7522 = vld [vmem:[%s7498 + $0xb8] sm:$0xff]
    %v7523 = vld [vmem:[%s7498 + $0xc0] sm:$0xff]
    %v7524 = vld [vmem:[%s7498 + $0xc8] sm:$0xff]
    %v7525 = vld [vmem:[%s7498 + $0xd0] sm:$0xff]
    %v7526 = vld [vmem:[%s7498 + $0xd8] sm:$0xff]
    %v7527 = vld [vmem:[%s7498 + $0xe0] sm:$0xff]
    %v7528 = vld [vmem:[%s7498 + $0xe8] sm:$0xff]
    %v7529 = vld [vmem:[%s7498 + $0xf0] sm:$0xff]
    %v7530 = vld [vmem:[%s7498 + $0xf8] sm:$0xff]
    %v7563 = vunpack.c.l.b16 %v7499
    %v7564 = vunpack.c.h.b16 %v7499
    %v7565 = vunpack.c.l.b16 %v7500
    %v7566 = vunpack.c.h.b16 %v7500
    %v7567 = vunpack.c.l.b16 %v7501
    %v7568 = vunpack.c.h.b16 %v7501
    %v7569 = vunpack.c.l.b16 %v7502
    %v7570 = vunpack.c.h.b16 %v7502
    %v7571 = vunpack.c.l.b16 %v7503
    %v7572 = vunpack.c.h.b16 %v7503
    %v7573 = vunpack.c.l.b16 %v7504
    %v7574 = vunpack.c.h.b16 %v7504
    %v7575 = vunpack.c.l.b16 %v7505
    %v7576 = vunpack.c.h.b16 %v7505
    %v7577 = vunpack.c.l.b16 %v7506
    %v7578 = vunpack.c.h.b16 %v7506
    %v7579 = vunpack.c.l.b16 %v7507
    %v7580 = vunpack.c.h.b16 %v7507
    %v7581 = vunpack.c.l.b16 %v7508
    %v7582 = vunpack.c.h.b16 %v7508
    %v7583 = vunpack.c.l.b16 %v7509
    %v7584 = vunpack.c.h.b16 %v7509
    %v7585 = vunpack.c.l.b16 %v7510
    %v7586 = vunpack.c.h.b16 %v7510
    %v7587 = vunpack.c.l.b16 %v7511
    %v7588 = vunpack.c.h.b16 %v7511
    %v7589 = vunpack.c.l.b16 %v7512
    %v7590 = vunpack.c.h.b16 %v7512
    %v7591 = vunpack.c.l.b16 %v7513
    %v7592 = vunpack.c.h.b16 %v7513
    %v7593 = vunpack.c.l.b16 %v7514
    %v7594 = vunpack.c.h.b16 %v7514
    %v7595 = vunpack.c.l.b16 %v7515
    %v7596 = vunpack.c.h.b16 %v7515
    %v7597 = vunpack.c.l.b16 %v7516
    %v7598 = vunpack.c.h.b16 %v7516
    %v7599 = vunpack.c.l.b16 %v7517
    %v7600 = vunpack.c.h.b16 %v7517
    %v7601 = vunpack.c.l.b16 %v7518
    %v7602 = vunpack.c.h.b16 %v7518
    %v7603 = vunpack.c.l.b16 %v7519
    %v7604 = vunpack.c.h.b16 %v7519
    %v7605 = vunpack.c.l.b16 %v7520
    %v7606 = vunpack.c.h.b16 %v7520
    %v7607 = vunpack.c.l.b16 %v7521
    %v7608 = vunpack.c.h.b16 %v7521
    %v7609 = vunpack.c.l.b16 %v7522
    %v7610 = vunpack.c.h.b16 %v7522
    %v7611 = vunpack.c.l.b16 %v7523
    %v7612 = vunpack.c.h.b16 %v7523
    %v7613 = vunpack.c.l.b16 %v7524
    %v7614 = vunpack.c.h.b16 %v7524
    %v7615 = vunpack.c.l.b16 %v7525
    %v7616 = vunpack.c.h.b16 %v7525
    %v7617 = vunpack.c.l.b16 %v7526
    %v7618 = vunpack.c.h.b16 %v7526
    %v7619 = vunpack.c.l.b16 %v7527
    %v7620 = vunpack.c.h.b16 %v7527
    %v7621 = vunpack.c.l.b16 %v7528
    %v7622 = vunpack.c.h.b16 %v7528
    %v7623 = vunpack.c.l.b16 %v7529
    %v7624 = vunpack.c.h.b16 %v7529
    %v7625 = vunpack.c.l.b16 %v7530
    %v7626 = vunpack.c.h.b16 %v7530
    %v7627 = vpack.c.b16 %v7565, %v7563
    %v7628 = vpack.c.b16 %v7566, %v7564
    %v7629 = vpack.c.b16 %v7569, %v7567
    %v7630 = vpack.c.b16 %v7570, %v7568
    %v7631 = vpack.c.b16 %v7573, %v7571
    %v7632 = vpack.c.b16 %v7574, %v7572
    %v7633 = vpack.c.b16 %v7577, %v7575
    %v7634 = vpack.c.b16 %v7578, %v7576
    %v7635 = vpack.c.b16 %v7581, %v7579
    %v7636 = vpack.c.b16 %v7582, %v7580
    %v7637 = vpack.c.b16 %v7585, %v7583
    %v7638 = vpack.c.b16 %v7586, %v7584
    %v7639 = vpack.c.b16 %v7589, %v7587
    %v7640 = vpack.c.b16 %v7590, %v7588
    %v7641 = vpack.c.b16 %v7593, %v7591
    %v7642 = vpack.c.b16 %v7594, %v7592
    %v7643 = vpack.c.b16 %v7597, %v7595
    %v7644 = vpack.c.b16 %v7598, %v7596
    %v7645 = vpack.c.b16 %v7601, %v7599
    %v7646 = vpack.c.b16 %v7602, %v7600
    %v7647 = vpack.c.b16 %v7605, %v7603
    %v7648 = vpack.c.b16 %v7606, %v7604
    %v7649 = vpack.c.b16 %v7609, %v7607
    %v7650 = vpack.c.b16 %v7610, %v7608
    %v7651 = vpack.c.b16 %v7613, %v7611
    %v7652 = vpack.c.b16 %v7614, %v7612
    %v7653 = vpack.c.b16 %v7617, %v7615
    %v7654 = vpack.c.b16 %v7618, %v7616
    %v7655 = vpack.c.b16 %v7621, %v7619
    %v7656 = vpack.c.b16 %v7622, %v7620
    %v7657 = vpack.c.b16 %v7625, %v7623
    %v7658 = vpack.c.b16 %v7626, %v7624
    %7691 = vmatprep.subr.bf16.mxu0 %v7628
    %7692 = vmatpush1.bf16.msra.mxu0 %v7627
    %7693 = vmatprep.subr.bf16.mxu0 %v7630
    %7694 = vmatpush1.bf16.msra.mxu0 %v7629
    %7695 = vmatprep.subr.bf16.mxu0 %v7632
    %7696 = vmatpush1.bf16.msra.mxu0 %v7631
    %7697 = vmatprep.subr.bf16.mxu0 %v7634
    %7698 = vmatpush1.bf16.msra.mxu0 %v7633
    %7699 = vmatprep.subr.bf16.mxu0 %v7636
    %7700 = vmatpush1.bf16.msra.mxu0 %v7635
    %7701 = vmatprep.subr.bf16.mxu0 %v7638
    %7702 = vmatpush1.bf16.msra.mxu0 %v7637
    %7703 = vmatprep.subr.bf16.mxu0 %v7640
    %7704 = vmatpush1.bf16.msra.mxu0 %v7639
    %7705 = vmatprep.subr.bf16.mxu0 %v7642
    %7706 = vmatpush1.bf16.msra.mxu0 %v7641
    %7707 = vmatprep.subr.bf16.mxu0 %v7644
    %7708 = vmatpush1.bf16.msra.mxu0 %v7643
    %7709 = vmatprep.subr.bf16.mxu0 %v7646
    %7710 = vmatpush1.bf16.msra.mxu0 %v7645
    %7711 = vmatprep.subr.bf16.mxu0 %v7648
    %7712 = vmatpush1.bf16.msra.mxu0 %v7647
    %7713 = vmatprep.subr.bf16.mxu0 %v7650
    %7714 = vmatpush1.bf16.msra.mxu0 %v7649
    %7715 = vmatprep.subr.bf16.mxu0 %v7652
    %7716 = vmatpush1.bf16.msra.mxu0 %v7651
    %7717 = vmatprep.subr.bf16.mxu0 %v7654
    %7718 = vmatpush1.bf16.msra.mxu0 %v7653
    %7719 = vmatprep.subr.bf16.mxu0 %v7656
    %7720 = vmatpush1.bf16.msra.mxu0 %v7655
    %7721 = vmatprep.subr.bf16.mxu0 %v7658
    %7722 = vmatpush1.bf16.msra.mxu0 %v7657
    %7723 = vmatprep.mubr.bf16.mxu0 %v7215
    %7724 = vmatmul.mubr.bf16.gmra.mrb[0].mxu0 %v7214
    %v7725 = vpop.f32.mrb[0].mxu0
    %v7726 = vadd.f32 0.0, %v7725
    %v7727 = vpop.f32.mrb[0].mxu0
    %v7728 = vadd.f32 0.0, %v7727
    %v7729 = vpop.f32.mrb[0].mxu0
    %v7730 = vadd.f32 0.0, %v7729
    %v7731 = vpop.f32.mrb[0].mxu0
    %v7732 = vadd.f32 0.0, %v7731
    %7733 = vmatprep.mubr.bf16.mxu0 %v7217
    %7734 = vmatmul.mubr.bf16.gmra.mrb[0].mxu0 %v7216
    %v7735 = vpop.f32.mrb[0].mxu0
    %v7736 = vadd.f32 0.0, %v7735
    %v7737 = vpop.f32.mrb[0].mxu0
    %v7738 = vadd.f32 0.0, %v7737
    %v7739 = vpop.f32.mrb[0].mxu0
    %v7740 = vadd.f32 0.0, %v7739
    %v7741 = vpop.f32.mrb[0].mxu0
    %v7742 = vadd.f32 0.0, %v7741
    %7743 = vmatprep.mubr.bf16.mxu0 %v7219
    %7744 = vmatmul.mubr.bf16.gmra.mrb[0].mxu0 %v7218
    %v7745 = vpop.f32.mrb[0].mxu0
    %v7746 = vadd.f32 0.0, %v7745
    %v7747 = vpop.f32.mrb[0].mxu0
    %v7748 = vadd.f32 0.0, %v7747
    %v7749 = vpop.f32.mrb[0].mxu0
    %v7750 = vadd.f32 0.0, %v7749
    %v7751 = vpop.f32.mrb[0].mxu0
    %v7752 = vadd.f32 0.0, %v7751
    %7753 = vmatprep.mubr.bf16.mxu0 %v7221
    %7754 = vmatmul.mubr.bf16.gmra.mrb[0].mxu0 %v7220
    %v7755 = vpop.f32.mrb[0].mxu0
    %v7756 = vadd.f32 0.0, %v7755
    %v7757 = vpop.f32.mrb[0].mxu0
    %v7758 = vadd.f32 0.0, %v7757
    %v7759 = vpop.f32.mrb[0].mxu0
    %v7760 = vadd.f32 0.0, %v7759
    %v7761 = vpop.f32.mrb[0].mxu0
    %v7762 = vadd.f32 0.0, %v7761
    %7763 = vdwg.mxu0
    %v7796 = vunpack.c.l.b16 %v7466
    %v7797 = vunpack.c.h.b16 %v7466
    %v7798 = vunpack.c.l.b16 %v7467
    %v7799 = vunpack.c.h.b16 %v7467
    %v7800 = vunpack.c.l.b16 %v7468
    %v7801 = vunpack.c.h.b16 %v7468
    %v7802 = vunpack.c.l.b16 %v7469
    %v7803 = vunpack.c.h.b16 %v7469
    %v7804 = vunpack.c.l.b16 %v7470
    %v7805 = vunpack.c.h.b16 %v7470
    %v7806 = vunpack.c.l.b16 %v7471
    %v7807 = vunpack.c.h.b16 %v7471
    %v7808 = vunpack.c.l.b16 %v7472
    %v7809 = vunpack.c.h.b16 %v7472
    %v7810 = vunpack.c.l.b16 %v7473
    %v7811 = vunpack.c.h.b16 %v7473
    %v7812 = vunpack.c.l.b16 %v7474
    %v7813 = vunpack.c.h.b16 %v7474
    %v7814 = vunpack.c.l.b16 %v7475
    %v7815 = vunpack.c.h.b16 %v7475
    %v7816 = vunpack.c.l.b16 %v7476
    %v7817 = vunpack.c.h.b16 %v7476
    %v7818 = vunpack.c.l.b16 %v7477
    %v7819 = vunpack.c.h.b16 %v7477
    %v7820 = vunpack.c.l.b16 %v7478
    %v7821 = vunpack.c.h.b16 %v7478
    %v7822 = vunpack.c.l.b16 %v7479
    %v7823 = vunpack.c.h.b16 %v7479
    %v7824 = vunpack.c.l.b16 %v7480
    %v7825 = vunpack.c.h.b16 %v7480
    %v7826 = vunpack.c.l.b16 %v7481
    %v7827 = vunpack.c.h.b16 %v7481
    %v7828 = vunpack.c.l.b16 %v7482
    %v7829 = vunpack.c.h.b16 %v7482
    %v7830 = vunpack.c.l.b16 %v7483
    %v7831 = vunpack.c.h.b16 %v7483
    %v7832 = vunpack.c.l.b16 %v7484
    %v7833 = vunpack.c.h.b16 %v7484
    %v7834 = vunpack.c.l.b16 %v7485
    %v7835 = vunpack.c.h.b16 %v7485
    %v7836 = vunpack.c.l.b16 %v7486
    %v7837 = vunpack.c.h.b16 %v7486
    %v7838 = vunpack.c.l.b16 %v7487
    %v7839 = vunpack.c.h.b16 %v7487
    %v7840 = vunpack.c.l.b16 %v7488
    %v7841 = vunpack.c.h.b16 %v7488
    %v7842 = vunpack.c.l.b16 %v7489
    %v7843 = vunpack.c.h.b16 %v7489
    %v7844 = vunpack.c.l.b16 %v7490
    %v7845 = vunpack.c.h.b16 %v7490
    %v7846 = vunpack.c.l.b16 %v7491
    %v7847 = vunpack.c.h.b16 %v7491
    %v7848 = vunpack.c.l.b16 %v7492
    %v7849 = vunpack.c.h.b16 %v7492
    %v7850 = vunpack.c.l.b16 %v7493
    %v7851 = vunpack.c.h.b16 %v7493
    %v7852 = vunpack.c.l.b16 %v7494
    %v7853 = vunpack.c.h.b16 %v7494
    %v7854 = vunpack.c.l.b16 %v7495
    %v7855 = vunpack.c.h.b16 %v7495
    %v7856 = vunpack.c.l.b16 %v7496
    %v7857 = vunpack.c.h.b16 %v7496
    %v7858 = vunpack.c.l.b16 %v7497
    %v7859 = vunpack.c.h.b16 %v7497
    %v7860 = vpack.c.b16 %v7798, %v7796
    %v7861 = vpack.c.b16 %v7799, %v7797
    %v7862 = vpack.c.b16 %v7802, %v7800
    %v7863 = vpack.c.b16 %v7803, %v7801
    %v7864 = vpack.c.b16 %v7806, %v7804
    %v7865 = vpack.c.b16 %v7807, %v7805
    %v7866 = vpack.c.b16 %v7810, %v7808
    %v7867 = vpack.c.b16 %v7811, %v7809
    %v7868 = vpack.c.b16 %v7814, %v7812
    %v7869 = vpack.c.b16 %v7815, %v7813
    %v7870 = vpack.c.b16 %v7818, %v7816
    %v7871 = vpack.c.b16 %v7819, %v7817
    %v7872 = vpack.c.b16 %v7822, %v7820
    %v7873 = vpack.c.b16 %v7823, %v7821
    %v7874 = vpack.c.b16 %v7826, %v7824
    %v7875 = vpack.c.b16 %v7827, %v7825
    %v7876 = vpack.c.b16 %v7830, %v7828
    %v7877 = vpack.c.b16 %v7831, %v7829
    %v7878 = vpack.c.b16 %v7834, %v7832
    %v7879 = vpack.c.b16 %v7835, %v7833
    %v7880 = vpack.c.b16 %v7838, %v7836
    %v7881 = vpack.c.b16 %v7839, %v7837
    %v7882 = vpack.c.b16 %v7842, %v7840
    %v7883 = vpack.c.b16 %v7843, %v7841
    %v7884 = vpack.c.b16 %v7846, %v7844
    %v7885 = vpack.c.b16 %v7847, %v7845
    %v7886 = vpack.c.b16 %v7850, %v7848
    %v7887 = vpack.c.b16 %v7851, %v7849
    %v7888 = vpack.c.b16 %v7854, %v7852
    %v7889 = vpack.c.b16 %v7855, %v7853
    %v7890 = vpack.c.b16 %v7858, %v7856
    %v7891 = vpack.c.b16 %v7859, %v7857
    %7924 = vmatprep.subr.bf16.mxu0 %v7861
    %7925 = vmatpush1.bf16.msra.mxu0 %v7860
    %7926 = vmatprep.subr.bf16.mxu0 %v7863
    %7927 = vmatpush1.bf16.msra.mxu0 %v7862
    %7928 = vmatprep.subr.bf16.mxu0 %v7865
    %7929 = vmatpush1.bf16.msra.mxu0 %v7864
    %7930 = vmatprep.subr.bf16.mxu0 %v7867
    %7931 = vmatpush1.bf16.msra.mxu0 %v7866
    %7932 = vmatprep.subr.bf16.mxu0 %v7869
    %7933 = vmatpush1.bf16.msra.mxu0 %v7868
    %7934 = vmatprep.subr.bf16.mxu0 %v7871
    %7935 = vmatpush1.bf16.msra.mxu0 %v7870
    %7936 = vmatprep.subr.bf16.mxu0 %v7873
    %7937 = vmatpush1.bf16.msra.mxu0 %v7872
    %7938 = vmatprep.subr.bf16.mxu0 %v7875
    %7939 = vmatpush1.bf16.msra.mxu0 %v7874
    %7940 = vmatprep.subr.bf16.mxu0 %v7877
    %7941 = vmatpush1.bf16.msra.mxu0 %v7876
    %7942 = vmatprep.subr.bf16.mxu0 %v7879
    %7943 = vmatpush1.bf16.msra.mxu0 %v7878
    %7944 = vmatprep.subr.bf16.mxu0 %v7881
    %7945 = vmatpush1.bf16.msra.mxu0 %v7880
    %7946 = vmatprep.subr.bf16.mxu0 %v7883
    %7947 = vmatpush1.bf16.msra.mxu0 %v7882
    %7948 = vmatprep.subr.bf16.mxu0 %v7885
    %7949 = vmatpush1.bf16.msra.mxu0 %v7884
    %7950 = vmatprep.subr.bf16.mxu0 %v7887
    %7951 = vmatpush1.bf16.msra.mxu0 %v7886
    %7952 = vmatprep.subr.bf16.mxu0 %v7889
    %7953 = vmatpush1.bf16.msra.mxu0 %v7888
    %7954 = vmatprep.subr.bf16.mxu0 %v7891
    %7955 = vmatpush1.bf16.msra.mxu0 %v7890
    %7956 = vmatprep.mubr.bf16.mxu0 %v7337
    %7957 = vmatmul.mubr.bf16.gmra.mrb[0].mxu0 %v7336
    %v7958 = vpop.f32.mrb[0].mxu0
    %v7959 = vadd.f32 %v7726, %v7958
    %v7960 = vpop.f32.mrb[0].mxu0
    %v7961 = vadd.f32 %v7728, %v7960
    %v7962 = vpop.f32.mrb[0].mxu0
    %v7963 = vadd.f32 %v7730, %v7962
    %v7964 = vpop.f32.mrb[0].mxu0
    %v7965 = vadd.f32 %v7732, %v7964
    %7966 = vmatprep.mubr.bf16.mxu0 %v7339
    %7967 = vmatmul.mubr.bf16.gmra.mrb[0].mxu0 %v7338
    %v7968 = vpop.f32.mrb[0].mxu0
    %v7969 = vadd.f32 %v7736, %v7968
    %v7970 = vpop.f32.mrb[0].mxu0
    %v7971 = vadd.f32 %v7738, %v7970
    %v7972 = vpop.f32.mrb[0].mxu0
    %v7973 = vadd.f32 %v7740, %v7972
    %v7974 = vpop.f32.mrb[0].mxu0
    %v7975 = vadd.f32 %v7742, %v7974
    %7976 = vmatprep.mubr.bf16.mxu0 %v7341
    %7977 = vmatmul.mubr.bf16.gmra.mrb[0].mxu0 %v7340
    %v7978 = vpop.f32.mrb[0].mxu0
    %v7979 = vadd.f32 %v7746, %v7978
    %v7980 = vpop.f32.mrb[0].mxu0
    %v7981 = vadd.f32 %v7748, %v7980
    %v7982 = vpop.f32.mrb[0].mxu0
    %v7983 = vadd.f32 %v7750, %v7982
    %v7984 = vpop.f32.mrb[0].mxu0
    %v7985 = vadd.f32 %v7752, %v7984
    %7986 = vmatprep.mubr.bf16.mxu0 %v7343
    %7987 = vmatmul.mubr.bf16.gmra.mrb[0].mxu0 %v7342
    %v7988 = vpop.f32.mrb[0].mxu0
    %v7989 = vadd.f32 %v7756, %v7988
    %v7990 = vpop.f32.mrb[0].mxu0
    %v7991 = vadd.f32 %v7758, %v7990
    %v7992 = vpop.f32.mrb[0].mxu0
    %v7993 = vadd.f32 %v7760, %v7992
    %v7994 = vpop.f32.mrb[0].mxu0
    %v7995 = vadd.f32 %v7762, %v7994
    %7996 = vdwg.mxu0
    %s7997 = scalar_lea.vmem %s6, 512
    %v7998 = vld [vmem:[%s7997] sm:$0xff]
    %v7999 = vld [vmem:[%s7997 + $0x8] sm:$0xff]
    %v8000 = vld [vmem:[%s7997 + $0x10] sm:$0xff]
    %v8001 = vld [vmem:[%s7997 + $0x18] sm:$0xff]
    %v8002 = vld [vmem:[%s7997 + $0x20] sm:$0xff]
    %v8003 = vld [vmem:[%s7997 + $0x28] sm:$0xff]
    %v8004 = vld [vmem:[%s7997 + $0x30] sm:$0xff]
    %v8005 = vld [vmem:[%s7997 + $0x38] sm:$0xff]
    %v8006 = vld [vmem:[%s7997 + $0x40] sm:$0xff]
    %v8007 = vld [vmem:[%s7997 + $0x48] sm:$0xff]
    %v8008 = vld [vmem:[%s7997 + $0x50] sm:$0xff]
    %v8009 = vld [vmem:[%s7997 + $0x58] sm:$0xff]
    %v8010 = vld [vmem:[%s7997 + $0x60] sm:$0xff]
    %v8011 = vld [vmem:[%s7997 + $0x68] sm:$0xff]
    %v8012 = vld [vmem:[%s7997 + $0x70] sm:$0xff]
    %v8013 = vld [vmem:[%s7997 + $0x78] sm:$0xff]
    %v8014 = vld [vmem:[%s7997 + $0x80] sm:$0xff]
    %v8015 = vld [vmem:[%s7997 + $0x88] sm:$0xff]
    %v8016 = vld [vmem:[%s7997 + $0x90] sm:$0xff]
    %v8017 = vld [vmem:[%s7997 + $0x98] sm:$0xff]
    %v8018 = vld [vmem:[%s7997 + $0xa0] sm:$0xff]
    %v8019 = vld [vmem:[%s7997 + $0xa8] sm:$0xff]
    %v8020 = vld [vmem:[%s7997 + $0xb0] sm:$0xff]
    %v8021 = vld [vmem:[%s7997 + $0xb8] sm:$0xff]
    %v8022 = vld [vmem:[%s7997 + $0xc0] sm:$0xff]
    %v8023 = vld [vmem:[%s7997 + $0xc8] sm:$0xff]
    %v8024 = vld [vmem:[%s7997 + $0xd0] sm:$0xff]
    %v8025 = vld [vmem:[%s7997 + $0xd8] sm:$0xff]
    %v8026 = vld [vmem:[%s7997 + $0xe0] sm:$0xff]
    %v8027 = vld [vmem:[%s7997 + $0xe8] sm:$0xff]
    %v8028 = vld [vmem:[%s7997 + $0xf0] sm:$0xff]
    %v8029 = vld [vmem:[%s7997 + $0xf8] sm:$0xff]
    %v8062 = vunpack.c.l.b16 %v7998
    %v8063 = vunpack.c.h.b16 %v7998
    %v8064 = vunpack.c.l.b16 %v7999
    %v8065 = vunpack.c.h.b16 %v7999
    %v8066 = vunpack.c.l.b16 %v8000
    %v8067 = vunpack.c.h.b16 %v8000
    %v8068 = vunpack.c.l.b16 %v8001
    %v8069 = vunpack.c.h.b16 %v8001
    %v8070 = vunpack.c.l.b16 %v8002
    %v8071 = vunpack.c.h.b16 %v8002
    %v8072 = vunpack.c.l.b16 %v8003
    %v8073 = vunpack.c.h.b16 %v8003
    %v8074 = vunpack.c.l.b16 %v8004
    %v8075 = vunpack.c.h.b16 %v8004
    %v8076 = vunpack.c.l.b16 %v8005
    %v8077 = vunpack.c.h.b16 %v8005
    %v8078 = vunpack.c.l.b16 %v8006
    %v8079 = vunpack.c.h.b16 %v8006
    %v8080 = vunpack.c.l.b16 %v8007
    %v8081 = vunpack.c.h.b16 %v8007
    %v8082 = vunpack.c.l.b16 %v8008
    %v8083 = vunpack.c.h.b16 %v8008
    %v8084 = vunpack.c.l.b16 %v8009
    %v8085 = vunpack.c.h.b16 %v8009
    %v8086 = vunpack.c.l.b16 %v8010
    %v8087 = vunpack.c.h.b16 %v8010
    %v8088 = vunpack.c.l.b16 %v8011
    %v8089 = vunpack.c.h.b16 %v8011
    %v8090 = vunpack.c.l.b16 %v8012
    %v8091 = vunpack.c.h.b16 %v8012
    %v8092 = vunpack.c.l.b16 %v8013
    %v8093 = vunpack.c.h.b16 %v8013
    %v8094 = vunpack.c.l.b16 %v8014
    %v8095 = vunpack.c.h.b16 %v8014
    %v8096 = vunpack.c.l.b16 %v8015
    %v8097 = vunpack.c.h.b16 %v8015
    %v8098 = vunpack.c.l.b16 %v8016
    %v8099 = vunpack.c.h.b16 %v8016
    %v8100 = vunpack.c.l.b16 %v8017
    %v8101 = vunpack.c.h.b16 %v8017
    %v8102 = vunpack.c.l.b16 %v8018
    %v8103 = vunpack.c.h.b16 %v8018
    %v8104 = vunpack.c.l.b16 %v8019
    %v8105 = vunpack.c.h.b16 %v8019
    %v8106 = vunpack.c.l.b16 %v8020
    %v8107 = vunpack.c.h.b16 %v8020
    %v8108 = vunpack.c.l.b16 %v8021
    %v8109 = vunpack.c.h.b16 %v8021
    %v8110 = vunpack.c.l.b16 %v8022
    %v8111 = vunpack.c.h.b16 %v8022
    %v8112 = vunpack.c.l.b16 %v8023
    %v8113 = vunpack.c.h.b16 %v8023
    %v8114 = vunpack.c.l.b16 %v8024
    %v8115 = vunpack.c.h.b16 %v8024
    %v8116 = vunpack.c.l.b16 %v8025
    %v8117 = vunpack.c.h.b16 %v8025
    %v8118 = vunpack.c.l.b16 %v8026
    %v8119 = vunpack.c.h.b16 %v8026
    %v8120 = vunpack.c.l.b16 %v8027
    %v8121 = vunpack.c.h.b16 %v8027
    %v8122 = vunpack.c.l.b16 %v8028
    %v8123 = vunpack.c.h.b16 %v8028
    %v8124 = vunpack.c.l.b16 %v8029
    %v8125 = vunpack.c.h.b16 %v8029
    %v8126 = vpack.c.b16 %v8064, %v8062
    %v8127 = vpack.c.b16 %v8065, %v8063
    %v8128 = vpack.c.b16 %v8068, %v8066
    %v8129 = vpack.c.b16 %v8069, %v8067
    %v8130 = vpack.c.b16 %v8072, %v8070
    %v8131 = vpack.c.b16 %v8073, %v8071
    %v8132 = vpack.c.b16 %v8076, %v8074
    %v8133 = vpack.c.b16 %v8077, %v8075
    %v8134 = vpack.c.b16 %v8080, %v8078
    %v8135 = vpack.c.b16 %v8081, %v8079
    %v8136 = vpack.c.b16 %v8084, %v8082
    %v8137 = vpack.c.b16 %v8085, %v8083
    %v8138 = vpack.c.b16 %v8088, %v8086
    %v8139 = vpack.c.b16 %v8089, %v8087
    %v8140 = vpack.c.b16 %v8092, %v8090
    %v8141 = vpack.c.b16 %v8093, %v8091
    %v8142 = vpack.c.b16 %v8096, %v8094
    %v8143 = vpack.c.b16 %v8097, %v8095
    %v8144 = vpack.c.b16 %v8100, %v8098
    %v8145 = vpack.c.b16 %v8101, %v8099
    %v8146 = vpack.c.b16 %v8104, %v8102
    %v8147 = vpack.c.b16 %v8105, %v8103
    %v8148 = vpack.c.b16 %v8108, %v8106
    %v8149 = vpack.c.b16 %v8109, %v8107
    %v8150 = vpack.c.b16 %v8112, %v8110
    %v8151 = vpack.c.b16 %v8113, %v8111
    %v8152 = vpack.c.b16 %v8116, %v8114
    %v8153 = vpack.c.b16 %v8117, %v8115
    %v8154 = vpack.c.b16 %v8120, %v8118
    %v8155 = vpack.c.b16 %v8121, %v8119
    %v8156 = vpack.c.b16 %v8124, %v8122
    %v8157 = vpack.c.b16 %v8125, %v8123
    %8190 = vmatprep.subr.bf16.mxu0 %v8127
    %8191 = vmatpush1.bf16.msra.mxu0 %v8126
    %8192 = vmatprep.subr.bf16.mxu0 %v8129
    %8193 = vmatpush1.bf16.msra.mxu0 %v8128
    %8194 = vmatprep.subr.bf16.mxu0 %v8131
    %8195 = vmatpush1.bf16.msra.mxu0 %v8130
    %8196 = vmatprep.subr.bf16.mxu0 %v8133
    %8197 = vmatpush1.bf16.msra.mxu0 %v8132
    %8198 = vmatprep.subr.bf16.mxu0 %v8135
    %8199 = vmatpush1.bf16.msra.mxu0 %v8134
    %8200 = vmatprep.subr.bf16.mxu0 %v8137
    %8201 = vmatpush1.bf16.msra.mxu0 %v8136
    %8202 = vmatprep.subr.bf16.mxu0 %v8139
    %8203 = vmatpush1.bf16.msra.mxu0 %v8138
    %8204 = vmatprep.subr.bf16.mxu0 %v8141
    %8205 = vmatpush1.bf16.msra.mxu0 %v8140
    %8206 = vmatprep.subr.bf16.mxu0 %v8143
    %8207 = vmatpush1.bf16.msra.mxu0 %v8142
    %8208 = vmatprep.subr.bf16.mxu0 %v8145
    %8209 = vmatpush1.bf16.msra.mxu0 %v8144
    %8210 = vmatprep.subr.bf16.mxu0 %v8147
    %8211 = vmatpush1.bf16.msra.mxu0 %v8146
    %8212 = vmatprep.subr.bf16.mxu0 %v8149
    %8213 = vmatpush1.bf16.msra.mxu0 %v8148
    %8214 = vmatprep.subr.bf16.mxu0 %v8151
    %8215 = vmatpush1.bf16.msra.mxu0 %v8150
    %8216 = vmatprep.subr.bf16.mxu0 %v8153
    %8217 = vmatpush1.bf16.msra.mxu0 %v8152
    %8218 = vmatprep.subr.bf16.mxu0 %v8155
    %8219 = vmatpush1.bf16.msra.mxu0 %v8154
    %8220 = vmatprep.subr.bf16.mxu0 %v8157
    %8221 = vmatpush1.bf16.msra.mxu0 %v8156
    %8222 = vmatprep.mubr.bf16.mxu0 %v7459
    %8223 = vmatmul.mubr.bf16.gmra.mrb[0].mxu0 %v7458
    %v8224 = vpop.f32.mrb[0].mxu0
    %v8225 = vadd.f32 0.0, %v8224
    %v8226 = vpop.f32.mrb[0].mxu0
    %v8227 = vadd.f32 0.0, %v8226
    %v8228 = vpop.f32.mrb[0].mxu0
    %v8229 = vadd.f32 0.0, %v8228
    %v8230 = vpop.f32.mrb[0].mxu0
    %v8231 = vadd.f32 0.0, %v8230
    %8232 = vmatprep.mubr.bf16.mxu0 %v7461
    %8233 = vmatmul.mubr.bf16.gmra.mrb[0].mxu0 %v7460
    %v8234 = vpop.f32.mrb[0].mxu0
    %v8235 = vadd.f32 0.0, %v8234
    %v8236 = vpop.f32.mrb[0].mxu0
    %v8237 = vadd.f32 0.0, %v8236
    %v8238 = vpop.f32.mrb[0].mxu0
    %v8239 = vadd.f32 0.0, %v8238
    %v8240 = vpop.f32.mrb[0].mxu0
    %v8241 = vadd.f32 0.0, %v8240
    %8242 = vmatprep.mubr.bf16.mxu0 %v7463
    %8243 = vmatmul.mubr.bf16.gmra.mrb[0].mxu0 %v7462
    %v8244 = vpop.f32.mrb[0].mxu0
    %v8245 = vadd.f32 0.0, %v8244
    %v8246 = vpop.f32.mrb[0].mxu0
    %v8247 = vadd.f32 0.0, %v8246
    %v8248 = vpop.f32.mrb[0].mxu0
    %v8249 = vadd.f32 0.0, %v8248
    %v8250 = vpop.f32.mrb[0].mxu0
    %v8251 = vadd.f32 0.0, %v8250
    %8252 = vmatprep.mubr.bf16.mxu0 %v7465
    %8253 = vmatmul.mubr.bf16.gmra.mrb[0].mxu0 %v7464
    %v8254 = vpop.f32.mrb[0].mxu0
    %v8255 = vadd.f32 0.0, %v8254
    %v8256 = vpop.f32.mrb[0].mxu0
    %v8257 = vadd.f32 0.0, %v8256
    %v8258 = vpop.f32.mrb[0].mxu0
    %v8259 = vadd.f32 0.0, %v8258
    %v8260 = vpop.f32.mrb[0].mxu0
    %v8261 = vadd.f32 0.0, %v8260
    %8262 = vdwg.mxu0
    %v8263 = vadd.f32 %v7959, %v8225
    %v8264 = vadd.f32 %v7961, %v8227
    %v8265 = vadd.f32 %v7963, %v8229
    %v8266 = vadd.f32 %v7965, %v8231
    %v8267 = vadd.f32 %v7969, %v8235
    %v8268 = vadd.f32 %v7971, %v8237
    %v8269 = vadd.f32 %v7973, %v8239
    %v8270 = vadd.f32 %v7975, %v8241
    %v8271 = vadd.f32 %v7979, %v8245
    %v8272 = vadd.f32 %v7981, %v8247
    %v8273 = vadd.f32 %v7983, %v8249
    %v8274 = vadd.f32 %v7985, %v8251
    %v8275 = vadd.f32 %v7989, %v8255
    %v8276 = vadd.f32 %v7991, %v8257
    %v8277 = vadd.f32 %v7993, %v8259
    %v8278 = vadd.f32 %v7995, %v8261
    %v8279 = vld [vmem:[%s7] sm:$0x3]
    %v8281 = vlaneseq
    %v8282 = vshrl.u32 %v8281, 7
    %v8283 = vsub.s32 0, %v8282
    %v8284 = vrot.slane %v8279, %v8283
    %v8285 = vlaneseq
    %v8286 = vshrl.u32 %v8285, 7
    %v8287 = vsub.s32 1, %v8286
    %v8288 = vrot.slane %v8279, %v8287
    %v8291 = vadd.f32 %v8263, %v8284
    %v8292 = vadd.f32 %v8264, %v8288
    %v8293 = vadd.f32 %v8265, %v8284
    %v8294 = vadd.f32 %v8266, %v8288
    %v8295 = vadd.f32 %v8267, %v8284
    %v8296 = vadd.f32 %v8268, %v8288
    %v8297 = vadd.f32 %v8269, %v8284
    %v8298 = vadd.f32 %v8270, %v8288
    %v8299 = vadd.f32 %v8271, %v8284
    %v8300 = vadd.f32 %v8272, %v8288
    %v8301 = vadd.f32 %v8273, %v8284
    %v8302 = vadd.f32 %v8274, %v8288
    %v8303 = vadd.f32 %v8275, %v8284
    %v8304 = vadd.f32 %v8276, %v8288
    %v8305 = vadd.f32 %v8277, %v8284
    %v8306 = vadd.f32 %v8278, %v8288
    %v8307 = vmax.f32 %v8291, 0.0
    %v8308 = vmax.f32 %v8292, 0.0
    %v8309 = vmax.f32 %v8293, 0.0
    %v8310 = vmax.f32 %v8294, 0.0
    %v8311 = vmax.f32 %v8295, 0.0
    %v8312 = vmax.f32 %v8296, 0.0
    %v8313 = vmax.f32 %v8297, 0.0
    %v8314 = vmax.f32 %v8298, 0.0
    %v8315 = vmax.f32 %v8299, 0.0
    %v8316 = vmax.f32 %v8300, 0.0
    %v8317 = vmax.f32 %v8301, 0.0
    %v8318 = vmax.f32 %v8302, 0.0
    %v8319 = vmax.f32 %v8303, 0.0
    %v8320 = vmax.f32 %v8304, 0.0
    %v8321 = vmax.f32 %v8305, 0.0
    %v8322 = vmax.f32 %v8306, 0.0
    %v8323 = vpack.c.bf16 %v8309, %v8307
    %v8324 = vpack.c.bf16 %v8310, %v8308
    %v8325 = vpack.c.bf16 %v8313, %v8311
    %v8326 = vpack.c.bf16 %v8314, %v8312
    %v8327 = vpack.c.bf16 %v8317, %v8315
    %v8328 = vpack.c.bf16 %v8318, %v8316
    %v8329 = vpack.c.bf16 %v8321, %v8319
    %v8330 = vpack.c.bf16 %v8322, %v8320
    %8331 = vmatprep.subr.bf16.mxu0 %v8324
    %8332 = vmatpush1.bf16.msra.mxu0 %v8323
    %8333 = vmatprep.subr.bf16.mxu0 %v8326
    %8334 = vmatpush1.bf16.msra.mxu0 %v8325
    %8335 = vmatprep.subr.bf16.mxu0 %v8328
    %8336 = vmatpush1.bf16.msra.mxu0 %v8327
    %8337 = vmatprep.subr.bf16.mxu0 %v8330
    %8338 = vmatpush1.bf16.msra.mxu0 %v8329
    %8339 = vmatprep.subr.bf16.mxu0 0
    %8340 = vmatpush1.bf16.msra.mxu0 0
    %8341 = vmatprep.subr.bf16.mxu0 0
    %8342 = vmatpush1.bf16.msra.mxu0 0
    %8343 = vmatprep.subr.bf16.mxu0 0
    %8344 = vmatpush1.bf16.msra.mxu0 0
    %8345 = vmatprep.subr.bf16.mxu0 0
    %8346 = vmatpush1.bf16.msra.mxu0 0
    %8347 = vmatprep.subr.bf16.mxu0 0
    %8348 = vmatpush1.bf16.msra.mxu0 0
    %8349 = vmatprep.subr.bf16.mxu0 0
    %8350 = vmatpush1.bf16.msra.mxu0 0
    %8351 = vmatprep.subr.bf16.mxu0 0
    %8352 = vmatpush1.bf16.msra.mxu0 0
    %8353 = vmatprep.subr.bf16.mxu0 0
    %8354 = vmatpush1.bf16.msra.mxu0 0
    %8355 = vmatprep.subr.bf16.mxu0 0
    %8356 = vmatpush1.bf16.msra.mxu0 0
    %8357 = vmatprep.subr.bf16.mxu0 0
    %8358 = vmatpush1.bf16.msra.mxu0 0
    %8359 = vmatprep.subr.bf16.mxu0 0
    %8360 = vmatpush1.bf16.msra.mxu0 0
    %8361 = vmatprep.subr.bf16.mxu0 0
    %8362 = vmatpush1.bf16.msra.mxu0 0
    %8363 = vmatprep.mubr.bf16.mxu0 0
    %8364 = vmatmul.mubr.bf16.gmra.mrb[0].mxu0 %v7252
    %v8365 = vpop.f32.mrb[0].mxu0
    %v8366 = vadd.f32 0.0, %v8365
    %v8367 = vpop.f32.mrb[0].mxu0
    %v8368 = vadd.f32 0.0, %v8367
    %v8369 = vpop.f32.mrb[0].mxu0
    %v8370 = vadd.f32 0.0, %v8369
    %v8371 = vpop.f32.mrb[0].mxu0
    %v8372 = vadd.f32 0.0, %v8371
    %8373 = vmatprep.mubr.bf16.mxu0 0
    %8374 = vmatmul.mubr.bf16.gmra.mrb[0].mxu0 %v7255
    %v8375 = vpop.f32.mrb[0].mxu0
    %v8376 = vadd.f32 0.0, %v8375
    %v8377 = vpop.f32.mrb[0].mxu0
    %v8378 = vadd.f32 0.0, %v8377
    %v8379 = vpop.f32.mrb[0].mxu0
    %v8380 = vadd.f32 0.0, %v8379
    %v8381 = vpop.f32.mrb[0].mxu0
    %v8382 = vadd.f32 0.0, %v8381
    %8383 = vmatprep.mubr.bf16.mxu0 0
    %8384 = vmatmul.mubr.bf16.gmra.mrb[0].mxu0 %v7258
    %v8385 = vpop.f32.mrb[0].mxu0
    %v8386 = vadd.f32 0.0, %v8385
    %v8387 = vpop.f32.mrb[0].mxu0
    %v8388 = vadd.f32 0.0, %v8387
    %v8389 = vpop.f32.mrb[0].mxu0
    %v8390 = vadd.f32 0.0, %v8389
    %v8391 = vpop.f32.mrb[0].mxu0
    %v8392 = vadd.f32 0.0, %v8391
    %8393 = vmatprep.mubr.bf16.mxu0 0
    %8394 = vmatmul.mubr.bf16.gmra.mrb[0].mxu0 %v7261
    %v8395 = vpop.f32.mrb[0].mxu0
    %v8396 = vadd.f32 0.0, %v8395
    %v8397 = vpop.f32.mrb[0].mxu0
    %v8398 = vadd.f32 0.0, %v8397
    %v8399 = vpop.f32.mrb[0].mxu0
    %v8400 = vadd.f32 0.0, %v8399
    %v8401 = vpop.f32.mrb[0].mxu0
    %v8402 = vadd.f32 0.0, %v8401
    %8403 = vdwg.mxu0
    %v8404 = vpack.c.bf16 %v8370, %v8366
    %v8405 = vpack.c.bf16 %v8372, %v8368
    %v8406 = vpack.c.bf16 %v8380, %v8376
    %v8407 = vpack.c.bf16 %v8382, %v8378
    %v8408 = vpack.c.bf16 %v8390, %v8386
    %v8409 = vpack.c.bf16 %v8392, %v8388
    %v8410 = vpack.c.bf16 %v8400, %v8396
    %v8411 = vpack.c.bf16 %v8402, %v8398
    %8412 = vmatprep.subr.bf16.mxu0 %v8324
    %8413 = vmatpush1.bf16.msra.mxu0 %v8323
    %8414 = vmatprep.subr.bf16.mxu0 %v8326
    %8415 = vmatpush1.bf16.msra.mxu0 %v8325
    %8416 = vmatprep.subr.bf16.mxu0 %v8328
    %8417 = vmatpush1.bf16.msra.mxu0 %v8327
    %8418 = vmatprep.subr.bf16.mxu0 %v8330
    %8419 = vmatpush1.bf16.msra.mxu0 %v8329
    %8420 = vmatprep.subr.bf16.mxu0 0
    %8421 = vmatpush1.bf16.msra.mxu0 0
    %8422 = vmatprep.subr.bf16.mxu0 0
    %8423 = vmatpush1.bf16.msra.mxu0 0
    %8424 = vmatprep.subr.bf16.mxu0 0
    %8425 = vmatpush1.bf16.msra.mxu0 0
    %8426 = vmatprep.subr.bf16.mxu0 0
    %8427 = vmatpush1.bf16.msra.mxu0 0
    %8428 = vmatprep.subr.bf16.mxu0 0
    %8429 = vmatpush1.bf16.msra.mxu0 0
    %8430 = vmatprep.subr.bf16.mxu0 0
    %8431 = vmatpush1.bf16.msra.mxu0 0
    %8432 = vmatprep.subr.bf16.mxu0 0
    %8433 = vmatpush1.bf16.msra.mxu0 0
    %8434 = vmatprep.subr.bf16.mxu0 0
    %8435 = vmatpush1.bf16.msra.mxu0 0
    %8436 = vmatprep.subr.bf16.mxu0 0
    %8437 = vmatpush1.bf16.msra.mxu0 0
    %8438 = vmatprep.subr.bf16.mxu0 0
    %8439 = vmatpush1.bf16.msra.mxu0 0
    %8440 = vmatprep.subr.bf16.mxu0 0
    %8441 = vmatpush1.bf16.msra.mxu0 0
    %8442 = vmatprep.subr.bf16.mxu0 0
    %8443 = vmatpush1.bf16.msra.mxu0 0
    %8444 = vmatprep.mubr.bf16.mxu0 0
    %8445 = vmatmul.mubr.bf16.gmra.mrb[0].mxu0 %v7374
    %v8446 = vpop.f32.mrb[0].mxu0
    %v8447 = vadd.f32 0.0, %v8446
    %v8448 = vpop.f32.mrb[0].mxu0
    %v8449 = vadd.f32 0.0, %v8448
    %v8450 = vpop.f32.mrb[0].mxu0
    %v8451 = vadd.f32 0.0, %v8450
    %v8452 = vpop.f32.mrb[0].mxu0
    %v8453 = vadd.f32 0.0, %v8452
    %8454 = vmatprep.mubr.bf16.mxu0 0
    %8455 = vmatmul.mubr.bf16.gmra.mrb[0].mxu0 %v7377
    %v8456 = vpop.f32.mrb[0].mxu0
    %v8457 = vadd.f32 0.0, %v8456
    %v8458 = vpop.f32.mrb[0].mxu0
    %v8459 = vadd.f32 0.0, %v8458
    %v8460 = vpop.f32.mrb[0].mxu0
    %v8461 = vadd.f32 0.0, %v8460
    %v8462 = vpop.f32.mrb[0].mxu0
    %v8463 = vadd.f32 0.0, %v8462
    %8464 = vmatprep.mubr.bf16.mxu0 0
    %8465 = vmatmul.mubr.bf16.gmra.mrb[0].mxu0 %v7380
    %v8466 = vpop.f32.mrb[0].mxu0
    %v8467 = vadd.f32 0.0, %v8466
    %v8468 = vpop.f32.mrb[0].mxu0
    %v8469 = vadd.f32 0.0, %v8468
    %v8470 = vpop.f32.mrb[0].mxu0
    %v8471 = vadd.f32 0.0, %v8470
    %v8472 = vpop.f32.mrb[0].mxu0
    %v8473 = vadd.f32 0.0, %v8472
    %8474 = vmatprep.mubr.bf16.mxu0 0
    %8475 = vmatmul.mubr.bf16.gmra.mrb[0].mxu0 %v7383
    %v8476 = vpop.f32.mrb[0].mxu0
    %v8477 = vadd.f32 0.0, %v8476
    %v8478 = vpop.f32.mrb[0].mxu0
    %v8479 = vadd.f32 0.0, %v8478
    %v8480 = vpop.f32.mrb[0].mxu0
    %v8481 = vadd.f32 0.0, %v8480
    %v8482 = vpop.f32.mrb[0].mxu0
    %v8483 = vadd.f32 0.0, %v8482
    %8484 = vdwg.mxu0
    %v8485 = vpack.c.bf16 %v8451, %v8447
    %v8486 = vpack.c.bf16 %v8453, %v8449
    %v8487 = vpack.c.bf16 %v8461, %v8457
    %v8488 = vpack.c.bf16 %v8463, %v8459
    %v8489 = vpack.c.bf16 %v8471, %v8467
    %v8490 = vpack.c.bf16 %v8473, %v8469
    %v8491 = vpack.c.bf16 %v8481, %v8477
    %v8492 = vpack.c.bf16 %v8483, %v8479
    %v8493 = vld [vmem:[%s8] sm:$0xf]
    %v8494 = vld [vmem:[%s8 + $0x4] sm:$0xf]
    %v8495 = vld [vmem:[%s8 + $0x8] sm:$0xf]
    %v8496 = vld [vmem:[%s8 + $0xc] sm:$0xf]
    %v8497 = vld [vmem:[%s8 + $0x10] sm:$0xf]
    %v8498 = vld [vmem:[%s8 + $0x14] sm:$0xf]
    %v8499 = vld [vmem:[%s8 + $0x18] sm:$0xf]
    %v8500 = vld [vmem:[%s8 + $0x1c] sm:$0xf]
    %v8501 = vld [vmem:[%s8 + $0x20] sm:$0xf]
    %v8502 = vld [vmem:[%s8 + $0x24] sm:$0xf]
    %v8503 = vld [vmem:[%s8 + $0x28] sm:$0xf]
    %v8504 = vld [vmem:[%s8 + $0x2c] sm:$0xf]
    %v8505 = vld [vmem:[%s8 + $0x30] sm:$0xf]
    %v8506 = vld [vmem:[%s8 + $0x34] sm:$0xf]
    %v8507 = vld [vmem:[%s8 + $0x38] sm:$0xf]
    %v8508 = vld [vmem:[%s8 + $0x3c] sm:$0xf]
    %v8509 = vld [vmem:[%s8 + $0x40] sm:$0xf]
    %v8510 = vld [vmem:[%s8 + $0x44] sm:$0xf]
    %v8511 = vld [vmem:[%s8 + $0x48] sm:$0xf]
    %v8512 = vld [vmem:[%s8 + $0x4c] sm:$0xf]
    %v8513 = vld [vmem:[%s8 + $0x50] sm:$0xf]
    %v8514 = vld [vmem:[%s8 + $0x54] sm:$0xf]
    %v8515 = vld [vmem:[%s8 + $0x58] sm:$0xf]
    %v8516 = vld [vmem:[%s8 + $0x5c] sm:$0xf]
    %v8517 = vld [vmem:[%s8 + $0x60] sm:$0xf]
    %v8518 = vld [vmem:[%s8 + $0x64] sm:$0xf]
    %v8519 = vld [vmem:[%s8 + $0x68] sm:$0xf]
    %v8520 = vld [vmem:[%s8 + $0x6c] sm:$0xf]
    %v8521 = vld [vmem:[%s8 + $0x70] sm:$0xf]
    %v8522 = vld [vmem:[%s8 + $0x74] sm:$0xf]
    %v8523 = vld [vmem:[%s8 + $0x78] sm:$0xf]
    %v8524 = vld [vmem:[%s8 + $0x7c] sm:$0xf]
    %s8525 = scalar_lea.vmem %s8, 128
    %v8526 = vld [vmem:[%s8525] sm:$0xf]
    %v8527 = vld [vmem:[%s8525 + $0x4] sm:$0xf]
    %v8528 = vld [vmem:[%s8525 + $0x8] sm:$0xf]
    %v8529 = vld [vmem:[%s8525 + $0xc] sm:$0xf]
    %v8530 = vld [vmem:[%s8525 + $0x10] sm:$0xf]
    %v8531 = vld [vmem:[%s8525 + $0x14] sm:$0xf]
    %v8532 = vld [vmem:[%s8525 + $0x18] sm:$0xf]
    %v8533 = vld [vmem:[%s8525 + $0x1c] sm:$0xf]
    %v8534 = vld [vmem:[%s8525 + $0x20] sm:$0xf]
    %v8535 = vld [vmem:[%s8525 + $0x24] sm:$0xf]
    %v8536 = vld [vmem:[%s8525 + $0x28] sm:$0xf]
    %v8537 = vld [vmem:[%s8525 + $0x2c] sm:$0xf]
    %v8538 = vld [vmem:[%s8525 + $0x30] sm:$0xf]
    %v8539 = vld [vmem:[%s8525 + $0x34] sm:$0xf]
    %v8540 = vld [vmem:[%s8525 + $0x38] sm:$0xf]
    %v8541 = vld [vmem:[%s8525 + $0x3c] sm:$0xf]
    %v8542 = vld [vmem:[%s8525 + $0x40] sm:$0xf]
    %v8543 = vld [vmem:[%s8525 + $0x44] sm:$0xf]
    %v8544 = vld [vmem:[%s8525 + $0x48] sm:$0xf]
    %v8545 = vld [vmem:[%s8525 + $0x4c] sm:$0xf]
    %v8546 = vld [vmem:[%s8525 + $0x50] sm:$0xf]
    %v8547 = vld [vmem:[%s8525 + $0x54] sm:$0xf]
    %v8548 = vld [vmem:[%s8525 + $0x58] sm:$0xf]
    %v8549 = vld [vmem:[%s8525 + $0x5c] sm:$0xf]
    %v8550 = vld [vmem:[%s8525 + $0x60] sm:$0xf]
    %v8551 = vld [vmem:[%s8525 + $0x64] sm:$0xf]
    %v8552 = vld [vmem:[%s8525 + $0x68] sm:$0xf]
    %v8553 = vld [vmem:[%s8525 + $0x6c] sm:$0xf]
    %v8554 = vld [vmem:[%s8525 + $0x70] sm:$0xf]
    %v8555 = vld [vmem:[%s8525 + $0x74] sm:$0xf]
    %v8556 = vld [vmem:[%s8525 + $0x78] sm:$0xf]
    %v8557 = vld [vmem:[%s8525 + $0x7c] sm:$0xf]
    %v8590 = vunpack.c.l.b16 %v8526
    %v8591 = vunpack.c.l.b16 %v8527
    %v8592 = vunpack.c.l.b16 %v8528
    %v8593 = vunpack.c.l.b16 %v8529
    %v8594 = vunpack.c.l.b16 %v8530
    %v8595 = vunpack.c.l.b16 %v8531
    %v8596 = vunpack.c.l.b16 %v8532
    %v8597 = vunpack.c.l.b16 %v8533
    %v8598 = vunpack.c.l.b16 %v8534
    %v8599 = vunpack.c.l.b16 %v8535
    %v8600 = vunpack.c.l.b16 %v8536
    %v8601 = vunpack.c.l.b16 %v8537
    %v8602 = vunpack.c.l.b16 %v8538
    %v8603 = vunpack.c.l.b16 %v8539
    %v8604 = vunpack.c.l.b16 %v8540
    %v8605 = vunpack.c.l.b16 %v8541
    %v8606 = vunpack.c.l.b16 %v8542
    %v8607 = vunpack.c.l.b16 %v8543
    %v8608 = vunpack.c.l.b16 %v8544
    %v8609 = vunpack.c.l.b16 %v8545
    %v8610 = vunpack.c.l.b16 %v8546
    %v8611 = vunpack.c.l.b16 %v8547
    %v8612 = vunpack.c.l.b16 %v8548
    %v8613 = vunpack.c.l.b16 %v8549
    %v8614 = vunpack.c.l.b16 %v8550
    %v8615 = vunpack.c.l.b16 %v8551
    %v8616 = vunpack.c.l.b16 %v8552
    %v8617 = vunpack.c.l.b16 %v8553
    %v8618 = vunpack.c.l.b16 %v8554
    %v8619 = vunpack.c.l.b16 %v8555
    %v8620 = vunpack.c.l.b16 %v8556
    %v8621 = vunpack.c.l.b16 %v8557
    %v8622 = vpack.c.b16 %v8591, %v8590
    %v8623 = vpack.c.b16 %v8593, %v8592
    %v8624 = vpack.c.b16 %v8595, %v8594
    %v8625 = vpack.c.b16 %v8597, %v8596
    %v8626 = vpack.c.b16 %v8599, %v8598
    %v8627 = vpack.c.b16 %v8601, %v8600
    %v8628 = vpack.c.b16 %v8603, %v8602
    %v8629 = vpack.c.b16 %v8605, %v8604
    %v8630 = vpack.c.b16 %v8607, %v8606
    %v8631 = vpack.c.b16 %v8609, %v8608
    %v8632 = vpack.c.b16 %v8611, %v8610
    %v8633 = vpack.c.b16 %v8613, %v8612
    %v8634 = vpack.c.b16 %v8615, %v8614
    %v8635 = vpack.c.b16 %v8617, %v8616
    %v8636 = vpack.c.b16 %v8619, %v8618
    %v8637 = vpack.c.b16 %v8621, %v8620
    %8654 = vmatprep.subr.bf16.mxu0 0
    %8655 = vmatpush1.bf16.msra.mxu0 %v8622
    %8656 = vmatprep.subr.bf16.mxu0 0
    %8657 = vmatpush1.bf16.msra.mxu0 %v8623
    %8658 = vmatprep.subr.bf16.mxu0 0
    %8659 = vmatpush1.bf16.msra.mxu0 %v8624
    %8660 = vmatprep.subr.bf16.mxu0 0
    %8661 = vmatpush1.bf16.msra.mxu0 %v8625
    %8662 = vmatprep.subr.bf16.mxu0 0
    %8663 = vmatpush1.bf16.msra.mxu0 %v8626
    %8664 = vmatprep.subr.bf16.mxu0 0
    %8665 = vmatpush1.bf16.msra.mxu0 %v8627
    %8666 = vmatprep.subr.bf16.mxu0 0
    %8667 = vmatpush1.bf16.msra.mxu0 %v8628
    %8668 = vmatprep.subr.bf16.mxu0 0
    %8669 = vmatpush1.bf16.msra.mxu0 %v8629
    %8670 = vmatprep.subr.bf16.mxu0 0
    %8671 = vmatpush1.bf16.msra.mxu0 %v8630
    %8672 = vmatprep.subr.bf16.mxu0 0
    %8673 = vmatpush1.bf16.msra.mxu0 %v8631
    %8674 = vmatprep.subr.bf16.mxu0 0
    %8675 = vmatpush1.bf16.msra.mxu0 %v8632
    %8676 = vmatprep.subr.bf16.mxu0 0
    %8677 = vmatpush1.bf16.msra.mxu0 %v8633
    %8678 = vmatprep.subr.bf16.mxu0 0
    %8679 = vmatpush1.bf16.msra.mxu0 %v8634
    %8680 = vmatprep.subr.bf16.mxu0 0
    %8681 = vmatpush1.bf16.msra.mxu0 %v8635
    %8682 = vmatprep.subr.bf16.mxu0 0
    %8683 = vmatpush1.bf16.msra.mxu0 %v8636
    %8684 = vmatprep.subr.bf16.mxu0 0
    %8685 = vmatpush1.bf16.msra.mxu0 %v8637
    %8686 = vmatprep.mubr.bf16.mxu0 %v8324
    %8687 = vmatmul.mubr.bf16.gmra.mrb[0].mxu0 %v8323
    %v8688 = vpop.f32.mrb[0].mxu0
    %v8689 = vadd.f32 0.0, %v8688
    %v8690 = vpop.f32.mrb[0].mxu0
    %v8691 = vpop.f32.mrb[0].mxu0
    %v8692 = vadd.f32 0.0, %v8691
    %v8693 = vpop.f32.mrb[0].mxu0
    %8694 = vmatprep.mubr.bf16.mxu0 %v8326
    %8695 = vmatmul.mubr.bf16.gmra.mrb[0].mxu0 %v8325
    %v8696 = vpop.f32.mrb[0].mxu0
    %v8697 = vadd.f32 0.0, %v8696
    %v8698 = vpop.f32.mrb[0].mxu0
    %v8699 = vpop.f32.mrb[0].mxu0
    %v8700 = vadd.f32 0.0, %v8699
    %v8701 = vpop.f32.mrb[0].mxu0
    %8702 = vmatprep.mubr.bf16.mxu0 %v8328
    %8703 = vmatmul.mubr.bf16.gmra.mrb[0].mxu0 %v8327
    %v8704 = vpop.f32.mrb[0].mxu0
    %v8705 = vadd.f32 0.0, %v8704
    %v8706 = vpop.f32.mrb[0].mxu0
    %v8707 = vpop.f32.mrb[0].mxu0
    %v8708 = vadd.f32 0.0, %v8707
    %v8709 = vpop.f32.mrb[0].mxu0
    %8710 = vmatprep.mubr.bf16.mxu0 %v8330
    %8711 = vmatmul.mubr.bf16.gmra.mrb[0].mxu0 %v8329
    %v8712 = vpop.f32.mrb[0].mxu0
    %v8713 = vadd.f32 0.0, %v8712
    %v8714 = vpop.f32.mrb[0].mxu0
    %v8715 = vpop.f32.mrb[0].mxu0
    %v8716 = vadd.f32 0.0, %v8715
    %v8717 = vpop.f32.mrb[0].mxu0
    %8718 = vdwg.mxu0
    %v8751 = vunpack.c.l.b16 %v8493
    %v8752 = vunpack.c.l.b16 %v8494
    %v8753 = vunpack.c.l.b16 %v8495
    %v8754 = vunpack.c.l.b16 %v8496
    %v8755 = vunpack.c.l.b16 %v8497
    %v8756 = vunpack.c.l.b16 %v8498
    %v8757 = vunpack.c.l.b16 %v8499
    %v8758 = vunpack.c.l.b16 %v8500
    %v8759 = vunpack.c.l.b16 %v8501
    %v8760 = vunpack.c.l.b16 %v8502
    %v8761 = vunpack.c.l.b16 %v8503
    %v8762 = vunpack.c.l.b16 %v8504
    %v8763 = vunpack.c.l.b16 %v8505
    %v8764 = vunpack.c.l.b16 %v8506
    %v8765 = vunpack.c.l.b16 %v8507
    %v8766 = vunpack.c.l.b16 %v8508
    %v8767 = vunpack.c.l.b16 %v8509
    %v8768 = vunpack.c.l.b16 %v8510
    %v8769 = vunpack.c.l.b16 %v8511
    %v8770 = vunpack.c.l.b16 %v8512
    %v8771 = vunpack.c.l.b16 %v8513
    %v8772 = vunpack.c.l.b16 %v8514
    %v8773 = vunpack.c.l.b16 %v8515
    %v8774 = vunpack.c.l.b16 %v8516
    %v8775 = vunpack.c.l.b16 %v8517
    %v8776 = vunpack.c.l.b16 %v8518
    %v8777 = vunpack.c.l.b16 %v8519
    %v8778 = vunpack.c.l.b16 %v8520
    %v8779 = vunpack.c.l.b16 %v8521
    %v8780 = vunpack.c.l.b16 %v8522
    %v8781 = vunpack.c.l.b16 %v8523
    %v8782 = vunpack.c.l.b16 %v8524
    %v8783 = vpack.c.b16 %v8752, %v8751
    %v8784 = vpack.c.b16 %v8754, %v8753
    %v8785 = vpack.c.b16 %v8756, %v8755
    %v8786 = vpack.c.b16 %v8758, %v8757
    %v8787 = vpack.c.b16 %v8760, %v8759
    %v8788 = vpack.c.b16 %v8762, %v8761
    %v8789 = vpack.c.b16 %v8764, %v8763
    %v8790 = vpack.c.b16 %v8766, %v8765
    %v8791 = vpack.c.b16 %v8768, %v8767
    %v8792 = vpack.c.b16 %v8770, %v8769
    %v8793 = vpack.c.b16 %v8772, %v8771
    %v8794 = vpack.c.b16 %v8774, %v8773
    %v8795 = vpack.c.b16 %v8776, %v8775
    %v8796 = vpack.c.b16 %v8778, %v8777
    %v8797 = vpack.c.b16 %v8780, %v8779
    %v8798 = vpack.c.b16 %v8782, %v8781
    %8815 = vmatprep.subr.bf16.mxu0 0
    %8816 = vmatpush1.bf16.msra.mxu0 %v8783
    %8817 = vmatprep.subr.bf16.mxu0 0
    %8818 = vmatpush1.bf16.msra.mxu0 %v8784
    %8819 = vmatprep.subr.bf16.mxu0 0
    %8820 = vmatpush1.bf16.msra.mxu0 %v8785
    %8821 = vmatprep.subr.bf16.mxu0 0
    %8822 = vmatpush1.bf16.msra.mxu0 %v8786
    %8823 = vmatprep.subr.bf16.mxu0 0
    %8824 = vmatpush1.bf16.msra.mxu0 %v8787
    %8825 = vmatprep.subr.bf16.mxu0 0
    %8826 = vmatpush1.bf16.msra.mxu0 %v8788
    %8827 = vmatprep.subr.bf16.mxu0 0
    %8828 = vmatpush1.bf16.msra.mxu0 %v8789
    %8829 = vmatprep.subr.bf16.mxu0 0
    %8830 = vmatpush1.bf16.msra.mxu0 %v8790
    %8831 = vmatprep.subr.bf16.mxu0 0
    %8832 = vmatpush1.bf16.msra.mxu0 %v8791
    %8833 = vmatprep.subr.bf16.mxu0 0
    %8834 = vmatpush1.bf16.msra.mxu0 %v8792
    %8835 = vmatprep.subr.bf16.mxu0 0
    %8836 = vmatpush1.bf16.msra.mxu0 %v8793
    %8837 = vmatprep.subr.bf16.mxu0 0
    %8838 = vmatpush1.bf16.msra.mxu0 %v8794
    %8839 = vmatprep.subr.bf16.mxu0 0
    %8840 = vmatpush1.bf16.msra.mxu0 %v8795
    %8841 = vmatprep.subr.bf16.mxu0 0
    %8842 = vmatpush1.bf16.msra.mxu0 %v8796
    %8843 = vmatprep.subr.bf16.mxu0 0
    %8844 = vmatpush1.bf16.msra.mxu0 %v8797
    %8845 = vmatprep.subr.bf16.mxu0 0
    %8846 = vmatpush1.bf16.msra.mxu0 %v8798
    %8847 = vmatprep.mubr.bf16.mxu0 %v8405
    %8848 = vmatmul.mubr.bf16.gmra.mrb[0].mxu0 %v8404
    %v8849 = vpop.f32.mrb[0].mxu0
    %v8850 = vadd.f32 %v8689, %v8849
    %v8851 = vpop.f32.mrb[0].mxu0
    %v8852 = vpop.f32.mrb[0].mxu0
    %v8853 = vadd.f32 %v8692, %v8852
    %v8854 = vpop.f32.mrb[0].mxu0
    %8855 = vmatprep.mubr.bf16.mxu0 %v8407
    %8856 = vmatmul.mubr.bf16.gmra.mrb[0].mxu0 %v8406
    %v8857 = vpop.f32.mrb[0].mxu0
    %v8858 = vadd.f32 %v8697, %v8857
    %v8859 = vpop.f32.mrb[0].mxu0
    %v8860 = vpop.f32.mrb[0].mxu0
    %v8861 = vadd.f32 %v8700, %v8860
    %v8862 = vpop.f32.mrb[0].mxu0
    %8863 = vmatprep.mubr.bf16.mxu0 %v8409
    %8864 = vmatmul.mubr.bf16.gmra.mrb[0].mxu0 %v8408
    %v8865 = vpop.f32.mrb[0].mxu0
    %v8866 = vadd.f32 %v8705, %v8865
    %v8867 = vpop.f32.mrb[0].mxu0
    %v8868 = vpop.f32.mrb[0].mxu0
    %v8869 = vadd.f32 %v8708, %v8868
    %v8870 = vpop.f32.mrb[0].mxu0
    %8871 = vmatprep.mubr.bf16.mxu0 %v8411
    %8872 = vmatmul.mubr.bf16.gmra.mrb[0].mxu0 %v8410
    %v8873 = vpop.f32.mrb[0].mxu0
    %v8874 = vadd.f32 %v8713, %v8873
    %v8875 = vpop.f32.mrb[0].mxu0
    %v8876 = vpop.f32.mrb[0].mxu0
    %v8877 = vadd.f32 %v8716, %v8876
    %v8878 = vpop.f32.mrb[0].mxu0
    %8879 = vdwg.mxu0
    %s8880 = scalar_lea.vmem %s8, 256
    %v8881 = vld [vmem:[%s8880] sm:$0xf]
    %v8882 = vld [vmem:[%s8880 + $0x4] sm:$0xf]
    %v8883 = vld [vmem:[%s8880 + $0x8] sm:$0xf]
    %v8884 = vld [vmem:[%s8880 + $0xc] sm:$0xf]
    %v8885 = vld [vmem:[%s8880 + $0x10] sm:$0xf]
    %v8886 = vld [vmem:[%s8880 + $0x14] sm:$0xf]
    %v8887 = vld [vmem:[%s8880 + $0x18] sm:$0xf]
    %v8888 = vld [vmem:[%s8880 + $0x1c] sm:$0xf]
    %v8889 = vld [vmem:[%s8880 + $0x20] sm:$0xf]
    %v8890 = vld [vmem:[%s8880 + $0x24] sm:$0xf]
    %v8891 = vld [vmem:[%s8880 + $0x28] sm:$0xf]
    %v8892 = vld [vmem:[%s8880 + $0x2c] sm:$0xf]
    %v8893 = vld [vmem:[%s8880 + $0x30] sm:$0xf]
    %v8894 = vld [vmem:[%s8880 + $0x34] sm:$0xf]
    %v8895 = vld [vmem:[%s8880 + $0x38] sm:$0xf]
    %v8896 = vld [vmem:[%s8880 + $0x3c] sm:$0xf]
    %v8897 = vld [vmem:[%s8880 + $0x40] sm:$0xf]
    %v8898 = vld [vmem:[%s8880 + $0x44] sm:$0xf]
    %v8899 = vld [vmem:[%s8880 + $0x48] sm:$0xf]
    %v8900 = vld [vmem:[%s8880 + $0x4c] sm:$0xf]
    %v8901 = vld [vmem:[%s8880 + $0x50] sm:$0xf]
    %v8902 = vld [vmem:[%s8880 + $0x54] sm:$0xf]
    %v8903 = vld [vmem:[%s8880 + $0x58] sm:$0xf]
    %v8904 = vld [vmem:[%s8880 + $0x5c] sm:$0xf]
    %v8905 = vld [vmem:[%s8880 + $0x60] sm:$0xf]
    %v8906 = vld [vmem:[%s8880 + $0x64] sm:$0xf]
    %v8907 = vld [vmem:[%s8880 + $0x68] sm:$0xf]
    %v8908 = vld [vmem:[%s8880 + $0x6c] sm:$0xf]
    %v8909 = vld [vmem:[%s8880 + $0x70] sm:$0xf]
    %v8910 = vld [vmem:[%s8880 + $0x74] sm:$0xf]
    %v8911 = vld [vmem:[%s8880 + $0x78] sm:$0xf]
    %v8912 = vld [vmem:[%s8880 + $0x7c] sm:$0xf]
    %v8945 = vunpack.c.l.b16 %v8881
    %v8946 = vunpack.c.l.b16 %v8882
    %v8947 = vunpack.c.l.b16 %v8883
    %v8948 = vunpack.c.l.b16 %v8884
    %v8949 = vunpack.c.l.b16 %v8885
    %v8950 = vunpack.c.l.b16 %v8886
    %v8951 = vunpack.c.l.b16 %v8887
    %v8952 = vunpack.c.l.b16 %v8888
    %v8953 = vunpack.c.l.b16 %v8889
    %v8954 = vunpack.c.l.b16 %v8890
    %v8955 = vunpack.c.l.b16 %v8891
    %v8956 = vunpack.c.l.b16 %v8892
    %v8957 = vunpack.c.l.b16 %v8893
    %v8958 = vunpack.c.l.b16 %v8894
    %v8959 = vunpack.c.l.b16 %v8895
    %v8960 = vunpack.c.l.b16 %v8896
    %v8961 = vunpack.c.l.b16 %v8897
    %v8962 = vunpack.c.l.b16 %v8898
    %v8963 = vunpack.c.l.b16 %v8899
    %v8964 = vunpack.c.l.b16 %v8900
    %v8965 = vunpack.c.l.b16 %v8901
    %v8966 = vunpack.c.l.b16 %v8902
    %v8967 = vunpack.c.l.b16 %v8903
    %v8968 = vunpack.c.l.b16 %v8904
    %v8969 = vunpack.c.l.b16 %v8905
    %v8970 = vunpack.c.l.b16 %v8906
    %v8971 = vunpack.c.l.b16 %v8907
    %v8972 = vunpack.c.l.b16 %v8908
    %v8973 = vunpack.c.l.b16 %v8909
    %v8974 = vunpack.c.l.b16 %v8910
    %v8975 = vunpack.c.l.b16 %v8911
    %v8976 = vunpack.c.l.b16 %v8912
    %v8977 = vpack.c.b16 %v8946, %v8945
    %v8978 = vpack.c.b16 %v8948, %v8947
    %v8979 = vpack.c.b16 %v8950, %v8949
    %v8980 = vpack.c.b16 %v8952, %v8951
    %v8981 = vpack.c.b16 %v8954, %v8953
    %v8982 = vpack.c.b16 %v8956, %v8955
    %v8983 = vpack.c.b16 %v8958, %v8957
    %v8984 = vpack.c.b16 %v8960, %v8959
    %v8985 = vpack.c.b16 %v8962, %v8961
    %v8986 = vpack.c.b16 %v8964, %v8963
    %v8987 = vpack.c.b16 %v8966, %v8965
    %v8988 = vpack.c.b16 %v8968, %v8967
    %v8989 = vpack.c.b16 %v8970, %v8969
    %v8990 = vpack.c.b16 %v8972, %v8971
    %v8991 = vpack.c.b16 %v8974, %v8973
    %v8992 = vpack.c.b16 %v8976, %v8975
    %9009 = vmatprep.subr.bf16.mxu0 0
    %9010 = vmatpush1.bf16.msra.mxu0 %v8977
    %9011 = vmatprep.subr.bf16.mxu0 0
    %9012 = vmatpush1.bf16.msra.mxu0 %v8978
    %9013 = vmatprep.subr.bf16.mxu0 0
    %9014 = vmatpush1.bf16.msra.mxu0 %v8979
    %9015 = vmatprep.subr.bf16.mxu0 0
    %9016 = vmatpush1.bf16.msra.mxu0 %v8980
    %9017 = vmatprep.subr.bf16.mxu0 0
    %9018 = vmatpush1.bf16.msra.mxu0 %v8981
    %9019 = vmatprep.subr.bf16.mxu0 0
    %9020 = vmatpush1.bf16.msra.mxu0 %v8982
    %9021 = vmatprep.subr.bf16.mxu0 0
    %9022 = vmatpush1.bf16.msra.mxu0 %v8983
    %9023 = vmatprep.subr.bf16.mxu0 0
    %9024 = vmatpush1.bf16.msra.mxu0 %v8984
    %9025 = vmatprep.subr.bf16.mxu0 0
    %9026 = vmatpush1.bf16.msra.mxu0 %v8985
    %9027 = vmatprep.subr.bf16.mxu0 0
    %9028 = vmatpush1.bf16.msra.mxu0 %v8986
    %9029 = vmatprep.subr.bf16.mxu0 0
    %9030 = vmatpush1.bf16.msra.mxu0 %v8987
    %9031 = vmatprep.subr.bf16.mxu0 0
    %9032 = vmatpush1.bf16.msra.mxu0 %v8988
    %9033 = vmatprep.subr.bf16.mxu0 0
    %9034 = vmatpush1.bf16.msra.mxu0 %v8989
    %9035 = vmatprep.subr.bf16.mxu0 0
    %9036 = vmatpush1.bf16.msra.mxu0 %v8990
    %9037 = vmatprep.subr.bf16.mxu0 0
    %9038 = vmatpush1.bf16.msra.mxu0 %v8991
    %9039 = vmatprep.subr.bf16.mxu0 0
    %9040 = vmatpush1.bf16.msra.mxu0 %v8992
    %9041 = vmatprep.mubr.bf16.mxu0 %v8486
    %9042 = vmatmul.mubr.bf16.gmra.mrb[0].mxu0 %v8485
    %v9043 = vpop.f32.mrb[0].mxu0
    %v9044 = vadd.f32 0.0, %v9043
    %v9045 = vpop.f32.mrb[0].mxu0
    %v9046 = vpop.f32.mrb[0].mxu0
    %v9047 = vadd.f32 0.0, %v9046
    %v9048 = vpop.f32.mrb[0].mxu0
    %9049 = vmatprep.mubr.bf16.mxu0 %v8488
    %9050 = vmatmul.mubr.bf16.gmra.mrb[0].mxu0 %v8487
    %v9051 = vpop.f32.mrb[0].mxu0
    %v9052 = vadd.f32 0.0, %v9051
    %v9053 = vpop.f32.mrb[0].mxu0
    %v9054 = vpop.f32.mrb[0].mxu0
    %v9055 = vadd.f32 0.0, %v9054
    %v9056 = vpop.f32.mrb[0].mxu0
    %9057 = vmatprep.mubr.bf16.mxu0 %v8490
    %9058 = vmatmul.mubr.bf16.gmra.mrb[0].mxu0 %v8489
    %v9059 = vpop.f32.mrb[0].mxu0
    %v9060 = vadd.f32 0.0, %v9059
    %v9061 = vpop.f32.mrb[0].mxu0
    %v9062 = vpop.f32.mrb[0].mxu0
    %v9063 = vadd.f32 0.0, %v9062
    %v9064 = vpop.f32.mrb[0].mxu0
    %9065 = vmatprep.mubr.bf16.mxu0 %v8492
    %9066 = vmatmul.mubr.bf16.gmra.mrb[0].mxu0 %v8491
    %v9067 = vpop.f32.mrb[0].mxu0
    %v9068 = vadd.f32 0.0, %v9067
    %v9069 = vpop.f32.mrb[0].mxu0
    %v9070 = vpop.f32.mrb[0].mxu0
    %v9071 = vadd.f32 0.0, %v9070
    %v9072 = vpop.f32.mrb[0].mxu0
    %9073 = vdwg.mxu0
    %v9074 = vadd.f32 %v8850, %v9044
    %v9075 = vadd.f32 %v8853, %v9047
    %v9076 = vadd.f32 %v8858, %v9052
    %v9077 = vadd.f32 %v8861, %v9055
    %v9078 = vadd.f32 %v8866, %v9060
    %v9079 = vadd.f32 %v8869, %v9063
    %v9080 = vadd.f32 %v8874, %v9068
    %v9081 = vadd.f32 %v8877, %v9071
    %v9082 = vld [vmem:[%s9] sm:$0xf]
    %v9083 = vld [vmem:[%s9 + $0x4] sm:$0xf]
    %v9084 = vld [vmem:[%s9 + $0x8] sm:$0xf]
    %v9085 = vld [vmem:[%s9 + $0xc] sm:$0xf]
    %v9086 = vld [vmem:[%s9 + $0x10] sm:$0xf]
    %v9087 = vld [vmem:[%s9 + $0x14] sm:$0xf]
    %v9088 = vld [vmem:[%s9 + $0x18] sm:$0xf]
    %v9089 = vld [vmem:[%s9 + $0x1c] sm:$0xf]
    %v9090 = vld [vmem:[%s9 + $0x20] sm:$0xf]
    %v9091 = vld [vmem:[%s9 + $0x24] sm:$0xf]
    %v9092 = vld [vmem:[%s9 + $0x28] sm:$0xf]
    %v9093 = vld [vmem:[%s9 + $0x2c] sm:$0xf]
    %v9094 = vld [vmem:[%s9 + $0x30] sm:$0xf]
    %v9095 = vld [vmem:[%s9 + $0x34] sm:$0xf]
    %v9096 = vld [vmem:[%s9 + $0x38] sm:$0xf]
    %v9097 = vld [vmem:[%s9 + $0x3c] sm:$0xf]
    %v9098 = vld [vmem:[%s9 + $0x40] sm:$0xf]
    %v9099 = vld [vmem:[%s9 + $0x44] sm:$0xf]
    %v9100 = vld [vmem:[%s9 + $0x48] sm:$0xf]
    %v9101 = vld [vmem:[%s9 + $0x4c] sm:$0xf]
    %v9102 = vld [vmem:[%s9 + $0x50] sm:$0xf]
    %v9103 = vld [vmem:[%s9 + $0x54] sm:$0xf]
    %v9104 = vld [vmem:[%s9 + $0x58] sm:$0xf]
    %v9105 = vld [vmem:[%s9 + $0x5c] sm:$0xf]
    %v9106 = vld [vmem:[%s9 + $0x60] sm:$0xf]
    %v9107 = vld [vmem:[%s9 + $0x64] sm:$0xf]
    %v9108 = vld [vmem:[%s9 + $0x68] sm:$0xf]
    %v9109 = vld [vmem:[%s9 + $0x6c] sm:$0xf]
    %v9110 = vld [vmem:[%s9 + $0x70] sm:$0xf]
    %v9111 = vld [vmem:[%s9 + $0x74] sm:$0xf]
    %v9112 = vld [vmem:[%s9 + $0x78] sm:$0xf]
    %v9113 = vld [vmem:[%s9 + $0x7c] sm:$0xf]
    %s9114 = scalar_lea.vmem %s9, 128
    %v9115 = vld [vmem:[%s9114] sm:$0xf]
    %v9116 = vld [vmem:[%s9114 + $0x4] sm:$0xf]
    %v9117 = vld [vmem:[%s9114 + $0x8] sm:$0xf]
    %v9118 = vld [vmem:[%s9114 + $0xc] sm:$0xf]
    %v9119 = vld [vmem:[%s9114 + $0x10] sm:$0xf]
    %v9120 = vld [vmem:[%s9114 + $0x14] sm:$0xf]
    %v9121 = vld [vmem:[%s9114 + $0x18] sm:$0xf]
    %v9122 = vld [vmem:[%s9114 + $0x1c] sm:$0xf]
    %v9123 = vld [vmem:[%s9114 + $0x20] sm:$0xf]
    %v9124 = vld [vmem:[%s9114 + $0x24] sm:$0xf]
    %v9125 = vld [vmem:[%s9114 + $0x28] sm:$0xf]
    %v9126 = vld [vmem:[%s9114 + $0x2c] sm:$0xf]
    %v9127 = vld [vmem:[%s9114 + $0x30] sm:$0xf]
    %v9128 = vld [vmem:[%s9114 + $0x34] sm:$0xf]
    %v9129 = vld [vmem:[%s9114 + $0x38] sm:$0xf]
    %v9130 = vld [vmem:[%s9114 + $0x3c] sm:$0xf]
    %v9131 = vld [vmem:[%s9114 + $0x40] sm:$0xf]
    %v9132 = vld [vmem:[%s9114 + $0x44] sm:$0xf]
    %v9133 = vld [vmem:[%s9114 + $0x48] sm:$0xf]
    %v9134 = vld [vmem:[%s9114 + $0x4c] sm:$0xf]
    %v9135 = vld [vmem:[%s9114 + $0x50] sm:$0xf]
    %v9136 = vld [vmem:[%s9114 + $0x54] sm:$0xf]
    %v9137 = vld [vmem:[%s9114 + $0x58] sm:$0xf]
    %v9138 = vld [vmem:[%s9114 + $0x5c] sm:$0xf]
    %v9139 = vld [vmem:[%s9114 + $0x60] sm:$0xf]
    %v9140 = vld [vmem:[%s9114 + $0x64] sm:$0xf]
    %v9141 = vld [vmem:[%s9114 + $0x68] sm:$0xf]
    %v9142 = vld [vmem:[%s9114 + $0x6c] sm:$0xf]
    %v9143 = vld [vmem:[%s9114 + $0x70] sm:$0xf]
    %v9144 = vld [vmem:[%s9114 + $0x74] sm:$0xf]
    %v9145 = vld [vmem:[%s9114 + $0x78] sm:$0xf]
    %v9146 = vld [vmem:[%s9114 + $0x7c] sm:$0xf]
    %v9179 = vunpack.c.l.b16 %v9115
    %v9180 = vunpack.c.l.b16 %v9116
    %v9181 = vunpack.c.l.b16 %v9117
    %v9182 = vunpack.c.l.b16 %v9118
    %v9183 = vunpack.c.l.b16 %v9119
    %v9184 = vunpack.c.l.b16 %v9120
    %v9185 = vunpack.c.l.b16 %v9121
    %v9186 = vunpack.c.l.b16 %v9122
    %v9187 = vunpack.c.l.b16 %v9123
    %v9188 = vunpack.c.l.b16 %v9124
    %v9189 = vunpack.c.l.b16 %v9125
    %v9190 = vunpack.c.l.b16 %v9126
    %v9191 = vunpack.c.l.b16 %v9127
    %v9192 = vunpack.c.l.b16 %v9128
    %v9193 = vunpack.c.l.b16 %v9129
    %v9194 = vunpack.c.l.b16 %v9130
    %v9195 = vunpack.c.l.b16 %v9131
    %v9196 = vunpack.c.l.b16 %v9132
    %v9197 = vunpack.c.l.b16 %v9133
    %v9198 = vunpack.c.l.b16 %v9134
    %v9199 = vunpack.c.l.b16 %v9135
    %v9200 = vunpack.c.l.b16 %v9136
    %v9201 = vunpack.c.l.b16 %v9137
    %v9202 = vunpack.c.l.b16 %v9138
    %v9203 = vunpack.c.l.b16 %v9139
    %v9204 = vunpack.c.l.b16 %v9140
    %v9205 = vunpack.c.l.b16 %v9141
    %v9206 = vunpack.c.l.b16 %v9142
    %v9207 = vunpack.c.l.b16 %v9143
    %v9208 = vunpack.c.l.b16 %v9144
    %v9209 = vunpack.c.l.b16 %v9145
    %v9210 = vunpack.c.l.b16 %v9146
    %v9211 = vpack.c.b16 %v9180, %v9179
    %v9212 = vpack.c.b16 %v9182, %v9181
    %v9213 = vpack.c.b16 %v9184, %v9183
    %v9214 = vpack.c.b16 %v9186, %v9185
    %v9215 = vpack.c.b16 %v9188, %v9187
    %v9216 = vpack.c.b16 %v9190, %v9189
    %v9217 = vpack.c.b16 %v9192, %v9191
    %v9218 = vpack.c.b16 %v9194, %v9193
    %v9219 = vpack.c.b16 %v9196, %v9195
    %v9220 = vpack.c.b16 %v9198, %v9197
    %v9221 = vpack.c.b16 %v9200, %v9199
    %v9222 = vpack.c.b16 %v9202, %v9201
    %v9223 = vpack.c.b16 %v9204, %v9203
    %v9224 = vpack.c.b16 %v9206, %v9205
    %v9225 = vpack.c.b16 %v9208, %v9207
    %v9226 = vpack.c.b16 %v9210, %v9209
    %9243 = vmatprep.subr.bf16.mxu0 0
    %9244 = vmatpush1.bf16.msra.mxu0 %v9211
    %9245 = vmatprep.subr.bf16.mxu0 0
    %9246 = vmatpush1.bf16.msra.mxu0 %v9212
    %9247 = vmatprep.subr.bf16.mxu0 0
    %9248 = vmatpush1.bf16.msra.mxu0 %v9213
    %9249 = vmatprep.subr.bf16.mxu0 0
    %9250 = vmatpush1.bf16.msra.mxu0 %v9214
    %9251 = vmatprep.subr.bf16.mxu0 0
    %9252 = vmatpush1.bf16.msra.mxu0 %v9215
    %9253 = vmatprep.subr.bf16.mxu0 0
    %9254 = vmatpush1.bf16.msra.mxu0 %v9216
    %9255 = vmatprep.subr.bf16.mxu0 0
    %9256 = vmatpush1.bf16.msra.mxu0 %v9217
    %9257 = vmatprep.subr.bf16.mxu0 0
    %9258 = vmatpush1.bf16.msra.mxu0 %v9218
    %9259 = vmatprep.subr.bf16.mxu0 0
    %9260 = vmatpush1.bf16.msra.mxu0 %v9219
    %9261 = vmatprep.subr.bf16.mxu0 0
    %9262 = vmatpush1.bf16.msra.mxu0 %v9220
    %9263 = vmatprep.subr.bf16.mxu0 0
    %9264 = vmatpush1.bf16.msra.mxu0 %v9221
    %9265 = vmatprep.subr.bf16.mxu0 0
    %9266 = vmatpush1.bf16.msra.mxu0 %v9222
    %9267 = vmatprep.subr.bf16.mxu0 0
    %9268 = vmatpush1.bf16.msra.mxu0 %v9223
    %9269 = vmatprep.subr.bf16.mxu0 0
    %9270 = vmatpush1.bf16.msra.mxu0 %v9224
    %9271 = vmatprep.subr.bf16.mxu0 0
    %9272 = vmatpush1.bf16.msra.mxu0 %v9225
    %9273 = vmatprep.subr.bf16.mxu0 0
    %9274 = vmatpush1.bf16.msra.mxu0 %v9226
    %9275 = vmatprep.mubr.bf16.mxu0 %v8324
    %9276 = vmatmul.mubr.bf16.gmra.mrb[0].mxu0 %v8323
    %v9277 = vpop.f32.mrb[0].mxu0
    %v9278 = vadd.f32 0.0, %v9277
    %v9279 = vpop.f32.mrb[0].mxu0
    %v9280 = vpop.f32.mrb[0].mxu0
    %v9281 = vadd.f32 0.0, %v9280
    %v9282 = vpop.f32.mrb[0].mxu0
    %9283 = vmatprep.mubr.bf16.mxu0 %v8326
    %9284 = vmatmul.mubr.bf16.gmra.mrb[0].mxu0 %v8325
    %v9285 = vpop.f32.mrb[0].mxu0
    %v9286 = vadd.f32 0.0, %v9285
    %v9287 = vpop.f32.mrb[0].mxu0
    %v9288 = vpop.f32.mrb[0].mxu0
    %v9289 = vadd.f32 0.0, %v9288
    %v9290 = vpop.f32.mrb[0].mxu0
    %9291 = vmatprep.mubr.bf16.mxu0 %v8328
    %9292 = vmatmul.mubr.bf16.gmra.mrb[0].mxu0 %v8327
    %v9293 = vpop.f32.mrb[0].mxu0
    %v9294 = vadd.f32 0.0, %v9293
    %v9295 = vpop.f32.mrb[0].mxu0
    %v9296 = vpop.f32.mrb[0].mxu0
    %v9297 = vadd.f32 0.0, %v9296
    %v9298 = vpop.f32.mrb[0].mxu0
    %9299 = vmatprep.mubr.bf16.mxu0 %v8330
    %9300 = vmatmul.mubr.bf16.gmra.mrb[0].mxu0 %v8329
    %v9301 = vpop.f32.mrb[0].mxu0
    %v9302 = vadd.f32 0.0, %v9301
    %v9303 = vpop.f32.mrb[0].mxu0
    %v9304 = vpop.f32.mrb[0].mxu0
    %v9305 = vadd.f32 0.0, %v9304
    %v9306 = vpop.f32.mrb[0].mxu0
    %9307 = vdwg.mxu0
    %v9340 = vunpack.c.l.b16 %v9082
    %v9341 = vunpack.c.l.b16 %v9083
    %v9342 = vunpack.c.l.b16 %v9084
    %v9343 = vunpack.c.l.b16 %v9085
    %v9344 = vunpack.c.l.b16 %v9086
    %v9345 = vunpack.c.l.b16 %v9087
    %v9346 = vunpack.c.l.b16 %v9088
    %v9347 = vunpack.c.l.b16 %v9089
    %v9348 = vunpack.c.l.b16 %v9090
    %v9349 = vunpack.c.l.b16 %v9091
    %v9350 = vunpack.c.l.b16 %v9092
    %v9351 = vunpack.c.l.b16 %v9093
    %v9352 = vunpack.c.l.b16 %v9094
    %v9353 = vunpack.c.l.b16 %v9095
    %v9354 = vunpack.c.l.b16 %v9096
    %v9355 = vunpack.c.l.b16 %v9097
    %v9356 = vunpack.c.l.b16 %v9098
    %v9357 = vunpack.c.l.b16 %v9099
    %v9358 = vunpack.c.l.b16 %v9100
    %v9359 = vunpack.c.l.b16 %v9101
    %v9360 = vunpack.c.l.b16 %v9102
    %v9361 = vunpack.c.l.b16 %v9103
    %v9362 = vunpack.c.l.b16 %v9104
    %v9363 = vunpack.c.l.b16 %v9105
    %v9364 = vunpack.c.l.b16 %v9106
    %v9365 = vunpack.c.l.b16 %v9107
    %v9366 = vunpack.c.l.b16 %v9108
    %v9367 = vunpack.c.l.b16 %v9109
    %v9368 = vunpack.c.l.b16 %v9110
    %v9369 = vunpack.c.l.b16 %v9111
    %v9370 = vunpack.c.l.b16 %v9112
    %v9371 = vunpack.c.l.b16 %v9113
    %v9372 = vpack.c.b16 %v9341, %v9340
    %v9373 = vpack.c.b16 %v9343, %v9342
    %v9374 = vpack.c.b16 %v9345, %v9344
    %v9375 = vpack.c.b16 %v9347, %v9346
    %v9376 = vpack.c.b16 %v9349, %v9348
    %v9377 = vpack.c.b16 %v9351, %v9350
    %v9378 = vpack.c.b16 %v9353, %v9352
    %v9379 = vpack.c.b16 %v9355, %v9354
    %v9380 = vpack.c.b16 %v9357, %v9356
    %v9381 = vpack.c.b16 %v9359, %v9358
    %v9382 = vpack.c.b16 %v9361, %v9360
    %v9383 = vpack.c.b16 %v9363, %v9362
    %v9384 = vpack.c.b16 %v9365, %v9364
    %v9385 = vpack.c.b16 %v9367, %v9366
    %v9386 = vpack.c.b16 %v9369, %v9368
    %v9387 = vpack.c.b16 %v9371, %v9370
    %9404 = vmatprep.subr.bf16.mxu0 0
    %9405 = vmatpush1.bf16.msra.mxu0 %v9372
    %9406 = vmatprep.subr.bf16.mxu0 0
    %9407 = vmatpush1.bf16.msra.mxu0 %v9373
    %9408 = vmatprep.subr.bf16.mxu0 0
    %9409 = vmatpush1.bf16.msra.mxu0 %v9374
    %9410 = vmatprep.subr.bf16.mxu0 0
    %9411 = vmatpush1.bf16.msra.mxu0 %v9375
    %9412 = vmatprep.subr.bf16.mxu0 0
    %9413 = vmatpush1.bf16.msra.mxu0 %v9376
    %9414 = vmatprep.subr.bf16.mxu0 0
    %9415 = vmatpush1.bf16.msra.mxu0 %v9377
    %9416 = vmatprep.subr.bf16.mxu0 0
    %9417 = vmatpush1.bf16.msra.mxu0 %v9378
    %9418 = vmatprep.subr.bf16.mxu0 0
    %9419 = vmatpush1.bf16.msra.mxu0 %v9379
    %9420 = vmatprep.subr.bf16.mxu0 0
    %9421 = vmatpush1.bf16.msra.mxu0 %v9380
    %9422 = vmatprep.subr.bf16.mxu0 0
    %9423 = vmatpush1.bf16.msra.mxu0 %v9381
    %9424 = vmatprep.subr.bf16.mxu0 0
    %9425 = vmatpush1.bf16.msra.mxu0 %v9382
    %9426 = vmatprep.subr.bf16.mxu0 0
    %9427 = vmatpush1.bf16.msra.mxu0 %v9383
    %9428 = vmatprep.subr.bf16.mxu0 0
    %9429 = vmatpush1.bf16.msra.mxu0 %v9384
    %9430 = vmatprep.subr.bf16.mxu0 0
    %9431 = vmatpush1.bf16.msra.mxu0 %v9385
    %9432 = vmatprep.subr.bf16.mxu0 0
    %9433 = vmatpush1.bf16.msra.mxu0 %v9386
    %9434 = vmatprep.subr.bf16.mxu0 0
    %9435 = vmatpush1.bf16.msra.mxu0 %v9387
    %9436 = vmatprep.mubr.bf16.mxu0 %v8405
    %9437 = vmatmul.mubr.bf16.gmra.mrb[0].mxu0 %v8404
    %v9438 = vpop.f32.mrb[0].mxu0
    %v9439 = vadd.f32 %v9278, %v9438
    %v9440 = vpop.f32.mrb[0].mxu0
    %v9441 = vpop.f32.mrb[0].mxu0
    %v9442 = vadd.f32 %v9281, %v9441
    %v9443 = vpop.f32.mrb[0].mxu0
    %9444 = vmatprep.mubr.bf16.mxu0 %v8407
    %9445 = vmatmul.mubr.bf16.gmra.mrb[0].mxu0 %v8406
    %v9446 = vpop.f32.mrb[0].mxu0
    %v9447 = vadd.f32 %v9286, %v9446
    %v9448 = vpop.f32.mrb[0].mxu0
    %v9449 = vpop.f32.mrb[0].mxu0
    %v9450 = vadd.f32 %v9289, %v9449
    %v9451 = vpop.f32.mrb[0].mxu0
    %9452 = vmatprep.mubr.bf16.mxu0 %v8409
    %9453 = vmatmul.mubr.bf16.gmra.mrb[0].mxu0 %v8408
    %v9454 = vpop.f32.mrb[0].mxu0
    %v9455 = vadd.f32 %v9294, %v9454
    %v9456 = vpop.f32.mrb[0].mxu0
    %v9457 = vpop.f32.mrb[0].mxu0
    %v9458 = vadd.f32 %v9297, %v9457
    %v9459 = vpop.f32.mrb[0].mxu0
    %9460 = vmatprep.mubr.bf16.mxu0 %v8411
    %9461 = vmatmul.mubr.bf16.gmra.mrb[0].mxu0 %v8410
    %v9462 = vpop.f32.mrb[0].mxu0
    %v9463 = vadd.f32 %v9302, %v9462
    %v9464 = vpop.f32.mrb[0].mxu0
    %v9465 = vpop.f32.mrb[0].mxu0
    %v9466 = vadd.f32 %v9305, %v9465
    %v9467 = vpop.f32.mrb[0].mxu0
    %9468 = vdwg.mxu0
    %s9469 = scalar_lea.vmem %s9, 256
    %v9470 = vld [vmem:[%s9469] sm:$0xf]
    %v9471 = vld [vmem:[%s9469 + $0x4] sm:$0xf]
    %v9472 = vld [vmem:[%s9469 + $0x8] sm:$0xf]
    %v9473 = vld [vmem:[%s9469 + $0xc] sm:$0xf]
    %v9474 = vld [vmem:[%s9469 + $0x10] sm:$0xf]
    %v9475 = vld [vmem:[%s9469 + $0x14] sm:$0xf]
    %v9476 = vld [vmem:[%s9469 + $0x18] sm:$0xf]
    %v9477 = vld [vmem:[%s9469 + $0x1c] sm:$0xf]
    %v9478 = vld [vmem:[%s9469 + $0x20] sm:$0xf]
    %v9479 = vld [vmem:[%s9469 + $0x24] sm:$0xf]
    %v9480 = vld [vmem:[%s9469 + $0x28] sm:$0xf]
    %v9481 = vld [vmem:[%s9469 + $0x2c] sm:$0xf]
    %v9482 = vld [vmem:[%s9469 + $0x30] sm:$0xf]
    %v9483 = vld [vmem:[%s9469 + $0x34] sm:$0xf]
    %v9484 = vld [vmem:[%s9469 + $0x38] sm:$0xf]
    %v9485 = vld [vmem:[%s9469 + $0x3c] sm:$0xf]
    %v9486 = vld [vmem:[%s9469 + $0x40] sm:$0xf]
    %v9487 = vld [vmem:[%s9469 + $0x44] sm:$0xf]
    %v9488 = vld [vmem:[%s9469 + $0x48] sm:$0xf]
    %v9489 = vld [vmem:[%s9469 + $0x4c] sm:$0xf]
    %v9490 = vld [vmem:[%s9469 + $0x50] sm:$0xf]
    %v9491 = vld [vmem:[%s9469 + $0x54] sm:$0xf]
    %v9492 = vld [vmem:[%s9469 + $0x58] sm:$0xf]
    %v9493 = vld [vmem:[%s9469 + $0x5c] sm:$0xf]
    %v9494 = vld [vmem:[%s9469 + $0x60] sm:$0xf]
    %v9495 = vld [vmem:[%s9469 + $0x64] sm:$0xf]
    %v9496 = vld [vmem:[%s9469 + $0x68] sm:$0xf]
    %v9497 = vld [vmem:[%s9469 + $0x6c] sm:$0xf]
    %v9498 = vld [vmem:[%s9469 + $0x70] sm:$0xf]
    %v9499 = vld [vmem:[%s9469 + $0x74] sm:$0xf]
    %v9500 = vld [vmem:[%s9469 + $0x78] sm:$0xf]
    %v9501 = vld [vmem:[%s9469 + $0x7c] sm:$0xf]
    %v9534 = vunpack.c.l.b16 %v9470
    %v9535 = vunpack.c.l.b16 %v9471
    %v9536 = vunpack.c.l.b16 %v9472
    %v9537 = vunpack.c.l.b16 %v9473
    %v9538 = vunpack.c.l.b16 %v9474
    %v9539 = vunpack.c.l.b16 %v9475
    %v9540 = vunpack.c.l.b16 %v9476
    %v9541 = vunpack.c.l.b16 %v9477
    %v9542 = vunpack.c.l.b16 %v9478
    %v9543 = vunpack.c.l.b16 %v9479
    %v9544 = vunpack.c.l.b16 %v9480
    %v9545 = vunpack.c.l.b16 %v9481
    %v9546 = vunpack.c.l.b16 %v9482
    %v9547 = vunpack.c.l.b16 %v9483
    %v9548 = vunpack.c.l.b16 %v9484
    %v9549 = vunpack.c.l.b16 %v9485
    %v9550 = vunpack.c.l.b16 %v9486
    %v9551 = vunpack.c.l.b16 %v9487
    %v9552 = vunpack.c.l.b16 %v9488
    %v9553 = vunpack.c.l.b16 %v9489
    %v9554 = vunpack.c.l.b16 %v9490
    %v9555 = vunpack.c.l.b16 %v9491
    %v9556 = vunpack.c.l.b16 %v9492
    %v9557 = vunpack.c.l.b16 %v9493
    %v9558 = vunpack.c.l.b16 %v9494
    %v9559 = vunpack.c.l.b16 %v9495
    %v9560 = vunpack.c.l.b16 %v9496
    %v9561 = vunpack.c.l.b16 %v9497
    %v9562 = vunpack.c.l.b16 %v9498
    %v9563 = vunpack.c.l.b16 %v9499
    %v9564 = vunpack.c.l.b16 %v9500
    %v9565 = vunpack.c.l.b16 %v9501
    %v9566 = vpack.c.b16 %v9535, %v9534
    %v9567 = vpack.c.b16 %v9537, %v9536
    %v9568 = vpack.c.b16 %v9539, %v9538
    %v9569 = vpack.c.b16 %v9541, %v9540
    %v9570 = vpack.c.b16 %v9543, %v9542
    %v9571 = vpack.c.b16 %v9545, %v9544
    %v9572 = vpack.c.b16 %v9547, %v9546
    %v9573 = vpack.c.b16 %v9549, %v9548
    %v9574 = vpack.c.b16 %v9551, %v9550
    %v9575 = vpack.c.b16 %v9553, %v9552
    %v9576 = vpack.c.b16 %v9555, %v9554
    %v9577 = vpack.c.b16 %v9557, %v9556
    %v9578 = vpack.c.b16 %v9559, %v9558
    %v9579 = vpack.c.b16 %v9561, %v9560
    %v9580 = vpack.c.b16 %v9563, %v9562
    %v9581 = vpack.c.b16 %v9565, %v9564
    %9598 = vmatprep.subr.bf16.mxu0 0
    %9599 = vmatpush1.bf16.msra.mxu0 %v9566
    %9600 = vmatprep.subr.bf16.mxu0 0
    %9601 = vmatpush1.bf16.msra.mxu0 %v9567
    %9602 = vmatprep.subr.bf16.mxu0 0
    %9603 = vmatpush1.bf16.msra.mxu0 %v9568
    %9604 = vmatprep.subr.bf16.mxu0 0
    %9605 = vmatpush1.bf16.msra.mxu0 %v9569
    %9606 = vmatprep.subr.bf16.mxu0 0
    %9607 = vmatpush1.bf16.msra.mxu0 %v9570
    %9608 = vmatprep.subr.bf16.mxu0 0
    %9609 = vmatpush1.bf16.msra.mxu0 %v9571
    %9610 = vmatprep.subr.bf16.mxu0 0
    %9611 = vmatpush1.bf16.msra.mxu0 %v9572
    %9612 = vmatprep.subr.bf16.mxu0 0
    %9613 = vmatpush1.bf16.msra.mxu0 %v9573
    %9614 = vmatprep.subr.bf16.mxu0 0
    %9615 = vmatpush1.bf16.msra.mxu0 %v9574
    %9616 = vmatprep.subr.bf16.mxu0 0
    %9617 = vmatpush1.bf16.msra.mxu0 %v9575
    %9618 = vmatprep.subr.bf16.mxu0 0
    %9619 = vmatpush1.bf16.msra.mxu0 %v9576
    %9620 = vmatprep.subr.bf16.mxu0 0
    %9621 = vmatpush1.bf16.msra.mxu0 %v9577
    %9622 = vmatprep.subr.bf16.mxu0 0
    %9623 = vmatpush1.bf16.msra.mxu0 %v9578
    %9624 = vmatprep.subr.bf16.mxu0 0
    %9625 = vmatpush1.bf16.msra.mxu0 %v9579
    %9626 = vmatprep.subr.bf16.mxu0 0
    %9627 = vmatpush1.bf16.msra.mxu0 %v9580
    %9628 = vmatprep.subr.bf16.mxu0 0
    %9629 = vmatpush1.bf16.msra.mxu0 %v9581
    %9630 = vmatprep.mubr.bf16.mxu0 %v8486
    %9631 = vmatmul.mubr.bf16.gmra.mrb[0].mxu0 %v8485
    %v9632 = vpop.f32.mrb[0].mxu0
    %v9633 = vadd.f32 0.0, %v9632
    %v9634 = vpop.f32.mrb[0].mxu0
    %v9635 = vpop.f32.mrb[0].mxu0
    %v9636 = vadd.f32 0.0, %v9635
    %v9637 = vpop.f32.mrb[0].mxu0
    %9638 = vmatprep.mubr.bf16.mxu0 %v8488
    %9639 = vmatmul.mubr.bf16.gmra.mrb[0].mxu0 %v8487
    %v9640 = vpop.f32.mrb[0].mxu0
    %v9641 = vadd.f32 0.0, %v9640
    %v9642 = vpop.f32.mrb[0].mxu0
    %v9643 = vpop.f32.mrb[0].mxu0
    %v9644 = vadd.f32 0.0, %v9643
    %v9645 = vpop.f32.mrb[0].mxu0
    %9646 = vmatprep.mubr.bf16.mxu0 %v8490
    %9647 = vmatmul.mubr.bf16.gmra.mrb[0].mxu0 %v8489
    %v9648 = vpop.f32.mrb[0].mxu0
    %v9649 = vadd.f32 0.0, %v9648
    %v9650 = vpop.f32.mrb[0].mxu0
    %v9651 = vpop.f32.mrb[0].mxu0
    %v9652 = vadd.f32 0.0, %v9651
    %v9653 = vpop.f32.mrb[0].mxu0
    %9654 = vmatprep.mubr.bf16.mxu0 %v8492
    %9655 = vmatmul.mubr.bf16.gmra.mrb[0].mxu0 %v8491
    %v9656 = vpop.f32.mrb[0].mxu0
    %v9657 = vadd.f32 0.0, %v9656
    %v9658 = vpop.f32.mrb[0].mxu0
    %v9659 = vpop.f32.mrb[0].mxu0
    %v9660 = vadd.f32 0.0, %v9659
    %v9661 = vpop.f32.mrb[0].mxu0
    %9662 = vdwg.mxu0
    %v9663 = vadd.f32 %v9439, %v9633
    %v9664 = vadd.f32 %v9442, %v9636
    %v9665 = vadd.f32 %v9447, %v9641
    %v9666 = vadd.f32 %v9450, %v9644
    %v9667 = vadd.f32 %v9455, %v9649
    %v9668 = vadd.f32 %v9458, %v9652
    %v9669 = vadd.f32 %v9463, %v9657
    %v9670 = vadd.f32 %v9466, %v9660
    %v9671 = vmax.f32 %v9074, %v9663
    %v9672 = vmax.f32 %v9075, %v9664
    %v9673 = vmax.f32 %v9076, %v9665
    %v9674 = vmax.f32 %v9077, %v9666
    %v9675 = vmax.f32 %v9078, %v9667
    %v9676 = vmax.f32 %v9079, %v9668
    %v9677 = vmax.f32 %v9080, %v9669
    %v9678 = vmax.f32 %v9081, %v9670
    %v9679 = vld [vmem:[%s10] sm:$0x1]
    %v9681 = vlaneseq
    %v9682 = vshrl.u32 %v9681, 7
    %v9683 = vsub.s32 0, %v9682
    %v9684 = vrot.slane %v9679, %v9683
    %v9686 = vadd.f32 %v9671, %v9684
    %v9687 = vadd.f32 %v9672, %v9684
    %v9688 = vadd.f32 %v9673, %v9684
    %v9689 = vadd.f32 %v9674, %v9684
    %v9690 = vadd.f32 %v9675, %v9684
    %v9691 = vadd.f32 %v9676, %v9684
    %v9692 = vadd.f32 %v9677, %v9684
    %v9693 = vadd.f32 %v9678, %v9684
    %v9694 = vmax.f32 %v9686, 0.0
    %v9695 = vmax.f32 %v9687, 0.0
    %v9696 = vmax.f32 %v9688, 0.0
    %v9697 = vmax.f32 %v9689, 0.0
    %v9698 = vmax.f32 %v9690, 0.0
    %v9699 = vmax.f32 %v9691, 0.0
    %v9700 = vmax.f32 %v9692, 0.0
    %v9701 = vmax.f32 %v9693, 0.0
    %v9702 = vld [vmem:[%s14] sm:$0xff]
    %v9703 = vld [vmem:[%s14 + $0x8] sm:$0xff]
    %v9704 = vld [vmem:[%s14 + $0x10] sm:$0xff]
    %v9705 = vld [vmem:[%s14 + $0x18] sm:$0xff]
    %v9707 = vsel %vm7250, %v9702, 0
    %v9710 = vsel %vm7250, %v9703, 0
    %v9713 = vsel %vm7250, %v9704, 0
    %v9716 = vsel %vm7250, %v9705, 0
    %9718 = vmatprep.subr.mxu0 0.0
    %v9719 = vand.u32 %v9694, 4294901760
    %9720 = vmatpush1.msra.mxu0 %v9719
    %9721 = vmatprep.subr.mxu0 0.0
    %v9722 = vand.u32 %v9695, 4294901760
    %9723 = vmatpush1.msra.mxu0 %v9722
    %9724 = vmatprep.subr.mxu0 0.0
    %v9725 = vand.u32 %v9696, 4294901760
    %9726 = vmatpush1.msra.mxu0 %v9725
    %9727 = vmatprep.subr.mxu0 0.0
    %v9728 = vand.u32 %v9697, 4294901760
    %9729 = vmatpush1.msra.mxu0 %v9728
    %9730 = vmatprep.subr.mxu0 0.0
    %v9731 = vand.u32 %v9698, 4294901760
    %9732 = vmatpush1.msra.mxu0 %v9731
    %9733 = vmatprep.subr.mxu0 0.0
    %v9734 = vand.u32 %v9699, 4294901760
    %9735 = vmatpush1.msra.mxu0 %v9734
    %9736 = vmatprep.subr.mxu0 0.0
    %v9737 = vand.u32 %v9700, 4294901760
    %9738 = vmatpush1.msra.mxu0 %v9737
    %9739 = vmatprep.subr.mxu0 0.0
    %v9740 = vand.u32 %v9701, 4294901760
    %9741 = vmatpush1.msra.mxu0 %v9740
    %9742 = vmatprep.subr.mxu0 0.0
    %9743 = vmatpush1.msra.mxu0 0.0
    %9744 = vmatprep.subr.mxu0 0.0
    %9745 = vmatpush1.msra.mxu0 0.0
    %9746 = vmatprep.subr.mxu0 0.0
    %9747 = vmatpush1.msra.mxu0 0.0
    %9748 = vmatprep.subr.mxu0 0.0
    %9749 = vmatpush1.msra.mxu0 0.0
    %9750 = vmatprep.subr.mxu0 0.0
    %9751 = vmatpush1.msra.mxu0 0.0
    %9752 = vmatprep.subr.mxu0 0.0
    %9753 = vmatpush1.msra.mxu0 0.0
    %9754 = vmatprep.subr.mxu0 0.0
    %9755 = vmatpush1.msra.mxu0 0.0
    %9756 = vmatprep.subr.mxu0 0.0
    %9757 = vmatpush1.msra.mxu0 0.0
    %9758 = vmatprep.subr.mxu0 0.0
    %9759 = vmatpush1.msra.mxu0 0.0
    %9760 = vmatprep.subr.mxu0 0.0
    %9761 = vmatpush1.msra.mxu0 0.0
    %9762 = vmatprep.subr.mxu0 0.0
    %9763 = vmatpush1.msra.mxu0 0.0
    %9764 = vmatprep.subr.mxu0 0.0
    %9765 = vmatpush1.msra.mxu0 0.0
    %9766 = vmatprep.subr.mxu0 0.0
    %9767 = vmatpush1.msra.mxu0 0.0
    %9768 = vmatprep.subr.mxu0 0.0
    %9769 = vmatpush1.msra.mxu0 0.0
    %9770 = vmatprep.subr.mxu0 0.0
    %9771 = vmatpush1.msra.mxu0 0.0
    %9772 = vmatprep.subr.mxu0 0.0
    %9773 = vmatpush1.msra.mxu0 0.0
    %9774 = vmatprep.subr.mxu0 0.0
    %9775 = vmatpush1.msra.mxu0 0.0
    %9776 = vmatprep.subr.mxu0 0.0
    %9777 = vmatpush1.msra.mxu0 0.0
    %9778 = vmatprep.subr.mxu0 0.0
    %9779 = vmatpush1.msra.mxu0 0.0
    %9780 = vmatprep.subr.mxu0 0.0
    %9781 = vmatpush1.msra.mxu0 0.0
    %9782 = vmatprep.subr.mxu0 0.0
    %9783 = vmatpush1.msra.mxu0 0.0
    %9784 = vmatprep.subr.mxu0 0.0
    %9785 = vmatpush1.msra.mxu0 0.0
    %9786 = vmatprep.subr.mxu0 0.0
    %9787 = vmatpush1.msra.mxu0 0.0
    %9788 = vmatprep.subr.mxu0 0.0
    %9789 = vmatpush1.msra.mxu0 0.0
    %9790 = vmatprep.mubr.f32.mxu0 0.0
    %v9791 = vand.u32 %v9707, 4294901760
    %v9792 = vsub.f32 %v9707, %v9791
    %v9793 = vand.u32 %v9792, 4294901760
    %v9794 = vsub.f32 %v9792, %v9793
    %v9795 = vand.u32 %v9794, 4294901760
    %9796 = vmatmul.mubr.f32.gmra.mrb[0].mxu0 %v9795
    %v9797 = vpop.f32.mrb[0].mxu0
    %v9798 = vadd.f32 0.0, %v9797
    %v9799 = vpop.f32.mrb[0].mxu0
    %9800 = vmatprep.mubr.f32.mxu0 0.0
    %v9801 = vand.u32 %v9710, 4294901760
    %v9802 = vsub.f32 %v9710, %v9801
    %v9803 = vand.u32 %v9802, 4294901760
    %v9804 = vsub.f32 %v9802, %v9803
    %v9805 = vand.u32 %v9804, 4294901760
    %9806 = vmatmul.mubr.f32.gmra.mrb[0].mxu0 %v9805
    %v9807 = vpop.f32.mrb[0].mxu0
    %v9808 = vadd.f32 0.0, %v9807
    %v9809 = vpop.f32.mrb[0].mxu0
    %9810 = vmatprep.mubr.f32.mxu0 0.0
    %v9811 = vand.u32 %v9713, 4294901760
    %v9812 = vsub.f32 %v9713, %v9811
    %v9813 = vand.u32 %v9812, 4294901760
    %v9814 = vsub.f32 %v9812, %v9813
    %v9815 = vand.u32 %v9814, 4294901760
    %9816 = vmatmul.mubr.f32.gmra.mrb[0].mxu0 %v9815
    %v9817 = vpop.f32.mrb[0].mxu0
    %v9818 = vadd.f32 0.0, %v9817
    %v9819 = vpop.f32.mrb[0].mxu0
    %9820 = vmatprep.mubr.f32.mxu0 0.0
    %v9821 = vand.u32 %v9716, 4294901760
    %v9822 = vsub.f32 %v9716, %v9821
    %v9823 = vand.u32 %v9822, 4294901760
    %v9824 = vsub.f32 %v9822, %v9823
    %v9825 = vand.u32 %v9824, 4294901760
    %9826 = vmatmul.mubr.f32.gmra.mrb[0].mxu0 %v9825
    %v9827 = vpop.f32.mrb[0].mxu0
    %v9828 = vadd.f32 0.0, %v9827
    %v9829 = vpop.f32.mrb[0].mxu0
    %9830 = vdwg.mxu0
    %9831 = vmatprep.subr.mxu0 0.0
    %v9832 = vand.u32 %v9694, 4294901760
    %v9833 = vsub.f32 %v9694, %v9832
    %v9834 = vand.u32 %v9833, 4294901760
    %v9835 = vsub.f32 %v9833, %v9834
    %v9836 = vand.u32 %v9835, 4294901760
    %9837 = vmatpush1.msra.mxu0 %v9836
    %9838 = vmatprep.subr.mxu0 0.0
    %v9839 = vand.u32 %v9695, 4294901760
    %v9840 = vsub.f32 %v9695, %v9839
    %v9841 = vand.u32 %v9840, 4294901760
    %v9842 = vsub.f32 %v9840, %v9841
    %v9843 = vand.u32 %v9842, 4294901760
    %9844 = vmatpush1.msra.mxu0 %v9843
    %9845 = vmatprep.subr.mxu0 0.0
    %v9846 = vand.u32 %v9696, 4294901760
    %v9847 = vsub.f32 %v9696, %v9846
    %v9848 = vand.u32 %v9847, 4294901760
    %v9849 = vsub.f32 %v9847, %v9848
    %v9850 = vand.u32 %v9849, 4294901760
    %9851 = vmatpush1.msra.mxu0 %v9850
    %9852 = vmatprep.subr.mxu0 0.0
    %v9853 = vand.u32 %v9697, 4294901760
    %v9854 = vsub.f32 %v9697, %v9853
    %v9855 = vand.u32 %v9854, 4294901760
    %v9856 = vsub.f32 %v9854, %v9855
    %v9857 = vand.u32 %v9856, 4294901760
    %9858 = vmatpush1.msra.mxu0 %v9857
    %9859 = vmatprep.subr.mxu0 0.0
    %v9860 = vand.u32 %v9698, 4294901760
    %v9861 = vsub.f32 %v9698, %v9860
    %v9862 = vand.u32 %v9861, 4294901760
    %v9863 = vsub.f32 %v9861, %v9862
    %v9864 = vand.u32 %v9863, 4294901760
    %9865 = vmatpush1.msra.mxu0 %v9864
    %9866 = vmatprep.subr.mxu0 0.0
    %v9867 = vand.u32 %v9699, 4294901760
    %v9868 = vsub.f32 %v9699, %v9867
    %v9869 = vand.u32 %v9868, 4294901760
    %v9870 = vsub.f32 %v9868, %v9869
    %v9871 = vand.u32 %v9870, 4294901760
    %9872 = vmatpush1.msra.mxu0 %v9871
    %9873 = vmatprep.subr.mxu0 0.0
    %v9874 = vand.u32 %v9700, 4294901760
    %v9875 = vsub.f32 %v9700, %v9874
    %v9876 = vand.u32 %v9875, 4294901760
    %v9877 = vsub.f32 %v9875, %v9876
    %v9878 = vand.u32 %v9877, 4294901760
    %9879 = vmatpush1.msra.mxu0 %v9878
    %9880 = vmatprep.subr.mxu0 0.0
    %v9881 = vand.u32 %v9701, 4294901760
    %v9882 = vsub.f32 %v9701, %v9881
    %v9883 = vand.u32 %v9882, 4294901760
    %v9884 = vsub.f32 %v9882, %v9883
    %v9885 = vand.u32 %v9884, 4294901760
    %9886 = vmatpush1.msra.mxu0 %v9885
    %9887 = vmatprep.subr.mxu0 0.0
    %9888 = vmatpush1.msra.mxu0 0.0
    %9889 = vmatprep.subr.mxu0 0.0
    %9890 = vmatpush1.msra.mxu0 0.0
    %9891 = vmatprep.subr.mxu0 0.0
    %9892 = vmatpush1.msra.mxu0 0.0
    %9893 = vmatprep.subr.mxu0 0.0
    %9894 = vmatpush1.msra.mxu0 0.0
    %9895 = vmatprep.subr.mxu0 0.0
    %9896 = vmatpush1.msra.mxu0 0.0
    %9897 = vmatprep.subr.mxu0 0.0
    %9898 = vmatpush1.msra.mxu0 0.0
    %9899 = vmatprep.subr.mxu0 0.0
    %9900 = vmatpush1.msra.mxu0 0.0
    %9901 = vmatprep.subr.mxu0 0.0
    %9902 = vmatpush1.msra.mxu0 0.0
    %9903 = vmatprep.subr.mxu0 0.0
    %9904 = vmatpush1.msra.mxu0 0.0
    %9905 = vmatprep.subr.mxu0 0.0
    %9906 = vmatpush1.msra.mxu0 0.0
    %9907 = vmatprep.subr.mxu0 0.0
    %9908 = vmatpush1.msra.mxu0 0.0
    %9909 = vmatprep.subr.mxu0 0.0
    %9910 = vmatpush1.msra.mxu0 0.0
    %9911 = vmatprep.subr.mxu0 0.0
    %9912 = vmatpush1.msra.mxu0 0.0
    %9913 = vmatprep.subr.mxu0 0.0
    %9914 = vmatpush1.msra.mxu0 0.0
    %9915 = vmatprep.subr.mxu0 0.0
    %9916 = vmatpush1.msra.mxu0 0.0
    %9917 = vmatprep.subr.mxu0 0.0
    %9918 = vmatpush1.msra.mxu0 0.0
    %9919 = vmatprep.subr.mxu0 0.0
    %9920 = vmatpush1.msra.mxu0 0.0
    %9921 = vmatprep.subr.mxu0 0.0
    %9922 = vmatpush1.msra.mxu0 0.0
    %9923 = vmatprep.subr.mxu0 0.0
    %9924 = vmatpush1.msra.mxu0 0.0
    %9925 = vmatprep.subr.mxu0 0.0
    %9926 = vmatpush1.msra.mxu0 0.0
    %9927 = vmatprep.subr.mxu0 0.0
    %9928 = vmatpush1.msra.mxu0 0.0
    %9929 = vmatprep.subr.mxu0 0.0
    %9930 = vmatpush1.msra.mxu0 0.0
    %9931 = vmatprep.subr.mxu0 0.0
    %9932 = vmatpush1.msra.mxu0 0.0
    %9933 = vmatprep.subr.mxu0 0.0
    %9934 = vmatpush1.msra.mxu0 0.0
    %9935 = vmatprep.mubr.f32.mxu0 0.0
    %v9936 = vand.u32 %v9707, 4294901760
    %9937 = vmatmul.mubr.f32.gmra.mrb[0].mxu0 %v9936
    %v9938 = vpop.f32.mrb[0].mxu0
    %v9939 = vadd.f32 %v9798, %v9938
    %v9940 = vpop.f32.mrb[0].mxu0
    %9941 = vmatprep.mubr.f32.mxu0 0.0
    %v9942 = vand.u32 %v9710, 4294901760
    %9943 = vmatmul.mubr.f32.gmra.mrb[0].mxu0 %v9942
    %v9944 = vpop.f32.mrb[0].mxu0
    %v9945 = vadd.f32 %v9808, %v9944
    %v9946 = vpop.f32.mrb[0].mxu0
    %9947 = vmatprep.mubr.f32.mxu0 0.0
    %v9948 = vand.u32 %v9713, 4294901760
    %9949 = vmatmul.mubr.f32.gmra.mrb[0].mxu0 %v9948
    %v9950 = vpop.f32.mrb[0].mxu0
    %v9951 = vadd.f32 %v9818, %v9950
    %v9952 = vpop.f32.mrb[0].mxu0
    %9953 = vmatprep.mubr.f32.mxu0 0.0
    %v9954 = vand.u32 %v9716, 4294901760
    %9955 = vmatmul.mubr.f32.gmra.mrb[0].mxu0 %v9954
    %v9956 = vpop.f32.mrb[0].mxu0
    %v9957 = vadd.f32 %v9828, %v9956
    %v9958 = vpop.f32.mrb[0].mxu0
    %9959 = vdwg.mxu0
    %9960 = vmatprep.subr.mxu0 0.0
    %v9961 = vand.u32 %v9694, 4294901760
    %v9962 = vsub.f32 %v9694, %v9961
    %9963 = vmatpush1.msra.mxu0 %v9962
    %9964 = vmatprep.subr.mxu0 0.0
    %v9965 = vand.u32 %v9695, 4294901760
    %v9966 = vsub.f32 %v9695, %v9965
    %9967 = vmatpush1.msra.mxu0 %v9966
    %9968 = vmatprep.subr.mxu0 0.0
    %v9969 = vand.u32 %v9696, 4294901760
    %v9970 = vsub.f32 %v9696, %v9969
    %9971 = vmatpush1.msra.mxu0 %v9970
    %9972 = vmatprep.subr.mxu0 0.0
    %v9973 = vand.u32 %v9697, 4294901760
    %v9974 = vsub.f32 %v9697, %v9973
    %9975 = vmatpush1.msra.mxu0 %v9974
    %9976 = vmatprep.subr.mxu0 0.0
    %v9977 = vand.u32 %v9698, 4294901760
    %v9978 = vsub.f32 %v9698, %v9977
    %9979 = vmatpush1.msra.mxu0 %v9978
    %9980 = vmatprep.subr.mxu0 0.0
    %v9981 = vand.u32 %v9699, 4294901760
    %v9982 = vsub.f32 %v9699, %v9981
    %9983 = vmatpush1.msra.mxu0 %v9982
    %9984 = vmatprep.subr.mxu0 0.0
    %v9985 = vand.u32 %v9700, 4294901760
    %v9986 = vsub.f32 %v9700, %v9985
    %9987 = vmatpush1.msra.mxu0 %v9986
    %9988 = vmatprep.subr.mxu0 0.0
    %v9989 = vand.u32 %v9701, 4294901760
    %v9990 = vsub.f32 %v9701, %v9989
    %9991 = vmatpush1.msra.mxu0 %v9990
    %9992 = vmatprep.subr.mxu0 0.0
    %9993 = vmatpush1.msra.mxu0 0.0
    %9994 = vmatprep.subr.mxu0 0.0
    %9995 = vmatpush1.msra.mxu0 0.0
    %9996 = vmatprep.subr.mxu0 0.0
    %9997 = vmatpush1.msra.mxu0 0.0
    %9998 = vmatprep.subr.mxu0 0.0
    %9999 = vmatpush1.msra.mxu0 0.0
    %10000 = vmatprep.subr.mxu0 0.0
    %10001 = vmatpush1.msra.mxu0 0.0
    %10002 = vmatprep.subr.mxu0 0.0
    %10003 = vmatpush1.msra.mxu0 0.0
    %10004 = vmatprep.subr.mxu0 0.0
    %10005 = vmatpush1.msra.mxu0 0.0
    %10006 = vmatprep.subr.mxu0 0.0
    %10007 = vmatpush1.msra.mxu0 0.0
    %10008 = vmatprep.subr.mxu0 0.0
    %10009 = vmatpush1.msra.mxu0 0.0
    %10010 = vmatprep.subr.mxu0 0.0
    %10011 = vmatpush1.msra.mxu0 0.0
    %10012 = vmatprep.subr.mxu0 0.0
    %10013 = vmatpush1.msra.mxu0 0.0
    %10014 = vmatprep.subr.mxu0 0.0
    %10015 = vmatpush1.msra.mxu0 0.0
    %10016 = vmatprep.subr.mxu0 0.0
    %10017 = vmatpush1.msra.mxu0 0.0
    %10018 = vmatprep.subr.mxu0 0.0
    %10019 = vmatpush1.msra.mxu0 0.0
    %10020 = vmatprep.subr.mxu0 0.0
    %10021 = vmatpush1.msra.mxu0 0.0
    %10022 = vmatprep.subr.mxu0 0.0
    %10023 = vmatpush1.msra.mxu0 0.0
    %10024 = vmatprep.subr.mxu0 0.0
    %10025 = vmatpush1.msra.mxu0 0.0
    %10026 = vmatprep.subr.mxu0 0.0
    %10027 = vmatpush1.msra.mxu0 0.0
    %10028 = vmatprep.subr.mxu0 0.0
    %10029 = vmatpush1.msra.mxu0 0.0
    %10030 = vmatprep.subr.mxu0 0.0
    %10031 = vmatpush1.msra.mxu0 0.0
    %10032 = vmatprep.subr.mxu0 0.0
    %10033 = vmatpush1.msra.mxu0 0.0
    %10034 = vmatprep.subr.mxu0 0.0
    %10035 = vmatpush1.msra.mxu0 0.0
    %10036 = vmatprep.subr.mxu0 0.0
    %10037 = vmatpush1.msra.mxu0 0.0
    %10038 = vmatprep.subr.mxu0 0.0
    %10039 = vmatpush1.msra.mxu0 0.0
    %10040 = vmatprep.mubr.f32.mxu0 0.0
    %v10041 = vand.u32 %v9707, 4294901760
    %v10042 = vsub.f32 %v9707, %v10041
    %10043 = vmatmul.mubr.f32.gmra.mrb[0].mxu0 %v10042
    %v10044 = vpop.f32.mrb[0].mxu0
    %v10045 = vadd.f32 %v9939, %v10044
    %v10046 = vpop.f32.mrb[0].mxu0
    %10047 = vmatprep.mubr.f32.mxu0 0.0
    %v10048 = vand.u32 %v9710, 4294901760
    %v10049 = vsub.f32 %v9710, %v10048
    %10050 = vmatmul.mubr.f32.gmra.mrb[0].mxu0 %v10049
    %v10051 = vpop.f32.mrb[0].mxu0
    %v10052 = vadd.f32 %v9945, %v10051
    %v10053 = vpop.f32.mrb[0].mxu0
    %10054 = vmatprep.mubr.f32.mxu0 0.0
    %v10055 = vand.u32 %v9713, 4294901760
    %v10056 = vsub.f32 %v9713, %v10055
    %10057 = vmatmul.mubr.f32.gmra.mrb[0].mxu0 %v10056
    %v10058 = vpop.f32.mrb[0].mxu0
    %v10059 = vadd.f32 %v9951, %v10058
    %v10060 = vpop.f32.mrb[0].mxu0
    %10061 = vmatprep.mubr.f32.mxu0 0.0
    %v10062 = vand.u32 %v9716, 4294901760
    %v10063 = vsub.f32 %v9716, %v10062
    %10064 = vmatmul.mubr.f32.gmra.mrb[0].mxu0 %v10063
    %v10065 = vpop.f32.mrb[0].mxu0
    %v10066 = vadd.f32 %v9957, %v10065
    %v10067 = vpop.f32.mrb[0].mxu0
    %10068 = vdwg.mxu0
    %10069 = vmatprep.subr.mxu0 0.0
    %v10070 = vand.u32 %v9694, 4294901760
    %10071 = vmatpush1.msra.mxu0 %v10070
    %10072 = vmatprep.subr.mxu0 0.0
    %v10073 = vand.u32 %v9695, 4294901760
    %10074 = vmatpush1.msra.mxu0 %v10073
    %10075 = vmatprep.subr.mxu0 0.0
    %v10076 = vand.u32 %v9696, 4294901760
    %10077 = vmatpush1.msra.mxu0 %v10076
    %10078 = vmatprep.subr.mxu0 0.0
    %v10079 = vand.u32 %v9697, 4294901760
    %10080 = vmatpush1.msra.mxu0 %v10079
    %10081 = vmatprep.subr.mxu0 0.0
    %v10082 = vand.u32 %v9698, 4294901760
    %10083 = vmatpush1.msra.mxu0 %v10082
    %10084 = vmatprep.subr.mxu0 0.0
    %v10085 = vand.u32 %v9699, 4294901760
    %10086 = vmatpush1.msra.mxu0 %v10085
    %10087 = vmatprep.subr.mxu0 0.0
    %v10088 = vand.u32 %v9700, 4294901760
    %10089 = vmatpush1.msra.mxu0 %v10088
    %10090 = vmatprep.subr.mxu0 0.0
    %v10091 = vand.u32 %v9701, 4294901760
    %10092 = vmatpush1.msra.mxu0 %v10091
    %10093 = vmatprep.subr.mxu0 0.0
    %10094 = vmatpush1.msra.mxu0 0.0
    %10095 = vmatprep.subr.mxu0 0.0
    %10096 = vmatpush1.msra.mxu0 0.0
    %10097 = vmatprep.subr.mxu0 0.0
    %10098 = vmatpush1.msra.mxu0 0.0
    %10099 = vmatprep.subr.mxu0 0.0
    %10100 = vmatpush1.msra.mxu0 0.0
    %10101 = vmatprep.subr.mxu0 0.0
    %10102 = vmatpush1.msra.mxu0 0.0
    %10103 = vmatprep.subr.mxu0 0.0
    %10104 = vmatpush1.msra.mxu0 0.0
    %10105 = vmatprep.subr.mxu0 0.0
    %10106 = vmatpush1.msra.mxu0 0.0
    %10107 = vmatprep.subr.mxu0 0.0
    %10108 = vmatpush1.msra.mxu0 0.0
    %10109 = vmatprep.subr.mxu0 0.0
    %10110 = vmatpush1.msra.mxu0 0.0
    %10111 = vmatprep.subr.mxu0 0.0
    %10112 = vmatpush1.msra.mxu0 0.0
    %10113 = vmatprep.subr.mxu0 0.0
    %10114 = vmatpush1.msra.mxu0 0.0
    %10115 = vmatprep.subr.mxu0 0.0
    %10116 = vmatpush1.msra.mxu0 0.0
    %10117 = vmatprep.subr.mxu0 0.0
    %10118 = vmatpush1.msra.mxu0 0.0
    %10119 = vmatprep.subr.mxu0 0.0
    %10120 = vmatpush1.msra.mxu0 0.0
    %10121 = vmatprep.subr.mxu0 0.0
    %10122 = vmatpush1.msra.mxu0 0.0
    %10123 = vmatprep.subr.mxu0 0.0
    %10124 = vmatpush1.msra.mxu0 0.0
    %10125 = vmatprep.subr.mxu0 0.0
    %10126 = vmatpush1.msra.mxu0 0.0
    %10127 = vmatprep.subr.mxu0 0.0
    %10128 = vmatpush1.msra.mxu0 0.0
    %10129 = vmatprep.subr.mxu0 0.0
    %10130 = vmatpush1.msra.mxu0 0.0
    %10131 = vmatprep.subr.mxu0 0.0
    %10132 = vmatpush1.msra.mxu0 0.0
    %10133 = vmatprep.subr.mxu0 0.0
    %10134 = vmatpush1.msra.mxu0 0.0
    %10135 = vmatprep.subr.mxu0 0.0
    %10136 = vmatpush1.msra.mxu0 0.0
    %10137 = vmatprep.subr.mxu0 0.0
    %10138 = vmatpush1.msra.mxu0 0.0
    %10139 = vmatprep.subr.mxu0 0.0
    %10140 = vmatpush1.msra.mxu0 0.0
    %10141 = vmatprep.mubr.f32.mxu0 0.0
    %v10142 = vand.u32 %v9707, 4294901760
    %v10143 = vsub.f32 %v9707, %v10142
    %v10144 = vand.u32 %v10143, 4294901760
    %10145 = vmatmul.mubr.f32.gmra.mrb[0].mxu0 %v10144
    %v10146 = vpop.f32.mrb[0].mxu0
    %v10147 = vadd.f32 %v10045, %v10146
    %v10148 = vpop.f32.mrb[0].mxu0
    %10149 = vmatprep.mubr.f32.mxu0 0.0
    %v10150 = vand.u32 %v9710, 4294901760
    %v10151 = vsub.f32 %v9710, %v10150
    %v10152 = vand.u32 %v10151, 4294901760
    %10153 = vmatmul.mubr.f32.gmra.mrb[0].mxu0 %v10152
    %v10154 = vpop.f32.mrb[0].mxu0
    %v10155 = vadd.f32 %v10052, %v10154
    %v10156 = vpop.f32.mrb[0].mxu0
    %10157 = vmatprep.mubr.f32.mxu0 0.0
    %v10158 = vand.u32 %v9713, 4294901760
    %v10159 = vsub.f32 %v9713, %v10158
    %v10160 = vand.u32 %v10159, 4294901760
    %10161 = vmatmul.mubr.f32.gmra.mrb[0].mxu0 %v10160
    %v10162 = vpop.f32.mrb[0].mxu0
    %v10163 = vadd.f32 %v10059, %v10162
    %v10164 = vpop.f32.mrb[0].mxu0
    %10165 = vmatprep.mubr.f32.mxu0 0.0
    %v10166 = vand.u32 %v9716, 4294901760
    %v10167 = vsub.f32 %v9716, %v10166
    %v10168 = vand.u32 %v10167, 4294901760
    %10169 = vmatmul.mubr.f32.gmra.mrb[0].mxu0 %v10168
    %v10170 = vpop.f32.mrb[0].mxu0
    %v10171 = vadd.f32 %v10066, %v10170
    %v10172 = vpop.f32.mrb[0].mxu0
    %10173 = vdwg.mxu0
    %10174 = vmatprep.subr.mxu0 0.0
    %v10175 = vand.u32 %v9694, 4294901760
    %v10176 = vsub.f32 %v9694, %v10175
    %v10177 = vand.u32 %v10176, 4294901760
    %10178 = vmatpush1.msra.mxu0 %v10177
    %10179 = vmatprep.subr.mxu0 0.0
    %v10180 = vand.u32 %v9695, 4294901760
    %v10181 = vsub.f32 %v9695, %v10180
    %v10182 = vand.u32 %v10181, 4294901760
    %10183 = vmatpush1.msra.mxu0 %v10182
    %10184 = vmatprep.subr.mxu0 0.0
    %v10185 = vand.u32 %v9696, 4294901760
    %v10186 = vsub.f32 %v9696, %v10185
    %v10187 = vand.u32 %v10186, 4294901760
    %10188 = vmatpush1.msra.mxu0 %v10187
    %10189 = vmatprep.subr.mxu0 0.0
    %v10190 = vand.u32 %v9697, 4294901760
    %v10191 = vsub.f32 %v9697, %v10190
    %v10192 = vand.u32 %v10191, 4294901760
    %10193 = vmatpush1.msra.mxu0 %v10192
    %10194 = vmatprep.subr.mxu0 0.0
    %v10195 = vand.u32 %v9698, 4294901760
    %v10196 = vsub.f32 %v9698, %v10195
    %v10197 = vand.u32 %v10196, 4294901760
    %10198 = vmatpush1.msra.mxu0 %v10197
    %10199 = vmatprep.subr.mxu0 0.0
    %v10200 = vand.u32 %v9699, 4294901760
    %v10201 = vsub.f32 %v9699, %v10200
    %v10202 = vand.u32 %v10201, 4294901760
    %10203 = vmatpush1.msra.mxu0 %v10202
    %10204 = vmatprep.subr.mxu0 0.0
    %v10205 = vand.u32 %v9700, 4294901760
    %v10206 = vsub.f32 %v9700, %v10205
    %v10207 = vand.u32 %v10206, 4294901760
    %10208 = vmatpush1.msra.mxu0 %v10207
    %10209 = vmatprep.subr.mxu0 0.0
    %v10210 = vand.u32 %v9701, 4294901760
    %v10211 = vsub.f32 %v9701, %v10210
    %v10212 = vand.u32 %v10211, 4294901760
    %10213 = vmatpush1.msra.mxu0 %v10212
    %10214 = vmatprep.subr.mxu0 0.0
    %10215 = vmatpush1.msra.mxu0 0.0
    %10216 = vmatprep.subr.mxu0 0.0
    %10217 = vmatpush1.msra.mxu0 0.0
    %10218 = vmatprep.subr.mxu0 0.0
    %10219 = vmatpush1.msra.mxu0 0.0
    %10220 = vmatprep.subr.mxu0 0.0
    %10221 = vmatpush1.msra.mxu0 0.0
    %10222 = vmatprep.subr.mxu0 0.0
    %10223 = vmatpush1.msra.mxu0 0.0
    %10224 = vmatprep.subr.mxu0 0.0
    %10225 = vmatpush1.msra.mxu0 0.0
    %10226 = vmatprep.subr.mxu0 0.0
    %10227 = vmatpush1.msra.mxu0 0.0
    %10228 = vmatprep.subr.mxu0 0.0
    %10229 = vmatpush1.msra.mxu0 0.0
    %10230 = vmatprep.subr.mxu0 0.0
    %10231 = vmatpush1.msra.mxu0 0.0
    %10232 = vmatprep.subr.mxu0 0.0
    %10233 = vmatpush1.msra.mxu0 0.0
    %10234 = vmatprep.subr.mxu0 0.0
    %10235 = vmatpush1.msra.mxu0 0.0
    %10236 = vmatprep.subr.mxu0 0.0
    %10237 = vmatpush1.msra.mxu0 0.0
    %10238 = vmatprep.subr.mxu0 0.0
    %10239 = vmatpush1.msra.mxu0 0.0
    %10240 = vmatprep.subr.mxu0 0.0
    %10241 = vmatpush1.msra.mxu0 0.0
    %10242 = vmatprep.subr.mxu0 0.0
    %10243 = vmatpush1.msra.mxu0 0.0
    %10244 = vmatprep.subr.mxu0 0.0
    %10245 = vmatpush1.msra.mxu0 0.0
    %10246 = vmatprep.subr.mxu0 0.0
    %10247 = vmatpush1.msra.mxu0 0.0
    %10248 = vmatprep.subr.mxu0 0.0
    %10249 = vmatpush1.msra.mxu0 0.0
    %10250 = vmatprep.subr.mxu0 0.0
    %10251 = vmatpush1.msra.mxu0 0.0
    %10252 = vmatprep.subr.mxu0 0.0
    %10253 = vmatpush1.msra.mxu0 0.0
    %10254 = vmatprep.subr.mxu0 0.0
    %10255 = vmatpush1.msra.mxu0 0.0
    %10256 = vmatprep.subr.mxu0 0.0
    %10257 = vmatpush1.msra.mxu0 0.0
    %10258 = vmatprep.subr.mxu0 0.0
    %10259 = vmatpush1.msra.mxu0 0.0
    %10260 = vmatprep.subr.mxu0 0.0
    %10261 = vmatpush1.msra.mxu0 0.0
    %10262 = vmatprep.mubr.f32.mxu0 0.0
    %v10263 = vand.u32 %v9707, 4294901760
    %10264 = vmatmul.mubr.f32.gmra.mrb[0].mxu0 %v10263
    %v10265 = vpop.f32.mrb[0].mxu0
    %v10266 = vadd.f32 %v10147, %v10265
    %v10267 = vpop.f32.mrb[0].mxu0
    %10268 = vmatprep.mubr.f32.mxu0 0.0
    %v10269 = vand.u32 %v9710, 4294901760
    %10270 = vmatmul.mubr.f32.gmra.mrb[0].mxu0 %v10269
    %v10271 = vpop.f32.mrb[0].mxu0
    %v10272 = vadd.f32 %v10155, %v10271
    %v10273 = vpop.f32.mrb[0].mxu0
    %10274 = vmatprep.mubr.f32.mxu0 0.0
    %v10275 = vand.u32 %v9713, 4294901760
    %10276 = vmatmul.mubr.f32.gmra.mrb[0].mxu0 %v10275
    %v10277 = vpop.f32.mrb[0].mxu0
    %v10278 = vadd.f32 %v10163, %v10277
    %v10279 = vpop.f32.mrb[0].mxu0
    %10280 = vmatprep.mubr.f32.mxu0 0.0
    %v10281 = vand.u32 %v9716, 4294901760
    %10282 = vmatmul.mubr.f32.gmra.mrb[0].mxu0 %v10281
    %v10283 = vpop.f32.mrb[0].mxu0
    %v10284 = vadd.f32 %v10171, %v10283
    %v10285 = vpop.f32.mrb[0].mxu0
    %10286 = vdwg.mxu0
    %10287 = vmatprep.subr.mxu0 0.0
    %v10288 = vand.u32 %v9694, 4294901760
    %10289 = vmatpush1.msra.mxu0 %v10288
    %10290 = vmatprep.subr.mxu0 0.0
    %v10291 = vand.u32 %v9695, 4294901760
    %10292 = vmatpush1.msra.mxu0 %v10291
    %10293 = vmatprep.subr.mxu0 0.0
    %v10294 = vand.u32 %v9696, 4294901760
    %10295 = vmatpush1.msra.mxu0 %v10294
    %10296 = vmatprep.subr.mxu0 0.0
    %v10297 = vand.u32 %v9697, 4294901760
    %10298 = vmatpush1.msra.mxu0 %v10297
    %10299 = vmatprep.subr.mxu0 0.0
    %v10300 = vand.u32 %v9698, 4294901760
    %10301 = vmatpush1.msra.mxu0 %v10300
    %10302 = vmatprep.subr.mxu0 0.0
    %v10303 = vand.u32 %v9699, 4294901760
    %10304 = vmatpush1.msra.mxu0 %v10303
    %10305 = vmatprep.subr.mxu0 0.0
    %v10306 = vand.u32 %v9700, 4294901760
    %10307 = vmatpush1.msra.mxu0 %v10306
    %10308 = vmatprep.subr.mxu0 0.0
    %v10309 = vand.u32 %v9701, 4294901760
    %10310 = vmatpush1.msra.mxu0 %v10309
    %10311 = vmatprep.subr.mxu0 0.0
    %10312 = vmatpush1.msra.mxu0 0.0
    %10313 = vmatprep.subr.mxu0 0.0
    %10314 = vmatpush1.msra.mxu0 0.0
    %10315 = vmatprep.subr.mxu0 0.0
    %10316 = vmatpush1.msra.mxu0 0.0
    %10317 = vmatprep.subr.mxu0 0.0
    %10318 = vmatpush1.msra.mxu0 0.0
    %10319 = vmatprep.subr.mxu0 0.0
    %10320 = vmatpush1.msra.mxu0 0.0
    %10321 = vmatprep.subr.mxu0 0.0
    %10322 = vmatpush1.msra.mxu0 0.0
    %10323 = vmatprep.subr.mxu0 0.0
    %10324 = vmatpush1.msra.mxu0 0.0
    %10325 = vmatprep.subr.mxu0 0.0
    %10326 = vmatpush1.msra.mxu0 0.0
    %10327 = vmatprep.subr.mxu0 0.0
    %10328 = vmatpush1.msra.mxu0 0.0
    %10329 = vmatprep.subr.mxu0 0.0
    %10330 = vmatpush1.msra.mxu0 0.0
    %10331 = vmatprep.subr.mxu0 0.0
    %10332 = vmatpush1.msra.mxu0 0.0
    %10333 = vmatprep.subr.mxu0 0.0
    %10334 = vmatpush1.msra.mxu0 0.0
    %10335 = vmatprep.subr.mxu0 0.0
    %10336 = vmatpush1.msra.mxu0 0.0
    %10337 = vmatprep.subr.mxu0 0.0
    %10338 = vmatpush1.msra.mxu0 0.0
    %10339 = vmatprep.subr.mxu0 0.0
    %10340 = vmatpush1.msra.mxu0 0.0
    %10341 = vmatprep.subr.mxu0 0.0
    %10342 = vmatpush1.msra.mxu0 0.0
    %10343 = vmatprep.subr.mxu0 0.0
    %10344 = vmatpush1.msra.mxu0 0.0
    %10345 = vmatprep.subr.mxu0 0.0
    %10346 = vmatpush1.msra.mxu0 0.0
    %10347 = vmatprep.subr.mxu0 0.0
    %10348 = vmatpush1.msra.mxu0 0.0
    %10349 = vmatprep.subr.mxu0 0.0
    %10350 = vmatpush1.msra.mxu0 0.0
    %10351 = vmatprep.subr.mxu0 0.0
    %10352 = vmatpush1.msra.mxu0 0.0
    %10353 = vmatprep.subr.mxu0 0.0
    %10354 = vmatpush1.msra.mxu0 0.0
    %10355 = vmatprep.subr.mxu0 0.0
    %10356 = vmatpush1.msra.mxu0 0.0
    %10357 = vmatprep.subr.mxu0 0.0
    %10358 = vmatpush1.msra.mxu0 0.0
    %10359 = vmatprep.mubr.f32.mxu0 0.0
    %v10360 = vand.u32 %v9707, 4294901760
    %10361 = vmatmul.mubr.f32.gmra.mrb[0].mxu0 %v10360
    %v10362 = vpop.f32.mrb[0].mxu0
    %v10363 = vadd.f32 %v10266, %v10362
    %v10364 = vpop.f32.mrb[0].mxu0
    %10365 = vmatprep.mubr.f32.mxu0 0.0
    %v10366 = vand.u32 %v9710, 4294901760
    %10367 = vmatmul.mubr.f32.gmra.mrb[0].mxu0 %v10366
    %v10368 = vpop.f32.mrb[0].mxu0
    %v10369 = vadd.f32 %v10272, %v10368
    %v10370 = vpop.f32.mrb[0].mxu0
    %10371 = vmatprep.mubr.f32.mxu0 0.0
    %v10372 = vand.u32 %v9713, 4294901760
    %10373 = vmatmul.mubr.f32.gmra.mrb[0].mxu0 %v10372
    %v10374 = vpop.f32.mrb[0].mxu0
    %v10375 = vadd.f32 %v10278, %v10374
    %v10376 = vpop.f32.mrb[0].mxu0
    %10377 = vmatprep.mubr.f32.mxu0 0.0
    %v10378 = vand.u32 %v9716, 4294901760
    %10379 = vmatmul.mubr.f32.gmra.mrb[0].mxu0 %v10378
    %v10380 = vpop.f32.mrb[0].mxu0
    %v10381 = vadd.f32 %v10284, %v10380
    %v10382 = vpop.f32.mrb[0].mxu0
    %10383 = vdwg.mxu0
    %s10384 = scalar_lea.vmem %s14, 32
    %v10385 = vld [vmem:[%s10384] sm:$0xff]
    %v10386 = vld [vmem:[%s10384 + $0x8] sm:$0xff]
    %v10387 = vld [vmem:[%s10384 + $0x10] sm:$0xff]
    %v10388 = vld [vmem:[%s10384 + $0x18] sm:$0xff]
    %v10390 = vsel %vm7250, %v10385, 0
    %v10393 = vsel %vm7250, %v10386, 0
    %v10396 = vsel %vm7250, %v10387, 0
    %v10399 = vsel %vm7250, %v10388, 0
    %10401 = vmatprep.subr.mxu0 0.0
    %v10402 = vand.u32 %v9694, 4294901760
    %10403 = vmatpush1.msra.mxu0 %v10402
    %10404 = vmatprep.subr.mxu0 0.0
    %v10405 = vand.u32 %v9695, 4294901760
    %10406 = vmatpush1.msra.mxu0 %v10405
    %10407 = vmatprep.subr.mxu0 0.0
    %v10408 = vand.u32 %v9696, 4294901760
    %10409 = vmatpush1.msra.mxu0 %v10408
    %10410 = vmatprep.subr.mxu0 0.0
    %v10411 = vand.u32 %v9697, 4294901760
    %10412 = vmatpush1.msra.mxu0 %v10411
    %10413 = vmatprep.subr.mxu0 0.0
    %v10414 = vand.u32 %v9698, 4294901760
    %10415 = vmatpush1.msra.mxu0 %v10414
    %10416 = vmatprep.subr.mxu0 0.0
    %v10417 = vand.u32 %v9699, 4294901760
    %10418 = vmatpush1.msra.mxu0 %v10417
    %10419 = vmatprep.subr.mxu0 0.0
    %v10420 = vand.u32 %v9700, 4294901760
    %10421 = vmatpush1.msra.mxu0 %v10420
    %10422 = vmatprep.subr.mxu0 0.0
    %v10423 = vand.u32 %v9701, 4294901760
    %10424 = vmatpush1.msra.mxu0 %v10423
    %10425 = vmatprep.subr.mxu0 0.0
    %10426 = vmatpush1.msra.mxu0 0.0
    %10427 = vmatprep.subr.mxu0 0.0
    %10428 = vmatpush1.msra.mxu0 0.0
    %10429 = vmatprep.subr.mxu0 0.0
    %10430 = vmatpush1.msra.mxu0 0.0
    %10431 = vmatprep.subr.mxu0 0.0
    %10432 = vmatpush1.msra.mxu0 0.0
    %10433 = vmatprep.subr.mxu0 0.0
    %10434 = vmatpush1.msra.mxu0 0.0
    %10435 = vmatprep.subr.mxu0 0.0
    %10436 = vmatpush1.msra.mxu0 0.0
    %10437 = vmatprep.subr.mxu0 0.0
    %10438 = vmatpush1.msra.mxu0 0.0
    %10439 = vmatprep.subr.mxu0 0.0
    %10440 = vmatpush1.msra.mxu0 0.0
    %10441 = vmatprep.subr.mxu0 0.0
    %10442 = vmatpush1.msra.mxu0 0.0
    %10443 = vmatprep.subr.mxu0 0.0
    %10444 = vmatpush1.msra.mxu0 0.0
    %10445 = vmatprep.subr.mxu0 0.0
    %10446 = vmatpush1.msra.mxu0 0.0
    %10447 = vmatprep.subr.mxu0 0.0
    %10448 = vmatpush1.msra.mxu0 0.0
    %10449 = vmatprep.subr.mxu0 0.0
    %10450 = vmatpush1.msra.mxu0 0.0
    %10451 = vmatprep.subr.mxu0 0.0
    %10452 = vmatpush1.msra.mxu0 0.0
    %10453 = vmatprep.subr.mxu0 0.0
    %10454 = vmatpush1.msra.mxu0 0.0
    %10455 = vmatprep.subr.mxu0 0.0
    %10456 = vmatpush1.msra.mxu0 0.0
    %10457 = vmatprep.subr.mxu0 0.0
    %10458 = vmatpush1.msra.mxu0 0.0
    %10459 = vmatprep.subr.mxu0 0.0
    %10460 = vmatpush1.msra.mxu0 0.0
    %10461 = vmatprep.subr.mxu0 0.0
    %10462 = vmatpush1.msra.mxu0 0.0
    %10463 = vmatprep.subr.mxu0 0.0
    %10464 = vmatpush1.msra.mxu0 0.0
    %10465 = vmatprep.subr.mxu0 0.0
    %10466 = vmatpush1.msra.mxu0 0.0
    %10467 = vmatprep.subr.mxu0 0.0
    %10468 = vmatpush1.msra.mxu0 0.0
    %10469 = vmatprep.subr.mxu0 0.0
    %10470 = vmatpush1.msra.mxu0 0.0
    %10471 = vmatprep.subr.mxu0 0.0
    %10472 = vmatpush1.msra.mxu0 0.0
    %10473 = vmatprep.mubr.f32.mxu0 0.0
    %v10474 = vand.u32 %v10390, 4294901760
    %v10475 = vsub.f32 %v10390, %v10474
    %v10476 = vand.u32 %v10475, 4294901760
    %v10477 = vsub.f32 %v10475, %v10476
    %v10478 = vand.u32 %v10477, 4294901760
    %10479 = vmatmul.mubr.f32.gmra.mrb[0].mxu0 %v10478
    %v10480 = vpop.f32.mrb[0].mxu0
    %v10481 = vadd.f32 0.0, %v10480
    %v10482 = vpop.f32.mrb[0].mxu0
    %10483 = vmatprep.mubr.f32.mxu0 0.0
    %v10484 = vand.u32 %v10393, 4294901760
    %v10485 = vsub.f32 %v10393, %v10484
    %v10486 = vand.u32 %v10485, 4294901760
    %v10487 = vsub.f32 %v10485, %v10486
    %v10488 = vand.u32 %v10487, 4294901760
    %10489 = vmatmul.mubr.f32.gmra.mrb[0].mxu0 %v10488
    %v10490 = vpop.f32.mrb[0].mxu0
    %v10491 = vadd.f32 0.0, %v10490
    %v10492 = vpop.f32.mrb[0].mxu0
    %10493 = vmatprep.mubr.f32.mxu0 0.0
    %v10494 = vand.u32 %v10396, 4294901760
    %v10495 = vsub.f32 %v10396, %v10494
    %v10496 = vand.u32 %v10495, 4294901760
    %v10497 = vsub.f32 %v10495, %v10496
    %v10498 = vand.u32 %v10497, 4294901760
    %10499 = vmatmul.mubr.f32.gmra.mrb[0].mxu0 %v10498
    %v10500 = vpop.f32.mrb[0].mxu0
    %v10501 = vadd.f32 0.0, %v10500
    %v10502 = vpop.f32.mrb[0].mxu0
    %10503 = vmatprep.mubr.f32.mxu0 0.0
    %v10504 = vand.u32 %v10399, 4294901760
    %v10505 = vsub.f32 %v10399, %v10504
    %v10506 = vand.u32 %v10505, 4294901760
    %v10507 = vsub.f32 %v10505, %v10506
    %v10508 = vand.u32 %v10507, 4294901760
    %10509 = vmatmul.mubr.f32.gmra.mrb[0].mxu0 %v10508
    %v10510 = vpop.f32.mrb[0].mxu0
    %v10511 = vadd.f32 0.0, %v10510
    %v10512 = vpop.f32.mrb[0].mxu0
    %10513 = vdwg.mxu0
    %10514 = vmatprep.subr.mxu0 0.0
    %v10515 = vand.u32 %v9694, 4294901760
    %v10516 = vsub.f32 %v9694, %v10515
    %v10517 = vand.u32 %v10516, 4294901760
    %v10518 = vsub.f32 %v10516, %v10517
    %v10519 = vand.u32 %v10518, 4294901760
    %10520 = vmatpush1.msra.mxu0 %v10519
    %10521 = vmatprep.subr.mxu0 0.0
    %v10522 = vand.u32 %v9695, 4294901760
    %v10523 = vsub.f32 %v9695, %v10522
    %v10524 = vand.u32 %v10523, 4294901760
    %v10525 = vsub.f32 %v10523, %v10524
    %v10526 = vand.u32 %v10525, 4294901760
    %10527 = vmatpush1.msra.mxu0 %v10526
    %10528 = vmatprep.subr.mxu0 0.0
    %v10529 = vand.u32 %v9696, 4294901760
    %v10530 = vsub.f32 %v9696, %v10529
    %v10531 = vand.u32 %v10530, 4294901760
    %v10532 = vsub.f32 %v10530, %v10531
    %v10533 = vand.u32 %v10532, 4294901760
    %10534 = vmatpush1.msra.mxu0 %v10533
    %10535 = vmatprep.subr.mxu0 0.0
    %v10536 = vand.u32 %v9697, 4294901760
    %v10537 = vsub.f32 %v9697, %v10536
    %v10538 = vand.u32 %v10537, 4294901760
    %v10539 = vsub.f32 %v10537, %v10538
    %v10540 = vand.u32 %v10539, 4294901760
    %10541 = vmatpush1.msra.mxu0 %v10540
    %10542 = vmatprep.subr.mxu0 0.0
    %v10543 = vand.u32 %v9698, 4294901760
    %v10544 = vsub.f32 %v9698, %v10543
    %v10545 = vand.u32 %v10544, 4294901760
    %v10546 = vsub.f32 %v10544, %v10545
    %v10547 = vand.u32 %v10546, 4294901760
    %10548 = vmatpush1.msra.mxu0 %v10547
    %10549 = vmatprep.subr.mxu0 0.0
    %v10550 = vand.u32 %v9699, 4294901760
    %v10551 = vsub.f32 %v9699, %v10550
    %v10552 = vand.u32 %v10551, 4294901760
    %v10553 = vsub.f32 %v10551, %v10552
    %v10554 = vand.u32 %v10553, 4294901760
    %10555 = vmatpush1.msra.mxu0 %v10554
    %10556 = vmatprep.subr.mxu0 0.0
    %v10557 = vand.u32 %v9700, 4294901760
    %v10558 = vsub.f32 %v9700, %v10557
    %v10559 = vand.u32 %v10558, 4294901760
    %v10560 = vsub.f32 %v10558, %v10559
    %v10561 = vand.u32 %v10560, 4294901760
    %10562 = vmatpush1.msra.mxu0 %v10561
    %10563 = vmatprep.subr.mxu0 0.0
    %v10564 = vand.u32 %v9701, 4294901760
    %v10565 = vsub.f32 %v9701, %v10564
    %v10566 = vand.u32 %v10565, 4294901760
    %v10567 = vsub.f32 %v10565, %v10566
    %v10568 = vand.u32 %v10567, 4294901760
    %10569 = vmatpush1.msra.mxu0 %v10568
    %10570 = vmatprep.subr.mxu0 0.0
    %10571 = vmatpush1.msra.mxu0 0.0
    %10572 = vmatprep.subr.mxu0 0.0
    %10573 = vmatpush1.msra.mxu0 0.0
    %10574 = vmatprep.subr.mxu0 0.0
    %10575 = vmatpush1.msra.mxu0 0.0
    %10576 = vmatprep.subr.mxu0 0.0
    %10577 = vmatpush1.msra.mxu0 0.0
    %10578 = vmatprep.subr.mxu0 0.0
    %10579 = vmatpush1.msra.mxu0 0.0
    %10580 = vmatprep.subr.mxu0 0.0
    %10581 = vmatpush1.msra.mxu0 0.0
    %10582 = vmatprep.subr.mxu0 0.0
    %10583 = vmatpush1.msra.mxu0 0.0
    %10584 = vmatprep.subr.mxu0 0.0
    %10585 = vmatpush1.msra.mxu0 0.0
    %10586 = vmatprep.subr.mxu0 0.0
    %10587 = vmatpush1.msra.mxu0 0.0
    %10588 = vmatprep.subr.mxu0 0.0
    %10589 = vmatpush1.msra.mxu0 0.0
    %10590 = vmatprep.subr.mxu0 0.0
    %10591 = vmatpush1.msra.mxu0 0.0
    %10592 = vmatprep.subr.mxu0 0.0
    %10593 = vmatpush1.msra.mxu0 0.0
    %10594 = vmatprep.subr.mxu0 0.0
    %10595 = vmatpush1.msra.mxu0 0.0
    %10596 = vmatprep.subr.mxu0 0.0
    %10597 = vmatpush1.msra.mxu0 0.0
    %10598 = vmatprep.subr.mxu0 0.0
    %10599 = vmatpush1.msra.mxu0 0.0
    %10600 = vmatprep.subr.mxu0 0.0
    %10601 = vmatpush1.msra.mxu0 0.0
    %10602 = vmatprep.subr.mxu0 0.0
    %10603 = vmatpush1.msra.mxu0 0.0
    %10604 = vmatprep.subr.mxu0 0.0
    %10605 = vmatpush1.msra.mxu0 0.0
    %10606 = vmatprep.subr.mxu0 0.0
    %10607 = vmatpush1.msra.mxu0 0.0
    %10608 = vmatprep.subr.mxu0 0.0
    %10609 = vmatpush1.msra.mxu0 0.0
    %10610 = vmatprep.subr.mxu0 0.0
    %10611 = vmatpush1.msra.mxu0 0.0
    %10612 = vmatprep.subr.mxu0 0.0
    %10613 = vmatpush1.msra.mxu0 0.0
    %10614 = vmatprep.subr.mxu0 0.0
    %10615 = vmatpush1.msra.mxu0 0.0
    %10616 = vmatprep.subr.mxu0 0.0
    %10617 = vmatpush1.msra.mxu0 0.0
    %10618 = vmatprep.mubr.f32.mxu0 0.0
    %v10619 = vand.u32 %v10390, 4294901760
    %10620 = vmatmul.mubr.f32.gmra.mrb[0].mxu0 %v10619
    %v10621 = vpop.f32.mrb[0].mxu0
    %v10622 = vadd.f32 %v10481, %v10621
    %v10623 = vpop.f32.mrb[0].mxu0
    %10624 = vmatprep.mubr.f32.mxu0 0.0
    %v10625 = vand.u32 %v10393, 4294901760
    %10626 = vmatmul.mubr.f32.gmra.mrb[0].mxu0 %v10625
    %v10627 = vpop.f32.mrb[0].mxu0
    %v10628 = vadd.f32 %v10491, %v10627
    %v10629 = vpop.f32.mrb[0].mxu0
    %10630 = vmatprep.mubr.f32.mxu0 0.0
    %v10631 = vand.u32 %v10396, 4294901760
    %10632 = vmatmul.mubr.f32.gmra.mrb[0].mxu0 %v10631
    %v10633 = vpop.f32.mrb[0].mxu0
    %v10634 = vadd.f32 %v10501, %v10633
    %v10635 = vpop.f32.mrb[0].mxu0
    %10636 = vmatprep.mubr.f32.mxu0 0.0
    %v10637 = vand.u32 %v10399, 4294901760
    %10638 = vmatmul.mubr.f32.gmra.mrb[0].mxu0 %v10637
    %v10639 = vpop.f32.mrb[0].mxu0
    %v10640 = vadd.f32 %v10511, %v10639
    %v10641 = vpop.f32.mrb[0].mxu0
    %10642 = vdwg.mxu0
    %10643 = vmatprep.subr.mxu0 0.0
    %v10644 = vand.u32 %v9694, 4294901760
    %v10645 = vsub.f32 %v9694, %v10644
    %10646 = vmatpush1.msra.mxu0 %v10645
    %10647 = vmatprep.subr.mxu0 0.0
    %v10648 = vand.u32 %v9695, 4294901760
    %v10649 = vsub.f32 %v9695, %v10648
    %10650 = vmatpush1.msra.mxu0 %v10649
    %10651 = vmatprep.subr.mxu0 0.0
    %v10652 = vand.u32 %v9696, 4294901760
    %v10653 = vsub.f32 %v9696, %v10652
    %10654 = vmatpush1.msra.mxu0 %v10653
    %10655 = vmatprep.subr.mxu0 0.0
    %v10656 = vand.u32 %v9697, 4294901760
    %v10657 = vsub.f32 %v9697, %v10656
    %10658 = vmatpush1.msra.mxu0 %v10657
    %10659 = vmatprep.subr.mxu0 0.0
    %v10660 = vand.u32 %v9698, 4294901760
    %v10661 = vsub.f32 %v9698, %v10660
    %10662 = vmatpush1.msra.mxu0 %v10661
    %10663 = vmatprep.subr.mxu0 0.0
    %v10664 = vand.u32 %v9699, 4294901760
    %v10665 = vsub.f32 %v9699, %v10664
    %10666 = vmatpush1.msra.mxu0 %v10665
    %10667 = vmatprep.subr.mxu0 0.0
    %v10668 = vand.u32 %v9700, 4294901760
    %v10669 = vsub.f32 %v9700, %v10668
    %10670 = vmatpush1.msra.mxu0 %v10669
    %10671 = vmatprep.subr.mxu0 0.0
    %v10672 = vand.u32 %v9701, 4294901760
    %v10673 = vsub.f32 %v9701, %v10672
    %10674 = vmatpush1.msra.mxu0 %v10673
    %10675 = vmatprep.subr.mxu0 0.0
    %10676 = vmatpush1.msra.mxu0 0.0
    %10677 = vmatprep.subr.mxu0 0.0
    %10678 = vmatpush1.msra.mxu0 0.0
    %10679 = vmatprep.subr.mxu0 0.0
    %10680 = vmatpush1.msra.mxu0 0.0
    %10681 = vmatprep.subr.mxu0 0.0
    %10682 = vmatpush1.msra.mxu0 0.0
    %10683 = vmatprep.subr.mxu0 0.0
    %10684 = vmatpush1.msra.mxu0 0.0
    %10685 = vmatprep.subr.mxu0 0.0
    %10686 = vmatpush1.msra.mxu0 0.0
    %10687 = vmatprep.subr.mxu0 0.0
    %10688 = vmatpush1.msra.mxu0 0.0
    %10689 = vmatprep.subr.mxu0 0.0
    %10690 = vmatpush1.msra.mxu0 0.0
    %10691 = vmatprep.subr.mxu0 0.0
    %10692 = vmatpush1.msra.mxu0 0.0
    %10693 = vmatprep.subr.mxu0 0.0
    %10694 = vmatpush1.msra.mxu0 0.0
    %10695 = vmatprep.subr.mxu0 0.0
    %10696 = vmatpush1.msra.mxu0 0.0
    %10697 = vmatprep.subr.mxu0 0.0
    %10698 = vmatpush1.msra.mxu0 0.0
    %10699 = vmatprep.subr.mxu0 0.0
    %10700 = vmatpush1.msra.mxu0 0.0
    %10701 = vmatprep.subr.mxu0 0.0
    %10702 = vmatpush1.msra.mxu0 0.0
    %10703 = vmatprep.subr.mxu0 0.0
    %10704 = vmatpush1.msra.mxu0 0.0
    %10705 = vmatprep.subr.mxu0 0.0
    %10706 = vmatpush1.msra.mxu0 0.0
    %10707 = vmatprep.subr.mxu0 0.0
    %10708 = vmatpush1.msra.mxu0 0.0
    %10709 = vmatprep.subr.mxu0 0.0
    %10710 = vmatpush1.msra.mxu0 0.0
    %10711 = vmatprep.subr.mxu0 0.0
    %10712 = vmatpush1.msra.mxu0 0.0
    %10713 = vmatprep.subr.mxu0 0.0
    %10714 = vmatpush1.msra.mxu0 0.0
    %10715 = vmatprep.subr.mxu0 0.0
    %10716 = vmatpush1.msra.mxu0 0.0
    %10717 = vmatprep.subr.mxu0 0.0
    %10718 = vmatpush1.msra.mxu0 0.0
    %10719 = vmatprep.subr.mxu0 0.0
    %10720 = vmatpush1.msra.mxu0 0.0
    %10721 = vmatprep.subr.mxu0 0.0
    %10722 = vmatpush1.msra.mxu0 0.0
    %10723 = vmatprep.mubr.f32.mxu0 0.0
    %v10724 = vand.u32 %v10390, 4294901760
    %v10725 = vsub.f32 %v10390, %v10724
    %10726 = vmatmul.mubr.f32.gmra.mrb[0].mxu0 %v10725
    %v10727 = vpop.f32.mrb[0].mxu0
    %v10728 = vadd.f32 %v10622, %v10727
    %v10729 = vpop.f32.mrb[0].mxu0
    %10730 = vmatprep.mubr.f32.mxu0 0.0
    %v10731 = vand.u32 %v10393, 4294901760
    %v10732 = vsub.f32 %v10393, %v10731
    %10733 = vmatmul.mubr.f32.gmra.mrb[0].mxu0 %v10732
    %v10734 = vpop.f32.mrb[0].mxu0
    %v10735 = vadd.f32 %v10628, %v10734
    %v10736 = vpop.f32.mrb[0].mxu0
    %10737 = vmatprep.mubr.f32.mxu0 0.0
    %v10738 = vand.u32 %v10396, 4294901760
    %v10739 = vsub.f32 %v10396, %v10738
    %10740 = vmatmul.mubr.f32.gmra.mrb[0].mxu0 %v10739
    %v10741 = vpop.f32.mrb[0].mxu0
    %v10742 = vadd.f32 %v10634, %v10741
    %v10743 = vpop.f32.mrb[0].mxu0
    %10744 = vmatprep.mubr.f32.mxu0 0.0
    %v10745 = vand.u32 %v10399, 4294901760
    %v10746 = vsub.f32 %v10399, %v10745
    %10747 = vmatmul.mubr.f32.gmra.mrb[0].mxu0 %v10746
    %v10748 = vpop.f32.mrb[0].mxu0
    %v10749 = vadd.f32 %v10640, %v10748
    %v10750 = vpop.f32.mrb[0].mxu0
    %10751 = vdwg.mxu0
    %10752 = vmatprep.subr.mxu0 0.0
    %v10753 = vand.u32 %v9694, 4294901760
    %10754 = vmatpush1.msra.mxu0 %v10753
    %10755 = vmatprep.subr.mxu0 0.0
    %v10756 = vand.u32 %v9695, 4294901760
    %10757 = vmatpush1.msra.mxu0 %v10756
    %10758 = vmatprep.subr.mxu0 0.0
    %v10759 = vand.u32 %v9696, 4294901760
    %10760 = vmatpush1.msra.mxu0 %v10759
    %10761 = vmatprep.subr.mxu0 0.0
    %v10762 = vand.u32 %v9697, 4294901760
    %10763 = vmatpush1.msra.mxu0 %v10762
    %10764 = vmatprep.subr.mxu0 0.0
    %v10765 = vand.u32 %v9698, 4294901760
    %10766 = vmatpush1.msra.mxu0 %v10765
    %10767 = vmatprep.subr.mxu0 0.0
    %v10768 = vand.u32 %v9699, 4294901760
    %10769 = vmatpush1.msra.mxu0 %v10768
    %10770 = vmatprep.subr.mxu0 0.0
    %v10771 = vand.u32 %v9700, 4294901760
    %10772 = vmatpush1.msra.mxu0 %v10771
    %10773 = vmatprep.subr.mxu0 0.0
    %v10774 = vand.u32 %v9701, 4294901760
    %10775 = vmatpush1.msra.mxu0 %v10774
    %10776 = vmatprep.subr.mxu0 0.0
    %10777 = vmatpush1.msra.mxu0 0.0
    %10778 = vmatprep.subr.mxu0 0.0
    %10779 = vmatpush1.msra.mxu0 0.0
    %10780 = vmatprep.subr.mxu0 0.0
    %10781 = vmatpush1.msra.mxu0 0.0
    %10782 = vmatprep.subr.mxu0 0.0
    %10783 = vmatpush1.msra.mxu0 0.0
    %10784 = vmatprep.subr.mxu0 0.0
    %10785 = vmatpush1.msra.mxu0 0.0
    %10786 = vmatprep.subr.mxu0 0.0
    %10787 = vmatpush1.msra.mxu0 0.0
    %10788 = vmatprep.subr.mxu0 0.0
    %10789 = vmatpush1.msra.mxu0 0.0
    %10790 = vmatprep.subr.mxu0 0.0
    %10791 = vmatpush1.msra.mxu0 0.0
    %10792 = vmatprep.subr.mxu0 0.0
    %10793 = vmatpush1.msra.mxu0 0.0
    %10794 = vmatprep.subr.mxu0 0.0
    %10795 = vmatpush1.msra.mxu0 0.0
    %10796 = vmatprep.subr.mxu0 0.0
    %10797 = vmatpush1.msra.mxu0 0.0
    %10798 = vmatprep.subr.mxu0 0.0
    %10799 = vmatpush1.msra.mxu0 0.0
    %10800 = vmatprep.subr.mxu0 0.0
    %10801 = vmatpush1.msra.mxu0 0.0
    %10802 = vmatprep.subr.mxu0 0.0
    %10803 = vmatpush1.msra.mxu0 0.0
    %10804 = vmatprep.subr.mxu0 0.0
    %10805 = vmatpush1.msra.mxu0 0.0
    %10806 = vmatprep.subr.mxu0 0.0
    %10807 = vmatpush1.msra.mxu0 0.0
    %10808 = vmatprep.subr.mxu0 0.0
    %10809 = vmatpush1.msra.mxu0 0.0
    %10810 = vmatprep.subr.mxu0 0.0
    %10811 = vmatpush1.msra.mxu0 0.0
    %10812 = vmatprep.subr.mxu0 0.0
    %10813 = vmatpush1.msra.mxu0 0.0
    %10814 = vmatprep.subr.mxu0 0.0
    %10815 = vmatpush1.msra.mxu0 0.0
    %10816 = vmatprep.subr.mxu0 0.0
    %10817 = vmatpush1.msra.mxu0 0.0
    %10818 = vmatprep.subr.mxu0 0.0
    %10819 = vmatpush1.msra.mxu0 0.0
    %10820 = vmatprep.subr.mxu0 0.0
    %10821 = vmatpush1.msra.mxu0 0.0
    %10822 = vmatprep.subr.mxu0 0.0
    %10823 = vmatpush1.msra.mxu0 0.0
    %10824 = vmatprep.mubr.f32.mxu0 0.0
    %v10825 = vand.u32 %v10390, 4294901760
    %v10826 = vsub.f32 %v10390, %v10825
    %v10827 = vand.u32 %v10826, 4294901760
    %10828 = vmatmul.mubr.f32.gmra.mrb[0].mxu0 %v10827
    %v10829 = vpop.f32.mrb[0].mxu0
    %v10830 = vadd.f32 %v10728, %v10829
    %v10831 = vpop.f32.mrb[0].mxu0
    %10832 = vmatprep.mubr.f32.mxu0 0.0
    %v10833 = vand.u32 %v10393, 4294901760
    %v10834 = vsub.f32 %v10393, %v10833
    %v10835 = vand.u32 %v10834, 4294901760
    %10836 = vmatmul.mubr.f32.gmra.mrb[0].mxu0 %v10835
    %v10837 = vpop.f32.mrb[0].mxu0
    %v10838 = vadd.f32 %v10735, %v10837
    %v10839 = vpop.f32.mrb[0].mxu0
    %10840 = vmatprep.mubr.f32.mxu0 0.0
    %v10841 = vand.u32 %v10396, 4294901760
    %v10842 = vsub.f32 %v10396, %v10841
    %v10843 = vand.u32 %v10842, 4294901760
    %10844 = vmatmul.mubr.f32.gmra.mrb[0].mxu0 %v10843
    %v10845 = vpop.f32.mrb[0].mxu0
    %v10846 = vadd.f32 %v10742, %v10845
    %v10847 = vpop.f32.mrb[0].mxu0
    %10848 = vmatprep.mubr.f32.mxu0 0.0
    %v10849 = vand.u32 %v10399, 4294901760
    %v10850 = vsub.f32 %v10399, %v10849
    %v10851 = vand.u32 %v10850, 4294901760
    %10852 = vmatmul.mubr.f32.gmra.mrb[0].mxu0 %v10851
    %v10853 = vpop.f32.mrb[0].mxu0
    %v10854 = vadd.f32 %v10749, %v10853
    %v10855 = vpop.f32.mrb[0].mxu0
    %10856 = vdwg.mxu0
    %10857 = vmatprep.subr.mxu0 0.0
    %v10858 = vand.u32 %v9694, 4294901760
    %v10859 = vsub.f32 %v9694, %v10858
    %v10860 = vand.u32 %v10859, 4294901760
    %10861 = vmatpush1.msra.mxu0 %v10860
    %10862 = vmatprep.subr.mxu0 0.0
    %v10863 = vand.u32 %v9695, 4294901760
    %v10864 = vsub.f32 %v9695, %v10863
    %v10865 = vand.u32 %v10864, 4294901760
    %10866 = vmatpush1.msra.mxu0 %v10865
    %10867 = vmatprep.subr.mxu0 0.0
    %v10868 = vand.u32 %v9696, 4294901760
    %v10869 = vsub.f32 %v9696, %v10868
    %v10870 = vand.u32 %v10869, 4294901760
    %10871 = vmatpush1.msra.mxu0 %v10870
    %10872 = vmatprep.subr.mxu0 0.0
    %v10873 = vand.u32 %v9697, 4294901760
    %v10874 = vsub.f32 %v9697, %v10873
    %v10875 = vand.u32 %v10874, 4294901760
    %10876 = vmatpush1.msra.mxu0 %v10875
    %10877 = vmatprep.subr.mxu0 0.0
    %v10878 = vand.u32 %v9698, 4294901760
    %v10879 = vsub.f32 %v9698, %v10878
    %v10880 = vand.u32 %v10879, 4294901760
    %10881 = vmatpush1.msra.mxu0 %v10880
    %10882 = vmatprep.subr.mxu0 0.0
    %v10883 = vand.u32 %v9699, 4294901760
    %v10884 = vsub.f32 %v9699, %v10883
    %v10885 = vand.u32 %v10884, 4294901760
    %10886 = vmatpush1.msra.mxu0 %v10885
    %10887 = vmatprep.subr.mxu0 0.0
    %v10888 = vand.u32 %v9700, 4294901760
    %v10889 = vsub.f32 %v9700, %v10888
    %v10890 = vand.u32 %v10889, 4294901760
    %10891 = vmatpush1.msra.mxu0 %v10890
    %10892 = vmatprep.subr.mxu0 0.0
    %v10893 = vand.u32 %v9701, 4294901760
    %v10894 = vsub.f32 %v9701, %v10893
    %v10895 = vand.u32 %v10894, 4294901760
    %10896 = vmatpush1.msra.mxu0 %v10895
    %10897 = vmatprep.subr.mxu0 0.0
    %10898 = vmatpush1.msra.mxu0 0.0
    %10899 = vmatprep.subr.mxu0 0.0
    %10900 = vmatpush1.msra.mxu0 0.0
    %10901 = vmatprep.subr.mxu0 0.0
    %10902 = vmatpush1.msra.mxu0 0.0
    %10903 = vmatprep.subr.mxu0 0.0
    %10904 = vmatpush1.msra.mxu0 0.0
    %10905 = vmatprep.subr.mxu0 0.0
    %10906 = vmatpush1.msra.mxu0 0.0
    %10907 = vmatprep.subr.mxu0 0.0
    %10908 = vmatpush1.msra.mxu0 0.0
    %10909 = vmatprep.subr.mxu0 0.0
    %10910 = vmatpush1.msra.mxu0 0.0
    %10911 = vmatprep.subr.mxu0 0.0
    %10912 = vmatpush1.msra.mxu0 0.0
    %10913 = vmatprep.subr.mxu0 0.0
    %10914 = vmatpush1.msra.mxu0 0.0
    %10915 = vmatprep.subr.mxu0 0.0
    %10916 = vmatpush1.msra.mxu0 0.0
    %10917 = vmatprep.subr.mxu0 0.0
    %10918 = vmatpush1.msra.mxu0 0.0
    %10919 = vmatprep.subr.mxu0 0.0
    %10920 = vmatpush1.msra.mxu0 0.0
    %10921 = vmatprep.subr.mxu0 0.0
    %10922 = vmatpush1.msra.mxu0 0.0
    %10923 = vmatprep.subr.mxu0 0.0
    %10924 = vmatpush1.msra.mxu0 0.0
    %10925 = vmatprep.subr.mxu0 0.0
    %10926 = vmatpush1.msra.mxu0 0.0
    %10927 = vmatprep.subr.mxu0 0.0
    %10928 = vmatpush1.msra.mxu0 0.0
    %10929 = vmatprep.subr.mxu0 0.0
    %10930 = vmatpush1.msra.mxu0 0.0
    %10931 = vmatprep.subr.mxu0 0.0
    %10932 = vmatpush1.msra.mxu0 0.0
    %10933 = vmatprep.subr.mxu0 0.0
    %10934 = vmatpush1.msra.mxu0 0.0
    %10935 = vmatprep.subr.mxu0 0.0
    %10936 = vmatpush1.msra.mxu0 0.0
    %10937 = vmatprep.subr.mxu0 0.0
    %10938 = vmatpush1.msra.mxu0 0.0
    %10939 = vmatprep.subr.mxu0 0.0
    %10940 = vmatpush1.msra.mxu0 0.0
    %10941 = vmatprep.subr.mxu0 0.0
    %10942 = vmatpush1.msra.mxu0 0.0
    %10943 = vmatprep.subr.mxu0 0.0
    %10944 = vmatpush1.msra.mxu0 0.0
    %10945 = vmatprep.mubr.f32.mxu0 0.0
    %v10946 = vand.u32 %v10390, 4294901760
    %10947 = vmatmul.mubr.f32.gmra.mrb[0].mxu0 %v10946
    %v10948 = vpop.f32.mrb[0].mxu0
    %v10949 = vadd.f32 %v10830, %v10948
    %v10950 = vpop.f32.mrb[0].mxu0
    %10951 = vmatprep.mubr.f32.mxu0 0.0
    %v10952 = vand.u32 %v10393, 4294901760
    %10953 = vmatmul.mubr.f32.gmra.mrb[0].mxu0 %v10952
    %v10954 = vpop.f32.mrb[0].mxu0
    %v10955 = vadd.f32 %v10838, %v10954
    %v10956 = vpop.f32.mrb[0].mxu0
    %10957 = vmatprep.mubr.f32.mxu0 0.0
    %v10958 = vand.u32 %v10396, 4294901760
    %10959 = vmatmul.mubr.f32.gmra.mrb[0].mxu0 %v10958
    %v10960 = vpop.f32.mrb[0].mxu0
    %v10961 = vadd.f32 %v10846, %v10960
    %v10962 = vpop.f32.mrb[0].mxu0
    %10963 = vmatprep.mubr.f32.mxu0 0.0
    %v10964 = vand.u32 %v10399, 4294901760
    %10965 = vmatmul.mubr.f32.gmra.mrb[0].mxu0 %v10964
    %v10966 = vpop.f32.mrb[0].mxu0
    %v10967 = vadd.f32 %v10854, %v10966
    %v10968 = vpop.f32.mrb[0].mxu0
    %10969 = vdwg.mxu0
    %10970 = vmatprep.subr.mxu0 0.0
    %v10971 = vand.u32 %v9694, 4294901760
    %10972 = vmatpush1.msra.mxu0 %v10971
    %10973 = vmatprep.subr.mxu0 0.0
    %v10974 = vand.u32 %v9695, 4294901760
    %10975 = vmatpush1.msra.mxu0 %v10974
    %10976 = vmatprep.subr.mxu0 0.0
    %v10977 = vand.u32 %v9696, 4294901760
    %10978 = vmatpush1.msra.mxu0 %v10977
    %10979 = vmatprep.subr.mxu0 0.0
    %v10980 = vand.u32 %v9697, 4294901760
    %10981 = vmatpush1.msra.mxu0 %v10980
    %10982 = vmatprep.subr.mxu0 0.0
    %v10983 = vand.u32 %v9698, 4294901760
    %10984 = vmatpush1.msra.mxu0 %v10983
    %10985 = vmatprep.subr.mxu0 0.0
    %v10986 = vand.u32 %v9699, 4294901760
    %10987 = vmatpush1.msra.mxu0 %v10986
    %10988 = vmatprep.subr.mxu0 0.0
    %v10989 = vand.u32 %v9700, 4294901760
    %10990 = vmatpush1.msra.mxu0 %v10989
    %10991 = vmatprep.subr.mxu0 0.0
    %v10992 = vand.u32 %v9701, 4294901760
    %10993 = vmatpush1.msra.mxu0 %v10992
    %10994 = vmatprep.subr.mxu0 0.0
    %10995 = vmatpush1.msra.mxu0 0.0
    %10996 = vmatprep.subr.mxu0 0.0
    %10997 = vmatpush1.msra.mxu0 0.0
    %10998 = vmatprep.subr.mxu0 0.0
    %10999 = vmatpush1.msra.mxu0 0.0
    %11000 = vmatprep.subr.mxu0 0.0
    %11001 = vmatpush1.msra.mxu0 0.0
    %11002 = vmatprep.subr.mxu0 0.0
    %11003 = vmatpush1.msra.mxu0 0.0
    %11004 = vmatprep.subr.mxu0 0.0
    %11005 = vmatpush1.msra.mxu0 0.0
    %11006 = vmatprep.subr.mxu0 0.0
    %11007 = vmatpush1.msra.mxu0 0.0
    %11008 = vmatprep.subr.mxu0 0.0
    %11009 = vmatpush1.msra.mxu0 0.0
    %11010 = vmatprep.subr.mxu0 0.0
    %11011 = vmatpush1.msra.mxu0 0.0
    %11012 = vmatprep.subr.mxu0 0.0
    %11013 = vmatpush1.msra.mxu0 0.0
    %11014 = vmatprep.subr.mxu0 0.0
    %11015 = vmatpush1.msra.mxu0 0.0
    %11016 = vmatprep.subr.mxu0 0.0
    %11017 = vmatpush1.msra.mxu0 0.0
    %11018 = vmatprep.subr.mxu0 0.0
    %11019 = vmatpush1.msra.mxu0 0.0
    %11020 = vmatprep.subr.mxu0 0.0
    %11021 = vmatpush1.msra.mxu0 0.0
    %11022 = vmatprep.subr.mxu0 0.0
    %11023 = vmatpush1.msra.mxu0 0.0
    %11024 = vmatprep.subr.mxu0 0.0
    %11025 = vmatpush1.msra.mxu0 0.0
    %11026 = vmatprep.subr.mxu0 0.0
    %11027 = vmatpush1.msra.mxu0 0.0
    %11028 = vmatprep.subr.mxu0 0.0
    %11029 = vmatpush1.msra.mxu0 0.0
    %11030 = vmatprep.subr.mxu0 0.0
    %11031 = vmatpush1.msra.mxu0 0.0
    %11032 = vmatprep.subr.mxu0 0.0
    %11033 = vmatpush1.msra.mxu0 0.0
    %11034 = vmatprep.subr.mxu0 0.0
    %11035 = vmatpush1.msra.mxu0 0.0
    %11036 = vmatprep.subr.mxu0 0.0
    %11037 = vmatpush1.msra.mxu0 0.0
    %11038 = vmatprep.subr.mxu0 0.0
    %11039 = vmatpush1.msra.mxu0 0.0
    %11040 = vmatprep.subr.mxu0 0.0
    %11041 = vmatpush1.msra.mxu0 0.0
    %11042 = vmatprep.mubr.f32.mxu0 0.0
    %v11043 = vand.u32 %v10390, 4294901760
    %11044 = vmatmul.mubr.f32.gmra.mrb[0].mxu0 %v11043
    %v11045 = vpop.f32.mrb[0].mxu0
    %v11046 = vadd.f32 %v10949, %v11045
    %v11047 = vpop.f32.mrb[0].mxu0
    %11048 = vmatprep.mubr.f32.mxu0 0.0
    %v11049 = vand.u32 %v10393, 4294901760
    %11050 = vmatmul.mubr.f32.gmra.mrb[0].mxu0 %v11049
    %v11051 = vpop.f32.mrb[0].mxu0
    %v11052 = vadd.f32 %v10955, %v11051
    %v11053 = vpop.f32.mrb[0].mxu0
    %11054 = vmatprep.mubr.f32.mxu0 0.0
    %v11055 = vand.u32 %v10396, 4294901760
    %11056 = vmatmul.mubr.f32.gmra.mrb[0].mxu0 %v11055
    %v11057 = vpop.f32.mrb[0].mxu0
    %v11058 = vadd.f32 %v10961, %v11057
    %v11059 = vpop.f32.mrb[0].mxu0
    %11060 = vmatprep.mubr.f32.mxu0 0.0
    %v11061 = vand.u32 %v10399, 4294901760
    %11062 = vmatmul.mubr.f32.gmra.mrb[0].mxu0 %v11061
    %v11063 = vpop.f32.mrb[0].mxu0
    %v11064 = vadd.f32 %v10967, %v11063
    %v11065 = vpop.f32.mrb[0].mxu0
    %11066 = vdwg.mxu0
    %v11067 = vmax.f32 %v10363, %v11046
    %v11068 = vmax.f32 %v10369, %v11052
    %v11069 = vmax.f32 %v10375, %v11058
    %v11070 = vmax.f32 %v10381, %v11064
    %v11071 = vlaneseq
    %v11072 = vshrl.u32 %v11071, 7
    %v11073 = vlaneseq
    %v11074 = vand.u32 %v11073, 127
    %v11075 = vld [vmem:[%s15] sm:$0xff]
    %v11076 = vld [vmem:[%s15 + $0x8] sm:$0xff]
    %v11077 = vmul.f32 %v11067, %v11075
    %v11078 = vmul.f32 %v11068, %v11076
    %v11079 = vadd.f32 %v11077, %v11078
    %11080 = vadd.xlane.f32.xlu0 %v11079
    %v11081 = vpop.xlane.xlu0 %11080
    %v11082 = vrot.slane %v11081, 4
    %v11083 = vadd.f32 %v11081, %v11082
    %v11084 = vrot.slane %v11083, 2
    %v11085 = vadd.f32 %v11083, %v11084
    %v11086 = vrot.slane %v11085, 1
    %v11087 = vadd.f32 %v11085, %v11086
    %s11088 = vtos %v11087
    %vm11089 = vcmp.eq.s32.totalorder %v11072, 0
    %vm11090 = vcmp.eq.s32.totalorder %v11074, 0
    %vm11091 = vmand %vm11089, %vm11090
    %v11092 = vstv %s11088
    %v11093 = vsel %vm11091, %v11092, 0.0
    %v11094 = vadd.f32 %v11093, 0.0
    %s11095 = scalar_lea.vmem %s15, 16
    %v11096 = vld [vmem:[%s11095] sm:$0xff]
    %v11097 = vld [vmem:[%s11095 + $0x8] sm:$0xff]
    %v11098 = vmul.f32 %v11067, %v11096
    %v11099 = vmul.f32 %v11068, %v11097
    %v11100 = vadd.f32 %v11098, %v11099
    %11101 = vadd.xlane.f32.xlu0 %v11100
    %v11102 = vpop.xlane.xlu0 %11101
    %v11103 = vrot.slane %v11102, 4
    %v11104 = vadd.f32 %v11102, %v11103
    %v11105 = vrot.slane %v11104, 2
    %v11106 = vadd.f32 %v11104, %v11105
    %v11107 = vrot.slane %v11106, 1
    %v11108 = vadd.f32 %v11106, %v11107
    %s11109 = vtos %v11108
    %vm11110 = vcmp.eq.s32.totalorder %v11074, 1
    %vm11111 = vmand %vm11089, %vm11110
    %v11112 = vstv %s11109
    %v11113 = vsel %vm11111, %v11112, 0.0
    %v11114 = vadd.f32 %v11094, %v11113
    %s11115 = scalar_lea.vmem %s15, 32
    %v11116 = vld [vmem:[%s11115] sm:$0xff]
    %v11117 = vld [vmem:[%s11115 + $0x8] sm:$0xff]
    %v11118 = vmul.f32 %v11067, %v11116
    %v11119 = vmul.f32 %v11068, %v11117
    %v11120 = vadd.f32 %v11118, %v11119
    %11121 = vadd.xlane.f32.xlu0 %v11120
    %v11122 = vpop.xlane.xlu0 %11121
    %v11123 = vrot.slane %v11122, 4
    %v11124 = vadd.f32 %v11122, %v11123
    %v11125 = vrot.slane %v11124, 2
    %v11126 = vadd.f32 %v11124, %v11125
    %v11127 = vrot.slane %v11126, 1
    %v11128 = vadd.f32 %v11126, %v11127
    %s11129 = vtos %v11128
    %vm11130 = vcmp.eq.s32.totalorder %v11074, 2
    %vm11131 = vmand %vm11089, %vm11130
    %v11132 = vstv %s11129
    %v11133 = vsel %vm11131, %v11132, 0.0
    %v11134 = vadd.f32 %v11114, %v11133
    %v11135 = vmul.f32 %v11069, %v11075
    %v11136 = vmul.f32 %v11070, %v11076
    %v11137 = vadd.f32 %v11135, %v11136
    %11138 = vadd.xlane.f32.xlu0 %v11137
    %v11139 = vpop.xlane.xlu0 %11138
    %v11140 = vrot.slane %v11139, 4
    %v11141 = vadd.f32 %v11139, %v11140
    %v11142 = vrot.slane %v11141, 2
    %v11143 = vadd.f32 %v11141, %v11142
    %v11144 = vrot.slane %v11143, 1
    %v11145 = vadd.f32 %v11143, %v11144
    %s11146 = vtos %v11145
    %vm11147 = vcmp.eq.s32.totalorder %v11072, 1
    %vm11148 = vmand %vm11147, %vm11090
    %v11149 = vstv %s11146
    %v11150 = vsel %vm11148, %v11149, 0.0
    %v11151 = vadd.f32 %v11134, %v11150
    %v11152 = vmul.f32 %v11069, %v11096
    %v11153 = vmul.f32 %v11070, %v11097
    %v11154 = vadd.f32 %v11152, %v11153
    %11155 = vadd.xlane.f32.xlu0 %v11154
    %v11156 = vpop.xlane.xlu0 %11155
    %v11157 = vrot.slane %v11156, 4
    %v11158 = vadd.f32 %v11156, %v11157
    %v11159 = vrot.slane %v11158, 2
    %v11160 = vadd.f32 %v11158, %v11159
    %v11161 = vrot.slane %v11160, 1
    %v11162 = vadd.f32 %v11160, %v11161
    %s11163 = vtos %v11162
    %vm11164 = vmand %vm11147, %vm11110
    %v11165 = vstv %s11163
    %v11166 = vsel %vm11164, %v11165, 0.0
    %v11167 = vadd.f32 %v11151, %v11166
    %v11168 = vmul.f32 %v11069, %v11116
    %v11169 = vmul.f32 %v11070, %v11117
    %v11170 = vadd.f32 %v11168, %v11169
    %11171 = vadd.xlane.f32.xlu0 %v11170
    %v11172 = vpop.xlane.xlu0 %11171
    %v11173 = vrot.slane %v11172, 4
    %v11174 = vadd.f32 %v11172, %v11173
    %v11175 = vrot.slane %v11174, 2
    %v11176 = vadd.f32 %v11174, %v11175
    %v11177 = vrot.slane %v11176, 1
    %v11178 = vadd.f32 %v11176, %v11177
    %s11179 = vtos %v11178
    %vm11180 = vmand %vm11147, %vm11130
    %v11181 = vstv %s11179
    %v11182 = vsel %vm11180, %v11181, 0.0
    %v11183 = vadd.f32 %v11167, %v11182
    %v11184 = vld [vmem:[%s16] sm:$0x1]
    %v11186 = vlaneseq
    %v11187 = vshrl.u32 %v11186, 7
    %v11188 = vsub.s32 0, %v11187
    %v11189 = vrot.slane %v11184, %v11188
    %v11191 = vadd.f32 %v11183, %v11189
    %vm11192 = vcmask 17408
    %11193 = vst.msk [vmem:[#allocation2] sm:$0x3] %vm11192, %v11191
    // Predicated region
    $region70: #{tiny_vgg_forward.1} parent=1 // pred_check
      _
    $region71: #{tiny_vgg_forward.1} parent=1 // pred_check_branch
      %11195 = sbr.rel (0) target = $region73
    $region72: #{tiny_vgg_forward.1} parent=1 // pred_region
      %s11197 = ssub.s32 32, 32
      %11198 = vsyncadd [#allocation3], %s11197
      %s11200 = sshll.u32 [#allocation2], 4
      %s11201 = int_to_ptr.vmem [resolvable:$true] %s11200
      %11203 = dma.vmem_to_hbm [thread:$0]  %s11201, 32, %s17, [#allocation3]
    $region73: #{tiny_vgg_forward.1} parent=1 // pred_fallthru
      _
    // Predicated region
    $region74: #{tiny_vgg_forward.1} parent=1 // pred_check
      _
    $region75: #{tiny_vgg_forward.1} parent=1 // pred_check_branch
      %11205 = sbr.rel (0) target = $region77
    $region76: #{tiny_vgg_forward.1} parent=1 // pred_region
      %11206 = dma.done [#allocation3], 32
    $region77: #{tiny_vgg_forward.1} parent=1 // pred_fallthru
      _
    %11207 = vsyncpa [#allocation3], 1

</llo_original>
